<compile_context>
chip_gen: v5e
topology: v5e:2x2
jax: 0.10.0
libtpu: 0.0.40
codegen_flags: <defaults>
</compile_context>

<pallas_src>
import functools

import jax
import jax.numpy as jnp
from jax import lax
from jax.experimental import pallas as pl
from jax.experimental.pallas import tpu as pltpu

EPS = 1e-5
VMEM_LIMIT = 48 * 1024 * 1024   # fits v7x's 64 MiB with headroom; raises default cap


# ---------------------------------------------------------------------------
# In-kernel helpers
# ---------------------------------------------------------------------------
def _fill_pad(pad_ref, center, halo, TH, W):
    """Build the reflection-padded (TH+2, W+2, C) f32 tile with slice stores.

    `center` is the (TH, W, C) block rows, `halo` the (2, W, C) top/bottom
    neighbour rows (already reflection-resolved by the wrapper / pass-1).
    """
    pad_ref[1:TH + 1, 1:W + 1, :] = center
    pad_ref[0:1, 1:W + 1, :] = halo[0:1]
    pad_ref[TH + 1:TH + 2, 1:W + 1, :] = halo[1:2]
    # W reflection: padded col 0 <- original col 1, padded col W+1 <- col W-2.
    pad_ref[:, 0:1, :] = pad_ref[:, 2:3, :]
    pad_ref[:, W + 1:W + 2, :] = pad_ref[:, W - 1:W, :]


def _conv3x3(pad_ref, w_ref, TH, W, C):
    """3x3 VALID conv over the padded tile: 9 accumulated MXU matmuls
    (bf16 in, K = C each) into one f32 accumulator.  Returns (TH*W, C) f32."""
    acc = None
    for dy in range(3):
        for dx in range(3):
            tap = pad_ref[dy:dy + TH, dx:dx + W, :].astype(jnp.bfloat16)
            p = jnp.dot(tap.reshape(TH * W, C), w_ref[dy * 3 + dx],
                        preferred_element_type=jnp.float32)
            acc = p if acc is None else acc + p
    return acc


def _tile_stats(acc):
    """Per-channel (mean, M2 = sum of squared deviations) of the f32 conv
    accumulator.  Combined across tiles with Chan's parallel formula in the
    wrapper -- numerically stable (no E[x^2]-E[x]^2 cancellation)."""
    mean = jnp.mean(acc, axis=0, keepdims=True)        # (1, C)
    dev = acc - mean
    m2 = jnp.sum(dev * dev, axis=0, keepdims=True)     # (1, C)
    return jnp.concatenate([mean, m2], axis=0)          # (2, C)


# ---------------------------------------------------------------------------
# Kernel bodies
# ---------------------------------------------------------------------------
def _conv1_kernel(x_ref, xh_ref, w_ref, h_ref, bnd_ref, st_ref, pad_ref,
                  *, TH, W, C):
    """Pass 1: Conv1(ReflPad(x)) -> bf16 h1 tile, boundary rows (the pass-2
    halo source) and per-tile BN1 partial statistics."""
    _fill_pad(pad_ref, x_ref[0], xh_ref[0, 0], TH, W)
    acc = _conv3x3(pad_ref, w_ref, TH, W, C)           # (TH*W, C) f32
    h = acc.astype(jnp.bfloat16).reshape(TH, W, C)
    h_ref[0] = h
    # Rows [0, 1, TH-2, TH-1] of this tile's conv output: everything any
    # neighbouring (or boundary) tile will need as a pass-2 halo row.
    bnd_ref[0, 0] = jnp.concatenate([h[0:2], h[TH - 2:TH]], axis=0)
    st_ref[0, 0] = _tile_stats(acc)


def _conv2_kernel(h1_ref, h1h_ref, w_ref, sc_ref, sh_ref, h_ref, st_ref,
                  pad_ref, *, TH, W, C):
    """Pass 2: Conv2(ReflPad(ReLU(BN1(h1)))) + per-tile BN2 partial stats.
    BN1 is applied as a precomputed per-channel affine, fused with ReLU."""
    sc = sc_ref[...].reshape(1, 1, C)
    sh = sh_ref[...].reshape(1, 1, C)
    center = jnp.maximum(h1_ref[0].astype(jnp.float32) * sc + sh, 0.0)
    halo = jnp.maximum(h1h_ref[0, 0].astype(jnp.float32) * sc + sh, 0.0)
    _fill_pad(pad_ref, center, halo, TH, W)
    acc = _conv3x3(pad_ref, w_ref, TH, W, C)
    h_ref[0] = acc.astype(jnp.bfloat16).reshape(TH, W, C)
    st_ref[0, 0] = _tile_stats(acc)


def _finalize_kernel(x_ref, h_ref, sc_ref, sh_ref, y_ref, *, C):
    """Pass 3: y = x + BN2(h2) with BN2 as a precomputed per-channel affine."""
    sc = sc_ref[...].reshape(1, 1, 1, C)
    sh = sh_ref[...].reshape(1, 1, 1, C)
    y_ref[...] = x_ref[...] + h_ref[...].astype(jnp.float32) * sc + sh


# ---------------------------------------------------------------------------
# Wrapper
# ---------------------------------------------------------------------------
def _combine_stats(st, gamma, beta, tile_count, total_count):
    """Chan-style combine of per-tile (mean, M2) -> training-mode BN affine."""
    means = st[:, :, 0, :]                                   # (N, nR, C)
    m2s = st[:, :, 1, :]
    gmean = jnp.mean(means, axis=(0, 1))                     # equal tile counts
    m2 = jnp.sum(m2s, axis=(0, 1)) + tile_count * jnp.sum(
        jnp.square(means - gmean[None, None, :]), axis=(0, 1))
    var = m2 / total_count                                   # biased (training)
    scale = gamma.astype(jnp.float32) * lax.rsqrt(var + EPS)
    shift = beta.astype(jnp.float32) - gmean * scale
    c = scale.shape[0]
    return scale.reshape(1, c), shift.reshape(1, c)


def _pick_row_block(H):
    # TH=32 keeps per-step VMEM ~12 MiB at CycleGAN sizes (C=256, W=64) while
    # amortizing per-step overhead and halo traffic.  Whole image when small.
    if H <= 32:
        return H
    for th in (32, 24, 16, 8):
        if H % th == 0:
            return th
    return H


@jax.jit
def residual_block_pallas(x_nchw, w1_oihw, g1, b1, w2_oihw, g2, b2):
    N, C, H, W = x_nchw.shape
    assert H >= 2 and W >= 2
    TH = _pick_row_block(H)
    nR = H // TH
    # TODO(synk): for v7x (2 TCs) with N == 1, prefer a TH that makes nR even.

    # TODO(synk): keep the surrounding model NHWC end-to-end to remove these
    # NCHW<->NHWC transpose passes from the hot path.
    x = jnp.transpose(x_nchw, (0, 2, 3, 1)).astype(jnp.float32)        # (N,H,W,C)

    # Conv weights (Cout,Cin,3,3) -> (9, Cin, Cout) bf16: one (C,C) matrix per
    # tap, resident in VMEM, driven as 9 accumulated MXU matmuls per tile.
    w1 = jnp.transpose(w1_oihw, (2, 3, 1, 0)).reshape(9, C, C).astype(jnp.bfloat16)
    w2 = jnp.transpose(w2_oihw, (2, 3, 1, 0)).reshape(9, C, C).astype(jnp.bfloat16)

    # Reflection-pad halo rows of x for every row block (tiny strided gather;
    # x is a pure input so this adds no serialization between kernels).
    top_idx = jnp.array([1 if r == 0 else r * TH - 1 for r in range(nR)], jnp.int32)
    bot_idx = jnp.array([H - 2 if r == nR - 1 else r * TH + TH for r in range(nR)],
                        jnp.int32)
    x_halo = jnp.stack([x[:, top_idx], x[:, bot_idx]], axis=2)         # (N,nR,2,W,C)

    grid = (N, nR)
    tile_spec = pl.BlockSpec((1, TH, W, C), lambda n, r: (n, r, 0, 0))
    halo_spec = pl.BlockSpec((1, 1, 2, W, C), lambda n, r: (n, r, 0, 0, 0))
    bnd_spec = pl.BlockSpec((1, 1, 4, W, C), lambda n, r: (n, r, 0, 0, 0))
    w_spec = pl.BlockSpec((9, C, C), lambda n, r: (0, 0, 0))
    vec_spec = pl.BlockSpec((1, C), lambda n, r: (0, 0))
    st_spec = pl.BlockSpec((1, 1, 2, C), lambda n, r: (n, r, 0, 0))

    params = pltpu.CompilerParams(
        dimension_semantics=("parallel", "parallel"),   # megacore-friendly
        vmem_limit_bytes=VMEM_LIMIT)
    pad_scratch = [pltpu.VMEM((TH + 2, W + 2, C), jnp.float32)]

    # ---- Pass 1: Conv1 + boundary rows + BN1 partial stats -----------------
    h1, bnd, st1 = pl.pallas_call(
        functools.partial(_conv1_kernel, TH=TH, W=W, C=C),
        grid=grid,
        in_specs=[tile_spec, halo_spec, w_spec],
        out_specs=(tile_spec, bnd_spec, st_spec),
        out_shape=(jax.ShapeDtypeStruct((N, H, W, C), jnp.bfloat16),
                   jax.ShapeDtypeStruct((N, nR, 4, W, C), jnp.bfloat16),
                   jax.ShapeDtypeStruct((N, nR, 2, C), jnp.float32)),
        scratch_shapes=pad_scratch,
        compiler_params=params,
    )(x, x_halo, w1)

    sc1, sh1 = _combine_stats(st1, g1, b1, TH * W, N * H * W)

    # Pass-2 halo from pass-1 boundary rows (tiny bf16 reshuffle; no strided
    # re-read of the full h1 from HBM).
    #   bnd[:, r] = h1 rows [r*TH, r*TH+1, r*TH+TH-2, r*TH+TH-1]
    top = jnp.concatenate([bnd[:, 0:1, 1], bnd[:, :-1, 3]], axis=1)    # (N,nR,W,C)
    bot = jnp.concatenate([bnd[:, 1:, 0], bnd[:, -1:, 2]], axis=1)     # (N,nR,W,C)
    h1_halo = jnp.stack([top, bot], axis=2)                            # (N,nR,2,W,C)

    # ---- Pass 2: fused BN1+ReLU -> Conv2 + BN2 partial stats ---------------
    h2, st2 = pl.pallas_call(
        functools.partial(_conv2_kernel, TH=TH, W=W, C=C),
        grid=grid,
        in_specs=[tile_spec, halo_spec, w_spec, vec_spec, vec_spec],
        out_specs=(tile_spec, st_spec),
        out_shape=(jax.ShapeDtypeStruct((N, H, W, C), jnp.bfloat16),
                   jax.ShapeDtypeStruct((N, nR, 2, C), jnp.float32)),
        scratch_shapes=pad_scratch,
        compiler_params=params,
    )(h1, h1_halo, w2, sc1, sh1)

    sc2, sh2 = _combine_stats(st2, g2, b2, TH * W, N * H * W)

    # ---- Pass 3: BN2 affine + residual add (elementwise, HBM-bound) --------
    # Full-image row blocks when they fit comfortably in VMEM, else reuse TH.
    RB3 = H if (20 * H * W * C) <= (24 * 1024 * 1024) else TH
    grid3 = (N, H // RB3)
    big_spec = pl.BlockSpec((1, RB3, W, C), lambda n, r: (n, r, 0, 0))
    vec3_spec = pl.BlockSpec((1, C), lambda n, r: (0, 0))
    y = pl.pallas_call(
        functools.partial(_finalize_kernel, C=C),
        grid=grid3,
        in_specs=[big_spec, big_spec, vec3_spec, vec3_spec],
        out_specs=big_spec,
        out_shape=jax.ShapeDtypeStruct((N, H, W, C), jnp.float32),
        input_output_aliases={0: 0},            # write y over x's buffer
        compiler_params=params,
    )(x, h2, sc2, sh2)

    return jnp.transpose(y, (0, 3, 1, 2))


# ---------------- pure-JAX reference (for verification only) ----------------
def _bn_ref(t_nchw, g, b):
    mean = jnp.mean(t_nchw, axis=(0, 2, 3), keepdims=True)
    var = jnp.mean((t_nchw - mean) ** 2, axis=(0, 2, 3), keepdims=True)
    return (t_nchw - mean) * lax.rsqrt(var + EPS) * g.reshape(1, -1, 1, 1) \
        + b.reshape(1, -1, 1, 1)


def residual_block_ref(x, w1, g1, b1, w2, g2, b2):
    dn = ('NCHW', 'OIHW', 'NCHW')
    h = jnp.pad(x, ((0, 0), (0, 0), (1, 1), (1, 1)), mode='reflect')
    h = lax.conv_general_dilated(h, w1, (1, 1), 'VALID', dimension_numbers=dn)
    h = jnp.maximum(_bn_ref(h, g1, b1), 0.0)
    h = jnp.pad(h, ((0, 0), (0, 0), (1, 1), (1, 1)), mode='reflect')
    h = lax.conv_general_dilated(h, w2, (1, 1), 'VALID', dimension_numbers=dn)
    h = _bn_ref(h, g2, b2)
    return x + h


if __name__ == "__main__":
    N, C, H, W = 2, 4, 16, 16
    key = jax.random.PRNGKey(0)
    kx, kw1, kw2 = jax.random.split(key, 3)

    x = jax.random.normal(kx, (N, C, H, W), jnp.float32)
    # deterministic conv weights (kaiming-uniform-ish scale); bias=False
    fan_in = C * 3 * 3
    bound = (1.0 / fan_in) ** 0.5
    w1 = jax.random.uniform(kw1, (C, C, 3, 3), jnp.float32, -bound, bound)
    w2 = jax.random.uniform(kw2, (C, C, 3, 3), jnp.float32, -bound, bound)
    # BatchNorm affine params (PyTorch default init: weight=1, bias=0)
    g1 = jnp.ones((C,), jnp.float32)
    b1 = jnp.zeros((C,), jnp.float32)
    g2 = jnp.ones((C,), jnp.float32)
    b2 = jnp.zeros((C,), jnp.float32)

    y = residual_block_pallas(x, w1, g1, b1, w2, g2, b2)
    y = jax.block_until_ready(y)

    y_ref = residual_block_ref(x, w1, g1, b1, w2, g2, b2)
    assert y.shape == (N, C, H, W)
    # bf16 MXU feeds + bf16 intermediates (f32 accumulation / f32 BN stats)
    # -> loose tolerance vs the f32 reference.
    max_err = float(jnp.max(jnp.abs(y - y_ref)))
    assert jnp.allclose(y, y_ref, atol=5e-2, rtol=5e-2), \
        f"mismatch vs reference (max abs err {max_err})"

    print("KERNEL_OK")
</pallas_src>

<mosaic_0001>
module attributes {stable_mosaic.version = 11 : i64} {
  func.func @_conv1_kernel(%arg0: i32, %arg1: i32, %arg2: memref<1x16x16x4xf32, #tpu.memory_space<vmem>>, %arg3: memref<1x1x2x16x4xf32, #tpu.memory_space<vmem>>, %arg4: memref<9x4x4xbf16, #tpu.memory_space<vmem>>, %arg5: memref<1x16x16x4xbf16, #tpu.memory_space<vmem>>, %arg6: memref<1x1x4x16x4xbf16, #tpu.memory_space<vmem>>, %arg7: memref<1x1x2x4xf32, #tpu.memory_space<vmem>>, %arg8: memref<18x18x4xf32, #tpu.memory_space<vmem>>) attributes {dimension_semantics = [#tpu.dimension_semantics<parallel>, #tpu.dimension_semantics<parallel>], iteration_bounds = array<i64: 2, 1>, scalar_prefetch = 0 : i64, scratch_operands = 1 : i64, tpu.core_type = #tpu.core_type<tc>, window_params = [{transform_indices = @transform_0, window_bounds = array<i64: 1, 16, 16, 4>}, {transform_indices = @transform_1, window_bounds = array<i64: 1, 1, 2, 16, 4>}, {pipeline_mode = #tpu.pipeline_mode<synchronous>, transform_indices = @transform_2, window_bounds = array<i64: 9, 4, 4>}, {transform_indices = @transform_3, window_bounds = array<i64: 1, 16, 16, 4>}, {transform_indices = @transform_4, window_bounds = array<i64: 1, 1, 4, 16, 4>}, {transform_indices = @transform_5, window_bounds = array<i64: 1, 1, 2, 4>}]} {
    %c0 = arith.constant 0 : index
    %c0_0 = arith.constant 0 : index
    %c0_1 = arith.constant 0 : index
    %c0_2 = arith.constant 0 : index
    %0 = vector.load %arg2[%c0, %c0_0, %c0_1, %c0_2] : memref<1x16x16x4xf32, #tpu.memory_space<vmem>>, vector<1x16x16x4xf32>
    %1 = vector.shape_cast %0 : vector<1x16x16x4xf32> to vector<16x16x4xf32>
    %c0_3 = arith.constant 0 : index
    %c0_4 = arith.constant 0 : index
    %c0_5 = arith.constant 0 : index
    %c0_6 = arith.constant 0 : index
    %c0_7 = arith.constant 0 : index
    %2 = vector.load %arg3[%c0_3, %c0_4, %c0_5, %c0_6, %c0_7] : memref<1x1x2x16x4xf32, #tpu.memory_space<vmem>>, vector<1x1x2x16x4xf32>
    %3 = vector.shape_cast %2 : vector<1x1x2x16x4xf32> to vector<2x16x4xf32>
    %c1 = arith.constant 1 : index
    %c1_8 = arith.constant 1 : index
    %c0_9 = arith.constant 0 : index
    %4 = vector.load %arg8[%c1, %c1_8, %c0_9] : memref<18x18x4xf32, #tpu.memory_space<vmem>>, vector<16x16x4xf32>
    tpu.vector_store %arg8[%c1, %c1_8, %c0_9], %1 {strides = array<i32>} : memref<18x18x4xf32, #tpu.memory_space<vmem>>, vector<16x16x4xf32>,
    %5 = vector.extract_strided_slice %3 {offsets = [0, 0, 0], sizes = [1, 16, 4], strides = [1, 1, 1]} : vector<2x16x4xf32> to vector<1x16x4xf32>
    %c0_10 = arith.constant 0 : index
    %c1_11 = arith.constant 1 : index
    %c0_12 = arith.constant 0 : index
    %6 = vector.load %arg8[%c0_10, %c1_11, %c0_12] : memref<18x18x4xf32, #tpu.memory_space<vmem>>, vector<1x16x4xf32>
    tpu.vector_store %arg8[%c0_10, %c1_11, %c0_12], %5 {strides = array<i32>} : memref<18x18x4xf32, #tpu.memory_space<vmem>>, vector<1x16x4xf32>,
    %7 = vector.extract_strided_slice %3 {offsets = [1, 0, 0], sizes = [1, 16, 4], strides = [1, 1, 1]} : vector<2x16x4xf32> to vector<1x16x4xf32>
    %c17 = arith.constant 17 : index
    %c1_13 = arith.constant 1 : index
    %c0_14 = arith.constant 0 : index
    %8 = vector.load %arg8[%c17, %c1_13, %c0_14] : memref<18x18x4xf32, #tpu.memory_space<vmem>>, vector<1x16x4xf32>
    tpu.vector_store %arg8[%c17, %c1_13, %c0_14], %7 {strides = array<i32>} : memref<18x18x4xf32, #tpu.memory_space<vmem>>, vector<1x16x4xf32>,
    %c0_15 = arith.constant 0 : index
    %c2 = arith.constant 2 : index
    %c0_16 = arith.constant 0 : index
    %9 = vector.load %arg8[%c0_15, %c2, %c0_16] : memref<18x18x4xf32, #tpu.memory_space<vmem>>, vector<18x1x4xf32>
    %c0_17 = arith.constant 0 : index
    %c0_18 = arith.constant 0 : index
    %c0_19 = arith.constant 0 : index
    %10 = vector.load %arg8[%c0_17, %c0_18, %c0_19] : memref<18x18x4xf32, #tpu.memory_space<vmem>>, vector<18x1x4xf32>
    tpu.vector_store %arg8[%c0_17, %c0_18, %c0_19], %9 {strides = array<i32>} : memref<18x18x4xf32, #tpu.memory_space<vmem>>, vector<18x1x4xf32>,
    %c0_20 = arith.constant 0 : index
    %c15 = arith.constant 15 : index
    %c0_21 = arith.constant 0 : index
    %11 = vector.load %arg8[%c0_20, %c15, %c0_21] : memref<18x18x4xf32, #tpu.memory_space<vmem>>, vector<18x1x4xf32>
    %c0_22 = arith.constant 0 : index
    %c17_23 = arith.constant 17 : index
    %c0_24 = arith.constant 0 : index
    %12 = vector.load %arg8[%c0_22, %c17_23, %c0_24] : memref<18x18x4xf32, #tpu.memory_space<vmem>>, vector<18x1x4xf32>
    tpu.vector_store %arg8[%c0_22, %c17_23, %c0_24], %11 {strides = array<i32>} : memref<18x18x4xf32, #tpu.memory_space<vmem>>, vector<18x1x4xf32>,
    %c0_25 = arith.constant 0 : index
    %c0_26 = arith.constant 0 : index
    %c0_27 = arith.constant 0 : index
    %13 = vector.load %arg8[%c0_25, %c0_26, %c0_27] : memref<18x18x4xf32, #tpu.memory_space<vmem>>, vector<16x16x4xf32>
    %14 = arith.truncf %13 : vector<16x16x4xf32> to vector<16x16x4xbf16>
    %15 = vector.shape_cast %14 : vector<16x16x4xbf16> to vector<256x4xbf16>
    %c0_28 = arith.constant 0 : index
    %c0_29 = arith.constant 0 : index
    %c0_30 = arith.constant 0 : index
    %16 = vector.load %arg4[%c0_28, %c0_29, %c0_30] : memref<9x4x4xbf16, #tpu.memory_space<vmem>>, vector<1x4x4xbf16>
    %17 = vector.shape_cast %16 : vector<1x4x4xbf16> to vector<4x4xbf16>
    %cst = arith.constant dense<0.000000e+00> : vector<256x4xf32>
    %18 = tpu.matmul %15, %17, %cst {dimension_numbers = #tpu.dot_dimension_numbers<[1], [0], [0], [1], [0, 0, 1, 1], [], []>} : vector<256x4xbf16>, vector<4x4xbf16>, vector<256x4xf32> -> vector<256x4xf32>
    %c0_31 = arith.constant 0 : index
    %c1_32 = arith.constant 1 : index
    %c0_33 = arith.constant 0 : index
    %19 = vector.load %arg8[%c0_31, %c1_32, %c0_33] : memref<18x18x4xf32, #tpu.memory_space<vmem>>, vector<16x16x4xf32>
    %20 = arith.truncf %19 : vector<16x16x4xf32> to vector<16x16x4xbf16>
    %21 = vector.shape_cast %20 : vector<16x16x4xbf16> to vector<256x4xbf16>
    %c1_34 = arith.constant 1 : index
    %c0_35 = arith.constant 0 : index
    %c0_36 = arith.constant 0 : index
    %22 = vector.load %arg4[%c1_34, %c0_35, %c0_36] : memref<9x4x4xbf16, #tpu.memory_space<vmem>>, vector<1x4x4xbf16>
    %23 = vector.shape_cast %22 : vector<1x4x4xbf16> to vector<4x4xbf16>
    %cst_37 = arith.constant dense<0.000000e+00> : vector<256x4xf32>
    %24 = tpu.matmul %21, %23, %cst_37 {dimension_numbers = #tpu.dot_dimension_numbers<[1], [0], [0], [1], [0, 0, 1, 1], [], []>} : vector<256x4xbf16>, vector<4x4xbf16>, vector<256x4xf32> -> vector<256x4xf32>
    %25 = arith.addf %18, %24 : vector<256x4xf32>
    %c0_38 = arith.constant 0 : index
    %c2_39 = arith.constant 2 : index
    %c0_40 = arith.constant 0 : index
    %26 = vector.load %arg8[%c0_38, %c2_39, %c0_40] : memref<18x18x4xf32, #tpu.memory_space<vmem>>, vector<16x16x4xf32>
    %27 = arith.truncf %26 : vector<16x16x4xf32> to vector<16x16x4xbf16>
    %28 = vector.shape_cast %27 : vector<16x16x4xbf16> to vector<256x4xbf16>
    %c2_41 = arith.constant 2 : index
    %c0_42 = arith.constant 0 : index
    %c0_43 = arith.constant 0 : index
    %29 = vector.load %arg4[%c2_41, %c0_42, %c0_43] : memref<9x4x4xbf16, #tpu.memory_space<vmem>>, vector<1x4x4xbf16>
    %30 = vector.shape_cast %29 : vector<1x4x4xbf16> to vector<4x4xbf16>
    %cst_44 = arith.constant dense<0.000000e+00> : vector<256x4xf32>
    %31 = tpu.matmul %28, %30, %cst_44 {dimension_numbers = #tpu.dot_dimension_numbers<[1], [0], [0], [1], [0, 0, 1, 1], [], []>} : vector<256x4xbf16>, vector<4x4xbf16>, vector<256x4xf32> -> vector<256x4xf32>
    %32 = arith.addf %25, %31 : vector<256x4xf32>
    %c1_45 = arith.constant 1 : index
    %c0_46 = arith.constant 0 : index
    %c0_47 = arith.constant 0 : index
    %33 = vector.load %arg8[%c1_45, %c0_46, %c0_47] : memref<18x18x4xf32, #tpu.memory_space<vmem>>, vector<16x16x4xf32>
    %34 = arith.truncf %33 : vector<16x16x4xf32> to vector<16x16x4xbf16>
    %35 = vector.shape_cast %34 : vector<16x16x4xbf16> to vector<256x4xbf16>
    %c3 = arith.constant 3 : index
    %c0_48 = arith.constant 0 : index
    %c0_49 = arith.constant 0 : index
    %36 = vector.load %arg4[%c3, %c0_48, %c0_49] : memref<9x4x4xbf16, #tpu.memory_space<vmem>>, vector<1x4x4xbf16>
    %37 = vector.shape_cast %36 : vector<1x4x4xbf16> to vector<4x4xbf16>
    %cst_50 = arith.constant dense<0.000000e+00> : vector<256x4xf32>
    %38 = tpu.matmul %35, %37, %cst_50 {dimension_numbers = #tpu.dot_dimension_numbers<[1], [0], [0], [1], [0, 0, 1, 1], [], []>} : vector<256x4xbf16>, vector<4x4xbf16>, vector<256x4xf32> -> vector<256x4xf32>
    %39 = arith.addf %32, %38 : vector<256x4xf32>
    %c1_51 = arith.constant 1 : index
    %c1_52 = arith.constant 1 : index
    %c0_53 = arith.constant 0 : index
    %40 = vector.load %arg8[%c1_51, %c1_52, %c0_53] : memref<18x18x4xf32, #tpu.memory_space<vmem>>, vector<16x16x4xf32>
    %41 = arith.truncf %40 : vector<16x16x4xf32> to vector<16x16x4xbf16>
    %42 = vector.shape_cast %41 : vector<16x16x4xbf16> to vector<256x4xbf16>
    %c4 = arith.constant 4 : index
    %c0_54 = arith.constant 0 : index
    %c0_55 = arith.constant 0 : index
    %43 = vector.load %arg4[%c4, %c0_54, %c0_55] : memref<9x4x4xbf16, #tpu.memory_space<vmem>>, vector<1x4x4xbf16>
    %44 = vector.shape_cast %43 : vector<1x4x4xbf16> to vector<4x4xbf16>
    %cst_56 = arith.constant dense<0.000000e+00> : vector<256x4xf32>
    %45 = tpu.matmul %42, %44, %cst_56 {dimension_numbers = #tpu.dot_dimension_numbers<[1], [0], [0], [1], [0, 0, 1, 1], [], []>} : vector<256x4xbf16>, vector<4x4xbf16>, vector<256x4xf32> -> vector<256x4xf32>
    %46 = arith.addf %39, %45 : vector<256x4xf32>
    %c1_57 = arith.constant 1 : index
    %c2_58 = arith.constant 2 : index
    %c0_59 = arith.constant 0 : index
    %47 = vector.load %arg8[%c1_57, %c2_58, %c0_59] : memref<18x18x4xf32, #tpu.memory_space<vmem>>, vector<16x16x4xf32>
    %48 = arith.truncf %47 : vector<16x16x4xf32> to vector<16x16x4xbf16>
    %49 = vector.shape_cast %48 : vector<16x16x4xbf16> to vector<256x4xbf16>
    %c5 = arith.constant 5 : index
    %c0_60 = arith.constant 0 : index
    %c0_61 = arith.constant 0 : index
    %50 = vector.load %arg4[%c5, %c0_60, %c0_61] : memref<9x4x4xbf16, #tpu.memory_space<vmem>>, vector<1x4x4xbf16>
    %51 = vector.shape_cast %50 : vector<1x4x4xbf16> to vector<4x4xbf16>
    %cst_62 = arith.constant dense<0.000000e+00> : vector<256x4xf32>
    %52 = tpu.matmul %49, %51, %cst_62 {dimension_numbers = #tpu.dot_dimension_numbers<[1], [0], [0], [1], [0, 0, 1, 1], [], []>} : vector<256x4xbf16>, vector<4x4xbf16>, vector<256x4xf32> -> vector<256x4xf32>
    %53 = arith.addf %46, %52 : vector<256x4xf32>
    %c2_63 = arith.constant 2 : index
    %c0_64 = arith.constant 0 : index
    %c0_65 = arith.constant 0 : index
    %54 = vector.load %arg8[%c2_63, %c0_64, %c0_65] : memref<18x18x4xf32, #tpu.memory_space<vmem>>, vector<16x16x4xf32>
    %55 = arith.truncf %54 : vector<16x16x4xf32> to vector<16x16x4xbf16>
    %56 = vector.shape_cast %55 : vector<16x16x4xbf16> to vector<256x4xbf16>
    %c6 = arith.constant 6 : index
    %c0_66 = arith.constant 0 : index
    %c0_67 = arith.constant 0 : index
    %57 = vector.load %arg4[%c6, %c0_66, %c0_67] : memref<9x4x4xbf16, #tpu.memory_space<vmem>>, vector<1x4x4xbf16>
    %58 = vector.shape_cast %57 : vector<1x4x4xbf16> to vector<4x4xbf16>
    %cst_68 = arith.constant dense<0.000000e+00> : vector<256x4xf32>
    %59 = tpu.matmul %56, %58, %cst_68 {dimension_numbers = #tpu.dot_dimension_numbers<[1], [0], [0], [1], [0, 0, 1, 1], [], []>} : vector<256x4xbf16>, vector<4x4xbf16>, vector<256x4xf32> -> vector<256x4xf32>
    %60 = arith.addf %53, %59 : vector<256x4xf32>
    %c2_69 = arith.constant 2 : index
    %c1_70 = arith.constant 1 : index
    %c0_71 = arith.constant 0 : index
    %61 = vector.load %arg8[%c2_69, %c1_70, %c0_71] : memref<18x18x4xf32, #tpu.memory_space<vmem>>, vector<16x16x4xf32>
    %62 = arith.truncf %61 : vector<16x16x4xf32> to vector<16x16x4xbf16>
    %63 = vector.shape_cast %62 : vector<16x16x4xbf16> to vector<256x4xbf16>
    %c7 = arith.constant 7 : index
    %c0_72 = arith.constant 0 : index
    %c0_73 = arith.constant 0 : index
    %64 = vector.load %arg4[%c7, %c0_72, %c0_73] : memref<9x4x4xbf16, #tpu.memory_space<vmem>>, vector<1x4x4xbf16>
    %65 = vector.shape_cast %64 : vector<1x4x4xbf16> to vector<4x4xbf16>
    %cst_74 = arith.constant dense<0.000000e+00> : vector<256x4xf32>
    %66 = tpu.matmul %63, %65, %cst_74 {dimension_numbers = #tpu.dot_dimension_numbers<[1], [0], [0], [1], [0, 0, 1, 1], [], []>} : vector<256x4xbf16>, vector<4x4xbf16>, vector<256x4xf32> -> vector<256x4xf32>
    %67 = arith.addf %60, %66 : vector<256x4xf32>
    %c2_75 = arith.constant 2 : index
    %c2_76 = arith.constant 2 : index
    %c0_77 = arith.constant 0 : index
    %68 = vector.load %arg8[%c2_75, %c2_76, %c0_77] : memref<18x18x4xf32, #tpu.memory_space<vmem>>, vector<16x16x4xf32>
    %69 = arith.truncf %68 : vector<16x16x4xf32> to vector<16x16x4xbf16>
    %70 = vector.shape_cast %69 : vector<16x16x4xbf16> to vector<256x4xbf16>
    %c8 = arith.constant 8 : index
    %c0_78 = arith.constant 0 : index
    %c0_79 = arith.constant 0 : index
    %71 = vector.load %arg4[%c8, %c0_78, %c0_79] : memref<9x4x4xbf16, #tpu.memory_space<vmem>>, vector<1x4x4xbf16>
    %72 = vector.shape_cast %71 : vector<1x4x4xbf16> to vector<4x4xbf16>
    %cst_80 = arith.constant dense<0.000000e+00> : vector<256x4xf32>
    %73 = tpu.matmul %70, %72, %cst_80 {dimension_numbers = #tpu.dot_dimension_numbers<[1], [0], [0], [1], [0, 0, 1, 1], [], []>} : vector<256x4xbf16>, vector<4x4xbf16>, vector<256x4xf32> -> vector<256x4xf32>
    %74 = arith.addf %67, %73 : vector<256x4xf32>
    %75 = arith.truncf %74 : vector<256x4xf32> to vector<256x4xbf16>
    %76 = vector.shape_cast %75 : vector<256x4xbf16> to vector<16x16x4xbf16>
    %c0_81 = arith.constant 0 : index
    %c0_82 = arith.constant 0 : index
    %c0_83 = arith.constant 0 : index
    %c0_84 = arith.constant 0 : index
    %77 = vector.load %arg5[%c0_81, %c0_82, %c0_83, %c0_84] : memref<1x16x16x4xbf16, #tpu.memory_space<vmem>>, vector<1x16x16x4xbf16>
    %78 = vector.shape_cast %77 : vector<1x16x16x4xbf16> to vector<16x16x4xbf16>
    %79 = vector.shape_cast %76 : vector<16x16x4xbf16> to vector<1x16x16x4xbf16>
    tpu.vector_store %arg5[%c0_81, %c0_82, %c0_83, %c0_84], %79 {strides = array<i32>} : memref<1x16x16x4xbf16, #tpu.memory_space<vmem>>, vector<1x16x16x4xbf16>,
    %80 = vector.extract_strided_slice %76 {offsets = [0, 0, 0], sizes = [2, 16, 4], strides = [1, 1, 1]} : vector<16x16x4xbf16> to vector<2x16x4xbf16>
    %81 = vector.extract_strided_slice %76 {offsets = [14, 0, 0], sizes = [2, 16, 4], strides = [1, 1, 1]} : vector<16x16x4xbf16> to vector<2x16x4xbf16>
    %82 = tpu.concatenate %80, %81 in 0 : vector<2x16x4xbf16>, vector<2x16x4xbf16> -> vector<4x16x4xbf16>
    %c0_85 = arith.constant 0 : index
    %c0_86 = arith.constant 0 : index
    %c0_87 = arith.constant 0 : index
    %c0_88 = arith.constant 0 : index
    %c0_89 = arith.constant 0 : index
    %83 = vector.load %arg6[%c0_85, %c0_86, %c0_87, %c0_88, %c0_89] : memref<1x1x4x16x4xbf16, #tpu.memory_space<vmem>>, vector<1x1x4x16x4xbf16>
    %84 = vector.shape_cast %83 : vector<1x1x4x16x4xbf16> to vector<4x16x4xbf16>
    %85 = vector.shape_cast %82 : vector<4x16x4xbf16> to vector<1x1x4x16x4xbf16>
    tpu.vector_store %arg6[%c0_85, %c0_86, %c0_87, %c0_88, %c0_89], %85 {strides = array<i32>} : memref<1x1x4x16x4xbf16, #tpu.memory_space<vmem>>, vector<1x1x4x16x4xbf16>,
    %cst_90 = arith.constant dense<0.000000e+00> : vector<4xf32>
    %86 = vector.multi_reduction <add>, %74, %cst_90 [0] : vector<256x4xf32> to vector<4xf32>
    %87 = vector.shape_cast %86 : vector<4xf32> to vector<1x4xf32>
    %cst_91 = arith.constant 2.560000e+02 : f32
    %88 = vector.broadcast %cst_91 : f32 to vector<1x4xf32>
    %89 = arith.divf %87, %88 : vector<1x4xf32>
    %90 = vector.broadcast %89 : vector<1x4xf32> to vector<256x4xf32>
    %91 = arith.subf %74, %90 : vector<256x4xf32>
    %92 = arith.mulf %91, %91 : vector<256x4xf32>
    %cst_92 = arith.constant dense<0.000000e+00> : vector<4xf32>
    %93 = vector.multi_reduction <add>, %92, %cst_92 [0] : vector<256x4xf32> to vector<4xf32>
    %94 = vector.shape_cast %93 : vector<4xf32> to vector<1x4xf32>
    %95 = tpu.concatenate %89, %94 in 0 : vector<1x4xf32>, vector<1x4xf32> -> vector<2x4xf32>
    %c0_93 = arith.constant 0 : index
    %c0_94 = arith.constant 0 : index
    %c0_95 = arith.constant 0 : index
    %c0_96 = arith.constant 0 : index
    %96 = vector.load %arg7[%c0_93, %c0_94, %c0_95, %c0_96] : memref<1x1x2x4xf32, #tpu.memory_space<vmem>>, vector<1x1x2x4xf32>
    %97 = vector.shape_cast %96 : vector<1x1x2x4xf32> to vector<2x4xf32>
    %98 = vector.shape_cast %95 : vector<2x4xf32> to vector<1x1x2x4xf32>
    tpu.vector_store %arg7[%c0_93, %c0_94, %c0_95, %c0_96], %98 {strides = array<i32>} : memref<1x1x2x4xf32, #tpu.memory_space<vmem>>, vector<1x1x2x4xf32>,
    return
  }
  func.func @transform_0(%arg0: i32, %arg1: i32) -> (i32, i32, i32, i32) {
    %c0_i32 = arith.constant 0 : i32
    %c0_i32_0 = arith.constant 0 : i32
    %c0_i32_1 = arith.constant 0 : i32
    return %arg0, %arg1, %c0_i32, %c0_i32_0 : i32, i32, i32, i32
  }
  func.func @transform_1(%arg0: i32, %arg1: i32) -> (i32, i32, i32, i32, i32) {
    %c0_i32 = arith.constant 0 : i32
    %c0_i32_0 = arith.constant 0 : i32
    %c0_i32_1 = arith.constant 0 : i32
    %c0_i32_2 = arith.constant 0 : i32
    return %arg0, %arg1, %c0_i32, %c0_i32_0, %c0_i32_1 : i32, i32, i32, i32, i32
  }
  func.func @transform_2(%arg0: i32, %arg1: i32) -> (i32, i32, i32) {
    %c0_i32 = arith.constant 0 : i32
    %c0_i32_0 = arith.constant 0 : i32
    %c0_i32_1 = arith.constant 0 : i32
    %c0_i32_2 = arith.constant 0 : i32
    return %c0_i32, %c0_i32_0, %c0_i32_1 : i32, i32, i32
  }
  func.func @transform_3(%arg0: i32, %arg1: i32) -> (i32, i32, i32, i32) {
    %c0_i32 = arith.constant 0 : i32
    %c0_i32_0 = arith.constant 0 : i32
    %c0_i32_1 = arith.constant 0 : i32
    return %arg0, %arg1, %c0_i32, %c0_i32_0 : i32, i32, i32, i32
  }
  func.func @transform_4(%arg0: i32, %arg1: i32) -> (i32, i32, i32, i32, i32) {
    %c0_i32 = arith.constant 0 : i32
    %c0_i32_0 = arith.constant 0 : i32
    %c0_i32_1 = arith.constant 0 : i32
    %c0_i32_2 = arith.constant 0 : i32
    return %arg0, %arg1, %c0_i32, %c0_i32_0, %c0_i32_1 : i32, i32, i32, i32, i32
  }
  func.func @transform_5(%arg0: i32, %arg1: i32) -> (i32, i32, i32, i32) {
    %c0_i32 = arith.constant 0 : i32
    %c0_i32_0 = arith.constant 0 : i32
    %c0_i32_1 = arith.constant 0 : i32
    return %arg0, %arg1, %c0_i32, %c0_i32_0 : i32, i32, i32, i32
  }
}

module attributes {stable_mosaic.version = 11 : i64} {
  func.func @_finalize_kernel(%arg0: i32, %arg1: i32, %arg2: memref<1x16x16x4xf32, #tpu.memory_space<vmem>>, %arg3: memref<1x16x16x4xbf16, #tpu.memory_space<vmem>>, %arg4: memref<1x4xf32, #tpu.memory_space<vmem>>, %arg5: memref<1x4xf32, #tpu.memory_space<vmem>>, %arg6: memref<1x16x16x4xf32, #tpu.memory_space<vmem>>) attributes {dimension_semantics = [#tpu.dimension_semantics<parallel>, #tpu.dimension_semantics<parallel>], iteration_bounds = array<i64: 2, 1>, scalar_prefetch = 0 : i64, scratch_operands = 0 : i64, tpu.core_type = #tpu.core_type<tc>, window_params = [{transform_indices = @transform_0, window_bounds = array<i64: 1, 16, 16, 4>}, {transform_indices = @transform_1, window_bounds = array<i64: 1, 16, 16, 4>}, {pipeline_mode = #tpu.pipeline_mode<synchronous>, transform_indices = @transform_2, window_bounds = array<i64: 1, 4>}, {pipeline_mode = #tpu.pipeline_mode<synchronous>, transform_indices = @transform_3, window_bounds = array<i64: 1, 4>}, {transform_indices = @transform_4, window_bounds = array<i64: 1, 16, 16, 4>}]} {
    %c0 = arith.constant 0 : index
    %c0_0 = arith.constant 0 : index
    %0 = vector.load %arg4[%c0, %c0_0] : memref<1x4xf32, #tpu.memory_space<vmem>>, vector<1x4xf32>
    %1 = vector.shape_cast %0 : vector<1x4xf32> to vector<1x1x1x4xf32>
    %c0_1 = arith.constant 0 : index
    %c0_2 = arith.constant 0 : index
    %2 = vector.load %arg5[%c0_1, %c0_2] : memref<1x4xf32, #tpu.memory_space<vmem>>, vector<1x4xf32>
    %3 = vector.shape_cast %2 : vector<1x4xf32> to vector<1x1x1x4xf32>
    %c0_3 = arith.constant 0 : index
    %c0_4 = arith.constant 0 : index
    %c0_5 = arith.constant 0 : index
    %c0_6 = arith.constant 0 : index
    %4 = vector.load %arg2[%c0_3, %c0_4, %c0_5, %c0_6] : memref<1x16x16x4xf32, #tpu.memory_space<vmem>>, vector<1x16x16x4xf32>
    %c0_7 = arith.constant 0 : index
    %c0_8 = arith.constant 0 : index
    %c0_9 = arith.constant 0 : index
    %c0_10 = arith.constant 0 : index
    %5 = vector.load %arg3[%c0_7, %c0_8, %c0_9, %c0_10] : memref<1x16x16x4xbf16, #tpu.memory_space<vmem>>, vector<1x16x16x4xbf16>
    %6 = arith.extf %5 : vector<1x16x16x4xbf16> to vector<1x16x16x4xf32>
    %7 = vector.broadcast %1 : vector<1x1x1x4xf32> to vector<1x16x16x4xf32>
    %8 = arith.mulf %6, %7 : vector<1x16x16x4xf32>
    %9 = arith.addf %4, %8 : vector<1x16x16x4xf32>
    %10 = vector.broadcast %3 : vector<1x1x1x4xf32> to vector<1x16x16x4xf32>
    %11 = arith.addf %9, %10 : vector<1x16x16x4xf32>
    %c0_11 = arith.constant 0 : index
    %c0_12 = arith.constant 0 : index
    %c0_13 = arith.constant 0 : index
    %c0_14 = arith.constant 0 : index
    %12 = vector.load %arg6[%c0_11, %c0_12, %c0_13, %c0_14] : memref<1x16x16x4xf32, #tpu.memory_space<vmem>>, vector<1x16x16x4xf32>
    tpu.vector_store %arg6[%c0_11, %c0_12, %c0_13, %c0_14], %11 {strides = array<i32>} : memref<1x16x16x4xf32, #tpu.memory_space<vmem>>, vector<1x16x16x4xf32>,
    return
  }
  func.func @transform_0(%arg0: i32, %arg1: i32) -> (i32, i32, i32, i32) {
    %c0_i32 = arith.constant 0 : i32
    %c0_i32_0 = arith.constant 0 : i32
    %c0_i32_1 = arith.constant 0 : i32
    return %arg0, %arg1, %c0_i32, %c0_i32_0 : i32, i32, i32, i32
  }
  func.func @transform_1(%arg0: i32, %arg1: i32) -> (i32, i32, i32, i32) {
    %c0_i32 = arith.constant 0 : i32
    %c0_i32_0 = arith.constant 0 : i32
    %c0_i32_1 = arith.constant 0 : i32
    return %arg0, %arg1, %c0_i32, %c0_i32_0 : i32, i32, i32, i32
  }
  func.func @transform_2(%arg0: i32, %arg1: i32) -> (i32, i32) {
    %c0_i32 = arith.constant 0 : i32
    %c0_i32_0 = arith.constant 0 : i32
    %c0_i32_1 = arith.constant 0 : i32
    return %c0_i32, %c0_i32_0 : i32, i32
  }
  func.func @transform_3(%arg0: i32, %arg1: i32) -> (i32, i32) {
    %c0_i32 = arith.constant 0 : i32
    %c0_i32_0 = arith.constant 0 : i32
    %c0_i32_1 = arith.constant 0 : i32
    return %c0_i32, %c0_i32_0 : i32, i32
  }
  func.func @transform_4(%arg0: i32, %arg1: i32) -> (i32, i32, i32, i32) {
    %c0_i32 = arith.constant 0 : i32
    %c0_i32_0 = arith.constant 0 : i32
    %c0_i32_1 = arith.constant 0 : i32
    return %arg0, %arg1, %c0_i32, %c0_i32_0 : i32, i32, i32, i32
  }
}

module attributes {stable_mosaic.version = 11 : i64} {
  func.func @_conv2_kernel(%arg0: i32, %arg1: i32, %arg2: memref<1x16x16x4xbf16, #tpu.memory_space<vmem>>, %arg3: memref<1x1x2x16x4xbf16, #tpu.memory_space<vmem>>, %arg4: memref<9x4x4xbf16, #tpu.memory_space<vmem>>, %arg5: memref<1x4xf32, #tpu.memory_space<vmem>>, %arg6: memref<1x4xf32, #tpu.memory_space<vmem>>, %arg7: memref<1x16x16x4xbf16, #tpu.memory_space<vmem>>, %arg8: memref<1x1x2x4xf32, #tpu.memory_space<vmem>>, %arg9: memref<18x18x4xf32, #tpu.memory_space<vmem>>) attributes {dimension_semantics = [#tpu.dimension_semantics<parallel>, #tpu.dimension_semantics<parallel>], iteration_bounds = array<i64: 2, 1>, scalar_prefetch = 0 : i64, scratch_operands = 1 : i64, tpu.core_type = #tpu.core_type<tc>, window_params = [{transform_indices = @transform_0, window_bounds = array<i64: 1, 16, 16, 4>}, {transform_indices = @transform_1, window_bounds = array<i64: 1, 1, 2, 16, 4>}, {pipeline_mode = #tpu.pipeline_mode<synchronous>, transform_indices = @transform_2, window_bounds = array<i64: 9, 4, 4>}, {pipeline_mode = #tpu.pipeline_mode<synchronous>, transform_indices = @transform_3, window_bounds = array<i64: 1, 4>}, {pipeline_mode = #tpu.pipeline_mode<synchronous>, transform_indices = @transform_4, window_bounds = array<i64: 1, 4>}, {transform_indices = @transform_5, window_bounds = array<i64: 1, 16, 16, 4>}, {transform_indices = @transform_6, window_bounds = array<i64: 1, 1, 2, 4>}]} {
    %c0 = arith.constant 0 : index
    %c0_0 = arith.constant 0 : index
    %0 = vector.load %arg5[%c0, %c0_0] : memref<1x4xf32, #tpu.memory_space<vmem>>, vector<1x4xf32>
    %1 = vector.shape_cast %0 : vector<1x4xf32> to vector<1x1x4xf32>
    %c0_1 = arith.constant 0 : index
    %c0_2 = arith.constant 0 : index
    %2 = vector.load %arg6[%c0_1, %c0_2] : memref<1x4xf32, #tpu.memory_space<vmem>>, vector<1x4xf32>
    %3 = vector.shape_cast %2 : vector<1x4xf32> to vector<1x1x4xf32>
    %c0_3 = arith.constant 0 : index
    %c0_4 = arith.constant 0 : index
    %c0_5 = arith.constant 0 : index
    %c0_6 = arith.constant 0 : index
    %4 = vector.load %arg2[%c0_3, %c0_4, %c0_5, %c0_6] : memref<1x16x16x4xbf16, #tpu.memory_space<vmem>>, vector<1x16x16x4xbf16>
    %5 = vector.shape_cast %4 : vector<1x16x16x4xbf16> to vector<16x16x4xbf16>
    %6 = arith.extf %5 : vector<16x16x4xbf16> to vector<16x16x4xf32>
    %7 = vector.broadcast %1 : vector<1x1x4xf32> to vector<16x16x4xf32>
    %8 = arith.mulf %6, %7 : vector<16x16x4xf32>
    %9 = vector.broadcast %3 : vector<1x1x4xf32> to vector<16x16x4xf32>
    %10 = arith.addf %8, %9 : vector<16x16x4xf32>
    %cst = arith.constant 0.000000e+00 : f32
    %11 = vector.broadcast %cst : f32 to vector<16x16x4xf32>
    %12 = arith.maximumf %10, %11 : vector<16x16x4xf32>
    %c0_7 = arith.constant 0 : index
    %c0_8 = arith.constant 0 : index
    %c0_9 = arith.constant 0 : index
    %c0_10 = arith.constant 0 : index
    %c0_11 = arith.constant 0 : index
    %13 = vector.load %arg3[%c0_7, %c0_8, %c0_9, %c0_10, %c0_11] : memref<1x1x2x16x4xbf16, #tpu.memory_space<vmem>>, vector<1x1x2x16x4xbf16>
    %14 = vector.shape_cast %13 : vector<1x1x2x16x4xbf16> to vector<2x16x4xbf16>
    %15 = arith.extf %14 : vector<2x16x4xbf16> to vector<2x16x4xf32>
    %16 = vector.broadcast %1 : vector<1x1x4xf32> to vector<2x16x4xf32>
    %17 = arith.mulf %15, %16 : vector<2x16x4xf32>
    %18 = vector.broadcast %3 : vector<1x1x4xf32> to vector<2x16x4xf32>
    %19 = arith.addf %17, %18 : vector<2x16x4xf32>
    %cst_12 = arith.constant 0.000000e+00 : f32
    %20 = vector.broadcast %cst_12 : f32 to vector<2x16x4xf32>
    %21 = arith.maximumf %19, %20 : vector<2x16x4xf32>
    %c1 = arith.constant 1 : index
    %c1_13 = arith.constant 1 : index
    %c0_14 = arith.constant 0 : index
    %22 = vector.load %arg9[%c1, %c1_13, %c0_14] : memref<18x18x4xf32, #tpu.memory_space<vmem>>, vector<16x16x4xf32>
    tpu.vector_store %arg9[%c1, %c1_13, %c0_14], %12 {strides = array<i32>} : memref<18x18x4xf32, #tpu.memory_space<vmem>>, vector<16x16x4xf32>,
    %23 = vector.extract_strided_slice %21 {offsets = [0, 0, 0], sizes = [1, 16, 4], strides = [1, 1, 1]} : vector<2x16x4xf32> to vector<1x16x4xf32>
    %c0_15 = arith.constant 0 : index
    %c1_16 = arith.constant 1 : index
    %c0_17 = arith.constant 0 : index
    %24 = vector.load %arg9[%c0_15, %c1_16, %c0_17] : memref<18x18x4xf32, #tpu.memory_space<vmem>>, vector<1x16x4xf32>
    tpu.vector_store %arg9[%c0_15, %c1_16, %c0_17], %23 {strides = array<i32>} : memref<18x18x4xf32, #tpu.memory_space<vmem>>, vector<1x16x4xf32>,
    %25 = vector.extract_strided_slice %21 {offsets = [1, 0, 0], sizes = [1, 16, 4], strides = [1, 1, 1]} : vector<2x16x4xf32> to vector<1x16x4xf32>
    %c17 = arith.constant 17 : index
    %c1_18 = arith.constant 1 : index
    %c0_19 = arith.constant 0 : index
    %26 = vector.load %arg9[%c17, %c1_18, %c0_19] : memref<18x18x4xf32, #tpu.memory_space<vmem>>, vector<1x16x4xf32>
    tpu.vector_store %arg9[%c17, %c1_18, %c0_19], %25 {strides = array<i32>} : memref<18x18x4xf32, #tpu.memory_space<vmem>>, vector<1x16x4xf32>,
    %c0_20 = arith.constant 0 : index
    %c2 = arith.constant 2 : index
    %c0_21 = arith.constant 0 : index
    %27 = vector.load %arg9[%c0_20, %c2, %c0_21] : memref<18x18x4xf32, #tpu.memory_space<vmem>>, vector<18x1x4xf32>
    %c0_22 = arith.constant 0 : index
    %c0_23 = arith.constant 0 : index
    %c0_24 = arith.constant 0 : index
    %28 = vector.load %arg9[%c0_22, %c0_23, %c0_24] : memref<18x18x4xf32, #tpu.memory_space<vmem>>, vector<18x1x4xf32>
    tpu.vector_store %arg9[%c0_22, %c0_23, %c0_24], %27 {strides = array<i32>} : memref<18x18x4xf32, #tpu.memory_space<vmem>>, vector<18x1x4xf32>,
    %c0_25 = arith.constant 0 : index
    %c15 = arith.constant 15 : index
    %c0_26 = arith.constant 0 : index
    %29 = vector.load %arg9[%c0_25, %c15, %c0_26] : memref<18x18x4xf32, #tpu.memory_space<vmem>>, vector<18x1x4xf32>
    %c0_27 = arith.constant 0 : index
    %c17_28 = arith.constant 17 : index
    %c0_29 = arith.constant 0 : index
    %30 = vector.load %arg9[%c0_27, %c17_28, %c0_29] : memref<18x18x4xf32, #tpu.memory_space<vmem>>, vector<18x1x4xf32>
    tpu.vector_store %arg9[%c0_27, %c17_28, %c0_29], %29 {strides = array<i32>} : memref<18x18x4xf32, #tpu.memory_space<vmem>>, vector<18x1x4xf32>,
    %c0_30 = arith.constant 0 : index
    %c0_31 = arith.constant 0 : index
    %c0_32 = arith.constant 0 : index
    %31 = vector.load %arg9[%c0_30, %c0_31, %c0_32] : memref<18x18x4xf32, #tpu.memory_space<vmem>>, vector<16x16x4xf32>
    %32 = arith.truncf %31 : vector<16x16x4xf32> to vector<16x16x4xbf16>
    %33 = vector.shape_cast %32 : vector<16x16x4xbf16> to vector<256x4xbf16>
    %c0_33 = arith.constant 0 : index
    %c0_34 = arith.constant 0 : index
    %c0_35 = arith.constant 0 : index
    %34 = vector.load %arg4[%c0_33, %c0_34, %c0_35] : memref<9x4x4xbf16, #tpu.memory_space<vmem>>, vector<1x4x4xbf16>
    %35 = vector.shape_cast %34 : vector<1x4x4xbf16> to vector<4x4xbf16>
    %cst_36 = arith.constant dense<0.000000e+00> : vector<256x4xf32>
    %36 = tpu.matmul %33, %35, %cst_36 {dimension_numbers = #tpu.dot_dimension_numbers<[1], [0], [0], [1], [0, 0, 1, 1], [], []>} : vector<256x4xbf16>, vector<4x4xbf16>, vector<256x4xf32> -> vector<256x4xf32>
    %c0_37 = arith.constant 0 : index
    %c1_38 = arith.constant 1 : index
    %c0_39 = arith.constant 0 : index
    %37 = vector.load %arg9[%c0_37, %c1_38, %c0_39] : memref<18x18x4xf32, #tpu.memory_space<vmem>>, vector<16x16x4xf32>
    %38 = arith.truncf %37 : vector<16x16x4xf32> to vector<16x16x4xbf16>
    %39 = vector.shape_cast %38 : vector<16x16x4xbf16> to vector<256x4xbf16>
    %c1_40 = arith.constant 1 : index
    %c0_41 = arith.constant 0 : index
    %c0_42 = arith.constant 0 : index
    %40 = vector.load %arg4[%c1_40, %c0_41, %c0_42] : memref<9x4x4xbf16, #tpu.memory_space<vmem>>, vector<1x4x4xbf16>
    %41 = vector.shape_cast %40 : vector<1x4x4xbf16> to vector<4x4xbf16>
    %cst_43 = arith.constant dense<0.000000e+00> : vector<256x4xf32>
    %42 = tpu.matmul %39, %41, %cst_43 {dimension_numbers = #tpu.dot_dimension_numbers<[1], [0], [0], [1], [0, 0, 1, 1], [], []>} : vector<256x4xbf16>, vector<4x4xbf16>, vector<256x4xf32> -> vector<256x4xf32>
    %43 = arith.addf %36, %42 : vector<256x4xf32>
    %c0_44 = arith.constant 0 : index
    %c2_45 = arith.constant 2 : index
    %c0_46 = arith.constant 0 : index
    %44 = vector.load %arg9[%c0_44, %c2_45, %c0_46] : memref<18x18x4xf32, #tpu.memory_space<vmem>>, vector<16x16x4xf32>
    %45 = arith.truncf %44 : vector<16x16x4xf32> to vector<16x16x4xbf16>
    %46 = vector.shape_cast %45 : vector<16x16x4xbf16> to vector<256x4xbf16>
    %c2_47 = arith.constant 2 : index
    %c0_48 = arith.constant 0 : index
    %c0_49 = arith.constant 0 : index
    %47 = vector.load %arg4[%c2_47, %c0_48, %c0_49] : memref<9x4x4xbf16, #tpu.memory_space<vmem>>, vector<1x4x4xbf16>
    %48 = vector.shape_cast %47 : vector<1x4x4xbf16> to vector<4x4xbf16>
    %cst_50 = arith.constant dense<0.000000e+00> : vector<256x4xf32>
    %49 = tpu.matmul %46, %48, %cst_50 {dimension_numbers = #tpu.dot_dimension_numbers<[1], [0], [0], [1], [0, 0, 1, 1], [], []>} : vector<256x4xbf16>, vector<4x4xbf16>, vector<256x4xf32> -> vector<256x4xf32>
    %50 = arith.addf %43, %49 : vector<256x4xf32>
    %c1_51 = arith.constant 1 : index
    %c0_52 = arith.constant 0 : index
    %c0_53 = arith.constant 0 : index
    %51 = vector.load %arg9[%c1_51, %c0_52, %c0_53] : memref<18x18x4xf32, #tpu.memory_space<vmem>>, vector<16x16x4xf32>
    %52 = arith.truncf %51 : vector<16x16x4xf32> to vector<16x16x4xbf16>
    %53 = vector.shape_cast %52 : vector<16x16x4xbf16> to vector<256x4xbf16>
    %c3 = arith.constant 3 : index
    %c0_54 = arith.constant 0 : index
    %c0_55 = arith.constant 0 : index
    %54 = vector.load %arg4[%c3, %c0_54, %c0_55] : memref<9x4x4xbf16, #tpu.memory_space<vmem>>, vector<1x4x4xbf16>
    %55 = vector.shape_cast %54 : vector<1x4x4xbf16> to vector<4x4xbf16>
    %cst_56 = arith.constant dense<0.000000e+00> : vector<256x4xf32>
    %56 = tpu.matmul %53, %55, %cst_56 {dimension_numbers = #tpu.dot_dimension_numbers<[1], [0], [0], [1], [0, 0, 1, 1], [], []>} : vector<256x4xbf16>, vector<4x4xbf16>, vector<256x4xf32> -> vector<256x4xf32>
    %57 = arith.addf %50, %56 : vector<256x4xf32>
    %c1_57 = arith.constant 1 : index
    %c1_58 = arith.constant 1 : index
    %c0_59 = arith.constant 0 : index
    %58 = vector.load %arg9[%c1_57, %c1_58, %c0_59] : memref<18x18x4xf32, #tpu.memory_space<vmem>>, vector<16x16x4xf32>
    %59 = arith.truncf %58 : vector<16x16x4xf32> to vector<16x16x4xbf16>
    %60 = vector.shape_cast %59 : vector<16x16x4xbf16> to vector<256x4xbf16>
    %c4 = arith.constant 4 : index
    %c0_60 = arith.constant 0 : index
    %c0_61 = arith.constant 0 : index
    %61 = vector.load %arg4[%c4, %c0_60, %c0_61] : memref<9x4x4xbf16, #tpu.memory_space<vmem>>, vector<1x4x4xbf16>
    %62 = vector.shape_cast %61 : vector<1x4x4xbf16> to vector<4x4xbf16>
    %cst_62 = arith.constant dense<0.000000e+00> : vector<256x4xf32>
    %63 = tpu.matmul %60, %62, %cst_62 {dimension_numbers = #tpu.dot_dimension_numbers<[1], [0], [0], [1], [0, 0, 1, 1], [], []>} : vector<256x4xbf16>, vector<4x4xbf16>, vector<256x4xf32> -> vector<256x4xf32>
    %64 = arith.addf %57, %63 : vector<256x4xf32>
    %c1_63 = arith.constant 1 : index
    %c2_64 = arith.constant 2 : index
    %c0_65 = arith.constant 0 : index
    %65 = vector.load %arg9[%c1_63, %c2_64, %c0_65] : memref<18x18x4xf32, #tpu.memory_space<vmem>>, vector<16x16x4xf32>
    %66 = arith.truncf %65 : vector<16x16x4xf32> to vector<16x16x4xbf16>
    %67 = vector.shape_cast %66 : vector<16x16x4xbf16> to vector<256x4xbf16>
    %c5 = arith.constant 5 : index
    %c0_66 = arith.constant 0 : index
    %c0_67 = arith.constant 0 : index
    %68 = vector.load %arg4[%c5, %c0_66, %c0_67] : memref<9x4x4xbf16, #tpu.memory_space<vmem>>, vector<1x4x4xbf16>
    %69 = vector.shape_cast %68 : vector<1x4x4xbf16> to vector<4x4xbf16>
    %cst_68 = arith.constant dense<0.000000e+00> : vector<256x4xf32>
    %70 = tpu.matmul %67, %69, %cst_68 {dimension_numbers = #tpu.dot_dimension_numbers<[1], [0], [0], [1], [0, 0, 1, 1], [], []>} : vector<256x4xbf16>, vector<4x4xbf16>, vector<256x4xf32> -> vector<256x4xf32>
    %71 = arith.addf %64, %70 : vector<256x4xf32>
    %c2_69 = arith.constant 2 : index
    %c0_70 = arith.constant 0 : index
    %c0_71 = arith.constant 0 : index
    %72 = vector.load %arg9[%c2_69, %c0_70, %c0_71] : memref<18x18x4xf32, #tpu.memory_space<vmem>>, vector<16x16x4xf32>
    %73 = arith.truncf %72 : vector<16x16x4xf32> to vector<16x16x4xbf16>
    %74 = vector.shape_cast %73 : vector<16x16x4xbf16> to vector<256x4xbf16>
    %c6 = arith.constant 6 : index
    %c0_72 = arith.constant 0 : index
    %c0_73 = arith.constant 0 : index
    %75 = vector.load %arg4[%c6, %c0_72, %c0_73] : memref<9x4x4xbf16, #tpu.memory_space<vmem>>, vector<1x4x4xbf16>
    %76 = vector.shape_cast %75 : vector<1x4x4xbf16> to vector<4x4xbf16>
    %cst_74 = arith.constant dense<0.000000e+00> : vector<256x4xf32>
    %77 = tpu.matmul %74, %76, %cst_74 {dimension_numbers = #tpu.dot_dimension_numbers<[1], [0], [0], [1], [0, 0, 1, 1], [], []>} : vector<256x4xbf16>, vector<4x4xbf16>, vector<256x4xf32> -> vector<256x4xf32>
    %78 = arith.addf %71, %77 : vector<256x4xf32>
    %c2_75 = arith.constant 2 : index
    %c1_76 = arith.constant 1 : index
    %c0_77 = arith.constant 0 : index
    %79 = vector.load %arg9[%c2_75, %c1_76, %c0_77] : memref<18x18x4xf32, #tpu.memory_space<vmem>>, vector<16x16x4xf32>
    %80 = arith.truncf %79 : vector<16x16x4xf32> to vector<16x16x4xbf16>
    %81 = vector.shape_cast %80 : vector<16x16x4xbf16> to vector<256x4xbf16>
    %c7 = arith.constant 7 : index
    %c0_78 = arith.constant 0 : index
    %c0_79 = arith.constant 0 : index
    %82 = vector.load %arg4[%c7, %c0_78, %c0_79] : memref<9x4x4xbf16, #tpu.memory_space<vmem>>, vector<1x4x4xbf16>
    %83 = vector.shape_cast %82 : vector<1x4x4xbf16> to vector<4x4xbf16>
    %cst_80 = arith.constant dense<0.000000e+00> : vector<256x4xf32>
    %84 = tpu.matmul %81, %83, %cst_80 {dimension_numbers = #tpu.dot_dimension_numbers<[1], [0], [0], [1], [0, 0, 1, 1], [], []>} : vector<256x4xbf16>, vector<4x4xbf16>, vector<256x4xf32> -> vector<256x4xf32>
    %85 = arith.addf %78, %84 : vector<256x4xf32>
    %c2_81 = arith.constant 2 : index
    %c2_82 = arith.constant 2 : index
    %c0_83 = arith.constant 0 : index
    %86 = vector.load %arg9[%c2_81, %c2_82, %c0_83] : memref<18x18x4xf32, #tpu.memory_space<vmem>>, vector<16x16x4xf32>
    %87 = arith.truncf %86 : vector<16x16x4xf32> to vector<16x16x4xbf16>
    %88 = vector.shape_cast %87 : vector<16x16x4xbf16> to vector<256x4xbf16>
    %c8 = arith.constant 8 : index
    %c0_84 = arith.constant 0 : index
    %c0_85 = arith.constant 0 : index
    %89 = vector.load %arg4[%c8, %c0_84, %c0_85] : memref<9x4x4xbf16, #tpu.memory_space<vmem>>, vector<1x4x4xbf16>
    %90 = vector.shape_cast %89 : vector<1x4x4xbf16> to vector<4x4xbf16>
    %cst_86 = arith.constant dense<0.000000e+00> : vector<256x4xf32>
    %91 = tpu.matmul %88, %90, %cst_86 {dimension_numbers = #tpu.dot_dimension_numbers<[1], [0], [0], [1], [0, 0, 1, 1], [], []>} : vector<256x4xbf16>, vector<4x4xbf16>, vector<256x4xf32> -> vector<256x4xf32>
    %92 = arith.addf %85, %91 : vector<256x4xf32>
    %93 = arith.truncf %92 : vector<256x4xf32> to vector<256x4xbf16>
    %94 = vector.shape_cast %93 : vector<256x4xbf16> to vector<16x16x4xbf16>
    %c0_87 = arith.constant 0 : index
    %c0_88 = arith.constant 0 : index
    %c0_89 = arith.constant 0 : index
    %c0_90 = arith.constant 0 : index
    %95 = vector.load %arg7[%c0_87, %c0_88, %c0_89, %c0_90] : memref<1x16x16x4xbf16, #tpu.memory_space<vmem>>, vector<1x16x16x4xbf16>
    %96 = vector.shape_cast %95 : vector<1x16x16x4xbf16> to vector<16x16x4xbf16>
    %97 = vector.shape_cast %94 : vector<16x16x4xbf16> to vector<1x16x16x4xbf16>
    tpu.vector_store %arg7[%c0_87, %c0_88, %c0_89, %c0_90], %97 {strides = array<i32>} : memref<1x16x16x4xbf16, #tpu.memory_space<vmem>>, vector<1x16x16x4xbf16>,
    %cst_91 = arith.constant dense<0.000000e+00> : vector<4xf32>
    %98 = vector.multi_reduction <add>, %92, %cst_91 [0] : vector<256x4xf32> to vector<4xf32>
    %99 = vector.shape_cast %98 : vector<4xf32> to vector<1x4xf32>
    %cst_92 = arith.constant 2.560000e+02 : f32
    %100 = vector.broadcast %cst_92 : f32 to vector<1x4xf32>
    %101 = arith.divf %99, %100 : vector<1x4xf32>
    %102 = vector.broadcast %101 : vector<1x4xf32> to vector<256x4xf32>
    %103 = arith.subf %92, %102 : vector<256x4xf32>
    %104 = arith.mulf %103, %103 : vector<256x4xf32>
    %cst_93 = arith.constant dense<0.000000e+00> : vector<4xf32>
    %105 = vector.multi_reduction <add>, %104, %cst_93 [0] : vector<256x4xf32> to vector<4xf32>
    %106 = vector.shape_cast %105 : vector<4xf32> to vector<1x4xf32>
    %107 = tpu.concatenate %101, %106 in 0 : vector<1x4xf32>, vector<1x4xf32> -> vector<2x4xf32>
    %c0_94 = arith.constant 0 : index
    %c0_95 = arith.constant 0 : index
    %c0_96 = arith.constant 0 : index
    %c0_97 = arith.constant 0 : index
    %108 = vector.load %arg8[%c0_94, %c0_95, %c0_96, %c0_97] : memref<1x1x2x4xf32, #tpu.memory_space<vmem>>, vector<1x1x2x4xf32>
    %109 = vector.shape_cast %108 : vector<1x1x2x4xf32> to vector<2x4xf32>
    %110 = vector.shape_cast %107 : vector<2x4xf32> to vector<1x1x2x4xf32>
    tpu.vector_store %arg8[%c0_94, %c0_95, %c0_96, %c0_97], %110 {strides = array<i32>} : memref<1x1x2x4xf32, #tpu.memory_space<vmem>>, vector<1x1x2x4xf32>,
    return
  }
  func.func @transform_0(%arg0: i32, %arg1: i32) -> (i32, i32, i32, i32) {
    %c0_i32 = arith.constant 0 : i32
    %c0_i32_0 = arith.constant 0 : i32
    %c0_i32_1 = arith.constant 0 : i32
    return %arg0, %arg1, %c0_i32, %c0_i32_0 : i32, i32, i32, i32
  }
  func.func @transform_1(%arg0: i32, %arg1: i32) -> (i32, i32, i32, i32, i32) {
    %c0_i32 = arith.constant 0 : i32
    %c0_i32_0 = arith.constant 0 : i32
    %c0_i32_1 = arith.constant 0 : i32
    %c0_i32_2 = arith.constant 0 : i32
    return %arg0, %arg1, %c0_i32, %c0_i32_0, %c0_i32_1 : i32, i32, i32, i32, i32
  }
  func.func @transform_2(%arg0: i32, %arg1: i32) -> (i32, i32, i32) {
    %c0_i32 = arith.constant 0 : i32
    %c0_i32_0 = arith.constant 0 : i32
    %c0_i32_1 = arith.constant 0 : i32
    %c0_i32_2 = arith.constant 0 : i32
    return %c0_i32, %c0_i32_0, %c0_i32_1 : i32, i32, i32
  }
  func.func @transform_3(%arg0: i32, %arg1: i32) -> (i32, i32) {
    %c0_i32 = arith.constant 0 : i32
    %c0_i32_0 = arith.constant 0 : i32
    %c0_i32_1 = arith.constant 0 : i32
    return %c0_i32, %c0_i32_0 : i32, i32
  }
  func.func @transform_4(%arg0: i32, %arg1: i32) -> (i32, i32) {
    %c0_i32 = arith.constant 0 : i32
    %c0_i32_0 = arith.constant 0 : i32
    %c0_i32_1 = arith.constant 0 : i32
    return %c0_i32, %c0_i32_0 : i32, i32
  }
  func.func @transform_5(%arg0: i32, %arg1: i32) -> (i32, i32, i32, i32) {
    %c0_i32 = arith.constant 0 : i32
    %c0_i32_0 = arith.constant 0 : i32
    %c0_i32_1 = arith.constant 0 : i32
    return %arg0, %arg1, %c0_i32, %c0_i32_0 : i32, i32, i32, i32
  }
  func.func @transform_6(%arg0: i32, %arg1: i32) -> (i32, i32, i32, i32) {
    %c0_i32 = arith.constant 0 : i32
    %c0_i32_0 = arith.constant 0 : i32
    %c0_i32_1 = arith.constant 0 : i32
    return %arg0, %arg1, %c0_i32, %c0_i32_0 : i32, i32, i32, i32
  }
}

</mosaic_0001>

<llo_original>
// kernel: residual_block_pallas.5
$region0: #{residual_block_pallas.5}
  #allocation0 [shape = 'u32[]', space=smem, size = 0x4, offset = 0x4, fixed_abs, tag = 'smem constant byte address 0x4 - core index']
  #allocation1 [shape = 'u32[72,128]{1,0:T(1,128)}', space=vmem, size = 0x9000, scoped, tag = 'internal scratch']
  %s0 = inlined_call_operand.vmem [shape: f32[2,16,16,4], index: 0, kind: input, shape index: {}, may-alias: {0,4}]
  %s1 = inlined_call_operand.vmem [shape: bf16[2,16,16,4], index: 1, kind: input, shape index: {}]
  %s2 = inlined_call_operand.vmem [shape: f32[1,4], index: 2, kind: input, shape index: {}]
  %s3 = inlined_call_operand.vmem [shape: f32[1,4], index: 3, kind: input, shape index: {}]
  %s4 = inlined_call_operand.vmem [shape: f32[2,16,16,4], index: 4, kind: output, shape index: {}, may-alias: {0,4}]
  %s5 = sld [smem:[#allocation0]]
  $region49: #{residual_block_pallas.5} parent=0
    _
  %s7 = ssub.s32 1, %s5
  %s8 = scalar_select 0, %s7, %s5
  loop: start=0, step=1, limit=4
  $region2: #{residual_block_pallas.5} parent=0 // loop_pre_header
    _
  $region3: #{residual_block_pallas.5} parent=0 // loop_header
    %s10 = sphi 0, %s14
    %p11 = scmp.ge.s32.totalorder %s10, 4
    %s17 = sphi 0, %s29
    %s18 = sphi 0, %s25
    %s19 = sphi 0, %s17
    %s20 = sphi 0, %s18
    %s21 = sphi 0, %s19
    %s22 = sphi 0, %s20
    %s34 = sphi 0, %s36
    %s37 = sphi 0, %s34
    %s38 = sphi 0, %s37
    %s54 = sphi 0, %s38
    %s62 = sphi 0, %s64
    %s65 = sphi 0, %s62
    %s66 = sphi 0, %s65
    %s82 = sphi 0, %s66
    %s86 = sphi 0, %s86
    %s88 = sphi 0, %s86
    %s89 = sphi 0, %s88
    %s103 = sphi 0, %s89
    %s107 = sphi 0, %s107
    %s109 = sphi 0, %s107
    %s110 = sphi 0, %s109
    %s124 = sphi 0, %s110
    %s132 = sphi 0, %s134
    %s135 = sphi 0, %s132
    %s136 = sphi 0, %s135
    %s152 = sphi 0, %s136
  $region4: #{residual_block_pallas.5} parent=0 // loop_header_branch
    %13 = sbr.rel (%p11) target = $region8
  $region5: #{residual_block_pallas.5} parent=0 // loop_body
    %s15 = ssub.s32 %s10, 1
    %s16 = ssub.s32 %s10, 2
    %s23 = sadd.s32 1, %s18
    %p24 = scmp.ge.s32.totalorder %s23, 1
    %s25 = scalar_select %p24, 0, %s23
    %s26 = sadd.s32 1, %s17
    %s27 = scalar_select %p24, %s26, %s17
    %p28 = scmp.ge.s32.totalorder %s27, 2
    %s29 = scalar_select %p28, 0, %s27
    %s30 = ssub.s32 %s17, %s29
    %s31 = ssub.s32 %s18, %s25
    %s32 = sor.u32 %s30, %s31
    %p33 = scmp.eq.s32.totalorder %s32, 0
    %s35 = sadd.s32 %s34, 1
    %s36 = scalar_select %p33, %s34, %s35
    %p39 = pneg %p33
    %p40 = scmp.eq.s32.totalorder %s10, 1
    %p41 = por %p39, %p40
    %p42 = scmp.ne.s32.totalorder %s34, %s37
    %p43 = scmp.eq.s32.totalorder %s10, 0
    %p44 = por %p42, %p43
    %p45 = scmp.ne.s32.totalorder %s34, %s37
    %p46 = scmp.eq.s32.totalorder %s15, 1
    %p47 = por %p45, %p46
    %p48 = scmp.ne.s32.totalorder %s37, %s38
    %p49 = scmp.eq.s32.totalorder %s15, 0
    %p50 = por %p48, %p49
    %p51 = scmp.ne.s32.totalorder %s37, %s38
    %p52 = scmp.eq.s32.totalorder %s16, 1
    %p53 = por %p51, %p52
    %p55 = scmp.ne.s32.totalorder %s38, %s54
    %p56 = scmp.eq.s32.totalorder %s16, 0
    %p57 = por %p55, %p56
    %s58 = ssub.s32 %s17, %s29
    %s59 = ssub.s32 %s18, %s25
    %s60 = sor.u32 %s58, %s59
    %p61 = scmp.eq.s32.totalorder %s60, 0
    %s63 = sadd.s32 %s62, 1
    %s64 = scalar_select %p61, %s62, %s63
    %p67 = pneg %p61
    %p68 = scmp.eq.s32.totalorder %s10, 1
    %p69 = por %p67, %p68
    %p70 = scmp.ne.s32.totalorder %s62, %s65
    %p71 = scmp.eq.s32.totalorder %s10, 0
    %p72 = por %p70, %p71
    %p73 = scmp.ne.s32.totalorder %s62, %s65
    %p74 = scmp.eq.s32.totalorder %s15, 1
    %p75 = por %p73, %p74
    %p76 = scmp.ne.s32.totalorder %s65, %s66
    %p77 = scmp.eq.s32.totalorder %s15, 0
    %p78 = por %p76, %p77
    %p79 = scmp.ne.s32.totalorder %s65, %s66
    %p80 = scmp.eq.s32.totalorder %s16, 1
    %p81 = por %p79, %p80
    %p83 = scmp.ne.s32.totalorder %s66, %s82
    %p84 = scmp.eq.s32.totalorder %s16, 0
    %p85 = por %p83, %p84
    %s87 = sadd.s32 %s86, 1
    %p90 = scmp.eq.s32.totalorder %s10, 1
    %p91 = scmp.ne.s32.totalorder %s86, %s88
    %p92 = scmp.eq.s32.totalorder %s10, 0
    %p93 = por %p91, %p92
    %p94 = scmp.ne.s32.totalorder %s86, %s88
    %p95 = scmp.eq.s32.totalorder %s15, 1
    %p96 = por %p94, %p95
    %p97 = scmp.ne.s32.totalorder %s88, %s89
    %p98 = scmp.eq.s32.totalorder %s15, 0
    %p99 = por %p97, %p98
    %p100 = scmp.ne.s32.totalorder %s88, %s89
    %p101 = scmp.eq.s32.totalorder %s16, 1
    %p102 = por %p100, %p101
    %p104 = scmp.ne.s32.totalorder %s89, %s103
    %p105 = scmp.eq.s32.totalorder %s16, 0
    %p106 = por %p104, %p105
    %s108 = sadd.s32 %s107, 1
    %p111 = scmp.eq.s32.totalorder %s10, 1
    %p112 = scmp.ne.s32.totalorder %s107, %s109
    %p113 = scmp.eq.s32.totalorder %s10, 0
    %p114 = por %p112, %p113
    %p115 = scmp.ne.s32.totalorder %s107, %s109
    %p116 = scmp.eq.s32.totalorder %s15, 1
    %p117 = por %p115, %p116
    %p118 = scmp.ne.s32.totalorder %s109, %s110
    %p119 = scmp.eq.s32.totalorder %s15, 0
    %p120 = por %p118, %p119
    %p121 = scmp.ne.s32.totalorder %s109, %s110
    %p122 = scmp.eq.s32.totalorder %s16, 1
    %p123 = por %p121, %p122
    %p125 = scmp.ne.s32.totalorder %s110, %s124
    %p126 = scmp.eq.s32.totalorder %s16, 0
    %p127 = por %p125, %p126
    %s128 = ssub.s32 %s17, %s29
    %s129 = ssub.s32 %s18, %s25
    %s130 = sor.u32 %s128, %s129
    %p131 = scmp.eq.s32.totalorder %s130, 0
    %s133 = sadd.s32 %s132, 1
    %s134 = scalar_select %p131, %s132, %s133
    %p137 = pneg %p131
    %p138 = scmp.eq.s32.totalorder %s10, 1
    %p139 = por %p137, %p138
    %p140 = scmp.ne.s32.totalorder %s132, %s135
    %p141 = scmp.eq.s32.totalorder %s10, 0
    %p142 = por %p140, %p141
    %p143 = scmp.ne.s32.totalorder %s132, %s135
    %p144 = scmp.eq.s32.totalorder %s15, 1
    %p145 = por %p143, %p144
    %p146 = scmp.ne.s32.totalorder %s135, %s136
    %p147 = scmp.eq.s32.totalorder %s15, 0
    %p148 = por %p146, %p147
    %p149 = scmp.ne.s32.totalorder %s135, %s136
    %p150 = scmp.eq.s32.totalorder %s16, 1
    %p151 = por %p149, %p150
    %p153 = scmp.ne.s32.totalorder %s136, %s152
    %p154 = scmp.eq.s32.totalorder %s16, 0
    %p155 = por %p153, %p154
    %p156 = scmp.le.s32.totalorder 1, %s10
    %p157 = scmp.lt.s32.totalorder %s10, 3
    %p158 = pnand %p156, %p157
    %p159 = pneg %p158
    // Predicated region
    $region9: #{residual_block_pallas.5} parent=5 // pred_check
      _
    $region10: #{residual_block_pallas.5} parent=5 // pred_check_branch
      %161 = sbr.rel (%p158) target = $region12
    $region11: #{residual_block_pallas.5} parent=5 // pred_region
      %s162 = ssub.s32 %s10, 1
      // Predicated region
      $region13: #{residual_block_pallas.5} parent=11 // pred_check
        %p163 = pneg %p99
      $region14: #{residual_block_pallas.5} parent=11 // pred_check_branch
        %165 = sbr.rel (%p163) target = $region16
      $region15: #{residual_block_pallas.5} parent=11 // pred_region
        _
      $region16: #{residual_block_pallas.5} parent=11 // pred_fallthru
        _
      // Predicated region
      $region17: #{residual_block_pallas.5} parent=11 // pred_check
        %p166 = pneg %p120
      $region18: #{residual_block_pallas.5} parent=11 // pred_check_branch
        %168 = sbr.rel (%p166) target = $region20
      $region19: #{residual_block_pallas.5} parent=11 // pred_region
        _
      $region20: #{residual_block_pallas.5} parent=11 // pred_fallthru
        _
    $region12: #{residual_block_pallas.5} parent=5 // pred_fallthru
      _
    %p169 = scmp.lt.s32.totalorder %s10, 2
    // Predicated region
    $region21: #{residual_block_pallas.5} parent=5 // pred_check
      %p170 = pneg %p169
    $region22: #{residual_block_pallas.5} parent=5 // pred_check_branch
      %172 = sbr.rel (%p170) target = $region24
    $region23: #{residual_block_pallas.5} parent=5 // pred_region
      // Predicated region
      $region25: #{residual_block_pallas.5} parent=23 // pred_check
        %p173 = pneg %p44
      $region26: #{residual_block_pallas.5} parent=23 // pred_check_branch
        %175 = sbr.rel (%p173) target = $region28
      $region27: #{residual_block_pallas.5} parent=23 // pred_region
        %s176 = smul.u32 16, %s18
        %p177 = scmp.lt.s32.totalorder %s17, 1
        %s178 = scalar_select %p177, %s17, 1
        %p179 = scmp.lt.s32.totalorder %s176, 15
        %s180 = scalar_select %p179, %s176, 15
        %s181 = smul.addr %s180, 2
        %s182 = smul.addr %s178, 32
        %s183 = sadd.s32 %s181, %s182
        %s184 = smul.addr %s183, 8
        %s185 = scalar_lea.vmem %s0, %s184
        %s186 = smul.u32 16, %s18
      $region28: #{residual_block_pallas.5} parent=23 // pred_fallthru
        _
      // Predicated region
      $region29: #{residual_block_pallas.5} parent=23 // pred_check
        %p187 = pneg %p72
      $region30: #{residual_block_pallas.5} parent=23 // pred_check_branch
        %189 = sbr.rel (%p187) target = $region32
      $region31: #{residual_block_pallas.5} parent=23 // pred_region
        %s190 = smul.u32 16, %s18
        %p191 = scmp.lt.s32.totalorder %s17, 1
        %s192 = scalar_select %p191, %s17, 1
        %p193 = scmp.lt.s32.totalorder %s190, 15
        %s194 = scalar_select %p193, %s190, 15
        %s195 = smul.addr %s194, 2
        %s196 = smul.addr %s192, 32
        %s197 = sadd.s32 %s195, %s196
        %s198 = smul.addr %s197, 4
        %s199 = scalar_lea.vmem %s1, %s198
        %s200 = smul.u32 16, %s18
      $region32: #{residual_block_pallas.5} parent=23 // pred_fallthru
        _
    $region24: #{residual_block_pallas.5} parent=5 // pred_fallthru
      _
    %p201 = scmp.le.s32.totalorder 1, %s10
    %p202 = scmp.lt.s32.totalorder %s10, 3
    %p203 = pnand %p201, %p202
    %p204 = pneg %p203
    // Predicated region
    $region33: #{residual_block_pallas.5} parent=5 // pred_check
      _
    $region34: #{residual_block_pallas.5} parent=5 // pred_check_branch
      %206 = sbr.rel (%p203) target = $region36
    $region35: #{residual_block_pallas.5} parent=5 // pred_region
      %s207 = ssub.s32 %s10, 1
      %s208 = smul.u32 16, %s20
      %p209 = scmp.lt.s32.totalorder %s19, 1
      %s210 = scalar_select %p209, %s19, 1
      %p211 = scmp.lt.s32.totalorder %s208, 15
      %s212 = scalar_select %p211, %s208, 15
      %s213 = smul.addr %s212, 2
      %s214 = smul.addr %s210, 32
      %s215 = sadd.s32 %s213, %s214
      %s216 = smul.addr %s215, 8
      %s217 = scalar_lea.vmem %s0, %s216
      %p218 = pneg %p50
      %p219 = pneg %p47
      %s220 = smul.u32 16, %s20
      %p221 = scmp.lt.s32.totalorder %s19, 1
      %s222 = scalar_select %p221, %s19, 1
      %p223 = scmp.lt.s32.totalorder %s220, 15
      %s224 = scalar_select %p223, %s220, 15
      %s225 = smul.addr %s224, 2
      %s226 = smul.addr %s222, 32
      %s227 = sadd.s32 %s225, %s226
      %s228 = smul.addr %s227, 4
      %s229 = scalar_lea.vmem %s1, %s228
      %p230 = pneg %p78
      %p231 = pneg %p75
      %p232 = pneg %p99
      %p233 = pneg %p96
      %p234 = pneg %p120
      %p235 = pneg %p117
      %p236 = pneg %p148
      %p237 = pneg %p145
      %s238 = smul.u32 16, %s20
      %p239 = scmp.lt.s32.totalorder %s19, 1
      %s240 = scalar_select %p239, %s19, 1
      %p241 = scmp.lt.s32.totalorder %s238, 15
      %s242 = scalar_select %p241, %s238, 15
      %s243 = smul.addr %s242, 2
      %s244 = smul.addr %s240, 32
      %s245 = sadd.s32 %s243, %s244
      %s246 = smul.addr %s245, 8
      %s247 = scalar_lea.vmem %s4, %s246
      %s248 = smul.u32 16, %s20
      %p249 = scmp.lt.s32.totalorder %s19, 1
      %s250 = scalar_select %p249, %s19, 1
      %p251 = scmp.lt.s32.totalorder %s248, 15
      %s252 = scalar_select %p251, %s248, 15
      %s253 = smul.addr %s252, 2
      %s254 = smul.addr %s250, 32
      %s255 = sadd.s32 %s253, %s254
      %s256 = smul.addr %s255, 8
      %s257 = scalar_lea.vmem %s0, %s256
      %s258 = smul.u32 16, %s20
      %s259 = smul.u32 16, %s20
      %p260 = scmp.lt.s32.totalorder %s19, 1
      %s261 = scalar_select %p260, %s19, 1
      %p262 = scmp.lt.s32.totalorder %s259, 15
      %s263 = scalar_select %p262, %s259, 15
      %s264 = smul.addr %s263, 2
      %s265 = smul.addr %s261, 32
      %s266 = sadd.s32 %s264, %s265
      %s267 = smul.addr %s266, 4
      %s268 = scalar_lea.vmem %s1, %s267
      %s269 = smul.u32 16, %s20
      %s270 = smul.u32 16, %s20
      %p271 = scmp.lt.s32.totalorder %s19, 1
      %s272 = scalar_select %p271, %s19, 1
      %p273 = scmp.lt.s32.totalorder %s270, 15
      %s274 = scalar_select %p273, %s270, 15
      %s275 = smul.addr %s274, 2
      %s276 = smul.addr %s272, 32
      %s277 = sadd.s32 %s275, %s276
      %s278 = smul.addr %s277, 8
      %s279 = scalar_lea.vmem %s4, %s278
      %s280 = smul.u32 16, %s20
      %v281 = vld [vmem:[%s2] sm:$0x1]
      %v282 = vld [vmem:[%s3] sm:$0x1]
      %v283 = vld [vmem:[%s257] sm:$0xff]
      %v284 = vld [vmem:[%s257 + $0x8] sm:$0xff]
      %v285 = vld [vmem:[%s257 + $0x10] sm:$0xff]
      %v286 = vld [vmem:[%s257 + $0x18] sm:$0xff]
      %v287 = vld [vmem:[%s257 + $0x20] sm:$0xff]
      %v288 = vld [vmem:[%s257 + $0x28] sm:$0xff]
      %v289 = vld [vmem:[%s257 + $0x30] sm:$0xff]
      %v290 = vld [vmem:[%s257 + $0x38] sm:$0xff]
      %v291 = vld [vmem:[%s257 + $0x40] sm:$0xff]
      %v292 = vld [vmem:[%s257 + $0x48] sm:$0xff]
      %v293 = vld [vmem:[%s257 + $0x50] sm:$0xff]
      %v294 = vld [vmem:[%s257 + $0x58] sm:$0xff]
      %v295 = vld [vmem:[%s257 + $0x60] sm:$0xff]
      %v296 = vld [vmem:[%s257 + $0x68] sm:$0xff]
      %v297 = vld [vmem:[%s257 + $0x70] sm:$0xff]
      %v298 = vld [vmem:[%s257 + $0x78] sm:$0xff]
      %v299 = vld [vmem:[%s257 + $0x80] sm:$0xff]
      %v300 = vld [vmem:[%s257 + $0x88] sm:$0xff]
      %v301 = vld [vmem:[%s257 + $0x90] sm:$0xff]
      %v302 = vld [vmem:[%s257 + $0x98] sm:$0xff]
      %v303 = vld [vmem:[%s257 + $0xa0] sm:$0xff]
      %v304 = vld [vmem:[%s257 + $0xa8] sm:$0xff]
      %v305 = vld [vmem:[%s257 + $0xb0] sm:$0xff]
      %v306 = vld [vmem:[%s257 + $0xb8] sm:$0xff]
      %v307 = vld [vmem:[%s257 + $0xc0] sm:$0xff]
      %v308 = vld [vmem:[%s257 + $0xc8] sm:$0xff]
      %v309 = vld [vmem:[%s257 + $0xd0] sm:$0xff]
      %v310 = vld [vmem:[%s257 + $0xd8] sm:$0xff]
      %v311 = vld [vmem:[%s257 + $0xe0] sm:$0xff]
      %v312 = vld [vmem:[%s257 + $0xe8] sm:$0xff]
      %v313 = vld [vmem:[%s257 + $0xf0] sm:$0xff]
      %v314 = vld [vmem:[%s257 + $0xf8] sm:$0xff]
      %v315 = vld [vmem:[%s268] sm:$0xf]
      %v316 = vld [vmem:[%s268 + $0x4] sm:$0xf]
      %v317 = vld [vmem:[%s268 + $0x8] sm:$0xf]
      %v318 = vld [vmem:[%s268 + $0xc] sm:$0xf]
      %v319 = vld [vmem:[%s268 + $0x10] sm:$0xf]
      %v320 = vld [vmem:[%s268 + $0x14] sm:$0xf]
      %v321 = vld [vmem:[%s268 + $0x18] sm:$0xf]
      %v322 = vld [vmem:[%s268 + $0x1c] sm:$0xf]
      %v323 = vld [vmem:[%s268 + $0x20] sm:$0xf]
      %v324 = vld [vmem:[%s268 + $0x24] sm:$0xf]
      %v325 = vld [vmem:[%s268 + $0x28] sm:$0xf]
      %v326 = vld [vmem:[%s268 + $0x2c] sm:$0xf]
      %v327 = vld [vmem:[%s268 + $0x30] sm:$0xf]
      %v328 = vld [vmem:[%s268 + $0x34] sm:$0xf]
      %v329 = vld [vmem:[%s268 + $0x38] sm:$0xf]
      %v330 = vld [vmem:[%s268 + $0x3c] sm:$0xf]
      %v331 = vld [vmem:[%s268 + $0x40] sm:$0xf]
      %v332 = vld [vmem:[%s268 + $0x44] sm:$0xf]
      %v333 = vld [vmem:[%s268 + $0x48] sm:$0xf]
      %v334 = vld [vmem:[%s268 + $0x4c] sm:$0xf]
      %v335 = vld [vmem:[%s268 + $0x50] sm:$0xf]
      %v336 = vld [vmem:[%s268 + $0x54] sm:$0xf]
      %v337 = vld [vmem:[%s268 + $0x58] sm:$0xf]
      %v338 = vld [vmem:[%s268 + $0x5c] sm:$0xf]
      %v339 = vld [vmem:[%s268 + $0x60] sm:$0xf]
      %v340 = vld [vmem:[%s268 + $0x64] sm:$0xf]
      %v341 = vld [vmem:[%s268 + $0x68] sm:$0xf]
      %v342 = vld [vmem:[%s268 + $0x6c] sm:$0xf]
      %v343 = vld [vmem:[%s268 + $0x70] sm:$0xf]
      %v344 = vld [vmem:[%s268 + $0x74] sm:$0xf]
      %v345 = vld [vmem:[%s268 + $0x78] sm:$0xf]
      %v346 = vld [vmem:[%s268 + $0x7c] sm:$0xf]
      %v347 = vunpack.c.l.bf16 %v315
      %v348 = vunpack.c.l.bf16 %v316
      %v349 = vunpack.c.l.bf16 %v317
      %v350 = vunpack.c.l.bf16 %v318
      %v351 = vunpack.c.l.bf16 %v319
      %v352 = vunpack.c.l.bf16 %v320
      %v353 = vunpack.c.l.bf16 %v321
      %v354 = vunpack.c.l.bf16 %v322
      %v355 = vunpack.c.l.bf16 %v323
      %v356 = vunpack.c.l.bf16 %v324
      %v357 = vunpack.c.l.bf16 %v325
      %v358 = vunpack.c.l.bf16 %v326
      %v359 = vunpack.c.l.bf16 %v327
      %v360 = vunpack.c.l.bf16 %v328
      %v361 = vunpack.c.l.bf16 %v329
      %v362 = vunpack.c.l.bf16 %v330
      %v363 = vunpack.c.l.bf16 %v331
      %v364 = vunpack.c.l.bf16 %v332
      %v365 = vunpack.c.l.bf16 %v333
      %v366 = vunpack.c.l.bf16 %v334
      %v367 = vunpack.c.l.bf16 %v335
      %v368 = vunpack.c.l.bf16 %v336
      %v369 = vunpack.c.l.bf16 %v337
      %v370 = vunpack.c.l.bf16 %v338
      %v371 = vunpack.c.l.bf16 %v339
      %v372 = vunpack.c.l.bf16 %v340
      %v373 = vunpack.c.l.bf16 %v341
      %v374 = vunpack.c.l.bf16 %v342
      %v375 = vunpack.c.l.bf16 %v343
      %v376 = vunpack.c.l.bf16 %v344
      %v377 = vunpack.c.l.bf16 %v345
      %v378 = vunpack.c.l.bf16 %v346
      %v380 = vperm.slane %v281, 0
      %v382 = vmul.f32 %v347, %v380
      %v383 = vmul.f32 %v348, %v380
      %v384 = vmul.f32 %v349, %v380
      %v385 = vmul.f32 %v350, %v380
      %v386 = vmul.f32 %v351, %v380
      %v387 = vmul.f32 %v352, %v380
      %v388 = vmul.f32 %v353, %v380
      %v389 = vmul.f32 %v354, %v380
      %v390 = vmul.f32 %v355, %v380
      %v391 = vmul.f32 %v356, %v380
      %v392 = vmul.f32 %v357, %v380
      %v393 = vmul.f32 %v358, %v380
      %v394 = vmul.f32 %v359, %v380
      %v395 = vmul.f32 %v360, %v380
      %v396 = vmul.f32 %v361, %v380
      %v397 = vmul.f32 %v362, %v380
      %v398 = vmul.f32 %v363, %v380
      %v399 = vmul.f32 %v364, %v380
      %v400 = vmul.f32 %v365, %v380
      %v401 = vmul.f32 %v366, %v380
      %v402 = vmul.f32 %v367, %v380
      %v403 = vmul.f32 %v368, %v380
      %v404 = vmul.f32 %v369, %v380
      %v405 = vmul.f32 %v370, %v380
      %v406 = vmul.f32 %v371, %v380
      %v407 = vmul.f32 %v372, %v380
      %v408 = vmul.f32 %v373, %v380
      %v409 = vmul.f32 %v374, %v380
      %v410 = vmul.f32 %v375, %v380
      %v411 = vmul.f32 %v376, %v380
      %v412 = vmul.f32 %v377, %v380
      %v413 = vmul.f32 %v378, %v380
      %v414 = vadd.f32 %v283, %v382
      %v415 = vadd.f32 %v284, %v383
      %v416 = vadd.f32 %v285, %v384
      %v417 = vadd.f32 %v286, %v385
      %v418 = vadd.f32 %v287, %v386
      %v419 = vadd.f32 %v288, %v387
      %v420 = vadd.f32 %v289, %v388
      %v421 = vadd.f32 %v290, %v389
      %v422 = vadd.f32 %v291, %v390
      %v423 = vadd.f32 %v292, %v391
      %v424 = vadd.f32 %v293, %v392
      %v425 = vadd.f32 %v294, %v393
      %v426 = vadd.f32 %v295, %v394
      %v427 = vadd.f32 %v296, %v395
      %v428 = vadd.f32 %v297, %v396
      %v429 = vadd.f32 %v298, %v397
      %v430 = vadd.f32 %v299, %v398
      %v431 = vadd.f32 %v300, %v399
      %v432 = vadd.f32 %v301, %v400
      %v433 = vadd.f32 %v302, %v401
      %v434 = vadd.f32 %v303, %v402
      %v435 = vadd.f32 %v304, %v403
      %v436 = vadd.f32 %v305, %v404
      %v437 = vadd.f32 %v306, %v405
      %v438 = vadd.f32 %v307, %v406
      %v439 = vadd.f32 %v308, %v407
      %v440 = vadd.f32 %v309, %v408
      %v441 = vadd.f32 %v310, %v409
      %v442 = vadd.f32 %v311, %v410
      %v443 = vadd.f32 %v312, %v411
      %v444 = vadd.f32 %v313, %v412
      %v445 = vadd.f32 %v314, %v413
      %v447 = vperm.slane %v282, 0
      %v449 = vadd.f32 %v414, %v447
      %v450 = vadd.f32 %v415, %v447
      %v451 = vadd.f32 %v416, %v447
      %v452 = vadd.f32 %v417, %v447
      %v453 = vadd.f32 %v418, %v447
      %v454 = vadd.f32 %v419, %v447
      %v455 = vadd.f32 %v420, %v447
      %v456 = vadd.f32 %v421, %v447
      %v457 = vadd.f32 %v422, %v447
      %v458 = vadd.f32 %v423, %v447
      %v459 = vadd.f32 %v424, %v447
      %v460 = vadd.f32 %v425, %v447
      %v461 = vadd.f32 %v426, %v447
      %v462 = vadd.f32 %v427, %v447
      %v463 = vadd.f32 %v428, %v447
      %v464 = vadd.f32 %v429, %v447
      %v465 = vadd.f32 %v430, %v447
      %v466 = vadd.f32 %v431, %v447
      %v467 = vadd.f32 %v432, %v447
      %v468 = vadd.f32 %v433, %v447
      %v469 = vadd.f32 %v434, %v447
      %v470 = vadd.f32 %v435, %v447
      %v471 = vadd.f32 %v436, %v447
      %v472 = vadd.f32 %v437, %v447
      %v473 = vadd.f32 %v438, %v447
      %v474 = vadd.f32 %v439, %v447
      %v475 = vadd.f32 %v440, %v447
      %v476 = vadd.f32 %v441, %v447
      %v477 = vadd.f32 %v442, %v447
      %v478 = vadd.f32 %v443, %v447
      %v479 = vadd.f32 %v444, %v447
      %v480 = vadd.f32 %v445, %v447
      %vm481 = vcmask 31744
      %482 = vst.msk [vmem:[%s279] sm:$0xff] %vm481, %v449
      %483 = vst.msk [vmem:[%s279 + $0x8] sm:$0xff] %vm481, %v450
      %484 = vst.msk [vmem:[%s279 + $0x10] sm:$0xff] %vm481, %v451
      %485 = vst.msk [vmem:[%s279 + $0x18] sm:$0xff] %vm481, %v452
      %486 = vst.msk [vmem:[%s279 + $0x20] sm:$0xff] %vm481, %v453
      %487 = vst.msk [vmem:[%s279 + $0x28] sm:$0xff] %vm481, %v454
      %488 = vst.msk [vmem:[%s279 + $0x30] sm:$0xff] %vm481, %v455
      %489 = vst.msk [vmem:[%s279 + $0x38] sm:$0xff] %vm481, %v456
      %490 = vst.msk [vmem:[%s279 + $0x40] sm:$0xff] %vm481, %v457
      %491 = vst.msk [vmem:[%s279 + $0x48] sm:$0xff] %vm481, %v458
      %492 = vst.msk [vmem:[%s279 + $0x50] sm:$0xff] %vm481, %v459
      %493 = vst.msk [vmem:[%s279 + $0x58] sm:$0xff] %vm481, %v460
      %494 = vst.msk [vmem:[%s279 + $0x60] sm:$0xff] %vm481, %v461
      %495 = vst.msk [vmem:[%s279 + $0x68] sm:$0xff] %vm481, %v462
      %496 = vst.msk [vmem:[%s279 + $0x70] sm:$0xff] %vm481, %v463
      %497 = vst.msk [vmem:[%s279 + $0x78] sm:$0xff] %vm481, %v464
      %498 = vst.msk [vmem:[%s279 + $0x80] sm:$0xff] %vm481, %v465
      %499 = vst.msk [vmem:[%s279 + $0x88] sm:$0xff] %vm481, %v466
      %500 = vst.msk [vmem:[%s279 + $0x90] sm:$0xff] %vm481, %v467
      %501 = vst.msk [vmem:[%s279 + $0x98] sm:$0xff] %vm481, %v468
      %502 = vst.msk [vmem:[%s279 + $0xa0] sm:$0xff] %vm481, %v469
      %503 = vst.msk [vmem:[%s279 + $0xa8] sm:$0xff] %vm481, %v470
      %504 = vst.msk [vmem:[%s279 + $0xb0] sm:$0xff] %vm481, %v471
      %505 = vst.msk [vmem:[%s279 + $0xb8] sm:$0xff] %vm481, %v472
      %506 = vst.msk [vmem:[%s279 + $0xc0] sm:$0xff] %vm481, %v473
      %507 = vst.msk [vmem:[%s279 + $0xc8] sm:$0xff] %vm481, %v474
      %508 = vst.msk [vmem:[%s279 + $0xd0] sm:$0xff] %vm481, %v475
      %509 = vst.msk [vmem:[%s279 + $0xd8] sm:$0xff] %vm481, %v476
      %510 = vst.msk [vmem:[%s279 + $0xe0] sm:$0xff] %vm481, %v477
      %511 = vst.msk [vmem:[%s279 + $0xe8] sm:$0xff] %vm481, %v478
      %512 = vst.msk [vmem:[%s279 + $0xf0] sm:$0xff] %vm481, %v479
      %513 = vst.msk [vmem:[%s279 + $0xf8] sm:$0xff] %vm481, %v480
      %s514 = smul.u32 16, %s20
      %p515 = scmp.lt.s32.totalorder %s19, 1
      %s516 = scalar_select %p515, %s19, 1
      %p517 = scmp.lt.s32.totalorder %s514, 15
      %s518 = scalar_select %p517, %s514, 15
      %s519 = smul.addr %s518, 2
      %s520 = smul.addr %s516, 32
      %s521 = sadd.s32 %s519, %s520
      %s522 = smul.addr %s521, 8
      %s523 = scalar_lea.vmem %s4, %s522
      // Predicated region
      $region37: #{residual_block_pallas.5} parent=35 // pred_check
        %p524 = pneg %p145
      $region38: #{residual_block_pallas.5} parent=35 // pred_check_branch
        %526 = sbr.rel (%p524) target = $region40
      $region39: #{residual_block_pallas.5} parent=35 // pred_region
        %s527 = smul.u32 16, %s20
      $region40: #{residual_block_pallas.5} parent=35 // pred_fallthru
        _
    $region36: #{residual_block_pallas.5} parent=5 // pred_fallthru
      _
    %p528 = scmp.le.s32.totalorder 2, %s10
    // Predicated region
    $region41: #{residual_block_pallas.5} parent=5 // pred_check
      %p529 = pneg %p528
    $region42: #{residual_block_pallas.5} parent=5 // pred_check_branch
      %531 = sbr.rel (%p529) target = $region44
    $region43: #{residual_block_pallas.5} parent=5 // pred_region
      %s532 = ssub.s32 %s10, 2
      // Predicated region
      $region45: #{residual_block_pallas.5} parent=43 // pred_check
        %p533 = pneg %p151
      $region46: #{residual_block_pallas.5} parent=43 // pred_check_branch
        %535 = sbr.rel (%p533) target = $region48
      $region47: #{residual_block_pallas.5} parent=43 // pred_region
        %s536 = smul.u32 16, %s22
        %p537 = scmp.lt.s32.totalorder %s21, 1
        %s538 = scalar_select %p537, %s21, 1
        %p539 = scmp.lt.s32.totalorder %s536, 15
        %s540 = scalar_select %p539, %s536, 15
        %s541 = smul.addr %s540, 2
        %s542 = smul.addr %s538, 32
        %s543 = sadd.s32 %s541, %s542
        %s544 = smul.addr %s543, 8
        %s545 = scalar_lea.vmem %s4, %s544
      $region48: #{residual_block_pallas.5} parent=43 // pred_fallthru
        _
    $region44: #{residual_block_pallas.5} parent=5 // pred_fallthru
      _
  $region6: #{residual_block_pallas.5} parent=0 // loop_footer
    %s14 = sadd.s32 1, %s10
  $region7: #{residual_block_pallas.5} parent=0 // loop_footer_branch
    %9 = sbr.rel target = $region3
  $region8: #{residual_block_pallas.5} parent=0 // loop_exit
    _

// kernel: residual_block_pallas.3
$region0: #{residual_block_pallas.3}
  #allocation0 [shape = 'u32[]', space=smem, size = 0x4, offset = 0x4, fixed_abs, tag = 'smem constant byte address 0x4 - core index']
  #allocation1 [shape = 'u32[72,128]{1,0:T(1,128)}', space=vmem, size = 0x9000, scoped, tag = 'internal scratch']
  #allocation2 [shape = 'f32[18,18,4]{2,1,0:T(8,128)}', space=vmem, size = 0x36000, scoped, tag = 'scratch operand']
  %s0 = inlined_call_operand.vmem [shape: f32[2,16,16,4], index: 0, kind: input, shape index: {}]
  %s1 = inlined_call_operand.vmem [shape: f32[2,1,2,16,4], index: 1, kind: input, shape index: {}]
  %s2 = inlined_call_operand.vmem [shape: bf16[9,4,4], index: 2, kind: input, shape index: {}]
  %s3 = inlined_call_operand.vmem [shape: bf16[2,16,16,4], index: 3, kind: output, shape index: {0}]
  %s4 = inlined_call_operand.vmem [shape: bf16[2,1,4,16,4], index: 4, kind: output, shape index: {1}]
  %s5 = inlined_call_operand.vmem [shape: f32[2,1,2,4], index: 5, kind: output, shape index: {2}]
  %6 = xla_tuple %s3, %s4, %s5
  %s7 = sld [smem:[#allocation0]]
  $region61: #{residual_block_pallas.3} parent=0
    _
  %s9 = ssub.s32 1, %s7
  %s10 = scalar_select 0, %s9, %s7
  loop: start=0, step=1, limit=4
  $region2: #{residual_block_pallas.3} parent=0 // loop_pre_header
    _
  $region3: #{residual_block_pallas.3} parent=0 // loop_header
    %s12 = sphi 0, %s16
    %p13 = scmp.ge.s32.totalorder %s12, 4
    %s19 = sphi 0, %s31
    %s20 = sphi 0, %s27
    %s21 = sphi 0, %s19
    %s22 = sphi 0, %s20
    %s23 = sphi 0, %s21
    %s24 = sphi 0, %s22
    %s36 = sphi 0, %s38
    %s39 = sphi 0, %s36
    %s40 = sphi 0, %s39
    %s56 = sphi 0, %s40
    %s64 = sphi 0, %s66
    %s67 = sphi 0, %s64
    %s68 = sphi 0, %s67
    %s84 = sphi 0, %s68
    %s88 = sphi 0, %s88
    %s90 = sphi 0, %s88
    %s91 = sphi 0, %s90
    %s105 = sphi 0, %s91
    %s113 = sphi 0, %s115
    %s116 = sphi 0, %s113
    %s117 = sphi 0, %s116
    %s133 = sphi 0, %s117
    %s141 = sphi 0, %s143
    %s144 = sphi 0, %s141
    %s145 = sphi 0, %s144
    %s161 = sphi 0, %s145
    %s169 = sphi 0, %s171
    %s172 = sphi 0, %s169
    %s173 = sphi 0, %s172
    %s189 = sphi 0, %s173
  $region4: #{residual_block_pallas.3} parent=0 // loop_header_branch
    %15 = sbr.rel (%p13) target = $region8
  $region5: #{residual_block_pallas.3} parent=0 // loop_body
    %s17 = ssub.s32 %s12, 1
    %s18 = ssub.s32 %s12, 2
    %s25 = sadd.s32 1, %s20
    %p26 = scmp.ge.s32.totalorder %s25, 1
    %s27 = scalar_select %p26, 0, %s25
    %s28 = sadd.s32 1, %s19
    %s29 = scalar_select %p26, %s28, %s19
    %p30 = scmp.ge.s32.totalorder %s29, 2
    %s31 = scalar_select %p30, 0, %s29
    %s32 = ssub.s32 %s19, %s31
    %s33 = ssub.s32 %s20, %s27
    %s34 = sor.u32 %s32, %s33
    %p35 = scmp.eq.s32.totalorder %s34, 0
    %s37 = sadd.s32 %s36, 1
    %s38 = scalar_select %p35, %s36, %s37
    %p41 = pneg %p35
    %p42 = scmp.eq.s32.totalorder %s12, 1
    %p43 = por %p41, %p42
    %p44 = scmp.ne.s32.totalorder %s36, %s39
    %p45 = scmp.eq.s32.totalorder %s12, 0
    %p46 = por %p44, %p45
    %p47 = scmp.ne.s32.totalorder %s36, %s39
    %p48 = scmp.eq.s32.totalorder %s17, 1
    %p49 = por %p47, %p48
    %p50 = scmp.ne.s32.totalorder %s39, %s40
    %p51 = scmp.eq.s32.totalorder %s17, 0
    %p52 = por %p50, %p51
    %p53 = scmp.ne.s32.totalorder %s39, %s40
    %p54 = scmp.eq.s32.totalorder %s18, 1
    %p55 = por %p53, %p54
    %p57 = scmp.ne.s32.totalorder %s40, %s56
    %p58 = scmp.eq.s32.totalorder %s18, 0
    %p59 = por %p57, %p58
    %s60 = ssub.s32 %s19, %s31
    %s61 = ssub.s32 %s20, %s27
    %s62 = sor.u32 %s60, %s61
    %p63 = scmp.eq.s32.totalorder %s62, 0
    %s65 = sadd.s32 %s64, 1
    %s66 = scalar_select %p63, %s64, %s65
    %p69 = pneg %p63
    %p70 = scmp.eq.s32.totalorder %s12, 1
    %p71 = por %p69, %p70
    %p72 = scmp.ne.s32.totalorder %s64, %s67
    %p73 = scmp.eq.s32.totalorder %s12, 0
    %p74 = por %p72, %p73
    %p75 = scmp.ne.s32.totalorder %s64, %s67
    %p76 = scmp.eq.s32.totalorder %s17, 1
    %p77 = por %p75, %p76
    %p78 = scmp.ne.s32.totalorder %s67, %s68
    %p79 = scmp.eq.s32.totalorder %s17, 0
    %p80 = por %p78, %p79
    %p81 = scmp.ne.s32.totalorder %s67, %s68
    %p82 = scmp.eq.s32.totalorder %s18, 1
    %p83 = por %p81, %p82
    %p85 = scmp.ne.s32.totalorder %s68, %s84
    %p86 = scmp.eq.s32.totalorder %s18, 0
    %p87 = por %p85, %p86
    %s89 = sadd.s32 %s88, 1
    %p92 = scmp.eq.s32.totalorder %s12, 1
    %p93 = scmp.ne.s32.totalorder %s88, %s90
    %p94 = scmp.eq.s32.totalorder %s12, 0
    %p95 = por %p93, %p94
    %p96 = scmp.ne.s32.totalorder %s88, %s90
    %p97 = scmp.eq.s32.totalorder %s17, 1
    %p98 = por %p96, %p97
    %p99 = scmp.ne.s32.totalorder %s90, %s91
    %p100 = scmp.eq.s32.totalorder %s17, 0
    %p101 = por %p99, %p100
    %p102 = scmp.ne.s32.totalorder %s90, %s91
    %p103 = scmp.eq.s32.totalorder %s18, 1
    %p104 = por %p102, %p103
    %p106 = scmp.ne.s32.totalorder %s91, %s105
    %p107 = scmp.eq.s32.totalorder %s18, 0
    %p108 = por %p106, %p107
    %s109 = ssub.s32 %s19, %s31
    %s110 = ssub.s32 %s20, %s27
    %s111 = sor.u32 %s109, %s110
    %p112 = scmp.eq.s32.totalorder %s111, 0
    %s114 = sadd.s32 %s113, 1
    %s115 = scalar_select %p112, %s113, %s114
    %p118 = pneg %p112
    %p119 = scmp.eq.s32.totalorder %s12, 1
    %p120 = por %p118, %p119
    %p121 = scmp.ne.s32.totalorder %s113, %s116
    %p122 = scmp.eq.s32.totalorder %s12, 0
    %p123 = por %p121, %p122
    %p124 = scmp.ne.s32.totalorder %s113, %s116
    %p125 = scmp.eq.s32.totalorder %s17, 1
    %p126 = por %p124, %p125
    %p127 = scmp.ne.s32.totalorder %s116, %s117
    %p128 = scmp.eq.s32.totalorder %s17, 0
    %p129 = por %p127, %p128
    %p130 = scmp.ne.s32.totalorder %s116, %s117
    %p131 = scmp.eq.s32.totalorder %s18, 1
    %p132 = por %p130, %p131
    %p134 = scmp.ne.s32.totalorder %s117, %s133
    %p135 = scmp.eq.s32.totalorder %s18, 0
    %p136 = por %p134, %p135
    %s137 = ssub.s32 %s19, %s31
    %s138 = ssub.s32 %s20, %s27
    %s139 = sor.u32 %s137, %s138
    %p140 = scmp.eq.s32.totalorder %s139, 0
    %s142 = sadd.s32 %s141, 1
    %s143 = scalar_select %p140, %s141, %s142
    %p146 = pneg %p140
    %p147 = scmp.eq.s32.totalorder %s12, 1
    %p148 = por %p146, %p147
    %p149 = scmp.ne.s32.totalorder %s141, %s144
    %p150 = scmp.eq.s32.totalorder %s12, 0
    %p151 = por %p149, %p150
    %p152 = scmp.ne.s32.totalorder %s141, %s144
    %p153 = scmp.eq.s32.totalorder %s17, 1
    %p154 = por %p152, %p153
    %p155 = scmp.ne.s32.totalorder %s144, %s145
    %p156 = scmp.eq.s32.totalorder %s17, 0
    %p157 = por %p155, %p156
    %p158 = scmp.ne.s32.totalorder %s144, %s145
    %p159 = scmp.eq.s32.totalorder %s18, 1
    %p160 = por %p158, %p159
    %p162 = scmp.ne.s32.totalorder %s145, %s161
    %p163 = scmp.eq.s32.totalorder %s18, 0
    %p164 = por %p162, %p163
    %s165 = ssub.s32 %s19, %s31
    %s166 = ssub.s32 %s20, %s27
    %s167 = sor.u32 %s165, %s166
    %p168 = scmp.eq.s32.totalorder %s167, 0
    %s170 = sadd.s32 %s169, 1
    %s171 = scalar_select %p168, %s169, %s170
    %p174 = pneg %p168
    %p175 = scmp.eq.s32.totalorder %s12, 1
    %p176 = por %p174, %p175
    %p177 = scmp.ne.s32.totalorder %s169, %s172
    %p178 = scmp.eq.s32.totalorder %s12, 0
    %p179 = por %p177, %p178
    %p180 = scmp.ne.s32.totalorder %s169, %s172
    %p181 = scmp.eq.s32.totalorder %s17, 1
    %p182 = por %p180, %p181
    %p183 = scmp.ne.s32.totalorder %s172, %s173
    %p184 = scmp.eq.s32.totalorder %s17, 0
    %p185 = por %p183, %p184
    %p186 = scmp.ne.s32.totalorder %s172, %s173
    %p187 = scmp.eq.s32.totalorder %s18, 1
    %p188 = por %p186, %p187
    %p190 = scmp.ne.s32.totalorder %s173, %s189
    %p191 = scmp.eq.s32.totalorder %s18, 0
    %p192 = por %p190, %p191
    %p193 = scmp.le.s32.totalorder 1, %s12
    %p194 = scmp.lt.s32.totalorder %s12, 3
    %p195 = pnand %p193, %p194
    %p196 = pneg %p195
    // Predicated region
    $region9: #{residual_block_pallas.3} parent=5 // pred_check
      _
    $region10: #{residual_block_pallas.3} parent=5 // pred_check_branch
      %198 = sbr.rel (%p195) target = $region12
    $region11: #{residual_block_pallas.3} parent=5 // pred_region
      %s199 = ssub.s32 %s12, 1
      // Predicated region
      $region13: #{residual_block_pallas.3} parent=11 // pred_check
        %p200 = pneg %p101
      $region14: #{residual_block_pallas.3} parent=11 // pred_check_branch
        %202 = sbr.rel (%p200) target = $region16
      $region15: #{residual_block_pallas.3} parent=11 // pred_region
        _
      $region16: #{residual_block_pallas.3} parent=11 // pred_fallthru
        _
    $region12: #{residual_block_pallas.3} parent=5 // pred_fallthru
      _
    %p203 = scmp.lt.s32.totalorder %s12, 2
    // Predicated region
    $region17: #{residual_block_pallas.3} parent=5 // pred_check
      %p204 = pneg %p203
    $region18: #{residual_block_pallas.3} parent=5 // pred_check_branch
      %206 = sbr.rel (%p204) target = $region20
    $region19: #{residual_block_pallas.3} parent=5 // pred_region
      // Predicated region
      $region21: #{residual_block_pallas.3} parent=19 // pred_check
        %p207 = pneg %p46
      $region22: #{residual_block_pallas.3} parent=19 // pred_check_branch
        %209 = sbr.rel (%p207) target = $region24
      $region23: #{residual_block_pallas.3} parent=19 // pred_region
        %s210 = smul.u32 16, %s20
        %p211 = scmp.lt.s32.totalorder %s19, 1
        %s212 = scalar_select %p211, %s19, 1
        %p213 = scmp.lt.s32.totalorder %s210, 15
        %s214 = scalar_select %p213, %s210, 15
        %s215 = smul.addr %s214, 2
        %s216 = smul.addr %s212, 32
        %s217 = sadd.s32 %s215, %s216
        %s218 = smul.addr %s217, 8
        %s219 = scalar_lea.vmem %s0, %s218
        %s220 = smul.u32 16, %s20
      $region24: #{residual_block_pallas.3} parent=19 // pred_fallthru
        _
      // Predicated region
      $region25: #{residual_block_pallas.3} parent=19 // pred_check
        %p221 = pneg %p74
      $region26: #{residual_block_pallas.3} parent=19 // pred_check_branch
        %223 = sbr.rel (%p221) target = $region28
      $region27: #{residual_block_pallas.3} parent=19 // pred_region
        %p224 = scmp.lt.s32.totalorder %s19, 1
        %s225 = scalar_select %p224, %s19, 1
        %p226 = scmp.lt.s32.totalorder %s20, 0
        %s227 = scalar_select %p226, %s20, 0
        %s228 = smul.addr %s227, 4
        %s229 = smul.addr %s225, 4
        %s230 = sadd.s32 %s228, %s229
        %s231 = smul.addr %s230, 8
        %s232 = scalar_lea.vmem %s1, %s231
      $region28: #{residual_block_pallas.3} parent=19 // pred_fallthru
        _
    $region20: #{residual_block_pallas.3} parent=5 // pred_fallthru
      _
    %p233 = scmp.le.s32.totalorder 1, %s12
    %p234 = scmp.lt.s32.totalorder %s12, 3
    %p235 = pnand %p233, %p234
    %p236 = pneg %p235
    // Predicated region
    $region29: #{residual_block_pallas.3} parent=5 // pred_check
      _
    $region30: #{residual_block_pallas.3} parent=5 // pred_check_branch
      %238 = sbr.rel (%p235) target = $region32
    $region31: #{residual_block_pallas.3} parent=5 // pred_region
      %s239 = ssub.s32 %s12, 1
      %s240 = smul.u32 16, %s22
      %p241 = scmp.lt.s32.totalorder %s21, 1
      %s242 = scalar_select %p241, %s21, 1
      %p243 = scmp.lt.s32.totalorder %s240, 15
      %s244 = scalar_select %p243, %s240, 15
      %s245 = smul.addr %s244, 2
      %s246 = smul.addr %s242, 32
      %s247 = sadd.s32 %s245, %s246
      %s248 = smul.addr %s247, 8
      %s249 = scalar_lea.vmem %s0, %s248
      %p250 = pneg %p52
      %p251 = pneg %p49
      %p252 = scmp.lt.s32.totalorder %s21, 1
      %s253 = scalar_select %p252, %s21, 1
      %p254 = scmp.lt.s32.totalorder %s22, 0
      %s255 = scalar_select %p254, %s22, 0
      %s256 = smul.addr %s255, 4
      %s257 = smul.addr %s253, 4
      %s258 = sadd.s32 %s256, %s257
      %s259 = smul.addr %s258, 8
      %s260 = scalar_lea.vmem %s1, %s259
      %p261 = pneg %p80
      %p262 = pneg %p77
      %p263 = pneg %p101
      %p264 = pneg %p98
      %p265 = pneg %p129
      %p266 = pneg %p126
      %s267 = smul.u32 16, %s22
      %p268 = scmp.lt.s32.totalorder %s21, 1
      %s269 = scalar_select %p268, %s21, 1
      %p270 = scmp.lt.s32.totalorder %s267, 15
      %s271 = scalar_select %p270, %s267, 15
      %s272 = smul.addr %s271, 2
      %s273 = smul.addr %s269, 32
      %s274 = sadd.s32 %s272, %s273
      %s275 = smul.addr %s274, 4
      %s276 = scalar_lea.vmem %s3, %s275
      %p277 = pneg %p157
      %p278 = pneg %p154
      %p279 = scmp.lt.s32.totalorder %s21, 1
      %s280 = scalar_select %p279, %s21, 1
      %p281 = scmp.lt.s32.totalorder %s22, 0
      %s282 = scalar_select %p281, %s22, 0
      %s283 = smul.addr %s282, 8
      %s284 = smul.addr %s280, 8
      %s285 = sadd.s32 %s283, %s284
      %s286 = smul.addr %s285, 4
      %s287 = scalar_lea.vmem %s4, %s286
      %p288 = pneg %p185
      %p289 = pneg %p182
      %p290 = scmp.lt.s32.totalorder %s21, 1
      %s291 = scalar_select %p290, %s21, 1
      %p292 = scmp.lt.s32.totalorder %s22, 0
      %s293 = scalar_select %p292, %s22, 0
      %s294 = sadd.s32 %s293, %s291
      %s295 = smul.addr %s294, 2
      %s296 = scalar_lea.vmem %s5, %s295
      %s297 = smul.u32 16, %s22
      %p298 = scmp.lt.s32.totalorder %s21, 1
      %s299 = scalar_select %p298, %s21, 1
      %p300 = scmp.lt.s32.totalorder %s297, 15
      %s301 = scalar_select %p300, %s297, 15
      %s302 = smul.addr %s301, 2
      %s303 = smul.addr %s299, 32
      %s304 = sadd.s32 %s302, %s303
      %s305 = smul.addr %s304, 8
      %s306 = scalar_lea.vmem %s0, %s305
      %s307 = smul.u32 16, %s22
      %p308 = scmp.lt.s32.totalorder %s21, 1
      %s309 = scalar_select %p308, %s21, 1
      %p310 = scmp.lt.s32.totalorder %s22, 0
      %s311 = scalar_select %p310, %s22, 0
      %s312 = smul.addr %s311, 4
      %s313 = smul.addr %s309, 4
      %s314 = sadd.s32 %s312, %s313
      %s315 = smul.addr %s314, 8
      %s316 = scalar_lea.vmem %s1, %s315
      %s317 = smul.u32 16, %s22
      %p318 = scmp.lt.s32.totalorder %s21, 1
      %s319 = scalar_select %p318, %s21, 1
      %p320 = scmp.lt.s32.totalorder %s317, 15
      %s321 = scalar_select %p320, %s317, 15
      %s322 = smul.addr %s321, 2
      %s323 = smul.addr %s319, 32
      %s324 = sadd.s32 %s322, %s323
      %s325 = smul.addr %s324, 4
      %s326 = scalar_lea.vmem %s3, %s325
      %s327 = smul.u32 16, %s22
      %p328 = scmp.lt.s32.totalorder %s21, 1
      %s329 = scalar_select %p328, %s21, 1
      %p330 = scmp.lt.s32.totalorder %s22, 0
      %s331 = scalar_select %p330, %s22, 0
      %s332 = smul.addr %s331, 8
      %s333 = smul.addr %s329, 8
      %s334 = sadd.s32 %s332, %s333
      %s335 = smul.addr %s334, 4
      %s336 = scalar_lea.vmem %s4, %s335
      %p337 = scmp.lt.s32.totalorder %s21, 1
      %s338 = scalar_select %p337, %s21, 1
      %p339 = scmp.lt.s32.totalorder %s22, 0
      %s340 = scalar_select %p339, %s22, 0
      %s341 = sadd.s32 %s340, %s338
      %s342 = smul.addr %s341, 2
      %s343 = scalar_lea.vmem %s5, %s342
      %v345 = vld [vmem:[%s306] sm:$0xff]
      %v346 = vld [vmem:[%s306 + $0x8] sm:$0xff]
      %v347 = vld [vmem:[%s306 + $0x10] sm:$0xff]
      %v348 = vld [vmem:[%s306 + $0x18] sm:$0xff]
      %v349 = vld [vmem:[%s306 + $0x20] sm:$0xff]
      %v350 = vld [vmem:[%s306 + $0x28] sm:$0xff]
      %v351 = vld [vmem:[%s306 + $0x30] sm:$0xff]
      %v352 = vld [vmem:[%s306 + $0x38] sm:$0xff]
      %v353 = vld [vmem:[%s306 + $0x40] sm:$0xff]
      %v354 = vld [vmem:[%s306 + $0x48] sm:$0xff]
      %v355 = vld [vmem:[%s306 + $0x50] sm:$0xff]
      %v356 = vld [vmem:[%s306 + $0x58] sm:$0xff]
      %v357 = vld [vmem:[%s306 + $0x60] sm:$0xff]
      %v358 = vld [vmem:[%s306 + $0x68] sm:$0xff]
      %v359 = vld [vmem:[%s306 + $0x70] sm:$0xff]
      %v360 = vld [vmem:[%s306 + $0x78] sm:$0xff]
      %v361 = vld [vmem:[%s306 + $0x80] sm:$0xff]
      %v362 = vld [vmem:[%s306 + $0x88] sm:$0xff]
      %v363 = vld [vmem:[%s306 + $0x90] sm:$0xff]
      %v364 = vld [vmem:[%s306 + $0x98] sm:$0xff]
      %v365 = vld [vmem:[%s306 + $0xa0] sm:$0xff]
      %v366 = vld [vmem:[%s306 + $0xa8] sm:$0xff]
      %v367 = vld [vmem:[%s306 + $0xb0] sm:$0xff]
      %v368 = vld [vmem:[%s306 + $0xb8] sm:$0xff]
      %v369 = vld [vmem:[%s306 + $0xc0] sm:$0xff]
      %v370 = vld [vmem:[%s306 + $0xc8] sm:$0xff]
      %v371 = vld [vmem:[%s306 + $0xd0] sm:$0xff]
      %v372 = vld [vmem:[%s306 + $0xd8] sm:$0xff]
      %v373 = vld [vmem:[%s306 + $0xe0] sm:$0xff]
      %v374 = vld [vmem:[%s306 + $0xe8] sm:$0xff]
      %v375 = vld [vmem:[%s306 + $0xf0] sm:$0xff]
      %v376 = vld [vmem:[%s306 + $0xf8] sm:$0xff]
      %v377 = vld [vmem:[%s316] sm:$0xff]
      %v378 = vld [vmem:[%s316 + $0x8] sm:$0xff]
      %v379 = vld [vmem:[%s316 + $0x10] sm:$0xff]
      %v380 = vld [vmem:[%s316 + $0x18] sm:$0xff]
      %s381 = scalar_lea.vmem [#allocation2], 24
      %vm382 = vcmask 31744
      %383 = vst.msk [vmem:[%s381 + $0x1] sm:$0xff] %vm382, %v345
      %384 = vst.msk [vmem:[%s381 + $0x9] sm:$0xff] %vm382, %v346
      %385 = vst.msk [vmem:[%s381 + $0x19] sm:$0xff] %vm382, %v347
      %386 = vst.msk [vmem:[%s381 + $0x21] sm:$0xff] %vm382, %v348
      %387 = vst.msk [vmem:[%s381 + $0x31] sm:$0xff] %vm382, %v349
      %388 = vst.msk [vmem:[%s381 + $0x39] sm:$0xff] %vm382, %v350
      %389 = vst.msk [vmem:[%s381 + $0x49] sm:$0xff] %vm382, %v351
      %390 = vst.msk [vmem:[%s381 + $0x51] sm:$0xff] %vm382, %v352
      %391 = vst.msk [vmem:[%s381 + $0x61] sm:$0xff] %vm382, %v353
      %392 = vst.msk [vmem:[%s381 + $0x69] sm:$0xff] %vm382, %v354
      %393 = vst.msk [vmem:[%s381 + $0x79] sm:$0xff] %vm382, %v355
      %394 = vst.msk [vmem:[%s381 + $0x81] sm:$0xff] %vm382, %v356
      %395 = vst.msk [vmem:[%s381 + $0x91] sm:$0xff] %vm382, %v357
      %396 = vst.msk [vmem:[%s381 + $0x99] sm:$0xff] %vm382, %v358
      %397 = vst.msk [vmem:[%s381 + $0xa9] sm:$0xff] %vm382, %v359
      %398 = vst.msk [vmem:[%s381 + $0xb1] sm:$0xff] %vm382, %v360
      %399 = vst.msk [vmem:[%s381 + $0xc1] sm:$0xff] %vm382, %v361
      %400 = vst.msk [vmem:[%s381 + $0xc9] sm:$0xff] %vm382, %v362
      %401 = vst.msk [vmem:[%s381 + $0xd9] sm:$0xff] %vm382, %v363
      %402 = vst.msk [vmem:[%s381 + $0xe1] sm:$0xff] %vm382, %v364
      %403 = vst.msk [vmem:[%s381 + $0xf1] sm:$0xff] %vm382, %v365
      %404 = vst.msk [vmem:[%s381 + $0xf9] sm:$0xff] %vm382, %v366
      %405 = vst.msk [vmem:[%s381 + $0x109] sm:$0xff] %vm382, %v367
      %406 = vst.msk [vmem:[%s381 + $0x111] sm:$0xff] %vm382, %v368
      %407 = vst.msk [vmem:[%s381 + $0x121] sm:$0xff] %vm382, %v369
      %408 = vst.msk [vmem:[%s381 + $0x129] sm:$0xff] %vm382, %v370
      %409 = vst.msk [vmem:[%s381 + $0x139] sm:$0xff] %vm382, %v371
      %410 = vst.msk [vmem:[%s381 + $0x141] sm:$0xff] %vm382, %v372
      %411 = vst.msk [vmem:[%s381 + $0x151] sm:$0xff] %vm382, %v373
      %412 = vst.msk [vmem:[%s381 + $0x159] sm:$0xff] %vm382, %v374
      %413 = vst.msk [vmem:[%s381 + $0x169] sm:$0xff] %vm382, %v375
      %414 = vst.msk [vmem:[%s381 + $0x171] sm:$0xff] %vm382, %v376
      %415 = vst.msk [vmem:[#allocation2 + $0x1] sm:$0xff] %vm382, %v377
      %416 = vst.msk [vmem:[#allocation2 + $0x9] sm:$0xff] %vm382, %v378
      %s417 = scalar_lea.vmem [#allocation2], 408
      %418 = vst.msk [vmem:[%s417 + $0x1] sm:$0xff] %vm382, %v379
      %419 = vst.msk [vmem:[%s417 + $0x9] sm:$0xff] %vm382, %v380
      %v420 = vld [vmem:[#allocation2 + $0x2] sm:$0x1]
      %v421 = vld [vmem:[#allocation2 + $0x1a] sm:$0x1]
      %v422 = vld [vmem:[#allocation2 + $0x32] sm:$0x1]
      %v423 = vld [vmem:[#allocation2 + $0x4a] sm:$0x1]
      %v424 = vld [vmem:[#allocation2 + $0x62] sm:$0x1]
      %v425 = vld [vmem:[#allocation2 + $0x7a] sm:$0x1]
      %v426 = vld [vmem:[#allocation2 + $0x92] sm:$0x1]
      %v427 = vld [vmem:[#allocation2 + $0xaa] sm:$0x1]
      %v428 = vld [vmem:[#allocation2 + $0xc2] sm:$0x1]
      %v429 = vld [vmem:[#allocation2 + $0xda] sm:$0x1]
      %v430 = vld [vmem:[#allocation2 + $0xf2] sm:$0x1]
      %v431 = vld [vmem:[#allocation2 + $0x10a] sm:$0x1]
      %v432 = vld [vmem:[#allocation2 + $0x122] sm:$0x1]
      %v433 = vld [vmem:[#allocation2 + $0x13a] sm:$0x1]
      %v434 = vld [vmem:[#allocation2 + $0x152] sm:$0x1]
      %v435 = vld [vmem:[#allocation2 + $0x16a] sm:$0x1]
      %v436 = vld [vmem:[#allocation2 + $0x182] sm:$0x1]
      %v437 = vld [vmem:[#allocation2 + $0x19a] sm:$0x1]
      %vm438 = vcmask 24576
      %439 = vst.msk [vmem:[#allocation2] sm:$0x1] %vm438, %v420
      %440 = vst.msk [vmem:[#allocation2 + $0x18] sm:$0x1] %vm438, %v421
      %441 = vst.msk [vmem:[#allocation2 + $0x30] sm:$0x1] %vm438, %v422
      %442 = vst.msk [vmem:[#allocation2 + $0x48] sm:$0x1] %vm438, %v423
      %443 = vst.msk [vmem:[#allocation2 + $0x60] sm:$0x1] %vm438, %v424
      %444 = vst.msk [vmem:[#allocation2 + $0x78] sm:$0x1] %vm438, %v425
      %445 = vst.msk [vmem:[#allocation2 + $0x90] sm:$0x1] %vm438, %v426
      %446 = vst.msk [vmem:[#allocation2 + $0xa8] sm:$0x1] %vm438, %v427
      %447 = vst.msk [vmem:[#allocation2 + $0xc0] sm:$0x1] %vm438, %v428
      %448 = vst.msk [vmem:[#allocation2 + $0xd8] sm:$0x1] %vm438, %v429
      %449 = vst.msk [vmem:[#allocation2 + $0xf0] sm:$0x1] %vm438, %v430
      %450 = vst.msk [vmem:[#allocation2 + $0x108] sm:$0x1] %vm438, %v431
      %451 = vst.msk [vmem:[#allocation2 + $0x120] sm:$0x1] %vm438, %v432
      %452 = vst.msk [vmem:[#allocation2 + $0x138] sm:$0x1] %vm438, %v433
      %453 = vst.msk [vmem:[#allocation2 + $0x150] sm:$0x1] %vm438, %v434
      %454 = vst.msk [vmem:[#allocation2 + $0x168] sm:$0x1] %vm438, %v435
      %455 = vst.msk [vmem:[#allocation2 + $0x180] sm:$0x1] %vm438, %v436
      %456 = vst.msk [vmem:[#allocation2 + $0x198] sm:$0x1] %vm438, %v437
      %v457 = vld [vmem:[#allocation2 + $0xf] sm:$0x1]
      %v458 = vld [vmem:[#allocation2 + $0x27] sm:$0x1]
      %v459 = vld [vmem:[#allocation2 + $0x3f] sm:$0x1]
      %v460 = vld [vmem:[#allocation2 + $0x57] sm:$0x1]
      %v461 = vld [vmem:[#allocation2 + $0x6f] sm:$0x1]
      %v462 = vld [vmem:[#allocation2 + $0x87] sm:$0x1]
      %v463 = vld [vmem:[#allocation2 + $0x9f] sm:$0x1]
      %v464 = vld [vmem:[#allocation2 + $0xb7] sm:$0x1]
      %v465 = vld [vmem:[#allocation2 + $0xcf] sm:$0x1]
      %v466 = vld [vmem:[#allocation2 + $0xe7] sm:$0x1]
      %v467 = vld [vmem:[#allocation2 + $0xff] sm:$0x1]
      %v468 = vld [vmem:[#allocation2 + $0x117] sm:$0x1]
      %v469 = vld [vmem:[#allocation2 + $0x12f] sm:$0x1]
      %v470 = vld [vmem:[#allocation2 + $0x147] sm:$0x1]
      %v471 = vld [vmem:[#allocation2 + $0x15f] sm:$0x1]
      %v472 = vld [vmem:[#allocation2 + $0x177] sm:$0x1]
      %v473 = vld [vmem:[#allocation2 + $0x18f] sm:$0x1]
      %v474 = vld [vmem:[#allocation2 + $0x1a7] sm:$0x1]
      %475 = vst.msk [vmem:[#allocation2 + $0x11] sm:$0x1] %vm438, %v457
      %476 = vst.msk [vmem:[#allocation2 + $0x29] sm:$0x1] %vm438, %v458
      %477 = vst.msk [vmem:[#allocation2 + $0x41] sm:$0x1] %vm438, %v459
      %478 = vst.msk [vmem:[#allocation2 + $0x59] sm:$0x1] %vm438, %v460
      %479 = vst.msk [vmem:[#allocation2 + $0x71] sm:$0x1] %vm438, %v461
      %480 = vst.msk [vmem:[#allocation2 + $0x89] sm:$0x1] %vm438, %v462
      %481 = vst.msk [vmem:[#allocation2 + $0xa1] sm:$0x1] %vm438, %v463
      %482 = vst.msk [vmem:[#allocation2 + $0xb9] sm:$0x1] %vm438, %v464
      %483 = vst.msk [vmem:[#allocation2 + $0xd1] sm:$0x1] %vm438, %v465
      %484 = vst.msk [vmem:[#allocation2 + $0xe9] sm:$0x1] %vm438, %v466
      %485 = vst.msk [vmem:[#allocation2 + $0x101] sm:$0x1] %vm438, %v467
      %486 = vst.msk [vmem:[#allocation2 + $0x119] sm:$0x1] %vm438, %v468
      %487 = vst.msk [vmem:[#allocation2 + $0x131] sm:$0x1] %vm438, %v469
      %488 = vst.msk [vmem:[#allocation2 + $0x149] sm:$0x1] %vm438, %v470
      %489 = vst.msk [vmem:[#allocation2 + $0x161] sm:$0x1] %vm438, %v471
      %490 = vst.msk [vmem:[#allocation2 + $0x179] sm:$0x1] %vm438, %v472
      %491 = vst.msk [vmem:[#allocation2 + $0x191] sm:$0x1] %vm438, %v473
      %492 = vst.msk [vmem:[#allocation2 + $0x1a9] sm:$0x1] %vm438, %v474
      %v493 = vld [vmem:[#allocation2] sm:$0xff]
      %v494 = vld [vmem:[#allocation2 + $0x8] sm:$0xff]
      %v495 = vld [vmem:[#allocation2 + $0x18] sm:$0xff]
      %v496 = vld [vmem:[#allocation2 + $0x20] sm:$0xff]
      %v497 = vld [vmem:[#allocation2 + $0x30] sm:$0xff]
      %v498 = vld [vmem:[#allocation2 + $0x38] sm:$0xff]
      %v499 = vld [vmem:[#allocation2 + $0x48] sm:$0xff]
      %v500 = vld [vmem:[#allocation2 + $0x50] sm:$0xff]
      %v501 = vld [vmem:[#allocation2 + $0x60] sm:$0xff]
      %v502 = vld [vmem:[#allocation2 + $0x68] sm:$0xff]
      %v503 = vld [vmem:[#allocation2 + $0x78] sm:$0xff]
      %v504 = vld [vmem:[#allocation2 + $0x80] sm:$0xff]
      %v505 = vld [vmem:[#allocation2 + $0x90] sm:$0xff]
      %v506 = vld [vmem:[#allocation2 + $0x98] sm:$0xff]
      %v507 = vld [vmem:[#allocation2 + $0xa8] sm:$0xff]
      %v508 = vld [vmem:[#allocation2 + $0xb0] sm:$0xff]
      %v509 = vld [vmem:[#allocation2 + $0xc0] sm:$0xff]
      %v510 = vld [vmem:[#allocation2 + $0xc8] sm:$0xff]
      %v511 = vld [vmem:[#allocation2 + $0xd8] sm:$0xff]
      %v512 = vld [vmem:[#allocation2 + $0xe0] sm:$0xff]
      %v513 = vld [vmem:[#allocation2 + $0xf0] sm:$0xff]
      %v514 = vld [vmem:[#allocation2 + $0xf8] sm:$0xff]
      %v515 = vld [vmem:[#allocation2 + $0x108] sm:$0xff]
      %v516 = vld [vmem:[#allocation2 + $0x110] sm:$0xff]
      %v517 = vld [vmem:[#allocation2 + $0x120] sm:$0xff]
      %v518 = vld [vmem:[#allocation2 + $0x128] sm:$0xff]
      %v519 = vld [vmem:[#allocation2 + $0x138] sm:$0xff]
      %v520 = vld [vmem:[#allocation2 + $0x140] sm:$0xff]
      %v521 = vld [vmem:[#allocation2 + $0x150] sm:$0xff]
      %v522 = vld [vmem:[#allocation2 + $0x158] sm:$0xff]
      %v523 = vld [vmem:[#allocation2 + $0x168] sm:$0xff]
      %v524 = vld [vmem:[#allocation2 + $0x170] sm:$0xff]
      %v525 = vpack.c.bf16 %v493, %v493
      %v526 = vpack.c.bf16 %v494, %v494
      %v527 = vpack.c.bf16 %v495, %v495
      %v528 = vpack.c.bf16 %v496, %v496
      %v529 = vpack.c.bf16 %v497, %v497
      %v530 = vpack.c.bf16 %v498, %v498
      %v531 = vpack.c.bf16 %v499, %v499
      %v532 = vpack.c.bf16 %v500, %v500
      %v533 = vpack.c.bf16 %v501, %v501
      %v534 = vpack.c.bf16 %v502, %v502
      %v535 = vpack.c.bf16 %v503, %v503
      %v536 = vpack.c.bf16 %v504, %v504
      %v537 = vpack.c.bf16 %v505, %v505
      %v538 = vpack.c.bf16 %v506, %v506
      %v539 = vpack.c.bf16 %v507, %v507
      %v540 = vpack.c.bf16 %v508, %v508
      %v541 = vpack.c.bf16 %v509, %v509
      %v542 = vpack.c.bf16 %v510, %v510
      %v543 = vpack.c.bf16 %v511, %v511
      %v544 = vpack.c.bf16 %v512, %v512
      %v545 = vpack.c.bf16 %v513, %v513
      %v546 = vpack.c.bf16 %v514, %v514
      %v547 = vpack.c.bf16 %v515, %v515
      %v548 = vpack.c.bf16 %v516, %v516
      %v549 = vpack.c.bf16 %v517, %v517
      %v550 = vpack.c.bf16 %v518, %v518
      %v551 = vpack.c.bf16 %v519, %v519
      %v552 = vpack.c.bf16 %v520, %v520
      %v553 = vpack.c.bf16 %v521, %v521
      %v554 = vpack.c.bf16 %v522, %v522
      %v555 = vpack.c.bf16 %v523, %v523
      %v556 = vpack.c.bf16 %v524, %v524
      %v557 = vld [vmem:[%s2] sm:$0x3]
      %v558 = vld [vmem:[#allocation2 + $0x1] sm:$0xff]
      %v559 = vld [vmem:[#allocation2 + $0x9] sm:$0xff]
      %v560 = vld [vmem:[#allocation2 + $0x19] sm:$0xff]
      %v561 = vld [vmem:[#allocation2 + $0x21] sm:$0xff]
      %v562 = vld [vmem:[#allocation2 + $0x31] sm:$0xff]
      %v563 = vld [vmem:[#allocation2 + $0x39] sm:$0xff]
      %v564 = vld [vmem:[#allocation2 + $0x49] sm:$0xff]
      %v565 = vld [vmem:[#allocation2 + $0x51] sm:$0xff]
      %v566 = vld [vmem:[#allocation2 + $0x61] sm:$0xff]
      %v567 = vld [vmem:[#allocation2 + $0x69] sm:$0xff]
      %v568 = vld [vmem:[#allocation2 + $0x79] sm:$0xff]
      %v569 = vld [vmem:[#allocation2 + $0x81] sm:$0xff]
      %v570 = vld [vmem:[#allocation2 + $0x91] sm:$0xff]
      %v571 = vld [vmem:[#allocation2 + $0x99] sm:$0xff]
      %v572 = vld [vmem:[#allocation2 + $0xa9] sm:$0xff]
      %v573 = vld [vmem:[#allocation2 + $0xb1] sm:$0xff]
      %v574 = vld [vmem:[#allocation2 + $0xc1] sm:$0xff]
      %v575 = vld [vmem:[#allocation2 + $0xc9] sm:$0xff]
      %v576 = vld [vmem:[#allocation2 + $0xd9] sm:$0xff]
      %v577 = vld [vmem:[#allocation2 + $0xe1] sm:$0xff]
      %v578 = vld [vmem:[#allocation2 + $0xf1] sm:$0xff]
      %v579 = vld [vmem:[#allocation2 + $0xf9] sm:$0xff]
      %v580 = vld [vmem:[#allocation2 + $0x109] sm:$0xff]
      %v581 = vld [vmem:[#allocation2 + $0x111] sm:$0xff]
      %v582 = vld [vmem:[#allocation2 + $0x121] sm:$0xff]
      %v583 = vld [vmem:[#allocation2 + $0x129] sm:$0xff]
      %v584 = vld [vmem:[#allocation2 + $0x139] sm:$0xff]
      %v585 = vld [vmem:[#allocation2 + $0x141] sm:$0xff]
      %v586 = vld [vmem:[#allocation2 + $0x151] sm:$0xff]
      %v587 = vld [vmem:[#allocation2 + $0x159] sm:$0xff]
      %v588 = vld [vmem:[#allocation2 + $0x169] sm:$0xff]
      %v589 = vld [vmem:[#allocation2 + $0x171] sm:$0xff]
      %v590 = vpack.c.bf16 %v558, %v558
      %v591 = vpack.c.bf16 %v559, %v559
      %v592 = vpack.c.bf16 %v560, %v560
      %v593 = vpack.c.bf16 %v561, %v561
      %v594 = vpack.c.bf16 %v562, %v562
      %v595 = vpack.c.bf16 %v563, %v563
      %v596 = vpack.c.bf16 %v564, %v564
      %v597 = vpack.c.bf16 %v565, %v565
      %v598 = vpack.c.bf16 %v566, %v566
      %v599 = vpack.c.bf16 %v567, %v567
      %v600 = vpack.c.bf16 %v568, %v568
      %v601 = vpack.c.bf16 %v569, %v569
      %v602 = vpack.c.bf16 %v570, %v570
      %v603 = vpack.c.bf16 %v571, %v571
      %v604 = vpack.c.bf16 %v572, %v572
      %v605 = vpack.c.bf16 %v573, %v573
      %v606 = vpack.c.bf16 %v574, %v574
      %v607 = vpack.c.bf16 %v575, %v575
      %v608 = vpack.c.bf16 %v576, %v576
      %v609 = vpack.c.bf16 %v577, %v577
      %v610 = vpack.c.bf16 %v578, %v578
      %v611 = vpack.c.bf16 %v579, %v579
      %v612 = vpack.c.bf16 %v580, %v580
      %v613 = vpack.c.bf16 %v581, %v581
      %v614 = vpack.c.bf16 %v582, %v582
      %v615 = vpack.c.bf16 %v583, %v583
      %v616 = vpack.c.bf16 %v584, %v584
      %v617 = vpack.c.bf16 %v585, %v585
      %v618 = vpack.c.bf16 %v586, %v586
      %v619 = vpack.c.bf16 %v587, %v587
      %v620 = vpack.c.bf16 %v588, %v588
      %v621 = vpack.c.bf16 %v589, %v589
      %s622 = scalar_lea.vmem %s2, 2
      %v623 = vld [vmem:[%s622] sm:$0x3]
      %v656 = vunpack.c.l.b16 %v590
      %v657 = vunpack.c.l.b16 %v591
      %v658 = vunpack.c.l.b16 %v592
      %v659 = vunpack.c.l.b16 %v593
      %v660 = vunpack.c.l.b16 %v594
      %v661 = vunpack.c.l.b16 %v595
      %v662 = vunpack.c.l.b16 %v596
      %v663 = vunpack.c.l.b16 %v597
      %v664 = vunpack.c.l.b16 %v598
      %v665 = vunpack.c.l.b16 %v599
      %v666 = vunpack.c.l.b16 %v600
      %v667 = vunpack.c.l.b16 %v601
      %v668 = vunpack.c.l.b16 %v602
      %v669 = vunpack.c.l.b16 %v603
      %v670 = vunpack.c.l.b16 %v604
      %v671 = vunpack.c.l.b16 %v605
      %v672 = vunpack.c.l.b16 %v606
      %v673 = vunpack.c.l.b16 %v607
      %v674 = vunpack.c.l.b16 %v608
      %v675 = vunpack.c.l.b16 %v609
      %v676 = vunpack.c.l.b16 %v610
      %v677 = vunpack.c.l.b16 %v611
      %v678 = vunpack.c.l.b16 %v612
      %v679 = vunpack.c.l.b16 %v613
      %v680 = vunpack.c.l.b16 %v614
      %v681 = vunpack.c.l.b16 %v615
      %v682 = vunpack.c.l.b16 %v616
      %v683 = vunpack.c.l.b16 %v617
      %v684 = vunpack.c.l.b16 %v618
      %v685 = vunpack.c.l.b16 %v619
      %v686 = vunpack.c.l.b16 %v620
      %v687 = vunpack.c.l.b16 %v621
      %v688 = vpack.c.b16 %v657, %v656
      %v689 = vpack.c.b16 %v659, %v658
      %v690 = vpack.c.b16 %v661, %v660
      %v691 = vpack.c.b16 %v663, %v662
      %v692 = vpack.c.b16 %v665, %v664
      %v693 = vpack.c.b16 %v667, %v666
      %v694 = vpack.c.b16 %v669, %v668
      %v695 = vpack.c.b16 %v671, %v670
      %v696 = vpack.c.b16 %v673, %v672
      %v697 = vpack.c.b16 %v675, %v674
      %v698 = vpack.c.b16 %v677, %v676
      %v699 = vpack.c.b16 %v679, %v678
      %v700 = vpack.c.b16 %v681, %v680
      %v701 = vpack.c.b16 %v683, %v682
      %v702 = vpack.c.b16 %v685, %v684
      %v703 = vpack.c.b16 %v687, %v686
      %v705 = vsel %vm382, %v688, 0
      %v708 = vsel %vm382, %v689, 0
      %v711 = vsel %vm382, %v690, 0
      %v714 = vsel %vm382, %v691, 0
      %v717 = vsel %vm382, %v692, 0
      %v720 = vsel %vm382, %v693, 0
      %v723 = vsel %vm382, %v694, 0
      %v726 = vsel %vm382, %v695, 0
      %v729 = vsel %vm382, %v696, 0
      %v732 = vsel %vm382, %v697, 0
      %v735 = vsel %vm382, %v698, 0
      %v738 = vsel %vm382, %v699, 0
      %v741 = vsel %vm382, %v700, 0
      %v744 = vsel %vm382, %v701, 0
      %v747 = vsel %vm382, %v702, 0
      %v750 = vsel %vm382, %v703, 0
      %vm752 = vcmask 1041408
      %v754 = vsel %vm752, %v623, 0
      %756 = vmatpush.bf16.msra.mxu0 0
      %757 = vmatpush.bf16.msra.mxu0 0
      %758 = vmatpush.bf16.msra.mxu0 0
      %759 = vmatpush.bf16.msra.mxu0 0
      %760 = vmatpush.bf16.msra.mxu0 0
      %761 = vmatpush.bf16.msra.mxu0 0
      %762 = vmatpush.bf16.msra.mxu0 0
      %763 = vmatpush.bf16.msra.mxu0 %v754
      %764 = vmatmul.bf16.gmra.mxu0 %v705
      %v765 = vpop.f32.mrf.mxu0
      %v766 = vadd.f32 0.0, %v765
      %v767 = vpop.f32.mrf.mxu0
      %v768 = vadd.f32 0.0, %v767
      %769 = vmatmul.bf16.gmra.mxu0 %v708
      %v770 = vpop.f32.mrf.mxu0
      %v771 = vadd.f32 0.0, %v770
      %v772 = vpop.f32.mrf.mxu0
      %v773 = vadd.f32 0.0, %v772
      %774 = vmatmul.bf16.gmra.mxu0 %v711
      %v775 = vpop.f32.mrf.mxu0
      %v776 = vadd.f32 0.0, %v775
      %v777 = vpop.f32.mrf.mxu0
      %v778 = vadd.f32 0.0, %v777
      %779 = vmatmul.bf16.gmra.mxu0 %v714
      %v780 = vpop.f32.mrf.mxu0
      %v781 = vadd.f32 0.0, %v780
      %v782 = vpop.f32.mrf.mxu0
      %v783 = vadd.f32 0.0, %v782
      %784 = vmatmul.bf16.gmra.mxu0 %v717
      %v785 = vpop.f32.mrf.mxu0
      %v786 = vadd.f32 0.0, %v785
      %v787 = vpop.f32.mrf.mxu0
      %v788 = vadd.f32 0.0, %v787
      %789 = vmatmul.bf16.gmra.mxu0 %v720
      %v790 = vpop.f32.mrf.mxu0
      %v791 = vadd.f32 0.0, %v790
      %v792 = vpop.f32.mrf.mxu0
      %v793 = vadd.f32 0.0, %v792
      %794 = vmatmul.bf16.gmra.mxu0 %v723
      %v795 = vpop.f32.mrf.mxu0
      %v796 = vadd.f32 0.0, %v795
      %v797 = vpop.f32.mrf.mxu0
      %v798 = vadd.f32 0.0, %v797
      %799 = vmatmul.bf16.gmra.mxu0 %v726
      %v800 = vpop.f32.mrf.mxu0
      %v801 = vadd.f32 0.0, %v800
      %v802 = vpop.f32.mrf.mxu0
      %v803 = vadd.f32 0.0, %v802
      %804 = vmatmul.bf16.gmra.mxu0 %v729
      %v805 = vpop.f32.mrf.mxu0
      %v806 = vadd.f32 0.0, %v805
      %v807 = vpop.f32.mrf.mxu0
      %v808 = vadd.f32 0.0, %v807
      %809 = vmatmul.bf16.gmra.mxu0 %v732
      %v810 = vpop.f32.mrf.mxu0
      %v811 = vadd.f32 0.0, %v810
      %v812 = vpop.f32.mrf.mxu0
      %v813 = vadd.f32 0.0, %v812
      %814 = vmatmul.bf16.gmra.mxu0 %v735
      %v815 = vpop.f32.mrf.mxu0
      %v816 = vadd.f32 0.0, %v815
      %v817 = vpop.f32.mrf.mxu0
      %v818 = vadd.f32 0.0, %v817
      %819 = vmatmul.bf16.gmra.mxu0 %v738
      %v820 = vpop.f32.mrf.mxu0
      %v821 = vadd.f32 0.0, %v820
      %v822 = vpop.f32.mrf.mxu0
      %v823 = vadd.f32 0.0, %v822
      %824 = vmatmul.bf16.gmra.mxu0 %v741
      %v825 = vpop.f32.mrf.mxu0
      %v826 = vadd.f32 0.0, %v825
      %v827 = vpop.f32.mrf.mxu0
      %v828 = vadd.f32 0.0, %v827
      %829 = vmatmul.bf16.gmra.mxu0 %v744
      %v830 = vpop.f32.mrf.mxu0
      %v831 = vadd.f32 0.0, %v830
      %v832 = vpop.f32.mrf.mxu0
      %v833 = vadd.f32 0.0, %v832
      %834 = vmatmul.bf16.gmra.mxu0 %v747
      %v835 = vpop.f32.mrf.mxu0
      %v836 = vadd.f32 0.0, %v835
      %v837 = vpop.f32.mrf.mxu0
      %v838 = vadd.f32 0.0, %v837
      %839 = vmatmul.bf16.gmra.mxu0 %v750
      %v840 = vpop.f32.mrf.mxu0
      %v841 = vadd.f32 0.0, %v840
      %v842 = vpop.f32.mrf.mxu0
      %v843 = vadd.f32 0.0, %v842
      %844 = vdwg.mxu0
      %v877 = vunpack.c.l.b16 %v525
      %v878 = vunpack.c.l.b16 %v526
      %v879 = vunpack.c.l.b16 %v527
      %v880 = vunpack.c.l.b16 %v528
      %v881 = vunpack.c.l.b16 %v529
      %v882 = vunpack.c.l.b16 %v530
      %v883 = vunpack.c.l.b16 %v531
      %v884 = vunpack.c.l.b16 %v532
      %v885 = vunpack.c.l.b16 %v533
      %v886 = vunpack.c.l.b16 %v534
      %v887 = vunpack.c.l.b16 %v535
      %v888 = vunpack.c.l.b16 %v536
      %v889 = vunpack.c.l.b16 %v537
      %v890 = vunpack.c.l.b16 %v538
      %v891 = vunpack.c.l.b16 %v539
      %v892 = vunpack.c.l.b16 %v540
      %v893 = vunpack.c.l.b16 %v541
      %v894 = vunpack.c.l.b16 %v542
      %v895 = vunpack.c.l.b16 %v543
      %v896 = vunpack.c.l.b16 %v544
      %v897 = vunpack.c.l.b16 %v545
      %v898 = vunpack.c.l.b16 %v546
      %v899 = vunpack.c.l.b16 %v547
      %v900 = vunpack.c.l.b16 %v548
      %v901 = vunpack.c.l.b16 %v549
      %v902 = vunpack.c.l.b16 %v550
      %v903 = vunpack.c.l.b16 %v551
      %v904 = vunpack.c.l.b16 %v552
      %v905 = vunpack.c.l.b16 %v553
      %v906 = vunpack.c.l.b16 %v554
      %v907 = vunpack.c.l.b16 %v555
      %v908 = vunpack.c.l.b16 %v556
      %v909 = vpack.c.b16 %v878, %v877
      %v910 = vpack.c.b16 %v880, %v879
      %v911 = vpack.c.b16 %v882, %v881
      %v912 = vpack.c.b16 %v884, %v883
      %v913 = vpack.c.b16 %v886, %v885
      %v914 = vpack.c.b16 %v888, %v887
      %v915 = vpack.c.b16 %v890, %v889
      %v916 = vpack.c.b16 %v892, %v891
      %v917 = vpack.c.b16 %v894, %v893
      %v918 = vpack.c.b16 %v896, %v895
      %v919 = vpack.c.b16 %v898, %v897
      %v920 = vpack.c.b16 %v900, %v899
      %v921 = vpack.c.b16 %v902, %v901
      %v922 = vpack.c.b16 %v904, %v903
      %v923 = vpack.c.b16 %v906, %v905
      %v924 = vpack.c.b16 %v908, %v907
      %v926 = vsel %vm382, %v909, 0
      %v929 = vsel %vm382, %v910, 0
      %v932 = vsel %vm382, %v911, 0
      %v935 = vsel %vm382, %v912, 0
      %v938 = vsel %vm382, %v913, 0
      %v941 = vsel %vm382, %v914, 0
      %v944 = vsel %vm382, %v915, 0
      %v947 = vsel %vm382, %v916, 0
      %v950 = vsel %vm382, %v917, 0
      %v953 = vsel %vm382, %v918, 0
      %v956 = vsel %vm382, %v919, 0
      %v959 = vsel %vm382, %v920, 0
      %v962 = vsel %vm382, %v921, 0
      %v965 = vsel %vm382, %v922, 0
      %v968 = vsel %vm382, %v923, 0
      %v971 = vsel %vm382, %v924, 0
      %v974 = vsel %vm752, %v557, 0
      %976 = vmatpush.bf16.msra.mxu0 0
      %977 = vmatpush.bf16.msra.mxu0 0
      %978 = vmatpush.bf16.msra.mxu0 0
      %979 = vmatpush.bf16.msra.mxu0 0
      %980 = vmatpush.bf16.msra.mxu0 0
      %981 = vmatpush.bf16.msra.mxu0 0
      %982 = vmatpush.bf16.msra.mxu0 0
      %983 = vmatpush.bf16.msra.mxu0 %v974
      %984 = vmatmul.bf16.gmra.mxu0 %v926
      %v985 = vpop.f32.mrf.mxu0
      %v986 = vadd.f32 %v766, %v985
      %v987 = vpop.f32.mrf.mxu0
      %v988 = vadd.f32 %v768, %v987
      %989 = vmatmul.bf16.gmra.mxu0 %v929
      %v990 = vpop.f32.mrf.mxu0
      %v991 = vadd.f32 %v771, %v990
      %v992 = vpop.f32.mrf.mxu0
      %v993 = vadd.f32 %v773, %v992
      %994 = vmatmul.bf16.gmra.mxu0 %v932
      %v995 = vpop.f32.mrf.mxu0
      %v996 = vadd.f32 %v776, %v995
      %v997 = vpop.f32.mrf.mxu0
      %v998 = vadd.f32 %v778, %v997
      %999 = vmatmul.bf16.gmra.mxu0 %v935
      %v1000 = vpop.f32.mrf.mxu0
      %v1001 = vadd.f32 %v781, %v1000
      %v1002 = vpop.f32.mrf.mxu0
      %v1003 = vadd.f32 %v783, %v1002
      %1004 = vmatmul.bf16.gmra.mxu0 %v938
      %v1005 = vpop.f32.mrf.mxu0
      %v1006 = vadd.f32 %v786, %v1005
      %v1007 = vpop.f32.mrf.mxu0
      %v1008 = vadd.f32 %v788, %v1007
      %1009 = vmatmul.bf16.gmra.mxu0 %v941
      %v1010 = vpop.f32.mrf.mxu0
      %v1011 = vadd.f32 %v791, %v1010
      %v1012 = vpop.f32.mrf.mxu0
      %v1013 = vadd.f32 %v793, %v1012
      %1014 = vmatmul.bf16.gmra.mxu0 %v944
      %v1015 = vpop.f32.mrf.mxu0
      %v1016 = vadd.f32 %v796, %v1015
      %v1017 = vpop.f32.mrf.mxu0
      %v1018 = vadd.f32 %v798, %v1017
      %1019 = vmatmul.bf16.gmra.mxu0 %v947
      %v1020 = vpop.f32.mrf.mxu0
      %v1021 = vadd.f32 %v801, %v1020
      %v1022 = vpop.f32.mrf.mxu0
      %v1023 = vadd.f32 %v803, %v1022
      %1024 = vmatmul.bf16.gmra.mxu0 %v950
      %v1025 = vpop.f32.mrf.mxu0
      %v1026 = vadd.f32 %v806, %v1025
      %v1027 = vpop.f32.mrf.mxu0
      %v1028 = vadd.f32 %v808, %v1027
      %1029 = vmatmul.bf16.gmra.mxu0 %v953
      %v1030 = vpop.f32.mrf.mxu0
      %v1031 = vadd.f32 %v811, %v1030
      %v1032 = vpop.f32.mrf.mxu0
      %v1033 = vadd.f32 %v813, %v1032
      %1034 = vmatmul.bf16.gmra.mxu0 %v956
      %v1035 = vpop.f32.mrf.mxu0
      %v1036 = vadd.f32 %v816, %v1035
      %v1037 = vpop.f32.mrf.mxu0
      %v1038 = vadd.f32 %v818, %v1037
      %1039 = vmatmul.bf16.gmra.mxu0 %v959
      %v1040 = vpop.f32.mrf.mxu0
      %v1041 = vadd.f32 %v821, %v1040
      %v1042 = vpop.f32.mrf.mxu0
      %v1043 = vadd.f32 %v823, %v1042
      %1044 = vmatmul.bf16.gmra.mxu0 %v962
      %v1045 = vpop.f32.mrf.mxu0
      %v1046 = vadd.f32 %v826, %v1045
      %v1047 = vpop.f32.mrf.mxu0
      %v1048 = vadd.f32 %v828, %v1047
      %1049 = vmatmul.bf16.gmra.mxu0 %v965
      %v1050 = vpop.f32.mrf.mxu0
      %v1051 = vadd.f32 %v831, %v1050
      %v1052 = vpop.f32.mrf.mxu0
      %v1053 = vadd.f32 %v833, %v1052
      %1054 = vmatmul.bf16.gmra.mxu0 %v968
      %v1055 = vpop.f32.mrf.mxu0
      %v1056 = vadd.f32 %v836, %v1055
      %v1057 = vpop.f32.mrf.mxu0
      %v1058 = vadd.f32 %v838, %v1057
      %1059 = vmatmul.bf16.gmra.mxu0 %v971
      %v1060 = vpop.f32.mrf.mxu0
      %v1061 = vadd.f32 %v841, %v1060
      %v1062 = vpop.f32.mrf.mxu0
      %v1063 = vadd.f32 %v843, %v1062
      %1064 = vdwg.mxu0
      %v1065 = vld [vmem:[#allocation2 + $0x2] sm:$0xff]
      %v1066 = vld [vmem:[#allocation2 + $0xa] sm:$0xff]
      %v1067 = vld [vmem:[#allocation2 + $0x1a] sm:$0xff]
      %v1068 = vld [vmem:[#allocation2 + $0x22] sm:$0xff]
      %v1069 = vld [vmem:[#allocation2 + $0x32] sm:$0xff]
      %v1070 = vld [vmem:[#allocation2 + $0x3a] sm:$0xff]
      %v1071 = vld [vmem:[#allocation2 + $0x4a] sm:$0xff]
      %v1072 = vld [vmem:[#allocation2 + $0x52] sm:$0xff]
      %v1073 = vld [vmem:[#allocation2 + $0x62] sm:$0xff]
      %v1074 = vld [vmem:[#allocation2 + $0x6a] sm:$0xff]
      %v1075 = vld [vmem:[#allocation2 + $0x7a] sm:$0xff]
      %v1076 = vld [vmem:[#allocation2 + $0x82] sm:$0xff]
      %v1077 = vld [vmem:[#allocation2 + $0x92] sm:$0xff]
      %v1078 = vld [vmem:[#allocation2 + $0x9a] sm:$0xff]
      %v1079 = vld [vmem:[#allocation2 + $0xaa] sm:$0xff]
      %v1080 = vld [vmem:[#allocation2 + $0xb2] sm:$0xff]
      %v1081 = vld [vmem:[#allocation2 + $0xc2] sm:$0xff]
      %v1082 = vld [vmem:[#allocation2 + $0xca] sm:$0xff]
      %v1083 = vld [vmem:[#allocation2 + $0xda] sm:$0xff]
      %v1084 = vld [vmem:[#allocation2 + $0xe2] sm:$0xff]
      %v1085 = vld [vmem:[#allocation2 + $0xf2] sm:$0xff]
      %v1086 = vld [vmem:[#allocation2 + $0xfa] sm:$0xff]
      %v1087 = vld [vmem:[#allocation2 + $0x10a] sm:$0xff]
      %v1088 = vld [vmem:[#allocation2 + $0x112] sm:$0xff]
      %v1089 = vld [vmem:[#allocation2 + $0x122] sm:$0xff]
      %v1090 = vld [vmem:[#allocation2 + $0x12a] sm:$0xff]
      %v1091 = vld [vmem:[#allocation2 + $0x13a] sm:$0xff]
      %v1092 = vld [vmem:[#allocation2 + $0x142] sm:$0xff]
      %v1093 = vld [vmem:[#allocation2 + $0x152] sm:$0xff]
      %v1094 = vld [vmem:[#allocation2 + $0x15a] sm:$0xff]
      %v1095 = vld [vmem:[#allocation2 + $0x16a] sm:$0xff]
      %v1096 = vld [vmem:[#allocation2 + $0x172] sm:$0xff]
      %v1097 = vpack.c.bf16 %v1065, %v1065
      %v1098 = vpack.c.bf16 %v1066, %v1066
      %v1099 = vpack.c.bf16 %v1067, %v1067
      %v1100 = vpack.c.bf16 %v1068, %v1068
      %v1101 = vpack.c.bf16 %v1069, %v1069
      %v1102 = vpack.c.bf16 %v1070, %v1070
      %v1103 = vpack.c.bf16 %v1071, %v1071
      %v1104 = vpack.c.bf16 %v1072, %v1072
      %v1105 = vpack.c.bf16 %v1073, %v1073
      %v1106 = vpack.c.bf16 %v1074, %v1074
      %v1107 = vpack.c.bf16 %v1075, %v1075
      %v1108 = vpack.c.bf16 %v1076, %v1076
      %v1109 = vpack.c.bf16 %v1077, %v1077
      %v1110 = vpack.c.bf16 %v1078, %v1078
      %v1111 = vpack.c.bf16 %v1079, %v1079
      %v1112 = vpack.c.bf16 %v1080, %v1080
      %v1113 = vpack.c.bf16 %v1081, %v1081
      %v1114 = vpack.c.bf16 %v1082, %v1082
      %v1115 = vpack.c.bf16 %v1083, %v1083
      %v1116 = vpack.c.bf16 %v1084, %v1084
      %v1117 = vpack.c.bf16 %v1085, %v1085
      %v1118 = vpack.c.bf16 %v1086, %v1086
      %v1119 = vpack.c.bf16 %v1087, %v1087
      %v1120 = vpack.c.bf16 %v1088, %v1088
      %v1121 = vpack.c.bf16 %v1089, %v1089
      %v1122 = vpack.c.bf16 %v1090, %v1090
      %v1123 = vpack.c.bf16 %v1091, %v1091
      %v1124 = vpack.c.bf16 %v1092, %v1092
      %v1125 = vpack.c.bf16 %v1093, %v1093
      %v1126 = vpack.c.bf16 %v1094, %v1094
      %v1127 = vpack.c.bf16 %v1095, %v1095
      %v1128 = vpack.c.bf16 %v1096, %v1096
      %s1129 = scalar_lea.vmem %s2, 4
      %v1130 = vld [vmem:[%s1129] sm:$0x3]
      %v1163 = vunpack.c.l.b16 %v1097
      %v1164 = vunpack.c.l.b16 %v1098
      %v1165 = vunpack.c.l.b16 %v1099
      %v1166 = vunpack.c.l.b16 %v1100
      %v1167 = vunpack.c.l.b16 %v1101
      %v1168 = vunpack.c.l.b16 %v1102
      %v1169 = vunpack.c.l.b16 %v1103
      %v1170 = vunpack.c.l.b16 %v1104
      %v1171 = vunpack.c.l.b16 %v1105
      %v1172 = vunpack.c.l.b16 %v1106
      %v1173 = vunpack.c.l.b16 %v1107
      %v1174 = vunpack.c.l.b16 %v1108
      %v1175 = vunpack.c.l.b16 %v1109
      %v1176 = vunpack.c.l.b16 %v1110
      %v1177 = vunpack.c.l.b16 %v1111
      %v1178 = vunpack.c.l.b16 %v1112
      %v1179 = vunpack.c.l.b16 %v1113
      %v1180 = vunpack.c.l.b16 %v1114
      %v1181 = vunpack.c.l.b16 %v1115
      %v1182 = vunpack.c.l.b16 %v1116
      %v1183 = vunpack.c.l.b16 %v1117
      %v1184 = vunpack.c.l.b16 %v1118
      %v1185 = vunpack.c.l.b16 %v1119
      %v1186 = vunpack.c.l.b16 %v1120
      %v1187 = vunpack.c.l.b16 %v1121
      %v1188 = vunpack.c.l.b16 %v1122
      %v1189 = vunpack.c.l.b16 %v1123
      %v1190 = vunpack.c.l.b16 %v1124
      %v1191 = vunpack.c.l.b16 %v1125
      %v1192 = vunpack.c.l.b16 %v1126
      %v1193 = vunpack.c.l.b16 %v1127
      %v1194 = vunpack.c.l.b16 %v1128
      %v1195 = vpack.c.b16 %v1164, %v1163
      %v1196 = vpack.c.b16 %v1166, %v1165
      %v1197 = vpack.c.b16 %v1168, %v1167
      %v1198 = vpack.c.b16 %v1170, %v1169
      %v1199 = vpack.c.b16 %v1172, %v1171
      %v1200 = vpack.c.b16 %v1174, %v1173
      %v1201 = vpack.c.b16 %v1176, %v1175
      %v1202 = vpack.c.b16 %v1178, %v1177
      %v1203 = vpack.c.b16 %v1180, %v1179
      %v1204 = vpack.c.b16 %v1182, %v1181
      %v1205 = vpack.c.b16 %v1184, %v1183
      %v1206 = vpack.c.b16 %v1186, %v1185
      %v1207 = vpack.c.b16 %v1188, %v1187
      %v1208 = vpack.c.b16 %v1190, %v1189
      %v1209 = vpack.c.b16 %v1192, %v1191
      %v1210 = vpack.c.b16 %v1194, %v1193
      %v1212 = vsel %vm382, %v1195, 0
      %v1215 = vsel %vm382, %v1196, 0
      %v1218 = vsel %vm382, %v1197, 0
      %v1221 = vsel %vm382, %v1198, 0
      %v1224 = vsel %vm382, %v1199, 0
      %v1227 = vsel %vm382, %v1200, 0
      %v1230 = vsel %vm382, %v1201, 0
      %v1233 = vsel %vm382, %v1202, 0
      %v1236 = vsel %vm382, %v1203, 0
      %v1239 = vsel %vm382, %v1204, 0
      %v1242 = vsel %vm382, %v1205, 0
      %v1245 = vsel %vm382, %v1206, 0
      %v1248 = vsel %vm382, %v1207, 0
      %v1251 = vsel %vm382, %v1208, 0
      %v1254 = vsel %vm382, %v1209, 0
      %v1257 = vsel %vm382, %v1210, 0
      %v1260 = vsel %vm752, %v1130, 0
      %1262 = vmatpush.bf16.msra.mxu0 0
      %1263 = vmatpush.bf16.msra.mxu0 0
      %1264 = vmatpush.bf16.msra.mxu0 0
      %1265 = vmatpush.bf16.msra.mxu0 0
      %1266 = vmatpush.bf16.msra.mxu0 0
      %1267 = vmatpush.bf16.msra.mxu0 0
      %1268 = vmatpush.bf16.msra.mxu0 0
      %1269 = vmatpush.bf16.msra.mxu0 %v1260
      %1270 = vmatmul.bf16.gmra.mxu0 %v1212
      %v1271 = vpop.f32.mrf.mxu0
      %v1272 = vadd.f32 0.0, %v1271
      %v1273 = vpop.f32.mrf.mxu0
      %v1274 = vadd.f32 0.0, %v1273
      %1275 = vmatmul.bf16.gmra.mxu0 %v1215
      %v1276 = vpop.f32.mrf.mxu0
      %v1277 = vadd.f32 0.0, %v1276
      %v1278 = vpop.f32.mrf.mxu0
      %v1279 = vadd.f32 0.0, %v1278
      %1280 = vmatmul.bf16.gmra.mxu0 %v1218
      %v1281 = vpop.f32.mrf.mxu0
      %v1282 = vadd.f32 0.0, %v1281
      %v1283 = vpop.f32.mrf.mxu0
      %v1284 = vadd.f32 0.0, %v1283
      %1285 = vmatmul.bf16.gmra.mxu0 %v1221
      %v1286 = vpop.f32.mrf.mxu0
      %v1287 = vadd.f32 0.0, %v1286
      %v1288 = vpop.f32.mrf.mxu0
      %v1289 = vadd.f32 0.0, %v1288
      %1290 = vmatmul.bf16.gmra.mxu0 %v1224
      %v1291 = vpop.f32.mrf.mxu0
      %v1292 = vadd.f32 0.0, %v1291
      %v1293 = vpop.f32.mrf.mxu0
      %v1294 = vadd.f32 0.0, %v1293
      %1295 = vmatmul.bf16.gmra.mxu0 %v1227
      %v1296 = vpop.f32.mrf.mxu0
      %v1297 = vadd.f32 0.0, %v1296
      %v1298 = vpop.f32.mrf.mxu0
      %v1299 = vadd.f32 0.0, %v1298
      %1300 = vmatmul.bf16.gmra.mxu0 %v1230
      %v1301 = vpop.f32.mrf.mxu0
      %v1302 = vadd.f32 0.0, %v1301
      %v1303 = vpop.f32.mrf.mxu0
      %v1304 = vadd.f32 0.0, %v1303
      %1305 = vmatmul.bf16.gmra.mxu0 %v1233
      %v1306 = vpop.f32.mrf.mxu0
      %v1307 = vadd.f32 0.0, %v1306
      %v1308 = vpop.f32.mrf.mxu0
      %v1309 = vadd.f32 0.0, %v1308
      %1310 = vmatmul.bf16.gmra.mxu0 %v1236
      %v1311 = vpop.f32.mrf.mxu0
      %v1312 = vadd.f32 0.0, %v1311
      %v1313 = vpop.f32.mrf.mxu0
      %v1314 = vadd.f32 0.0, %v1313
      %1315 = vmatmul.bf16.gmra.mxu0 %v1239
      %v1316 = vpop.f32.mrf.mxu0
      %v1317 = vadd.f32 0.0, %v1316
      %v1318 = vpop.f32.mrf.mxu0
      %v1319 = vadd.f32 0.0, %v1318
      %1320 = vmatmul.bf16.gmra.mxu0 %v1242
      %v1321 = vpop.f32.mrf.mxu0
      %v1322 = vadd.f32 0.0, %v1321
      %v1323 = vpop.f32.mrf.mxu0
      %v1324 = vadd.f32 0.0, %v1323
      %1325 = vmatmul.bf16.gmra.mxu0 %v1245
      %v1326 = vpop.f32.mrf.mxu0
      %v1327 = vadd.f32 0.0, %v1326
      %v1328 = vpop.f32.mrf.mxu0
      %v1329 = vadd.f32 0.0, %v1328
      %1330 = vmatmul.bf16.gmra.mxu0 %v1248
      %v1331 = vpop.f32.mrf.mxu0
      %v1332 = vadd.f32 0.0, %v1331
      %v1333 = vpop.f32.mrf.mxu0
      %v1334 = vadd.f32 0.0, %v1333
      %1335 = vmatmul.bf16.gmra.mxu0 %v1251
      %v1336 = vpop.f32.mrf.mxu0
      %v1337 = vadd.f32 0.0, %v1336
      %v1338 = vpop.f32.mrf.mxu0
      %v1339 = vadd.f32 0.0, %v1338
      %1340 = vmatmul.bf16.gmra.mxu0 %v1254
      %v1341 = vpop.f32.mrf.mxu0
      %v1342 = vadd.f32 0.0, %v1341
      %v1343 = vpop.f32.mrf.mxu0
      %v1344 = vadd.f32 0.0, %v1343
      %1345 = vmatmul.bf16.gmra.mxu0 %v1257
      %v1346 = vpop.f32.mrf.mxu0
      %v1347 = vadd.f32 0.0, %v1346
      %v1348 = vpop.f32.mrf.mxu0
      %v1349 = vadd.f32 0.0, %v1348
      %1350 = vdwg.mxu0
      %v1351 = vadd.f32 %v986, %v1272
      %v1352 = vadd.f32 %v988, %v1274
      %v1353 = vadd.f32 %v991, %v1277
      %v1354 = vadd.f32 %v993, %v1279
      %v1355 = vadd.f32 %v996, %v1282
      %v1356 = vadd.f32 %v998, %v1284
      %v1357 = vadd.f32 %v1001, %v1287
      %v1358 = vadd.f32 %v1003, %v1289
      %v1359 = vadd.f32 %v1006, %v1292
      %v1360 = vadd.f32 %v1008, %v1294
      %v1361 = vadd.f32 %v1011, %v1297
      %v1362 = vadd.f32 %v1013, %v1299
      %v1363 = vadd.f32 %v1016, %v1302
      %v1364 = vadd.f32 %v1018, %v1304
      %v1365 = vadd.f32 %v1021, %v1307
      %v1366 = vadd.f32 %v1023, %v1309
      %v1367 = vadd.f32 %v1026, %v1312
      %v1368 = vadd.f32 %v1028, %v1314
      %v1369 = vadd.f32 %v1031, %v1317
      %v1370 = vadd.f32 %v1033, %v1319
      %v1371 = vadd.f32 %v1036, %v1322
      %v1372 = vadd.f32 %v1038, %v1324
      %v1373 = vadd.f32 %v1041, %v1327
      %v1374 = vadd.f32 %v1043, %v1329
      %v1375 = vadd.f32 %v1046, %v1332
      %v1376 = vadd.f32 %v1048, %v1334
      %v1377 = vadd.f32 %v1051, %v1337
      %v1378 = vadd.f32 %v1053, %v1339
      %v1379 = vadd.f32 %v1056, %v1342
      %v1380 = vadd.f32 %v1058, %v1344
      %v1381 = vadd.f32 %v1061, %v1347
      %v1382 = vadd.f32 %v1063, %v1349
      %v1383 = vld [vmem:[%s381] sm:$0xff]
      %v1384 = vld [vmem:[%s381 + $0x8] sm:$0xff]
      %v1385 = vld [vmem:[%s381 + $0x18] sm:$0xff]
      %v1386 = vld [vmem:[%s381 + $0x20] sm:$0xff]
      %v1387 = vld [vmem:[%s381 + $0x30] sm:$0xff]
      %v1388 = vld [vmem:[%s381 + $0x38] sm:$0xff]
      %v1389 = vld [vmem:[%s381 + $0x48] sm:$0xff]
      %v1390 = vld [vmem:[%s381 + $0x50] sm:$0xff]
      %v1391 = vld [vmem:[%s381 + $0x60] sm:$0xff]
      %v1392 = vld [vmem:[%s381 + $0x68] sm:$0xff]
      %v1393 = vld [vmem:[%s381 + $0x78] sm:$0xff]
      %v1394 = vld [vmem:[%s381 + $0x80] sm:$0xff]
      %v1395 = vld [vmem:[%s381 + $0x90] sm:$0xff]
      %v1396 = vld [vmem:[%s381 + $0x98] sm:$0xff]
      %v1397 = vld [vmem:[%s381 + $0xa8] sm:$0xff]
      %v1398 = vld [vmem:[%s381 + $0xb0] sm:$0xff]
      %v1399 = vld [vmem:[%s381 + $0xc0] sm:$0xff]
      %v1400 = vld [vmem:[%s381 + $0xc8] sm:$0xff]
      %v1401 = vld [vmem:[%s381 + $0xd8] sm:$0xff]
      %v1402 = vld [vmem:[%s381 + $0xe0] sm:$0xff]
      %v1403 = vld [vmem:[%s381 + $0xf0] sm:$0xff]
      %v1404 = vld [vmem:[%s381 + $0xf8] sm:$0xff]
      %v1405 = vld [vmem:[%s381 + $0x108] sm:$0xff]
      %v1406 = vld [vmem:[%s381 + $0x110] sm:$0xff]
      %v1407 = vld [vmem:[%s381 + $0x120] sm:$0xff]
      %v1408 = vld [vmem:[%s381 + $0x128] sm:$0xff]
      %v1409 = vld [vmem:[%s381 + $0x138] sm:$0xff]
      %v1410 = vld [vmem:[%s381 + $0x140] sm:$0xff]
      %v1411 = vld [vmem:[%s381 + $0x150] sm:$0xff]
      %v1412 = vld [vmem:[%s381 + $0x158] sm:$0xff]
      %v1413 = vld [vmem:[%s381 + $0x168] sm:$0xff]
      %v1414 = vld [vmem:[%s381 + $0x170] sm:$0xff]
      %v1415 = vpack.c.bf16 %v1383, %v1383
      %v1416 = vpack.c.bf16 %v1384, %v1384
      %v1417 = vpack.c.bf16 %v1385, %v1385
      %v1418 = vpack.c.bf16 %v1386, %v1386
      %v1419 = vpack.c.bf16 %v1387, %v1387
      %v1420 = vpack.c.bf16 %v1388, %v1388
      %v1421 = vpack.c.bf16 %v1389, %v1389
      %v1422 = vpack.c.bf16 %v1390, %v1390
      %v1423 = vpack.c.bf16 %v1391, %v1391
      %v1424 = vpack.c.bf16 %v1392, %v1392
      %v1425 = vpack.c.bf16 %v1393, %v1393
      %v1426 = vpack.c.bf16 %v1394, %v1394
      %v1427 = vpack.c.bf16 %v1395, %v1395
      %v1428 = vpack.c.bf16 %v1396, %v1396
      %v1429 = vpack.c.bf16 %v1397, %v1397
      %v1430 = vpack.c.bf16 %v1398, %v1398
      %v1431 = vpack.c.bf16 %v1399, %v1399
      %v1432 = vpack.c.bf16 %v1400, %v1400
      %v1433 = vpack.c.bf16 %v1401, %v1401
      %v1434 = vpack.c.bf16 %v1402, %v1402
      %v1435 = vpack.c.bf16 %v1403, %v1403
      %v1436 = vpack.c.bf16 %v1404, %v1404
      %v1437 = vpack.c.bf16 %v1405, %v1405
      %v1438 = vpack.c.bf16 %v1406, %v1406
      %v1439 = vpack.c.bf16 %v1407, %v1407
      %v1440 = vpack.c.bf16 %v1408, %v1408
      %v1441 = vpack.c.bf16 %v1409, %v1409
      %v1442 = vpack.c.bf16 %v1410, %v1410
      %v1443 = vpack.c.bf16 %v1411, %v1411
      %v1444 = vpack.c.bf16 %v1412, %v1412
      %v1445 = vpack.c.bf16 %v1413, %v1413
      %v1446 = vpack.c.bf16 %v1414, %v1414
      %s1447 = scalar_lea.vmem %s2, 6
      %v1448 = vld [vmem:[%s1447] sm:$0x3]
      %v1481 = vunpack.c.l.b16 %v1415
      %v1482 = vunpack.c.l.b16 %v1416
      %v1483 = vunpack.c.l.b16 %v1417
      %v1484 = vunpack.c.l.b16 %v1418
      %v1485 = vunpack.c.l.b16 %v1419
      %v1486 = vunpack.c.l.b16 %v1420
      %v1487 = vunpack.c.l.b16 %v1421
      %v1488 = vunpack.c.l.b16 %v1422
      %v1489 = vunpack.c.l.b16 %v1423
      %v1490 = vunpack.c.l.b16 %v1424
      %v1491 = vunpack.c.l.b16 %v1425
      %v1492 = vunpack.c.l.b16 %v1426
      %v1493 = vunpack.c.l.b16 %v1427
      %v1494 = vunpack.c.l.b16 %v1428
      %v1495 = vunpack.c.l.b16 %v1429
      %v1496 = vunpack.c.l.b16 %v1430
      %v1497 = vunpack.c.l.b16 %v1431
      %v1498 = vunpack.c.l.b16 %v1432
      %v1499 = vunpack.c.l.b16 %v1433
      %v1500 = vunpack.c.l.b16 %v1434
      %v1501 = vunpack.c.l.b16 %v1435
      %v1502 = vunpack.c.l.b16 %v1436
      %v1503 = vunpack.c.l.b16 %v1437
      %v1504 = vunpack.c.l.b16 %v1438
      %v1505 = vunpack.c.l.b16 %v1439
      %v1506 = vunpack.c.l.b16 %v1440
      %v1507 = vunpack.c.l.b16 %v1441
      %v1508 = vunpack.c.l.b16 %v1442
      %v1509 = vunpack.c.l.b16 %v1443
      %v1510 = vunpack.c.l.b16 %v1444
      %v1511 = vunpack.c.l.b16 %v1445
      %v1512 = vunpack.c.l.b16 %v1446
      %v1513 = vpack.c.b16 %v1482, %v1481
      %v1514 = vpack.c.b16 %v1484, %v1483
      %v1515 = vpack.c.b16 %v1486, %v1485
      %v1516 = vpack.c.b16 %v1488, %v1487
      %v1517 = vpack.c.b16 %v1490, %v1489
      %v1518 = vpack.c.b16 %v1492, %v1491
      %v1519 = vpack.c.b16 %v1494, %v1493
      %v1520 = vpack.c.b16 %v1496, %v1495
      %v1521 = vpack.c.b16 %v1498, %v1497
      %v1522 = vpack.c.b16 %v1500, %v1499
      %v1523 = vpack.c.b16 %v1502, %v1501
      %v1524 = vpack.c.b16 %v1504, %v1503
      %v1525 = vpack.c.b16 %v1506, %v1505
      %v1526 = vpack.c.b16 %v1508, %v1507
      %v1527 = vpack.c.b16 %v1510, %v1509
      %v1528 = vpack.c.b16 %v1512, %v1511
      %v1530 = vsel %vm382, %v1513, 0
      %v1533 = vsel %vm382, %v1514, 0
      %v1536 = vsel %vm382, %v1515, 0
      %v1539 = vsel %vm382, %v1516, 0
      %v1542 = vsel %vm382, %v1517, 0
      %v1545 = vsel %vm382, %v1518, 0
      %v1548 = vsel %vm382, %v1519, 0
      %v1551 = vsel %vm382, %v1520, 0
      %v1554 = vsel %vm382, %v1521, 0
      %v1557 = vsel %vm382, %v1522, 0
      %v1560 = vsel %vm382, %v1523, 0
      %v1563 = vsel %vm382, %v1524, 0
      %v1566 = vsel %vm382, %v1525, 0
      %v1569 = vsel %vm382, %v1526, 0
      %v1572 = vsel %vm382, %v1527, 0
      %v1575 = vsel %vm382, %v1528, 0
      %v1578 = vsel %vm752, %v1448, 0
      %1580 = vmatpush.bf16.msra.mxu0 0
      %1581 = vmatpush.bf16.msra.mxu0 0
      %1582 = vmatpush.bf16.msra.mxu0 0
      %1583 = vmatpush.bf16.msra.mxu0 0
      %1584 = vmatpush.bf16.msra.mxu0 0
      %1585 = vmatpush.bf16.msra.mxu0 0
      %1586 = vmatpush.bf16.msra.mxu0 0
      %1587 = vmatpush.bf16.msra.mxu0 %v1578
      %1588 = vmatmul.bf16.gmra.mxu0 %v1530
      %v1589 = vpop.f32.mrf.mxu0
      %v1590 = vadd.f32 0.0, %v1589
      %v1591 = vpop.f32.mrf.mxu0
      %v1592 = vadd.f32 0.0, %v1591
      %1593 = vmatmul.bf16.gmra.mxu0 %v1533
      %v1594 = vpop.f32.mrf.mxu0
      %v1595 = vadd.f32 0.0, %v1594
      %v1596 = vpop.f32.mrf.mxu0
      %v1597 = vadd.f32 0.0, %v1596
      %1598 = vmatmul.bf16.gmra.mxu0 %v1536
      %v1599 = vpop.f32.mrf.mxu0
      %v1600 = vadd.f32 0.0, %v1599
      %v1601 = vpop.f32.mrf.mxu0
      %v1602 = vadd.f32 0.0, %v1601
      %1603 = vmatmul.bf16.gmra.mxu0 %v1539
      %v1604 = vpop.f32.mrf.mxu0
      %v1605 = vadd.f32 0.0, %v1604
      %v1606 = vpop.f32.mrf.mxu0
      %v1607 = vadd.f32 0.0, %v1606
      %1608 = vmatmul.bf16.gmra.mxu0 %v1542
      %v1609 = vpop.f32.mrf.mxu0
      %v1610 = vadd.f32 0.0, %v1609
      %v1611 = vpop.f32.mrf.mxu0
      %v1612 = vadd.f32 0.0, %v1611
      %1613 = vmatmul.bf16.gmra.mxu0 %v1545
      %v1614 = vpop.f32.mrf.mxu0
      %v1615 = vadd.f32 0.0, %v1614
      %v1616 = vpop.f32.mrf.mxu0
      %v1617 = vadd.f32 0.0, %v1616
      %1618 = vmatmul.bf16.gmra.mxu0 %v1548
      %v1619 = vpop.f32.mrf.mxu0
      %v1620 = vadd.f32 0.0, %v1619
      %v1621 = vpop.f32.mrf.mxu0
      %v1622 = vadd.f32 0.0, %v1621
      %1623 = vmatmul.bf16.gmra.mxu0 %v1551
      %v1624 = vpop.f32.mrf.mxu0
      %v1625 = vadd.f32 0.0, %v1624
      %v1626 = vpop.f32.mrf.mxu0
      %v1627 = vadd.f32 0.0, %v1626
      %1628 = vmatmul.bf16.gmra.mxu0 %v1554
      %v1629 = vpop.f32.mrf.mxu0
      %v1630 = vadd.f32 0.0, %v1629
      %v1631 = vpop.f32.mrf.mxu0
      %v1632 = vadd.f32 0.0, %v1631
      %1633 = vmatmul.bf16.gmra.mxu0 %v1557
      %v1634 = vpop.f32.mrf.mxu0
      %v1635 = vadd.f32 0.0, %v1634
      %v1636 = vpop.f32.mrf.mxu0
      %v1637 = vadd.f32 0.0, %v1636
      %1638 = vmatmul.bf16.gmra.mxu0 %v1560
      %v1639 = vpop.f32.mrf.mxu0
      %v1640 = vadd.f32 0.0, %v1639
      %v1641 = vpop.f32.mrf.mxu0
      %v1642 = vadd.f32 0.0, %v1641
      %1643 = vmatmul.bf16.gmra.mxu0 %v1563
      %v1644 = vpop.f32.mrf.mxu0
      %v1645 = vadd.f32 0.0, %v1644
      %v1646 = vpop.f32.mrf.mxu0
      %v1647 = vadd.f32 0.0, %v1646
      %1648 = vmatmul.bf16.gmra.mxu0 %v1566
      %v1649 = vpop.f32.mrf.mxu0
      %v1650 = vadd.f32 0.0, %v1649
      %v1651 = vpop.f32.mrf.mxu0
      %v1652 = vadd.f32 0.0, %v1651
      %1653 = vmatmul.bf16.gmra.mxu0 %v1569
      %v1654 = vpop.f32.mrf.mxu0
      %v1655 = vadd.f32 0.0, %v1654
      %v1656 = vpop.f32.mrf.mxu0
      %v1657 = vadd.f32 0.0, %v1656
      %1658 = vmatmul.bf16.gmra.mxu0 %v1572
      %v1659 = vpop.f32.mrf.mxu0
      %v1660 = vadd.f32 0.0, %v1659
      %v1661 = vpop.f32.mrf.mxu0
      %v1662 = vadd.f32 0.0, %v1661
      %1663 = vmatmul.bf16.gmra.mxu0 %v1575
      %v1664 = vpop.f32.mrf.mxu0
      %v1665 = vadd.f32 0.0, %v1664
      %v1666 = vpop.f32.mrf.mxu0
      %v1667 = vadd.f32 0.0, %v1666
      %1668 = vdwg.mxu0
      %v1669 = vadd.f32 %v1351, %v1590
      %v1670 = vadd.f32 %v1352, %v1592
      %v1671 = vadd.f32 %v1353, %v1595
      %v1672 = vadd.f32 %v1354, %v1597
      %v1673 = vadd.f32 %v1355, %v1600
      %v1674 = vadd.f32 %v1356, %v1602
      %v1675 = vadd.f32 %v1357, %v1605
      %v1676 = vadd.f32 %v1358, %v1607
      %v1677 = vadd.f32 %v1359, %v1610
      %v1678 = vadd.f32 %v1360, %v1612
      %v1679 = vadd.f32 %v1361, %v1615
      %v1680 = vadd.f32 %v1362, %v1617
      %v1681 = vadd.f32 %v1363, %v1620
      %v1682 = vadd.f32 %v1364, %v1622
      %v1683 = vadd.f32 %v1365, %v1625
      %v1684 = vadd.f32 %v1366, %v1627
      %v1685 = vadd.f32 %v1367, %v1630
      %v1686 = vadd.f32 %v1368, %v1632
      %v1687 = vadd.f32 %v1369, %v1635
      %v1688 = vadd.f32 %v1370, %v1637
      %v1689 = vadd.f32 %v1371, %v1640
      %v1690 = vadd.f32 %v1372, %v1642
      %v1691 = vadd.f32 %v1373, %v1645
      %v1692 = vadd.f32 %v1374, %v1647
      %v1693 = vadd.f32 %v1375, %v1650
      %v1694 = vadd.f32 %v1376, %v1652
      %v1695 = vadd.f32 %v1377, %v1655
      %v1696 = vadd.f32 %v1378, %v1657
      %v1697 = vadd.f32 %v1379, %v1660
      %v1698 = vadd.f32 %v1380, %v1662
      %v1699 = vadd.f32 %v1381, %v1665
      %v1700 = vadd.f32 %v1382, %v1667
      %v1701 = vld [vmem:[%s381 + $0x1] sm:$0xff]
      %v1702 = vld [vmem:[%s381 + $0x9] sm:$0xff]
      %v1703 = vld [vmem:[%s381 + $0x19] sm:$0xff]
      %v1704 = vld [vmem:[%s381 + $0x21] sm:$0xff]
      %v1705 = vld [vmem:[%s381 + $0x31] sm:$0xff]
      %v1706 = vld [vmem:[%s381 + $0x39] sm:$0xff]
      %v1707 = vld [vmem:[%s381 + $0x49] sm:$0xff]
      %v1708 = vld [vmem:[%s381 + $0x51] sm:$0xff]
      %v1709 = vld [vmem:[%s381 + $0x61] sm:$0xff]
      %v1710 = vld [vmem:[%s381 + $0x69] sm:$0xff]
      %v1711 = vld [vmem:[%s381 + $0x79] sm:$0xff]
      %v1712 = vld [vmem:[%s381 + $0x81] sm:$0xff]
      %v1713 = vld [vmem:[%s381 + $0x91] sm:$0xff]
      %v1714 = vld [vmem:[%s381 + $0x99] sm:$0xff]
      %v1715 = vld [vmem:[%s381 + $0xa9] sm:$0xff]
      %v1716 = vld [vmem:[%s381 + $0xb1] sm:$0xff]
      %v1717 = vld [vmem:[%s381 + $0xc1] sm:$0xff]
      %v1718 = vld [vmem:[%s381 + $0xc9] sm:$0xff]
      %v1719 = vld [vmem:[%s381 + $0xd9] sm:$0xff]
      %v1720 = vld [vmem:[%s381 + $0xe1] sm:$0xff]
      %v1721 = vld [vmem:[%s381 + $0xf1] sm:$0xff]
      %v1722 = vld [vmem:[%s381 + $0xf9] sm:$0xff]
      %v1723 = vld [vmem:[%s381 + $0x109] sm:$0xff]
      %v1724 = vld [vmem:[%s381 + $0x111] sm:$0xff]
      %v1725 = vld [vmem:[%s381 + $0x121] sm:$0xff]
      %v1726 = vld [vmem:[%s381 + $0x129] sm:$0xff]
      %v1727 = vld [vmem:[%s381 + $0x139] sm:$0xff]
      %v1728 = vld [vmem:[%s381 + $0x141] sm:$0xff]
      %v1729 = vld [vmem:[%s381 + $0x151] sm:$0xff]
      %v1730 = vld [vmem:[%s381 + $0x159] sm:$0xff]
      %v1731 = vld [vmem:[%s381 + $0x169] sm:$0xff]
      %v1732 = vld [vmem:[%s381 + $0x171] sm:$0xff]
      %v1733 = vpack.c.bf16 %v1701, %v1701
      %v1734 = vpack.c.bf16 %v1702, %v1702
      %v1735 = vpack.c.bf16 %v1703, %v1703
      %v1736 = vpack.c.bf16 %v1704, %v1704
      %v1737 = vpack.c.bf16 %v1705, %v1705
      %v1738 = vpack.c.bf16 %v1706, %v1706
      %v1739 = vpack.c.bf16 %v1707, %v1707
      %v1740 = vpack.c.bf16 %v1708, %v1708
      %v1741 = vpack.c.bf16 %v1709, %v1709
      %v1742 = vpack.c.bf16 %v1710, %v1710
      %v1743 = vpack.c.bf16 %v1711, %v1711
      %v1744 = vpack.c.bf16 %v1712, %v1712
      %v1745 = vpack.c.bf16 %v1713, %v1713
      %v1746 = vpack.c.bf16 %v1714, %v1714
      %v1747 = vpack.c.bf16 %v1715, %v1715
      %v1748 = vpack.c.bf16 %v1716, %v1716
      %v1749 = vpack.c.bf16 %v1717, %v1717
      %v1750 = vpack.c.bf16 %v1718, %v1718
      %v1751 = vpack.c.bf16 %v1719, %v1719
      %v1752 = vpack.c.bf16 %v1720, %v1720
      %v1753 = vpack.c.bf16 %v1721, %v1721
      %v1754 = vpack.c.bf16 %v1722, %v1722
      %v1755 = vpack.c.bf16 %v1723, %v1723
      %v1756 = vpack.c.bf16 %v1724, %v1724
      %v1757 = vpack.c.bf16 %v1725, %v1725
      %v1758 = vpack.c.bf16 %v1726, %v1726
      %v1759 = vpack.c.bf16 %v1727, %v1727
      %v1760 = vpack.c.bf16 %v1728, %v1728
      %v1761 = vpack.c.bf16 %v1729, %v1729
      %v1762 = vpack.c.bf16 %v1730, %v1730
      %v1763 = vpack.c.bf16 %v1731, %v1731
      %v1764 = vpack.c.bf16 %v1732, %v1732
      %s1765 = scalar_lea.vmem %s2, 8
      %v1766 = vld [vmem:[%s1765] sm:$0x3]
      %v1799 = vunpack.c.l.b16 %v1733
      %v1800 = vunpack.c.l.b16 %v1734
      %v1801 = vunpack.c.l.b16 %v1735
      %v1802 = vunpack.c.l.b16 %v1736
      %v1803 = vunpack.c.l.b16 %v1737
      %v1804 = vunpack.c.l.b16 %v1738
      %v1805 = vunpack.c.l.b16 %v1739
      %v1806 = vunpack.c.l.b16 %v1740
      %v1807 = vunpack.c.l.b16 %v1741
      %v1808 = vunpack.c.l.b16 %v1742
      %v1809 = vunpack.c.l.b16 %v1743
      %v1810 = vunpack.c.l.b16 %v1744
      %v1811 = vunpack.c.l.b16 %v1745
      %v1812 = vunpack.c.l.b16 %v1746
      %v1813 = vunpack.c.l.b16 %v1747
      %v1814 = vunpack.c.l.b16 %v1748
      %v1815 = vunpack.c.l.b16 %v1749
      %v1816 = vunpack.c.l.b16 %v1750
      %v1817 = vunpack.c.l.b16 %v1751
      %v1818 = vunpack.c.l.b16 %v1752
      %v1819 = vunpack.c.l.b16 %v1753
      %v1820 = vunpack.c.l.b16 %v1754
      %v1821 = vunpack.c.l.b16 %v1755
      %v1822 = vunpack.c.l.b16 %v1756
      %v1823 = vunpack.c.l.b16 %v1757
      %v1824 = vunpack.c.l.b16 %v1758
      %v1825 = vunpack.c.l.b16 %v1759
      %v1826 = vunpack.c.l.b16 %v1760
      %v1827 = vunpack.c.l.b16 %v1761
      %v1828 = vunpack.c.l.b16 %v1762
      %v1829 = vunpack.c.l.b16 %v1763
      %v1830 = vunpack.c.l.b16 %v1764
      %v1831 = vpack.c.b16 %v1800, %v1799
      %v1832 = vpack.c.b16 %v1802, %v1801
      %v1833 = vpack.c.b16 %v1804, %v1803
      %v1834 = vpack.c.b16 %v1806, %v1805
      %v1835 = vpack.c.b16 %v1808, %v1807
      %v1836 = vpack.c.b16 %v1810, %v1809
      %v1837 = vpack.c.b16 %v1812, %v1811
      %v1838 = vpack.c.b16 %v1814, %v1813
      %v1839 = vpack.c.b16 %v1816, %v1815
      %v1840 = vpack.c.b16 %v1818, %v1817
      %v1841 = vpack.c.b16 %v1820, %v1819
      %v1842 = vpack.c.b16 %v1822, %v1821
      %v1843 = vpack.c.b16 %v1824, %v1823
      %v1844 = vpack.c.b16 %v1826, %v1825
      %v1845 = vpack.c.b16 %v1828, %v1827
      %v1846 = vpack.c.b16 %v1830, %v1829
      %v1848 = vsel %vm382, %v1831, 0
      %v1851 = vsel %vm382, %v1832, 0
      %v1854 = vsel %vm382, %v1833, 0
      %v1857 = vsel %vm382, %v1834, 0
      %v1860 = vsel %vm382, %v1835, 0
      %v1863 = vsel %vm382, %v1836, 0
      %v1866 = vsel %vm382, %v1837, 0
      %v1869 = vsel %vm382, %v1838, 0
      %v1872 = vsel %vm382, %v1839, 0
      %v1875 = vsel %vm382, %v1840, 0
      %v1878 = vsel %vm382, %v1841, 0
      %v1881 = vsel %vm382, %v1842, 0
      %v1884 = vsel %vm382, %v1843, 0
      %v1887 = vsel %vm382, %v1844, 0
      %v1890 = vsel %vm382, %v1845, 0
      %v1893 = vsel %vm382, %v1846, 0
      %v1896 = vsel %vm752, %v1766, 0
      %1898 = vmatpush.bf16.msra.mxu0 0
      %1899 = vmatpush.bf16.msra.mxu0 0
      %1900 = vmatpush.bf16.msra.mxu0 0
      %1901 = vmatpush.bf16.msra.mxu0 0
      %1902 = vmatpush.bf16.msra.mxu0 0
      %1903 = vmatpush.bf16.msra.mxu0 0
      %1904 = vmatpush.bf16.msra.mxu0 0
      %1905 = vmatpush.bf16.msra.mxu0 %v1896
      %1906 = vmatmul.bf16.gmra.mxu0 %v1848
      %v1907 = vpop.f32.mrf.mxu0
      %v1908 = vadd.f32 0.0, %v1907
      %v1909 = vpop.f32.mrf.mxu0
      %v1910 = vadd.f32 0.0, %v1909
      %1911 = vmatmul.bf16.gmra.mxu0 %v1851
      %v1912 = vpop.f32.mrf.mxu0
      %v1913 = vadd.f32 0.0, %v1912
      %v1914 = vpop.f32.mrf.mxu0
      %v1915 = vadd.f32 0.0, %v1914
      %1916 = vmatmul.bf16.gmra.mxu0 %v1854
      %v1917 = vpop.f32.mrf.mxu0
      %v1918 = vadd.f32 0.0, %v1917
      %v1919 = vpop.f32.mrf.mxu0
      %v1920 = vadd.f32 0.0, %v1919
      %1921 = vmatmul.bf16.gmra.mxu0 %v1857
      %v1922 = vpop.f32.mrf.mxu0
      %v1923 = vadd.f32 0.0, %v1922
      %v1924 = vpop.f32.mrf.mxu0
      %v1925 = vadd.f32 0.0, %v1924
      %1926 = vmatmul.bf16.gmra.mxu0 %v1860
      %v1927 = vpop.f32.mrf.mxu0
      %v1928 = vadd.f32 0.0, %v1927
      %v1929 = vpop.f32.mrf.mxu0
      %v1930 = vadd.f32 0.0, %v1929
      %1931 = vmatmul.bf16.gmra.mxu0 %v1863
      %v1932 = vpop.f32.mrf.mxu0
      %v1933 = vadd.f32 0.0, %v1932
      %v1934 = vpop.f32.mrf.mxu0
      %v1935 = vadd.f32 0.0, %v1934
      %1936 = vmatmul.bf16.gmra.mxu0 %v1866
      %v1937 = vpop.f32.mrf.mxu0
      %v1938 = vadd.f32 0.0, %v1937
      %v1939 = vpop.f32.mrf.mxu0
      %v1940 = vadd.f32 0.0, %v1939
      %1941 = vmatmul.bf16.gmra.mxu0 %v1869
      %v1942 = vpop.f32.mrf.mxu0
      %v1943 = vadd.f32 0.0, %v1942
      %v1944 = vpop.f32.mrf.mxu0
      %v1945 = vadd.f32 0.0, %v1944
      %1946 = vmatmul.bf16.gmra.mxu0 %v1872
      %v1947 = vpop.f32.mrf.mxu0
      %v1948 = vadd.f32 0.0, %v1947
      %v1949 = vpop.f32.mrf.mxu0
      %v1950 = vadd.f32 0.0, %v1949
      %1951 = vmatmul.bf16.gmra.mxu0 %v1875
      %v1952 = vpop.f32.mrf.mxu0
      %v1953 = vadd.f32 0.0, %v1952
      %v1954 = vpop.f32.mrf.mxu0
      %v1955 = vadd.f32 0.0, %v1954
      %1956 = vmatmul.bf16.gmra.mxu0 %v1878
      %v1957 = vpop.f32.mrf.mxu0
      %v1958 = vadd.f32 0.0, %v1957
      %v1959 = vpop.f32.mrf.mxu0
      %v1960 = vadd.f32 0.0, %v1959
      %1961 = vmatmul.bf16.gmra.mxu0 %v1881
      %v1962 = vpop.f32.mrf.mxu0
      %v1963 = vadd.f32 0.0, %v1962
      %v1964 = vpop.f32.mrf.mxu0
      %v1965 = vadd.f32 0.0, %v1964
      %1966 = vmatmul.bf16.gmra.mxu0 %v1884
      %v1967 = vpop.f32.mrf.mxu0
      %v1968 = vadd.f32 0.0, %v1967
      %v1969 = vpop.f32.mrf.mxu0
      %v1970 = vadd.f32 0.0, %v1969
      %1971 = vmatmul.bf16.gmra.mxu0 %v1887
      %v1972 = vpop.f32.mrf.mxu0
      %v1973 = vadd.f32 0.0, %v1972
      %v1974 = vpop.f32.mrf.mxu0
      %v1975 = vadd.f32 0.0, %v1974
      %1976 = vmatmul.bf16.gmra.mxu0 %v1890
      %v1977 = vpop.f32.mrf.mxu0
      %v1978 = vadd.f32 0.0, %v1977
      %v1979 = vpop.f32.mrf.mxu0
      %v1980 = vadd.f32 0.0, %v1979
      %1981 = vmatmul.bf16.gmra.mxu0 %v1893
      %v1982 = vpop.f32.mrf.mxu0
      %v1983 = vadd.f32 0.0, %v1982
      %v1984 = vpop.f32.mrf.mxu0
      %v1985 = vadd.f32 0.0, %v1984
      %1986 = vdwg.mxu0
      %v1987 = vadd.f32 %v1669, %v1908
      %v1988 = vadd.f32 %v1670, %v1910
      %v1989 = vadd.f32 %v1671, %v1913
      %v1990 = vadd.f32 %v1672, %v1915
      %v1991 = vadd.f32 %v1673, %v1918
      %v1992 = vadd.f32 %v1674, %v1920
      %v1993 = vadd.f32 %v1675, %v1923
      %v1994 = vadd.f32 %v1676, %v1925
      %v1995 = vadd.f32 %v1677, %v1928
      %v1996 = vadd.f32 %v1678, %v1930
      %v1997 = vadd.f32 %v1679, %v1933
      %v1998 = vadd.f32 %v1680, %v1935
      %v1999 = vadd.f32 %v1681, %v1938
      %v2000 = vadd.f32 %v1682, %v1940
      %v2001 = vadd.f32 %v1683, %v1943
      %v2002 = vadd.f32 %v1684, %v1945
      %v2003 = vadd.f32 %v1685, %v1948
      %v2004 = vadd.f32 %v1686, %v1950
      %v2005 = vadd.f32 %v1687, %v1953
      %v2006 = vadd.f32 %v1688, %v1955
      %v2007 = vadd.f32 %v1689, %v1958
      %v2008 = vadd.f32 %v1690, %v1960
      %v2009 = vadd.f32 %v1691, %v1963
      %v2010 = vadd.f32 %v1692, %v1965
      %v2011 = vadd.f32 %v1693, %v1968
      %v2012 = vadd.f32 %v1694, %v1970
      %v2013 = vadd.f32 %v1695, %v1973
      %v2014 = vadd.f32 %v1696, %v1975
      %v2015 = vadd.f32 %v1697, %v1978
      %v2016 = vadd.f32 %v1698, %v1980
      %v2017 = vadd.f32 %v1699, %v1983
      %v2018 = vadd.f32 %v1700, %v1985
      %v2019 = vld [vmem:[%s381 + $0x2] sm:$0xff]
      %v2020 = vld [vmem:[%s381 + $0xa] sm:$0xff]
      %v2021 = vld [vmem:[%s381 + $0x1a] sm:$0xff]
      %v2022 = vld [vmem:[%s381 + $0x22] sm:$0xff]
      %v2023 = vld [vmem:[%s381 + $0x32] sm:$0xff]
      %v2024 = vld [vmem:[%s381 + $0x3a] sm:$0xff]
      %v2025 = vld [vmem:[%s381 + $0x4a] sm:$0xff]
      %v2026 = vld [vmem:[%s381 + $0x52] sm:$0xff]
      %v2027 = vld [vmem:[%s381 + $0x62] sm:$0xff]
      %v2028 = vld [vmem:[%s381 + $0x6a] sm:$0xff]
      %v2029 = vld [vmem:[%s381 + $0x7a] sm:$0xff]
      %v2030 = vld [vmem:[%s381 + $0x82] sm:$0xff]
      %v2031 = vld [vmem:[%s381 + $0x92] sm:$0xff]
      %v2032 = vld [vmem:[%s381 + $0x9a] sm:$0xff]
      %v2033 = vld [vmem:[%s381 + $0xaa] sm:$0xff]
      %v2034 = vld [vmem:[%s381 + $0xb2] sm:$0xff]
      %v2035 = vld [vmem:[%s381 + $0xc2] sm:$0xff]
      %v2036 = vld [vmem:[%s381 + $0xca] sm:$0xff]
      %v2037 = vld [vmem:[%s381 + $0xda] sm:$0xff]
      %v2038 = vld [vmem:[%s381 + $0xe2] sm:$0xff]
      %v2039 = vld [vmem:[%s381 + $0xf2] sm:$0xff]
      %v2040 = vld [vmem:[%s381 + $0xfa] sm:$0xff]
      %v2041 = vld [vmem:[%s381 + $0x10a] sm:$0xff]
      %v2042 = vld [vmem:[%s381 + $0x112] sm:$0xff]
      %v2043 = vld [vmem:[%s381 + $0x122] sm:$0xff]
      %v2044 = vld [vmem:[%s381 + $0x12a] sm:$0xff]
      %v2045 = vld [vmem:[%s381 + $0x13a] sm:$0xff]
      %v2046 = vld [vmem:[%s381 + $0x142] sm:$0xff]
      %v2047 = vld [vmem:[%s381 + $0x152] sm:$0xff]
      %v2048 = vld [vmem:[%s381 + $0x15a] sm:$0xff]
      %v2049 = vld [vmem:[%s381 + $0x16a] sm:$0xff]
      %v2050 = vld [vmem:[%s381 + $0x172] sm:$0xff]
      %v2051 = vpack.c.bf16 %v2019, %v2019
      %v2052 = vpack.c.bf16 %v2020, %v2020
      %v2053 = vpack.c.bf16 %v2021, %v2021
      %v2054 = vpack.c.bf16 %v2022, %v2022
      %v2055 = vpack.c.bf16 %v2023, %v2023
      %v2056 = vpack.c.bf16 %v2024, %v2024
      %v2057 = vpack.c.bf16 %v2025, %v2025
      %v2058 = vpack.c.bf16 %v2026, %v2026
      %v2059 = vpack.c.bf16 %v2027, %v2027
      %v2060 = vpack.c.bf16 %v2028, %v2028
      %v2061 = vpack.c.bf16 %v2029, %v2029
      %v2062 = vpack.c.bf16 %v2030, %v2030
      %v2063 = vpack.c.bf16 %v2031, %v2031
      %v2064 = vpack.c.bf16 %v2032, %v2032
      %v2065 = vpack.c.bf16 %v2033, %v2033
      %v2066 = vpack.c.bf16 %v2034, %v2034
      %v2067 = vpack.c.bf16 %v2035, %v2035
      %v2068 = vpack.c.bf16 %v2036, %v2036
      %v2069 = vpack.c.bf16 %v2037, %v2037
      %v2070 = vpack.c.bf16 %v2038, %v2038
      %v2071 = vpack.c.bf16 %v2039, %v2039
      %v2072 = vpack.c.bf16 %v2040, %v2040
      %v2073 = vpack.c.bf16 %v2041, %v2041
      %v2074 = vpack.c.bf16 %v2042, %v2042
      %v2075 = vpack.c.bf16 %v2043, %v2043
      %v2076 = vpack.c.bf16 %v2044, %v2044
      %v2077 = vpack.c.bf16 %v2045, %v2045
      %v2078 = vpack.c.bf16 %v2046, %v2046
      %v2079 = vpack.c.bf16 %v2047, %v2047
      %v2080 = vpack.c.bf16 %v2048, %v2048
      %v2081 = vpack.c.bf16 %v2049, %v2049
      %v2082 = vpack.c.bf16 %v2050, %v2050
      %s2083 = scalar_lea.vmem %s2, 10
      %v2084 = vld [vmem:[%s2083] sm:$0x3]
      %v2117 = vunpack.c.l.b16 %v2051
      %v2118 = vunpack.c.l.b16 %v2052
      %v2119 = vunpack.c.l.b16 %v2053
      %v2120 = vunpack.c.l.b16 %v2054
      %v2121 = vunpack.c.l.b16 %v2055
      %v2122 = vunpack.c.l.b16 %v2056
      %v2123 = vunpack.c.l.b16 %v2057
      %v2124 = vunpack.c.l.b16 %v2058
      %v2125 = vunpack.c.l.b16 %v2059
      %v2126 = vunpack.c.l.b16 %v2060
      %v2127 = vunpack.c.l.b16 %v2061
      %v2128 = vunpack.c.l.b16 %v2062
      %v2129 = vunpack.c.l.b16 %v2063
      %v2130 = vunpack.c.l.b16 %v2064
      %v2131 = vunpack.c.l.b16 %v2065
      %v2132 = vunpack.c.l.b16 %v2066
      %v2133 = vunpack.c.l.b16 %v2067
      %v2134 = vunpack.c.l.b16 %v2068
      %v2135 = vunpack.c.l.b16 %v2069
      %v2136 = vunpack.c.l.b16 %v2070
      %v2137 = vunpack.c.l.b16 %v2071
      %v2138 = vunpack.c.l.b16 %v2072
      %v2139 = vunpack.c.l.b16 %v2073
      %v2140 = vunpack.c.l.b16 %v2074
      %v2141 = vunpack.c.l.b16 %v2075
      %v2142 = vunpack.c.l.b16 %v2076
      %v2143 = vunpack.c.l.b16 %v2077
      %v2144 = vunpack.c.l.b16 %v2078
      %v2145 = vunpack.c.l.b16 %v2079
      %v2146 = vunpack.c.l.b16 %v2080
      %v2147 = vunpack.c.l.b16 %v2081
      %v2148 = vunpack.c.l.b16 %v2082
      %v2149 = vpack.c.b16 %v2118, %v2117
      %v2150 = vpack.c.b16 %v2120, %v2119
      %v2151 = vpack.c.b16 %v2122, %v2121
      %v2152 = vpack.c.b16 %v2124, %v2123
      %v2153 = vpack.c.b16 %v2126, %v2125
      %v2154 = vpack.c.b16 %v2128, %v2127
      %v2155 = vpack.c.b16 %v2130, %v2129
      %v2156 = vpack.c.b16 %v2132, %v2131
      %v2157 = vpack.c.b16 %v2134, %v2133
      %v2158 = vpack.c.b16 %v2136, %v2135
      %v2159 = vpack.c.b16 %v2138, %v2137
      %v2160 = vpack.c.b16 %v2140, %v2139
      %v2161 = vpack.c.b16 %v2142, %v2141
      %v2162 = vpack.c.b16 %v2144, %v2143
      %v2163 = vpack.c.b16 %v2146, %v2145
      %v2164 = vpack.c.b16 %v2148, %v2147
      %v2166 = vsel %vm382, %v2149, 0
      %v2169 = vsel %vm382, %v2150, 0
      %v2172 = vsel %vm382, %v2151, 0
      %v2175 = vsel %vm382, %v2152, 0
      %v2178 = vsel %vm382, %v2153, 0
      %v2181 = vsel %vm382, %v2154, 0
      %v2184 = vsel %vm382, %v2155, 0
      %v2187 = vsel %vm382, %v2156, 0
      %v2190 = vsel %vm382, %v2157, 0
      %v2193 = vsel %vm382, %v2158, 0
      %v2196 = vsel %vm382, %v2159, 0
      %v2199 = vsel %vm382, %v2160, 0
      %v2202 = vsel %vm382, %v2161, 0
      %v2205 = vsel %vm382, %v2162, 0
      %v2208 = vsel %vm382, %v2163, 0
      %v2211 = vsel %vm382, %v2164, 0
      %v2214 = vsel %vm752, %v2084, 0
      %2216 = vmatpush.bf16.msra.mxu0 0
      %2217 = vmatpush.bf16.msra.mxu0 0
      %2218 = vmatpush.bf16.msra.mxu0 0
      %2219 = vmatpush.bf16.msra.mxu0 0
      %2220 = vmatpush.bf16.msra.mxu0 0
      %2221 = vmatpush.bf16.msra.mxu0 0
      %2222 = vmatpush.bf16.msra.mxu0 0
      %2223 = vmatpush.bf16.msra.mxu0 %v2214
      %2224 = vmatmul.bf16.gmra.mxu0 %v2166
      %v2225 = vpop.f32.mrf.mxu0
      %v2226 = vadd.f32 0.0, %v2225
      %v2227 = vpop.f32.mrf.mxu0
      %v2228 = vadd.f32 0.0, %v2227
      %2229 = vmatmul.bf16.gmra.mxu0 %v2169
      %v2230 = vpop.f32.mrf.mxu0
      %v2231 = vadd.f32 0.0, %v2230
      %v2232 = vpop.f32.mrf.mxu0
      %v2233 = vadd.f32 0.0, %v2232
      %2234 = vmatmul.bf16.gmra.mxu0 %v2172
      %v2235 = vpop.f32.mrf.mxu0
      %v2236 = vadd.f32 0.0, %v2235
      %v2237 = vpop.f32.mrf.mxu0
      %v2238 = vadd.f32 0.0, %v2237
      %2239 = vmatmul.bf16.gmra.mxu0 %v2175
      %v2240 = vpop.f32.mrf.mxu0
      %v2241 = vadd.f32 0.0, %v2240
      %v2242 = vpop.f32.mrf.mxu0
      %v2243 = vadd.f32 0.0, %v2242
      %2244 = vmatmul.bf16.gmra.mxu0 %v2178
      %v2245 = vpop.f32.mrf.mxu0
      %v2246 = vadd.f32 0.0, %v2245
      %v2247 = vpop.f32.mrf.mxu0
      %v2248 = vadd.f32 0.0, %v2247
      %2249 = vmatmul.bf16.gmra.mxu0 %v2181
      %v2250 = vpop.f32.mrf.mxu0
      %v2251 = vadd.f32 0.0, %v2250
      %v2252 = vpop.f32.mrf.mxu0
      %v2253 = vadd.f32 0.0, %v2252
      %2254 = vmatmul.bf16.gmra.mxu0 %v2184
      %v2255 = vpop.f32.mrf.mxu0
      %v2256 = vadd.f32 0.0, %v2255
      %v2257 = vpop.f32.mrf.mxu0
      %v2258 = vadd.f32 0.0, %v2257
      %2259 = vmatmul.bf16.gmra.mxu0 %v2187
      %v2260 = vpop.f32.mrf.mxu0
      %v2261 = vadd.f32 0.0, %v2260
      %v2262 = vpop.f32.mrf.mxu0
      %v2263 = vadd.f32 0.0, %v2262
      %2264 = vmatmul.bf16.gmra.mxu0 %v2190
      %v2265 = vpop.f32.mrf.mxu0
      %v2266 = vadd.f32 0.0, %v2265
      %v2267 = vpop.f32.mrf.mxu0
      %v2268 = vadd.f32 0.0, %v2267
      %2269 = vmatmul.bf16.gmra.mxu0 %v2193
      %v2270 = vpop.f32.mrf.mxu0
      %v2271 = vadd.f32 0.0, %v2270
      %v2272 = vpop.f32.mrf.mxu0
      %v2273 = vadd.f32 0.0, %v2272
      %2274 = vmatmul.bf16.gmra.mxu0 %v2196
      %v2275 = vpop.f32.mrf.mxu0
      %v2276 = vadd.f32 0.0, %v2275
      %v2277 = vpop.f32.mrf.mxu0
      %v2278 = vadd.f32 0.0, %v2277
      %2279 = vmatmul.bf16.gmra.mxu0 %v2199
      %v2280 = vpop.f32.mrf.mxu0
      %v2281 = vadd.f32 0.0, %v2280
      %v2282 = vpop.f32.mrf.mxu0
      %v2283 = vadd.f32 0.0, %v2282
      %2284 = vmatmul.bf16.gmra.mxu0 %v2202
      %v2285 = vpop.f32.mrf.mxu0
      %v2286 = vadd.f32 0.0, %v2285
      %v2287 = vpop.f32.mrf.mxu0
      %v2288 = vadd.f32 0.0, %v2287
      %2289 = vmatmul.bf16.gmra.mxu0 %v2205
      %v2290 = vpop.f32.mrf.mxu0
      %v2291 = vadd.f32 0.0, %v2290
      %v2292 = vpop.f32.mrf.mxu0
      %v2293 = vadd.f32 0.0, %v2292
      %2294 = vmatmul.bf16.gmra.mxu0 %v2208
      %v2295 = vpop.f32.mrf.mxu0
      %v2296 = vadd.f32 0.0, %v2295
      %v2297 = vpop.f32.mrf.mxu0
      %v2298 = vadd.f32 0.0, %v2297
      %2299 = vmatmul.bf16.gmra.mxu0 %v2211
      %v2300 = vpop.f32.mrf.mxu0
      %v2301 = vadd.f32 0.0, %v2300
      %v2302 = vpop.f32.mrf.mxu0
      %v2303 = vadd.f32 0.0, %v2302
      %2304 = vdwg.mxu0
      %v2305 = vadd.f32 %v1987, %v2226
      %v2306 = vadd.f32 %v1988, %v2228
      %v2307 = vadd.f32 %v1989, %v2231
      %v2308 = vadd.f32 %v1990, %v2233
      %v2309 = vadd.f32 %v1991, %v2236
      %v2310 = vadd.f32 %v1992, %v2238
      %v2311 = vadd.f32 %v1993, %v2241
      %v2312 = vadd.f32 %v1994, %v2243
      %v2313 = vadd.f32 %v1995, %v2246
      %v2314 = vadd.f32 %v1996, %v2248
      %v2315 = vadd.f32 %v1997, %v2251
      %v2316 = vadd.f32 %v1998, %v2253
      %v2317 = vadd.f32 %v1999, %v2256
      %v2318 = vadd.f32 %v2000, %v2258
      %v2319 = vadd.f32 %v2001, %v2261
      %v2320 = vadd.f32 %v2002, %v2263
      %v2321 = vadd.f32 %v2003, %v2266
      %v2322 = vadd.f32 %v2004, %v2268
      %v2323 = vadd.f32 %v2005, %v2271
      %v2324 = vadd.f32 %v2006, %v2273
      %v2325 = vadd.f32 %v2007, %v2276
      %v2326 = vadd.f32 %v2008, %v2278
      %v2327 = vadd.f32 %v2009, %v2281
      %v2328 = vadd.f32 %v2010, %v2283
      %v2329 = vadd.f32 %v2011, %v2286
      %v2330 = vadd.f32 %v2012, %v2288
      %v2331 = vadd.f32 %v2013, %v2291
      %v2332 = vadd.f32 %v2014, %v2293
      %v2333 = vadd.f32 %v2015, %v2296
      %v2334 = vadd.f32 %v2016, %v2298
      %v2335 = vadd.f32 %v2017, %v2301
      %v2336 = vadd.f32 %v2018, %v2303
      %s2337 = scalar_lea.vmem [#allocation2], 48
      %v2338 = vld [vmem:[%s2337] sm:$0xff]
      %v2339 = vld [vmem:[%s2337 + $0x8] sm:$0xff]
      %v2340 = vld [vmem:[%s2337 + $0x18] sm:$0xff]
      %v2341 = vld [vmem:[%s2337 + $0x20] sm:$0xff]
      %v2342 = vld [vmem:[%s2337 + $0x30] sm:$0xff]
      %v2343 = vld [vmem:[%s2337 + $0x38] sm:$0xff]
      %v2344 = vld [vmem:[%s2337 + $0x48] sm:$0xff]
      %v2345 = vld [vmem:[%s2337 + $0x50] sm:$0xff]
      %v2346 = vld [vmem:[%s2337 + $0x60] sm:$0xff]
      %v2347 = vld [vmem:[%s2337 + $0x68] sm:$0xff]
      %v2348 = vld [vmem:[%s2337 + $0x78] sm:$0xff]
      %v2349 = vld [vmem:[%s2337 + $0x80] sm:$0xff]
      %v2350 = vld [vmem:[%s2337 + $0x90] sm:$0xff]
      %v2351 = vld [vmem:[%s2337 + $0x98] sm:$0xff]
      %v2352 = vld [vmem:[%s2337 + $0xa8] sm:$0xff]
      %v2353 = vld [vmem:[%s2337 + $0xb0] sm:$0xff]
      %v2354 = vld [vmem:[%s2337 + $0xc0] sm:$0xff]
      %v2355 = vld [vmem:[%s2337 + $0xc8] sm:$0xff]
      %v2356 = vld [vmem:[%s2337 + $0xd8] sm:$0xff]
      %v2357 = vld [vmem:[%s2337 + $0xe0] sm:$0xff]
      %v2358 = vld [vmem:[%s2337 + $0xf0] sm:$0xff]
      %v2359 = vld [vmem:[%s2337 + $0xf8] sm:$0xff]
      %v2360 = vld [vmem:[%s2337 + $0x108] sm:$0xff]
      %v2361 = vld [vmem:[%s2337 + $0x110] sm:$0xff]
      %v2362 = vld [vmem:[%s2337 + $0x120] sm:$0xff]
      %v2363 = vld [vmem:[%s2337 + $0x128] sm:$0xff]
      %v2364 = vld [vmem:[%s2337 + $0x138] sm:$0xff]
      %v2365 = vld [vmem:[%s2337 + $0x140] sm:$0xff]
      %v2366 = vld [vmem:[%s2337 + $0x150] sm:$0xff]
      %v2367 = vld [vmem:[%s2337 + $0x158] sm:$0xff]
      %v2368 = vld [vmem:[%s2337 + $0x168] sm:$0xff]
      %v2369 = vld [vmem:[%s2337 + $0x170] sm:$0xff]
      %v2370 = vpack.c.bf16 %v2338, %v2338
      %v2371 = vpack.c.bf16 %v2339, %v2339
      %v2372 = vpack.c.bf16 %v2340, %v2340
      %v2373 = vpack.c.bf16 %v2341, %v2341
      %v2374 = vpack.c.bf16 %v2342, %v2342
      %v2375 = vpack.c.bf16 %v2343, %v2343
      %v2376 = vpack.c.bf16 %v2344, %v2344
      %v2377 = vpack.c.bf16 %v2345, %v2345
      %v2378 = vpack.c.bf16 %v2346, %v2346
      %v2379 = vpack.c.bf16 %v2347, %v2347
      %v2380 = vpack.c.bf16 %v2348, %v2348
      %v2381 = vpack.c.bf16 %v2349, %v2349
      %v2382 = vpack.c.bf16 %v2350, %v2350
      %v2383 = vpack.c.bf16 %v2351, %v2351
      %v2384 = vpack.c.bf16 %v2352, %v2352
      %v2385 = vpack.c.bf16 %v2353, %v2353
      %v2386 = vpack.c.bf16 %v2354, %v2354
      %v2387 = vpack.c.bf16 %v2355, %v2355
      %v2388 = vpack.c.bf16 %v2356, %v2356
      %v2389 = vpack.c.bf16 %v2357, %v2357
      %v2390 = vpack.c.bf16 %v2358, %v2358
      %v2391 = vpack.c.bf16 %v2359, %v2359
      %v2392 = vpack.c.bf16 %v2360, %v2360
      %v2393 = vpack.c.bf16 %v2361, %v2361
      %v2394 = vpack.c.bf16 %v2362, %v2362
      %v2395 = vpack.c.bf16 %v2363, %v2363
      %v2396 = vpack.c.bf16 %v2364, %v2364
      %v2397 = vpack.c.bf16 %v2365, %v2365
      %v2398 = vpack.c.bf16 %v2366, %v2366
      %v2399 = vpack.c.bf16 %v2367, %v2367
      %v2400 = vpack.c.bf16 %v2368, %v2368
      %v2401 = vpack.c.bf16 %v2369, %v2369
      %s2402 = scalar_lea.vmem %s2, 12
      %v2403 = vld [vmem:[%s2402] sm:$0x3]
      %v2436 = vunpack.c.l.b16 %v2370
      %v2437 = vunpack.c.l.b16 %v2371
      %v2438 = vunpack.c.l.b16 %v2372
      %v2439 = vunpack.c.l.b16 %v2373
      %v2440 = vunpack.c.l.b16 %v2374
      %v2441 = vunpack.c.l.b16 %v2375
      %v2442 = vunpack.c.l.b16 %v2376
      %v2443 = vunpack.c.l.b16 %v2377
      %v2444 = vunpack.c.l.b16 %v2378
      %v2445 = vunpack.c.l.b16 %v2379
      %v2446 = vunpack.c.l.b16 %v2380
      %v2447 = vunpack.c.l.b16 %v2381
      %v2448 = vunpack.c.l.b16 %v2382
      %v2449 = vunpack.c.l.b16 %v2383
      %v2450 = vunpack.c.l.b16 %v2384
      %v2451 = vunpack.c.l.b16 %v2385
      %v2452 = vunpack.c.l.b16 %v2386
      %v2453 = vunpack.c.l.b16 %v2387
      %v2454 = vunpack.c.l.b16 %v2388
      %v2455 = vunpack.c.l.b16 %v2389
      %v2456 = vunpack.c.l.b16 %v2390
      %v2457 = vunpack.c.l.b16 %v2391
      %v2458 = vunpack.c.l.b16 %v2392
      %v2459 = vunpack.c.l.b16 %v2393
      %v2460 = vunpack.c.l.b16 %v2394
      %v2461 = vunpack.c.l.b16 %v2395
      %v2462 = vunpack.c.l.b16 %v2396
      %v2463 = vunpack.c.l.b16 %v2397
      %v2464 = vunpack.c.l.b16 %v2398
      %v2465 = vunpack.c.l.b16 %v2399
      %v2466 = vunpack.c.l.b16 %v2400
      %v2467 = vunpack.c.l.b16 %v2401
      %v2468 = vpack.c.b16 %v2437, %v2436
      %v2469 = vpack.c.b16 %v2439, %v2438
      %v2470 = vpack.c.b16 %v2441, %v2440
      %v2471 = vpack.c.b16 %v2443, %v2442
      %v2472 = vpack.c.b16 %v2445, %v2444
      %v2473 = vpack.c.b16 %v2447, %v2446
      %v2474 = vpack.c.b16 %v2449, %v2448
      %v2475 = vpack.c.b16 %v2451, %v2450
      %v2476 = vpack.c.b16 %v2453, %v2452
      %v2477 = vpack.c.b16 %v2455, %v2454
      %v2478 = vpack.c.b16 %v2457, %v2456
      %v2479 = vpack.c.b16 %v2459, %v2458
      %v2480 = vpack.c.b16 %v2461, %v2460
      %v2481 = vpack.c.b16 %v2463, %v2462
      %v2482 = vpack.c.b16 %v2465, %v2464
      %v2483 = vpack.c.b16 %v2467, %v2466
      %v2485 = vsel %vm382, %v2468, 0
      %v2488 = vsel %vm382, %v2469, 0
      %v2491 = vsel %vm382, %v2470, 0
      %v2494 = vsel %vm382, %v2471, 0
      %v2497 = vsel %vm382, %v2472, 0
      %v2500 = vsel %vm382, %v2473, 0
      %v2503 = vsel %vm382, %v2474, 0
      %v2506 = vsel %vm382, %v2475, 0
      %v2509 = vsel %vm382, %v2476, 0
      %v2512 = vsel %vm382, %v2477, 0
      %v2515 = vsel %vm382, %v2478, 0
      %v2518 = vsel %vm382, %v2479, 0
      %v2521 = vsel %vm382, %v2480, 0
      %v2524 = vsel %vm382, %v2481, 0
      %v2527 = vsel %vm382, %v2482, 0
      %v2530 = vsel %vm382, %v2483, 0
      %v2533 = vsel %vm752, %v2403, 0
      %2535 = vmatpush.bf16.msra.mxu0 0
      %2536 = vmatpush.bf16.msra.mxu0 0
      %2537 = vmatpush.bf16.msra.mxu0 0
      %2538 = vmatpush.bf16.msra.mxu0 0
      %2539 = vmatpush.bf16.msra.mxu0 0
      %2540 = vmatpush.bf16.msra.mxu0 0
      %2541 = vmatpush.bf16.msra.mxu0 0
      %2542 = vmatpush.bf16.msra.mxu0 %v2533
      %2543 = vmatmul.bf16.gmra.mxu0 %v2485
      %v2544 = vpop.f32.mrf.mxu0
      %v2545 = vadd.f32 0.0, %v2544
      %v2546 = vpop.f32.mrf.mxu0
      %v2547 = vadd.f32 0.0, %v2546
      %2548 = vmatmul.bf16.gmra.mxu0 %v2488
      %v2549 = vpop.f32.mrf.mxu0
      %v2550 = vadd.f32 0.0, %v2549
      %v2551 = vpop.f32.mrf.mxu0
      %v2552 = vadd.f32 0.0, %v2551
      %2553 = vmatmul.bf16.gmra.mxu0 %v2491
      %v2554 = vpop.f32.mrf.mxu0
      %v2555 = vadd.f32 0.0, %v2554
      %v2556 = vpop.f32.mrf.mxu0
      %v2557 = vadd.f32 0.0, %v2556
      %2558 = vmatmul.bf16.gmra.mxu0 %v2494
      %v2559 = vpop.f32.mrf.mxu0
      %v2560 = vadd.f32 0.0, %v2559
      %v2561 = vpop.f32.mrf.mxu0
      %v2562 = vadd.f32 0.0, %v2561
      %2563 = vmatmul.bf16.gmra.mxu0 %v2497
      %v2564 = vpop.f32.mrf.mxu0
      %v2565 = vadd.f32 0.0, %v2564
      %v2566 = vpop.f32.mrf.mxu0
      %v2567 = vadd.f32 0.0, %v2566
      %2568 = vmatmul.bf16.gmra.mxu0 %v2500
      %v2569 = vpop.f32.mrf.mxu0
      %v2570 = vadd.f32 0.0, %v2569
      %v2571 = vpop.f32.mrf.mxu0
      %v2572 = vadd.f32 0.0, %v2571
      %2573 = vmatmul.bf16.gmra.mxu0 %v2503
      %v2574 = vpop.f32.mrf.mxu0
      %v2575 = vadd.f32 0.0, %v2574
      %v2576 = vpop.f32.mrf.mxu0
      %v2577 = vadd.f32 0.0, %v2576
      %2578 = vmatmul.bf16.gmra.mxu0 %v2506
      %v2579 = vpop.f32.mrf.mxu0
      %v2580 = vadd.f32 0.0, %v2579
      %v2581 = vpop.f32.mrf.mxu0
      %v2582 = vadd.f32 0.0, %v2581
      %2583 = vmatmul.bf16.gmra.mxu0 %v2509
      %v2584 = vpop.f32.mrf.mxu0
      %v2585 = vadd.f32 0.0, %v2584
      %v2586 = vpop.f32.mrf.mxu0
      %v2587 = vadd.f32 0.0, %v2586
      %2588 = vmatmul.bf16.gmra.mxu0 %v2512
      %v2589 = vpop.f32.mrf.mxu0
      %v2590 = vadd.f32 0.0, %v2589
      %v2591 = vpop.f32.mrf.mxu0
      %v2592 = vadd.f32 0.0, %v2591
      %2593 = vmatmul.bf16.gmra.mxu0 %v2515
      %v2594 = vpop.f32.mrf.mxu0
      %v2595 = vadd.f32 0.0, %v2594
      %v2596 = vpop.f32.mrf.mxu0
      %v2597 = vadd.f32 0.0, %v2596
      %2598 = vmatmul.bf16.gmra.mxu0 %v2518
      %v2599 = vpop.f32.mrf.mxu0
      %v2600 = vadd.f32 0.0, %v2599
      %v2601 = vpop.f32.mrf.mxu0
      %v2602 = vadd.f32 0.0, %v2601
      %2603 = vmatmul.bf16.gmra.mxu0 %v2521
      %v2604 = vpop.f32.mrf.mxu0
      %v2605 = vadd.f32 0.0, %v2604
      %v2606 = vpop.f32.mrf.mxu0
      %v2607 = vadd.f32 0.0, %v2606
      %2608 = vmatmul.bf16.gmra.mxu0 %v2524
      %v2609 = vpop.f32.mrf.mxu0
      %v2610 = vadd.f32 0.0, %v2609
      %v2611 = vpop.f32.mrf.mxu0
      %v2612 = vadd.f32 0.0, %v2611
      %2613 = vmatmul.bf16.gmra.mxu0 %v2527
      %v2614 = vpop.f32.mrf.mxu0
      %v2615 = vadd.f32 0.0, %v2614
      %v2616 = vpop.f32.mrf.mxu0
      %v2617 = vadd.f32 0.0, %v2616
      %2618 = vmatmul.bf16.gmra.mxu0 %v2530
      %v2619 = vpop.f32.mrf.mxu0
      %v2620 = vadd.f32 0.0, %v2619
      %v2621 = vpop.f32.mrf.mxu0
      %v2622 = vadd.f32 0.0, %v2621
      %2623 = vdwg.mxu0
      %v2624 = vadd.f32 %v2305, %v2545
      %v2625 = vadd.f32 %v2306, %v2547
      %v2626 = vadd.f32 %v2307, %v2550
      %v2627 = vadd.f32 %v2308, %v2552
      %v2628 = vadd.f32 %v2309, %v2555
      %v2629 = vadd.f32 %v2310, %v2557
      %v2630 = vadd.f32 %v2311, %v2560
      %v2631 = vadd.f32 %v2312, %v2562
      %v2632 = vadd.f32 %v2313, %v2565
      %v2633 = vadd.f32 %v2314, %v2567
      %v2634 = vadd.f32 %v2315, %v2570
      %v2635 = vadd.f32 %v2316, %v2572
      %v2636 = vadd.f32 %v2317, %v2575
      %v2637 = vadd.f32 %v2318, %v2577
      %v2638 = vadd.f32 %v2319, %v2580
      %v2639 = vadd.f32 %v2320, %v2582
      %v2640 = vadd.f32 %v2321, %v2585
      %v2641 = vadd.f32 %v2322, %v2587
      %v2642 = vadd.f32 %v2323, %v2590
      %v2643 = vadd.f32 %v2324, %v2592
      %v2644 = vadd.f32 %v2325, %v2595
      %v2645 = vadd.f32 %v2326, %v2597
      %v2646 = vadd.f32 %v2327, %v2600
      %v2647 = vadd.f32 %v2328, %v2602
      %v2648 = vadd.f32 %v2329, %v2605
      %v2649 = vadd.f32 %v2330, %v2607
      %v2650 = vadd.f32 %v2331, %v2610
      %v2651 = vadd.f32 %v2332, %v2612
      %v2652 = vadd.f32 %v2333, %v2615
      %v2653 = vadd.f32 %v2334, %v2617
      %v2654 = vadd.f32 %v2335, %v2620
      %v2655 = vadd.f32 %v2336, %v2622
      %v2656 = vld [vmem:[%s2337 + $0x1] sm:$0xff]
      %v2657 = vld [vmem:[%s2337 + $0x9] sm:$0xff]
      %v2658 = vld [vmem:[%s2337 + $0x19] sm:$0xff]
      %v2659 = vld [vmem:[%s2337 + $0x21] sm:$0xff]
      %v2660 = vld [vmem:[%s2337 + $0x31] sm:$0xff]
      %v2661 = vld [vmem:[%s2337 + $0x39] sm:$0xff]
      %v2662 = vld [vmem:[%s2337 + $0x49] sm:$0xff]
      %v2663 = vld [vmem:[%s2337 + $0x51] sm:$0xff]
      %v2664 = vld [vmem:[%s2337 + $0x61] sm:$0xff]
      %v2665 = vld [vmem:[%s2337 + $0x69] sm:$0xff]
      %v2666 = vld [vmem:[%s2337 + $0x79] sm:$0xff]
      %v2667 = vld [vmem:[%s2337 + $0x81] sm:$0xff]
      %v2668 = vld [vmem:[%s2337 + $0x91] sm:$0xff]
      %v2669 = vld [vmem:[%s2337 + $0x99] sm:$0xff]
      %v2670 = vld [vmem:[%s2337 + $0xa9] sm:$0xff]
      %v2671 = vld [vmem:[%s2337 + $0xb1] sm:$0xff]
      %v2672 = vld [vmem:[%s2337 + $0xc1] sm:$0xff]
      %v2673 = vld [vmem:[%s2337 + $0xc9] sm:$0xff]
      %v2674 = vld [vmem:[%s2337 + $0xd9] sm:$0xff]
      %v2675 = vld [vmem:[%s2337 + $0xe1] sm:$0xff]
      %v2676 = vld [vmem:[%s2337 + $0xf1] sm:$0xff]
      %v2677 = vld [vmem:[%s2337 + $0xf9] sm:$0xff]
      %v2678 = vld [vmem:[%s2337 + $0x109] sm:$0xff]
      %v2679 = vld [vmem:[%s2337 + $0x111] sm:$0xff]
      %v2680 = vld [vmem:[%s2337 + $0x121] sm:$0xff]
      %v2681 = vld [vmem:[%s2337 + $0x129] sm:$0xff]
      %v2682 = vld [vmem:[%s2337 + $0x139] sm:$0xff]
      %v2683 = vld [vmem:[%s2337 + $0x141] sm:$0xff]
      %v2684 = vld [vmem:[%s2337 + $0x151] sm:$0xff]
      %v2685 = vld [vmem:[%s2337 + $0x159] sm:$0xff]
      %v2686 = vld [vmem:[%s2337 + $0x169] sm:$0xff]
      %v2687 = vld [vmem:[%s2337 + $0x171] sm:$0xff]
      %v2688 = vpack.c.bf16 %v2656, %v2656
      %v2689 = vpack.c.bf16 %v2657, %v2657
      %v2690 = vpack.c.bf16 %v2658, %v2658
      %v2691 = vpack.c.bf16 %v2659, %v2659
      %v2692 = vpack.c.bf16 %v2660, %v2660
      %v2693 = vpack.c.bf16 %v2661, %v2661
      %v2694 = vpack.c.bf16 %v2662, %v2662
      %v2695 = vpack.c.bf16 %v2663, %v2663
      %v2696 = vpack.c.bf16 %v2664, %v2664
      %v2697 = vpack.c.bf16 %v2665, %v2665
      %v2698 = vpack.c.bf16 %v2666, %v2666
      %v2699 = vpack.c.bf16 %v2667, %v2667
      %v2700 = vpack.c.bf16 %v2668, %v2668
      %v2701 = vpack.c.bf16 %v2669, %v2669
      %v2702 = vpack.c.bf16 %v2670, %v2670
      %v2703 = vpack.c.bf16 %v2671, %v2671
      %v2704 = vpack.c.bf16 %v2672, %v2672
      %v2705 = vpack.c.bf16 %v2673, %v2673
      %v2706 = vpack.c.bf16 %v2674, %v2674
      %v2707 = vpack.c.bf16 %v2675, %v2675
      %v2708 = vpack.c.bf16 %v2676, %v2676
      %v2709 = vpack.c.bf16 %v2677, %v2677
      %v2710 = vpack.c.bf16 %v2678, %v2678
      %v2711 = vpack.c.bf16 %v2679, %v2679
      %v2712 = vpack.c.bf16 %v2680, %v2680
      %v2713 = vpack.c.bf16 %v2681, %v2681
      %v2714 = vpack.c.bf16 %v2682, %v2682
      %v2715 = vpack.c.bf16 %v2683, %v2683
      %v2716 = vpack.c.bf16 %v2684, %v2684
      %v2717 = vpack.c.bf16 %v2685, %v2685
      %v2718 = vpack.c.bf16 %v2686, %v2686
      %v2719 = vpack.c.bf16 %v2687, %v2687
      %s2720 = scalar_lea.vmem %s2, 14
      %v2721 = vld [vmem:[%s2720] sm:$0x3]
      %v2754 = vunpack.c.l.b16 %v2688
      %v2755 = vunpack.c.l.b16 %v2689
      %v2756 = vunpack.c.l.b16 %v2690
      %v2757 = vunpack.c.l.b16 %v2691
      %v2758 = vunpack.c.l.b16 %v2692
      %v2759 = vunpack.c.l.b16 %v2693
      %v2760 = vunpack.c.l.b16 %v2694
      %v2761 = vunpack.c.l.b16 %v2695
      %v2762 = vunpack.c.l.b16 %v2696
      %v2763 = vunpack.c.l.b16 %v2697
      %v2764 = vunpack.c.l.b16 %v2698
      %v2765 = vunpack.c.l.b16 %v2699
      %v2766 = vunpack.c.l.b16 %v2700
      %v2767 = vunpack.c.l.b16 %v2701
      %v2768 = vunpack.c.l.b16 %v2702
      %v2769 = vunpack.c.l.b16 %v2703
      %v2770 = vunpack.c.l.b16 %v2704
      %v2771 = vunpack.c.l.b16 %v2705
      %v2772 = vunpack.c.l.b16 %v2706
      %v2773 = vunpack.c.l.b16 %v2707
      %v2774 = vunpack.c.l.b16 %v2708
      %v2775 = vunpack.c.l.b16 %v2709
      %v2776 = vunpack.c.l.b16 %v2710
      %v2777 = vunpack.c.l.b16 %v2711
      %v2778 = vunpack.c.l.b16 %v2712
      %v2779 = vunpack.c.l.b16 %v2713
      %v2780 = vunpack.c.l.b16 %v2714
      %v2781 = vunpack.c.l.b16 %v2715
      %v2782 = vunpack.c.l.b16 %v2716
      %v2783 = vunpack.c.l.b16 %v2717
      %v2784 = vunpack.c.l.b16 %v2718
      %v2785 = vunpack.c.l.b16 %v2719
      %v2786 = vpack.c.b16 %v2755, %v2754
      %v2787 = vpack.c.b16 %v2757, %v2756
      %v2788 = vpack.c.b16 %v2759, %v2758
      %v2789 = vpack.c.b16 %v2761, %v2760
      %v2790 = vpack.c.b16 %v2763, %v2762
      %v2791 = vpack.c.b16 %v2765, %v2764
      %v2792 = vpack.c.b16 %v2767, %v2766
      %v2793 = vpack.c.b16 %v2769, %v2768
      %v2794 = vpack.c.b16 %v2771, %v2770
      %v2795 = vpack.c.b16 %v2773, %v2772
      %v2796 = vpack.c.b16 %v2775, %v2774
      %v2797 = vpack.c.b16 %v2777, %v2776
      %v2798 = vpack.c.b16 %v2779, %v2778
      %v2799 = vpack.c.b16 %v2781, %v2780
      %v2800 = vpack.c.b16 %v2783, %v2782
      %v2801 = vpack.c.b16 %v2785, %v2784
      %v2803 = vsel %vm382, %v2786, 0
      %v2806 = vsel %vm382, %v2787, 0
      %v2809 = vsel %vm382, %v2788, 0
      %v2812 = vsel %vm382, %v2789, 0
      %v2815 = vsel %vm382, %v2790, 0
      %v2818 = vsel %vm382, %v2791, 0
      %v2821 = vsel %vm382, %v2792, 0
      %v2824 = vsel %vm382, %v2793, 0
      %v2827 = vsel %vm382, %v2794, 0
      %v2830 = vsel %vm382, %v2795, 0
      %v2833 = vsel %vm382, %v2796, 0
      %v2836 = vsel %vm382, %v2797, 0
      %v2839 = vsel %vm382, %v2798, 0
      %v2842 = vsel %vm382, %v2799, 0
      %v2845 = vsel %vm382, %v2800, 0
      %v2848 = vsel %vm382, %v2801, 0
      %v2851 = vsel %vm752, %v2721, 0
      %2853 = vmatpush.bf16.msra.mxu0 0
      %2854 = vmatpush.bf16.msra.mxu0 0
      %2855 = vmatpush.bf16.msra.mxu0 0
      %2856 = vmatpush.bf16.msra.mxu0 0
      %2857 = vmatpush.bf16.msra.mxu0 0
      %2858 = vmatpush.bf16.msra.mxu0 0
      %2859 = vmatpush.bf16.msra.mxu0 0
      %2860 = vmatpush.bf16.msra.mxu0 %v2851
      %2861 = vmatmul.bf16.gmra.mxu0 %v2803
      %v2862 = vpop.f32.mrf.mxu0
      %v2863 = vadd.f32 0.0, %v2862
      %v2864 = vpop.f32.mrf.mxu0
      %v2865 = vadd.f32 0.0, %v2864
      %2866 = vmatmul.bf16.gmra.mxu0 %v2806
      %v2867 = vpop.f32.mrf.mxu0
      %v2868 = vadd.f32 0.0, %v2867
      %v2869 = vpop.f32.mrf.mxu0
      %v2870 = vadd.f32 0.0, %v2869
      %2871 = vmatmul.bf16.gmra.mxu0 %v2809
      %v2872 = vpop.f32.mrf.mxu0
      %v2873 = vadd.f32 0.0, %v2872
      %v2874 = vpop.f32.mrf.mxu0
      %v2875 = vadd.f32 0.0, %v2874
      %2876 = vmatmul.bf16.gmra.mxu0 %v2812
      %v2877 = vpop.f32.mrf.mxu0
      %v2878 = vadd.f32 0.0, %v2877
      %v2879 = vpop.f32.mrf.mxu0
      %v2880 = vadd.f32 0.0, %v2879
      %2881 = vmatmul.bf16.gmra.mxu0 %v2815
      %v2882 = vpop.f32.mrf.mxu0
      %v2883 = vadd.f32 0.0, %v2882
      %v2884 = vpop.f32.mrf.mxu0
      %v2885 = vadd.f32 0.0, %v2884
      %2886 = vmatmul.bf16.gmra.mxu0 %v2818
      %v2887 = vpop.f32.mrf.mxu0
      %v2888 = vadd.f32 0.0, %v2887
      %v2889 = vpop.f32.mrf.mxu0
      %v2890 = vadd.f32 0.0, %v2889
      %2891 = vmatmul.bf16.gmra.mxu0 %v2821
      %v2892 = vpop.f32.mrf.mxu0
      %v2893 = vadd.f32 0.0, %v2892
      %v2894 = vpop.f32.mrf.mxu0
      %v2895 = vadd.f32 0.0, %v2894
      %2896 = vmatmul.bf16.gmra.mxu0 %v2824
      %v2897 = vpop.f32.mrf.mxu0
      %v2898 = vadd.f32 0.0, %v2897
      %v2899 = vpop.f32.mrf.mxu0
      %v2900 = vadd.f32 0.0, %v2899
      %2901 = vmatmul.bf16.gmra.mxu0 %v2827
      %v2902 = vpop.f32.mrf.mxu0
      %v2903 = vadd.f32 0.0, %v2902
      %v2904 = vpop.f32.mrf.mxu0
      %v2905 = vadd.f32 0.0, %v2904
      %2906 = vmatmul.bf16.gmra.mxu0 %v2830
      %v2907 = vpop.f32.mrf.mxu0
      %v2908 = vadd.f32 0.0, %v2907
      %v2909 = vpop.f32.mrf.mxu0
      %v2910 = vadd.f32 0.0, %v2909
      %2911 = vmatmul.bf16.gmra.mxu0 %v2833
      %v2912 = vpop.f32.mrf.mxu0
      %v2913 = vadd.f32 0.0, %v2912
      %v2914 = vpop.f32.mrf.mxu0
      %v2915 = vadd.f32 0.0, %v2914
      %2916 = vmatmul.bf16.gmra.mxu0 %v2836
      %v2917 = vpop.f32.mrf.mxu0
      %v2918 = vadd.f32 0.0, %v2917
      %v2919 = vpop.f32.mrf.mxu0
      %v2920 = vadd.f32 0.0, %v2919
      %2921 = vmatmul.bf16.gmra.mxu0 %v2839
      %v2922 = vpop.f32.mrf.mxu0
      %v2923 = vadd.f32 0.0, %v2922
      %v2924 = vpop.f32.mrf.mxu0
      %v2925 = vadd.f32 0.0, %v2924
      %2926 = vmatmul.bf16.gmra.mxu0 %v2842
      %v2927 = vpop.f32.mrf.mxu0
      %v2928 = vadd.f32 0.0, %v2927
      %v2929 = vpop.f32.mrf.mxu0
      %v2930 = vadd.f32 0.0, %v2929
      %2931 = vmatmul.bf16.gmra.mxu0 %v2845
      %v2932 = vpop.f32.mrf.mxu0
      %v2933 = vadd.f32 0.0, %v2932
      %v2934 = vpop.f32.mrf.mxu0
      %v2935 = vadd.f32 0.0, %v2934
      %2936 = vmatmul.bf16.gmra.mxu0 %v2848
      %v2937 = vpop.f32.mrf.mxu0
      %v2938 = vadd.f32 0.0, %v2937
      %v2939 = vpop.f32.mrf.mxu0
      %v2940 = vadd.f32 0.0, %v2939
      %2941 = vdwg.mxu0
      %v2942 = vadd.f32 %v2624, %v2863
      %v2943 = vadd.f32 %v2625, %v2865
      %v2944 = vadd.f32 %v2626, %v2868
      %v2945 = vadd.f32 %v2627, %v2870
      %v2946 = vadd.f32 %v2628, %v2873
      %v2947 = vadd.f32 %v2629, %v2875
      %v2948 = vadd.f32 %v2630, %v2878
      %v2949 = vadd.f32 %v2631, %v2880
      %v2950 = vadd.f32 %v2632, %v2883
      %v2951 = vadd.f32 %v2633, %v2885
      %v2952 = vadd.f32 %v2634, %v2888
      %v2953 = vadd.f32 %v2635, %v2890
      %v2954 = vadd.f32 %v2636, %v2893
      %v2955 = vadd.f32 %v2637, %v2895
      %v2956 = vadd.f32 %v2638, %v2898
      %v2957 = vadd.f32 %v2639, %v2900
      %v2958 = vadd.f32 %v2640, %v2903
      %v2959 = vadd.f32 %v2641, %v2905
      %v2960 = vadd.f32 %v2642, %v2908
      %v2961 = vadd.f32 %v2643, %v2910
      %v2962 = vadd.f32 %v2644, %v2913
      %v2963 = vadd.f32 %v2645, %v2915
      %v2964 = vadd.f32 %v2646, %v2918
      %v2965 = vadd.f32 %v2647, %v2920
      %v2966 = vadd.f32 %v2648, %v2923
      %v2967 = vadd.f32 %v2649, %v2925
      %v2968 = vadd.f32 %v2650, %v2928
      %v2969 = vadd.f32 %v2651, %v2930
      %v2970 = vadd.f32 %v2652, %v2933
      %v2971 = vadd.f32 %v2653, %v2935
      %v2972 = vadd.f32 %v2654, %v2938
      %v2973 = vadd.f32 %v2655, %v2940
      %v2974 = vld [vmem:[%s2337 + $0x2] sm:$0xff]
      %v2975 = vld [vmem:[%s2337 + $0xa] sm:$0xff]
      %v2976 = vld [vmem:[%s2337 + $0x1a] sm:$0xff]
      %v2977 = vld [vmem:[%s2337 + $0x22] sm:$0xff]
      %v2978 = vld [vmem:[%s2337 + $0x32] sm:$0xff]
      %v2979 = vld [vmem:[%s2337 + $0x3a] sm:$0xff]
      %v2980 = vld [vmem:[%s2337 + $0x4a] sm:$0xff]
      %v2981 = vld [vmem:[%s2337 + $0x52] sm:$0xff]
      %v2982 = vld [vmem:[%s2337 + $0x62] sm:$0xff]
      %v2983 = vld [vmem:[%s2337 + $0x6a] sm:$0xff]
      %v2984 = vld [vmem:[%s2337 + $0x7a] sm:$0xff]
      %v2985 = vld [vmem:[%s2337 + $0x82] sm:$0xff]
      %v2986 = vld [vmem:[%s2337 + $0x92] sm:$0xff]
      %v2987 = vld [vmem:[%s2337 + $0x9a] sm:$0xff]
      %v2988 = vld [vmem:[%s2337 + $0xaa] sm:$0xff]
      %v2989 = vld [vmem:[%s2337 + $0xb2] sm:$0xff]
      %v2990 = vld [vmem:[%s2337 + $0xc2] sm:$0xff]
      %v2991 = vld [vmem:[%s2337 + $0xca] sm:$0xff]
      %v2992 = vld [vmem:[%s2337 + $0xda] sm:$0xff]
      %v2993 = vld [vmem:[%s2337 + $0xe2] sm:$0xff]
      %v2994 = vld [vmem:[%s2337 + $0xf2] sm:$0xff]
      %v2995 = vld [vmem:[%s2337 + $0xfa] sm:$0xff]
      %v2996 = vld [vmem:[%s2337 + $0x10a] sm:$0xff]
      %v2997 = vld [vmem:[%s2337 + $0x112] sm:$0xff]
      %v2998 = vld [vmem:[%s2337 + $0x122] sm:$0xff]
      %v2999 = vld [vmem:[%s2337 + $0x12a] sm:$0xff]
      %v3000 = vld [vmem:[%s2337 + $0x13a] sm:$0xff]
      %v3001 = vld [vmem:[%s2337 + $0x142] sm:$0xff]
      %v3002 = vld [vmem:[%s2337 + $0x152] sm:$0xff]
      %v3003 = vld [vmem:[%s2337 + $0x15a] sm:$0xff]
      %v3004 = vld [vmem:[%s2337 + $0x16a] sm:$0xff]
      %v3005 = vld [vmem:[%s2337 + $0x172] sm:$0xff]
      %v3006 = vpack.c.bf16 %v2974, %v2974
      %v3007 = vpack.c.bf16 %v2975, %v2975
      %v3008 = vpack.c.bf16 %v2976, %v2976
      %v3009 = vpack.c.bf16 %v2977, %v2977
      %v3010 = vpack.c.bf16 %v2978, %v2978
      %v3011 = vpack.c.bf16 %v2979, %v2979
      %v3012 = vpack.c.bf16 %v2980, %v2980
      %v3013 = vpack.c.bf16 %v2981, %v2981
      %v3014 = vpack.c.bf16 %v2982, %v2982
      %v3015 = vpack.c.bf16 %v2983, %v2983
      %v3016 = vpack.c.bf16 %v2984, %v2984
      %v3017 = vpack.c.bf16 %v2985, %v2985
      %v3018 = vpack.c.bf16 %v2986, %v2986
      %v3019 = vpack.c.bf16 %v2987, %v2987
      %v3020 = vpack.c.bf16 %v2988, %v2988
      %v3021 = vpack.c.bf16 %v2989, %v2989
      %v3022 = vpack.c.bf16 %v2990, %v2990
      %v3023 = vpack.c.bf16 %v2991, %v2991
      %v3024 = vpack.c.bf16 %v2992, %v2992
      %v3025 = vpack.c.bf16 %v2993, %v2993
      %v3026 = vpack.c.bf16 %v2994, %v2994
      %v3027 = vpack.c.bf16 %v2995, %v2995
      %v3028 = vpack.c.bf16 %v2996, %v2996
      %v3029 = vpack.c.bf16 %v2997, %v2997
      %v3030 = vpack.c.bf16 %v2998, %v2998
      %v3031 = vpack.c.bf16 %v2999, %v2999
      %v3032 = vpack.c.bf16 %v3000, %v3000
      %v3033 = vpack.c.bf16 %v3001, %v3001
      %v3034 = vpack.c.bf16 %v3002, %v3002
      %v3035 = vpack.c.bf16 %v3003, %v3003
      %v3036 = vpack.c.bf16 %v3004, %v3004
      %v3037 = vpack.c.bf16 %v3005, %v3005
      %s3038 = scalar_lea.vmem %s2, 16
      %v3039 = vld [vmem:[%s3038] sm:$0x3]
      %v3072 = vunpack.c.l.b16 %v3006
      %v3073 = vunpack.c.l.b16 %v3007
      %v3074 = vunpack.c.l.b16 %v3008
      %v3075 = vunpack.c.l.b16 %v3009
      %v3076 = vunpack.c.l.b16 %v3010
      %v3077 = vunpack.c.l.b16 %v3011
      %v3078 = vunpack.c.l.b16 %v3012
      %v3079 = vunpack.c.l.b16 %v3013
      %v3080 = vunpack.c.l.b16 %v3014
      %v3081 = vunpack.c.l.b16 %v3015
      %v3082 = vunpack.c.l.b16 %v3016
      %v3083 = vunpack.c.l.b16 %v3017
      %v3084 = vunpack.c.l.b16 %v3018
      %v3085 = vunpack.c.l.b16 %v3019
      %v3086 = vunpack.c.l.b16 %v3020
      %v3087 = vunpack.c.l.b16 %v3021
      %v3088 = vunpack.c.l.b16 %v3022
      %v3089 = vunpack.c.l.b16 %v3023
      %v3090 = vunpack.c.l.b16 %v3024
      %v3091 = vunpack.c.l.b16 %v3025
      %v3092 = vunpack.c.l.b16 %v3026
      %v3093 = vunpack.c.l.b16 %v3027
      %v3094 = vunpack.c.l.b16 %v3028
      %v3095 = vunpack.c.l.b16 %v3029
      %v3096 = vunpack.c.l.b16 %v3030
      %v3097 = vunpack.c.l.b16 %v3031
      %v3098 = vunpack.c.l.b16 %v3032
      %v3099 = vunpack.c.l.b16 %v3033
      %v3100 = vunpack.c.l.b16 %v3034
      %v3101 = vunpack.c.l.b16 %v3035
      %v3102 = vunpack.c.l.b16 %v3036
      %v3103 = vunpack.c.l.b16 %v3037
      %v3104 = vpack.c.b16 %v3073, %v3072
      %v3105 = vpack.c.b16 %v3075, %v3074
      %v3106 = vpack.c.b16 %v3077, %v3076
      %v3107 = vpack.c.b16 %v3079, %v3078
      %v3108 = vpack.c.b16 %v3081, %v3080
      %v3109 = vpack.c.b16 %v3083, %v3082
      %v3110 = vpack.c.b16 %v3085, %v3084
      %v3111 = vpack.c.b16 %v3087, %v3086
      %v3112 = vpack.c.b16 %v3089, %v3088
      %v3113 = vpack.c.b16 %v3091, %v3090
      %v3114 = vpack.c.b16 %v3093, %v3092
      %v3115 = vpack.c.b16 %v3095, %v3094
      %v3116 = vpack.c.b16 %v3097, %v3096
      %v3117 = vpack.c.b16 %v3099, %v3098
      %v3118 = vpack.c.b16 %v3101, %v3100
      %v3119 = vpack.c.b16 %v3103, %v3102
      %v3121 = vsel %vm382, %v3104, 0
      %v3124 = vsel %vm382, %v3105, 0
      %v3127 = vsel %vm382, %v3106, 0
      %v3130 = vsel %vm382, %v3107, 0
      %v3133 = vsel %vm382, %v3108, 0
      %v3136 = vsel %vm382, %v3109, 0
      %v3139 = vsel %vm382, %v3110, 0
      %v3142 = vsel %vm382, %v3111, 0
      %v3145 = vsel %vm382, %v3112, 0
      %v3148 = vsel %vm382, %v3113, 0
      %v3151 = vsel %vm382, %v3114, 0
      %v3154 = vsel %vm382, %v3115, 0
      %v3157 = vsel %vm382, %v3116, 0
      %v3160 = vsel %vm382, %v3117, 0
      %v3163 = vsel %vm382, %v3118, 0
      %v3166 = vsel %vm382, %v3119, 0
      %v3169 = vsel %vm752, %v3039, 0
      %3171 = vmatpush.bf16.msra.mxu0 0
      %3172 = vmatpush.bf16.msra.mxu0 0
      %3173 = vmatpush.bf16.msra.mxu0 0
      %3174 = vmatpush.bf16.msra.mxu0 0
      %3175 = vmatpush.bf16.msra.mxu0 0
      %3176 = vmatpush.bf16.msra.mxu0 0
      %3177 = vmatpush.bf16.msra.mxu0 0
      %3178 = vmatpush.bf16.msra.mxu0 %v3169
      %3179 = vmatmul.bf16.gmra.mxu0 %v3121
      %v3180 = vpop.f32.mrf.mxu0
      %v3181 = vadd.f32 0.0, %v3180
      %v3182 = vpop.f32.mrf.mxu0
      %v3183 = vadd.f32 0.0, %v3182
      %3184 = vmatmul.bf16.gmra.mxu0 %v3124
      %v3185 = vpop.f32.mrf.mxu0
      %v3186 = vadd.f32 0.0, %v3185
      %v3187 = vpop.f32.mrf.mxu0
      %v3188 = vadd.f32 0.0, %v3187
      %3189 = vmatmul.bf16.gmra.mxu0 %v3127
      %v3190 = vpop.f32.mrf.mxu0
      %v3191 = vadd.f32 0.0, %v3190
      %v3192 = vpop.f32.mrf.mxu0
      %v3193 = vadd.f32 0.0, %v3192
      %3194 = vmatmul.bf16.gmra.mxu0 %v3130
      %v3195 = vpop.f32.mrf.mxu0
      %v3196 = vadd.f32 0.0, %v3195
      %v3197 = vpop.f32.mrf.mxu0
      %v3198 = vadd.f32 0.0, %v3197
      %3199 = vmatmul.bf16.gmra.mxu0 %v3133
      %v3200 = vpop.f32.mrf.mxu0
      %v3201 = vadd.f32 0.0, %v3200
      %v3202 = vpop.f32.mrf.mxu0
      %v3203 = vadd.f32 0.0, %v3202
      %3204 = vmatmul.bf16.gmra.mxu0 %v3136
      %v3205 = vpop.f32.mrf.mxu0
      %v3206 = vadd.f32 0.0, %v3205
      %v3207 = vpop.f32.mrf.mxu0
      %v3208 = vadd.f32 0.0, %v3207
      %3209 = vmatmul.bf16.gmra.mxu0 %v3139
      %v3210 = vpop.f32.mrf.mxu0
      %v3211 = vadd.f32 0.0, %v3210
      %v3212 = vpop.f32.mrf.mxu0
      %v3213 = vadd.f32 0.0, %v3212
      %3214 = vmatmul.bf16.gmra.mxu0 %v3142
      %v3215 = vpop.f32.mrf.mxu0
      %v3216 = vadd.f32 0.0, %v3215
      %v3217 = vpop.f32.mrf.mxu0
      %v3218 = vadd.f32 0.0, %v3217
      %3219 = vmatmul.bf16.gmra.mxu0 %v3145
      %v3220 = vpop.f32.mrf.mxu0
      %v3221 = vadd.f32 0.0, %v3220
      %v3222 = vpop.f32.mrf.mxu0
      %v3223 = vadd.f32 0.0, %v3222
      %3224 = vmatmul.bf16.gmra.mxu0 %v3148
      %v3225 = vpop.f32.mrf.mxu0
      %v3226 = vadd.f32 0.0, %v3225
      %v3227 = vpop.f32.mrf.mxu0
      %v3228 = vadd.f32 0.0, %v3227
      %3229 = vmatmul.bf16.gmra.mxu0 %v3151
      %v3230 = vpop.f32.mrf.mxu0
      %v3231 = vadd.f32 0.0, %v3230
      %v3232 = vpop.f32.mrf.mxu0
      %v3233 = vadd.f32 0.0, %v3232
      %3234 = vmatmul.bf16.gmra.mxu0 %v3154
      %v3235 = vpop.f32.mrf.mxu0
      %v3236 = vadd.f32 0.0, %v3235
      %v3237 = vpop.f32.mrf.mxu0
      %v3238 = vadd.f32 0.0, %v3237
      %3239 = vmatmul.bf16.gmra.mxu0 %v3157
      %v3240 = vpop.f32.mrf.mxu0
      %v3241 = vadd.f32 0.0, %v3240
      %v3242 = vpop.f32.mrf.mxu0
      %v3243 = vadd.f32 0.0, %v3242
      %3244 = vmatmul.bf16.gmra.mxu0 %v3160
      %v3245 = vpop.f32.mrf.mxu0
      %v3246 = vadd.f32 0.0, %v3245
      %v3247 = vpop.f32.mrf.mxu0
      %v3248 = vadd.f32 0.0, %v3247
      %3249 = vmatmul.bf16.gmra.mxu0 %v3163
      %v3250 = vpop.f32.mrf.mxu0
      %v3251 = vadd.f32 0.0, %v3250
      %v3252 = vpop.f32.mrf.mxu0
      %v3253 = vadd.f32 0.0, %v3252
      %3254 = vmatmul.bf16.gmra.mxu0 %v3166
      %v3255 = vpop.f32.mrf.mxu0
      %v3256 = vadd.f32 0.0, %v3255
      %v3257 = vpop.f32.mrf.mxu0
      %v3258 = vadd.f32 0.0, %v3257
      %3259 = vdwg.mxu0
      %v3260 = vadd.f32 %v2942, %v3181
      %v3261 = vadd.f32 %v2943, %v3183
      %v3262 = vadd.f32 %v2944, %v3186
      %v3263 = vadd.f32 %v2945, %v3188
      %v3264 = vadd.f32 %v2946, %v3191
      %v3265 = vadd.f32 %v2947, %v3193
      %v3266 = vadd.f32 %v2948, %v3196
      %v3267 = vadd.f32 %v2949, %v3198
      %v3268 = vadd.f32 %v2950, %v3201
      %v3269 = vadd.f32 %v2951, %v3203
      %v3270 = vadd.f32 %v2952, %v3206
      %v3271 = vadd.f32 %v2953, %v3208
      %v3272 = vadd.f32 %v2954, %v3211
      %v3273 = vadd.f32 %v2955, %v3213
      %v3274 = vadd.f32 %v2956, %v3216
      %v3275 = vadd.f32 %v2957, %v3218
      %v3276 = vadd.f32 %v2958, %v3221
      %v3277 = vadd.f32 %v2959, %v3223
      %v3278 = vadd.f32 %v2960, %v3226
      %v3279 = vadd.f32 %v2961, %v3228
      %v3280 = vadd.f32 %v2962, %v3231
      %v3281 = vadd.f32 %v2963, %v3233
      %v3282 = vadd.f32 %v2964, %v3236
      %v3283 = vadd.f32 %v2965, %v3238
      %v3284 = vadd.f32 %v2966, %v3241
      %v3285 = vadd.f32 %v2967, %v3243
      %v3286 = vadd.f32 %v2968, %v3246
      %v3287 = vadd.f32 %v2969, %v3248
      %v3288 = vadd.f32 %v2970, %v3251
      %v3289 = vadd.f32 %v2971, %v3253
      %v3290 = vadd.f32 %v2972, %v3256
      %v3291 = vadd.f32 %v2973, %v3258
      %v3292 = vpack.c.bf16 %v3260, %v3260
      %v3293 = vpack.c.bf16 %v3261, %v3261
      %v3294 = vpack.c.bf16 %v3262, %v3262
      %v3295 = vpack.c.bf16 %v3263, %v3263
      %v3296 = vpack.c.bf16 %v3264, %v3264
      %v3297 = vpack.c.bf16 %v3265, %v3265
      %v3298 = vpack.c.bf16 %v3266, %v3266
      %v3299 = vpack.c.bf16 %v3267, %v3267
      %v3300 = vpack.c.bf16 %v3268, %v3268
      %v3301 = vpack.c.bf16 %v3269, %v3269
      %v3302 = vpack.c.bf16 %v3270, %v3270
      %v3303 = vpack.c.bf16 %v3271, %v3271
      %v3304 = vpack.c.bf16 %v3272, %v3272
      %v3305 = vpack.c.bf16 %v3273, %v3273
      %v3306 = vpack.c.bf16 %v3274, %v3274
      %v3307 = vpack.c.bf16 %v3275, %v3275
      %v3308 = vpack.c.bf16 %v3276, %v3276
      %v3309 = vpack.c.bf16 %v3277, %v3277
      %v3310 = vpack.c.bf16 %v3278, %v3278
      %v3311 = vpack.c.bf16 %v3279, %v3279
      %v3312 = vpack.c.bf16 %v3280, %v3280
      %v3313 = vpack.c.bf16 %v3281, %v3281
      %v3314 = vpack.c.bf16 %v3282, %v3282
      %v3315 = vpack.c.bf16 %v3283, %v3283
      %v3316 = vpack.c.bf16 %v3284, %v3284
      %v3317 = vpack.c.bf16 %v3285, %v3285
      %v3318 = vpack.c.bf16 %v3286, %v3286
      %v3319 = vpack.c.bf16 %v3287, %v3287
      %v3320 = vpack.c.bf16 %v3288, %v3288
      %v3321 = vpack.c.bf16 %v3289, %v3289
      %v3322 = vpack.c.bf16 %v3290, %v3290
      %v3323 = vpack.c.bf16 %v3291, %v3291
      %vm3324 = vcmask 27648
      %3325 = vst.msk [vmem:[%s326] sm:$0xf] %vm3324, %v3292
      %3326 = vst.msk [vmem:[%s326 + $0x4] sm:$0xf] %vm3324, %v3293
      %3327 = vst.msk [vmem:[%s326 + $0x8] sm:$0xf] %vm3324, %v3294
      %3328 = vst.msk [vmem:[%s326 + $0xc] sm:$0xf] %vm3324, %v3295
      %3329 = vst.msk [vmem:[%s326 + $0x10] sm:$0xf] %vm3324, %v3296
      %3330 = vst.msk [vmem:[%s326 + $0x14] sm:$0xf] %vm3324, %v3297
      %3331 = vst.msk [vmem:[%s326 + $0x18] sm:$0xf] %vm3324, %v3298
      %3332 = vst.msk [vmem:[%s326 + $0x1c] sm:$0xf] %vm3324, %v3299
      %3333 = vst.msk [vmem:[%s326 + $0x20] sm:$0xf] %vm3324, %v3300
      %3334 = vst.msk [vmem:[%s326 + $0x24] sm:$0xf] %vm3324, %v3301
      %3335 = vst.msk [vmem:[%s326 + $0x28] sm:$0xf] %vm3324, %v3302
      %3336 = vst.msk [vmem:[%s326 + $0x2c] sm:$0xf] %vm3324, %v3303
      %3337 = vst.msk [vmem:[%s326 + $0x30] sm:$0xf] %vm3324, %v3304
      %3338 = vst.msk [vmem:[%s326 + $0x34] sm:$0xf] %vm3324, %v3305
      %3339 = vst.msk [vmem:[%s326 + $0x38] sm:$0xf] %vm3324, %v3306
      %3340 = vst.msk [vmem:[%s326 + $0x3c] sm:$0xf] %vm3324, %v3307
      %3341 = vst.msk [vmem:[%s326 + $0x40] sm:$0xf] %vm3324, %v3308
      %3342 = vst.msk [vmem:[%s326 + $0x44] sm:$0xf] %vm3324, %v3309
      %3343 = vst.msk [vmem:[%s326 + $0x48] sm:$0xf] %vm3324, %v3310
      %3344 = vst.msk [vmem:[%s326 + $0x4c] sm:$0xf] %vm3324, %v3311
      %3345 = vst.msk [vmem:[%s326 + $0x50] sm:$0xf] %vm3324, %v3312
      %3346 = vst.msk [vmem:[%s326 + $0x54] sm:$0xf] %vm3324, %v3313
      %3347 = vst.msk [vmem:[%s326 + $0x58] sm:$0xf] %vm3324, %v3314
      %3348 = vst.msk [vmem:[%s326 + $0x5c] sm:$0xf] %vm3324, %v3315
      %3349 = vst.msk [vmem:[%s326 + $0x60] sm:$0xf] %vm3324, %v3316
      %3350 = vst.msk [vmem:[%s326 + $0x64] sm:$0xf] %vm3324, %v3317
      %3351 = vst.msk [vmem:[%s326 + $0x68] sm:$0xf] %vm3324, %v3318
      %3352 = vst.msk [vmem:[%s326 + $0x6c] sm:$0xf] %vm3324, %v3319
      %3353 = vst.msk [vmem:[%s326 + $0x70] sm:$0xf] %vm3324, %v3320
      %3354 = vst.msk [vmem:[%s326 + $0x74] sm:$0xf] %vm3324, %v3321
      %3355 = vst.msk [vmem:[%s326 + $0x78] sm:$0xf] %vm3324, %v3322
      %3356 = vst.msk [vmem:[%s326 + $0x7c] sm:$0xf] %vm3324, %v3323
      %3357 = vst.msk [vmem:[%s336] sm:$0xf] %vm3324, %v3292
      %3358 = vst.msk [vmem:[%s336 + $0x4] sm:$0xf] %vm3324, %v3293
      %3359 = vst.msk [vmem:[%s336 + $0x8] sm:$0xf] %vm3324, %v3294
      %3360 = vst.msk [vmem:[%s336 + $0xc] sm:$0xf] %vm3324, %v3295
      %3361 = vst.msk [vmem:[%s336 + $0x10] sm:$0xf] %vm3324, %v3320
      %3362 = vst.msk [vmem:[%s336 + $0x14] sm:$0xf] %vm3324, %v3321
      %3363 = vst.msk [vmem:[%s336 + $0x18] sm:$0xf] %vm3324, %v3322
      %3364 = vst.msk [vmem:[%s336 + $0x1c] sm:$0xf] %vm3324, %v3323
      %v3365 = vsel %vm382, %v3260, 0.0
      %v3366 = vsel %vm382, %v3261, 0.0
      %v3367 = vadd.f32 %v3365, %v3366
      %v3368 = vsel %vm382, %v3262, 0.0
      %v3369 = vadd.f32 %v3367, %v3368
      %v3370 = vsel %vm382, %v3263, 0.0
      %v3371 = vadd.f32 %v3369, %v3370
      %v3372 = vsel %vm382, %v3264, 0.0
      %v3373 = vadd.f32 %v3371, %v3372
      %v3374 = vsel %vm382, %v3265, 0.0
      %v3375 = vadd.f32 %v3373, %v3374
      %v3376 = vsel %vm382, %v3266, 0.0
      %v3377 = vadd.f32 %v3375, %v3376
      %v3378 = vsel %vm382, %v3267, 0.0
      %v3379 = vadd.f32 %v3377, %v3378
      %v3380 = vsel %vm382, %v3268, 0.0
      %v3381 = vadd.f32 %v3379, %v3380
      %v3382 = vsel %vm382, %v3269, 0.0
      %v3383 = vadd.f32 %v3381, %v3382
      %v3384 = vsel %vm382, %v3270, 0.0
      %v3385 = vadd.f32 %v3383, %v3384
      %v3386 = vsel %vm382, %v3271, 0.0
      %v3387 = vadd.f32 %v3385, %v3386
      %v3388 = vsel %vm382, %v3272, 0.0
      %v3389 = vadd.f32 %v3387, %v3388
      %v3390 = vsel %vm382, %v3273, 0.0
      %v3391 = vadd.f32 %v3389, %v3390
      %v3392 = vsel %vm382, %v3274, 0.0
      %v3393 = vadd.f32 %v3391, %v3392
      %v3394 = vsel %vm382, %v3275, 0.0
      %v3395 = vadd.f32 %v3393, %v3394
      %v3396 = vsel %vm382, %v3276, 0.0
      %v3397 = vadd.f32 %v3395, %v3396
      %v3398 = vsel %vm382, %v3277, 0.0
      %v3399 = vadd.f32 %v3397, %v3398
      %v3400 = vsel %vm382, %v3278, 0.0
      %v3401 = vadd.f32 %v3399, %v3400
      %v3402 = vsel %vm382, %v3279, 0.0
      %v3403 = vadd.f32 %v3401, %v3402
      %v3404 = vsel %vm382, %v3280, 0.0
      %v3405 = vadd.f32 %v3403, %v3404
      %v3406 = vsel %vm382, %v3281, 0.0
      %v3407 = vadd.f32 %v3405, %v3406
      %v3408 = vsel %vm382, %v3282, 0.0
      %v3409 = vadd.f32 %v3407, %v3408
      %v3410 = vsel %vm382, %v3283, 0.0
      %v3411 = vadd.f32 %v3409, %v3410
      %v3412 = vsel %vm382, %v3284, 0.0
      %v3413 = vadd.f32 %v3411, %v3412
      %v3414 = vsel %vm382, %v3285, 0.0
      %v3415 = vadd.f32 %v3413, %v3414
      %v3416 = vsel %vm382, %v3286, 0.0
      %v3417 = vadd.f32 %v3415, %v3416
      %v3418 = vsel %vm382, %v3287, 0.0
      %v3419 = vadd.f32 %v3417, %v3418
      %v3420 = vsel %vm382, %v3288, 0.0
      %v3421 = vadd.f32 %v3419, %v3420
      %v3422 = vsel %vm382, %v3289, 0.0
      %v3423 = vadd.f32 %v3421, %v3422
      %v3424 = vsel %vm382, %v3290, 0.0
      %v3425 = vadd.f32 %v3423, %v3424
      %v3426 = vsel %vm382, %v3291, 0.0
      %v3427 = vadd.f32 %v3425, %v3426
      %v3428 = vrot.slane %v3427, 4
      %v3429 = vadd.f32 %v3427, %v3428
      %v3430 = vrot.slane %v3429, 2
      %v3431 = vadd.f32 %v3429, %v3430
      %v3432 = vrot.slane %v3431, 1
      %v3433 = vadd.f32 %v3431, %v3432
      %v3434 = vrcp.pop 256.0
      %v3435 = vmul.f32 256.0, %v3434
      %v3436 = vsub.f32 1.0, %v3435
      %v3437 = vmul.f32 %v3434, %v3436
      %v3438 = vadd.f32 %v3434, %v3437
      %vm3439 = vweird.f32 %v3434
      %v3440 = vsel %vm3439, %v3434, %v3438
      %v3441 = vmul.f32 %v3433, %v3440
      %v3442 = vsub.f32 %v3260, %v3441
      %v3443 = vsub.f32 %v3261, %v3441
      %v3444 = vsub.f32 %v3262, %v3441
      %v3445 = vsub.f32 %v3263, %v3441
      %v3446 = vsub.f32 %v3264, %v3441
      %v3447 = vsub.f32 %v3265, %v3441
      %v3448 = vsub.f32 %v3266, %v3441
      %v3449 = vsub.f32 %v3267, %v3441
      %v3450 = vsub.f32 %v3268, %v3441
      %v3451 = vsub.f32 %v3269, %v3441
      %v3452 = vsub.f32 %v3270, %v3441
      %v3453 = vsub.f32 %v3271, %v3441
      %v3454 = vsub.f32 %v3272, %v3441
      %v3455 = vsub.f32 %v3273, %v3441
      %v3456 = vsub.f32 %v3274, %v3441
      %v3457 = vsub.f32 %v3275, %v3441
      %v3458 = vsub.f32 %v3276, %v3441
      %v3459 = vsub.f32 %v3277, %v3441
      %v3460 = vsub.f32 %v3278, %v3441
      %v3461 = vsub.f32 %v3279, %v3441
      %v3462 = vsub.f32 %v3280, %v3441
      %v3463 = vsub.f32 %v3281, %v3441
      %v3464 = vsub.f32 %v3282, %v3441
      %v3465 = vsub.f32 %v3283, %v3441
      %v3466 = vsub.f32 %v3284, %v3441
      %v3467 = vsub.f32 %v3285, %v3441
      %v3468 = vsub.f32 %v3286, %v3441
      %v3469 = vsub.f32 %v3287, %v3441
      %v3470 = vsub.f32 %v3288, %v3441
      %v3471 = vsub.f32 %v3289, %v3441
      %v3472 = vsub.f32 %v3290, %v3441
      %v3473 = vsub.f32 %v3291, %v3441
      %v3474 = vmul.f32 %v3442, %v3442
      %v3475 = vmul.f32 %v3443, %v3443
      %v3476 = vmul.f32 %v3444, %v3444
      %v3477 = vmul.f32 %v3445, %v3445
      %v3478 = vmul.f32 %v3446, %v3446
      %v3479 = vmul.f32 %v3447, %v3447
      %v3480 = vmul.f32 %v3448, %v3448
      %v3481 = vmul.f32 %v3449, %v3449
      %v3482 = vmul.f32 %v3450, %v3450
      %v3483 = vmul.f32 %v3451, %v3451
      %v3484 = vmul.f32 %v3452, %v3452
      %v3485 = vmul.f32 %v3453, %v3453
      %v3486 = vmul.f32 %v3454, %v3454
      %v3487 = vmul.f32 %v3455, %v3455
      %v3488 = vmul.f32 %v3456, %v3456
      %v3489 = vmul.f32 %v3457, %v3457
      %v3490 = vmul.f32 %v3458, %v3458
      %v3491 = vmul.f32 %v3459, %v3459
      %v3492 = vmul.f32 %v3460, %v3460
      %v3493 = vmul.f32 %v3461, %v3461
      %v3494 = vmul.f32 %v3462, %v3462
      %v3495 = vmul.f32 %v3463, %v3463
      %v3496 = vmul.f32 %v3464, %v3464
      %v3497 = vmul.f32 %v3465, %v3465
      %v3498 = vmul.f32 %v3466, %v3466
      %v3499 = vmul.f32 %v3467, %v3467
      %v3500 = vmul.f32 %v3468, %v3468
      %v3501 = vmul.f32 %v3469, %v3469
      %v3502 = vmul.f32 %v3470, %v3470
      %v3503 = vmul.f32 %v3471, %v3471
      %v3504 = vmul.f32 %v3472, %v3472
      %v3505 = vmul.f32 %v3473, %v3473
      %v3506 = vsel %vm382, %v3474, 0.0
      %v3507 = vsel %vm382, %v3475, 0.0
      %v3508 = vadd.f32 %v3506, %v3507
      %v3509 = vsel %vm382, %v3476, 0.0
      %v3510 = vadd.f32 %v3508, %v3509
      %v3511 = vsel %vm382, %v3477, 0.0
      %v3512 = vadd.f32 %v3510, %v3511
      %v3513 = vsel %vm382, %v3478, 0.0
      %v3514 = vadd.f32 %v3512, %v3513
      %v3515 = vsel %vm382, %v3479, 0.0
      %v3516 = vadd.f32 %v3514, %v3515
      %v3517 = vsel %vm382, %v3480, 0.0
      %v3518 = vadd.f32 %v3516, %v3517
      %v3519 = vsel %vm382, %v3481, 0.0
      %v3520 = vadd.f32 %v3518, %v3519
      %v3521 = vsel %vm382, %v3482, 0.0
      %v3522 = vadd.f32 %v3520, %v3521
      %v3523 = vsel %vm382, %v3483, 0.0
      %v3524 = vadd.f32 %v3522, %v3523
      %v3525 = vsel %vm382, %v3484, 0.0
      %v3526 = vadd.f32 %v3524, %v3525
      %v3527 = vsel %vm382, %v3485, 0.0
      %v3528 = vadd.f32 %v3526, %v3527
      %v3529 = vsel %vm382, %v3486, 0.0
      %v3530 = vadd.f32 %v3528, %v3529
      %v3531 = vsel %vm382, %v3487, 0.0
      %v3532 = vadd.f32 %v3530, %v3531
      %v3533 = vsel %vm382, %v3488, 0.0
      %v3534 = vadd.f32 %v3532, %v3533
      %v3535 = vsel %vm382, %v3489, 0.0
      %v3536 = vadd.f32 %v3534, %v3535
      %v3537 = vsel %vm382, %v3490, 0.0
      %v3538 = vadd.f32 %v3536, %v3537
      %v3539 = vsel %vm382, %v3491, 0.0
      %v3540 = vadd.f32 %v3538, %v3539
      %v3541 = vsel %vm382, %v3492, 0.0
      %v3542 = vadd.f32 %v3540, %v3541
      %v3543 = vsel %vm382, %v3493, 0.0
      %v3544 = vadd.f32 %v3542, %v3543
      %v3545 = vsel %vm382, %v3494, 0.0
      %v3546 = vadd.f32 %v3544, %v3545
      %v3547 = vsel %vm382, %v3495, 0.0
      %v3548 = vadd.f32 %v3546, %v3547
      %v3549 = vsel %vm382, %v3496, 0.0
      %v3550 = vadd.f32 %v3548, %v3549
      %v3551 = vsel %vm382, %v3497, 0.0
      %v3552 = vadd.f32 %v3550, %v3551
      %v3553 = vsel %vm382, %v3498, 0.0
      %v3554 = vadd.f32 %v3552, %v3553
      %v3555 = vsel %vm382, %v3499, 0.0
      %v3556 = vadd.f32 %v3554, %v3555
      %v3557 = vsel %vm382, %v3500, 0.0
      %v3558 = vadd.f32 %v3556, %v3557
      %v3559 = vsel %vm382, %v3501, 0.0
      %v3560 = vadd.f32 %v3558, %v3559
      %v3561 = vsel %vm382, %v3502, 0.0
      %v3562 = vadd.f32 %v3560, %v3561
      %v3563 = vsel %vm382, %v3503, 0.0
      %v3564 = vadd.f32 %v3562, %v3563
      %v3565 = vsel %vm382, %v3504, 0.0
      %v3566 = vadd.f32 %v3564, %v3565
      %v3567 = vsel %vm382, %v3505, 0.0
      %v3568 = vadd.f32 %v3566, %v3567
      %v3569 = vrot.slane %v3568, 4
      %v3570 = vadd.f32 %v3568, %v3569
      %v3571 = vrot.slane %v3570, 2
      %v3572 = vadd.f32 %v3570, %v3571
      %v3573 = vrot.slane %v3572, 1
      %v3574 = vadd.f32 %v3572, %v3573
      %vm3575 = vcmask 1040384
      %v3576 = vsel %vm3575, %v3441, %v3574
      %vm3577 = vcmask 25600
      %3578 = vst.msk [vmem:[%s343] sm:$0x3] %vm3577, %v3576
      %s3579 = smul.u32 16, %s22
      %p3580 = scmp.lt.s32.totalorder %s21, 1
      %s3581 = scalar_select %p3580, %s21, 1
      %p3582 = scmp.lt.s32.totalorder %s3579, 15
      %s3583 = scalar_select %p3582, %s3579, 15
      %s3584 = smul.addr %s3583, 2
      %s3585 = smul.addr %s3581, 32
      %s3586 = sadd.s32 %s3584, %s3585
      %s3587 = smul.addr %s3586, 4
      %s3588 = scalar_lea.vmem %s3, %s3587
      %p3589 = scmp.lt.s32.totalorder %s21, 1
      %s3590 = scalar_select %p3589, %s21, 1
      %p3591 = scmp.lt.s32.totalorder %s22, 0
      %s3592 = scalar_select %p3591, %s22, 0
      %s3593 = smul.addr %s3592, 8
      %s3594 = smul.addr %s3590, 8
      %s3595 = sadd.s32 %s3593, %s3594
      %s3596 = smul.addr %s3595, 4
      %s3597 = scalar_lea.vmem %s4, %s3596
      %p3598 = scmp.lt.s32.totalorder %s21, 1
      %s3599 = scalar_select %p3598, %s21, 1
      %p3600 = scmp.lt.s32.totalorder %s22, 0
      %s3601 = scalar_select %p3600, %s22, 0
      %s3602 = sadd.s32 %s3601, %s3599
      %s3603 = smul.addr %s3602, 2
      %s3604 = scalar_lea.vmem %s5, %s3603
      // Predicated region
      $region33: #{residual_block_pallas.3} parent=31 // pred_check
        %p3605 = pneg %p126
      $region34: #{residual_block_pallas.3} parent=31 // pred_check_branch
        %3607 = sbr.rel (%p3605) target = $region36
      $region35: #{residual_block_pallas.3} parent=31 // pred_region
        %s3608 = smul.u32 16, %s22
      $region36: #{residual_block_pallas.3} parent=31 // pred_fallthru
        _
      // Predicated region
      $region37: #{residual_block_pallas.3} parent=31 // pred_check
        %p3609 = pneg %p154
      $region38: #{residual_block_pallas.3} parent=31 // pred_check_branch
        %3611 = sbr.rel (%p3609) target = $region40
      $region39: #{residual_block_pallas.3} parent=31 // pred_region
        _
      $region40: #{residual_block_pallas.3} parent=31 // pred_fallthru
        _
      // Predicated region
      $region41: #{residual_block_pallas.3} parent=31 // pred_check
        %p3612 = pneg %p182
      $region42: #{residual_block_pallas.3} parent=31 // pred_check_branch
        %3614 = sbr.rel (%p3612) target = $region44
      $region43: #{residual_block_pallas.3} parent=31 // pred_region
        _
      $region44: #{residual_block_pallas.3} parent=31 // pred_fallthru
        _
    $region32: #{residual_block_pallas.3} parent=5 // pred_fallthru
      _
    %p3615 = scmp.le.s32.totalorder 2, %s12
    // Predicated region
    $region45: #{residual_block_pallas.3} parent=5 // pred_check
      %p3616 = pneg %p3615
    $region46: #{residual_block_pallas.3} parent=5 // pred_check_branch
      %3618 = sbr.rel (%p3616) target = $region48
    $region47: #{residual_block_pallas.3} parent=5 // pred_region
      %s3619 = ssub.s32 %s12, 2
      // Predicated region
      $region49: #{residual_block_pallas.3} parent=47 // pred_check
        %p3620 = pneg %p132
      $region50: #{residual_block_pallas.3} parent=47 // pred_check_branch
        %3622 = sbr.rel (%p3620) target = $region52
      $region51: #{residual_block_pallas.3} parent=47 // pred_region
        %s3623 = smul.u32 16, %s24
        %p3624 = scmp.lt.s32.totalorder %s23, 1
        %s3625 = scalar_select %p3624, %s23, 1
        %p3626 = scmp.lt.s32.totalorder %s3623, 15
        %s3627 = scalar_select %p3626, %s3623, 15
        %s3628 = smul.addr %s3627, 2
        %s3629 = smul.addr %s3625, 32
        %s3630 = sadd.s32 %s3628, %s3629
        %s3631 = smul.addr %s3630, 4
        %s3632 = scalar_lea.vmem %s3, %s3631
      $region52: #{residual_block_pallas.3} parent=47 // pred_fallthru
        _
      // Predicated region
      $region53: #{residual_block_pallas.3} parent=47 // pred_check
        %p3633 = pneg %p160
      $region54: #{residual_block_pallas.3} parent=47 // pred_check_branch
        %3635 = sbr.rel (%p3633) target = $region56
      $region55: #{residual_block_pallas.3} parent=47 // pred_region
        %p3636 = scmp.lt.s32.totalorder %s23, 1
        %s3637 = scalar_select %p3636, %s23, 1
        %p3638 = scmp.lt.s32.totalorder %s24, 0
        %s3639 = scalar_select %p3638, %s24, 0
        %s3640 = smul.addr %s3639, 8
        %s3641 = smul.addr %s3637, 8
        %s3642 = sadd.s32 %s3640, %s3641
        %s3643 = smul.addr %s3642, 4
        %s3644 = scalar_lea.vmem %s4, %s3643
      $region56: #{residual_block_pallas.3} parent=47 // pred_fallthru
        _
      // Predicated region
      $region57: #{residual_block_pallas.3} parent=47 // pred_check
        %p3645 = pneg %p188
      $region58: #{residual_block_pallas.3} parent=47 // pred_check_branch
        %3647 = sbr.rel (%p3645) target = $region60
      $region59: #{residual_block_pallas.3} parent=47 // pred_region
        %p3648 = scmp.lt.s32.totalorder %s23, 1
        %s3649 = scalar_select %p3648, %s23, 1
        %p3650 = scmp.lt.s32.totalorder %s24, 0
        %s3651 = scalar_select %p3650, %s24, 0
        %s3652 = sadd.s32 %s3651, %s3649
        %s3653 = smul.addr %s3652, 2
        %s3654 = scalar_lea.vmem %s5, %s3653
      $region60: #{residual_block_pallas.3} parent=47 // pred_fallthru
        _
    $region48: #{residual_block_pallas.3} parent=5 // pred_fallthru
      _
  $region6: #{residual_block_pallas.3} parent=0 // loop_footer
    %s16 = sadd.s32 1, %s12
  $region7: #{residual_block_pallas.3} parent=0 // loop_footer_branch
    %11 = sbr.rel target = $region3
  $region8: #{residual_block_pallas.3} parent=0 // loop_exit
    _

// kernel: residual_block_pallas.4
$region0: #{residual_block_pallas.4}
  #allocation0 [shape = 'u32[]', space=smem, size = 0x4, offset = 0x4, fixed_abs, tag = 'smem constant byte address 0x4 - core index']
  #allocation1 [shape = 'u32[72,128]{1,0:T(1,128)}', space=vmem, size = 0x9000, scoped, tag = 'internal scratch']
  #allocation2 [shape = 'f32[18,18,4]{2,1,0:T(8,128)}', space=vmem, size = 0x36000, scoped, tag = 'scratch operand']
  %s0 = inlined_call_operand.vmem [shape: bf16[2,16,16,4], index: 0, kind: input, shape index: {}]
  %s1 = inlined_call_operand.vmem [shape: bf16[2,1,2,16,4], index: 1, kind: input, shape index: {}]
  %s2 = inlined_call_operand.vmem [shape: bf16[9,4,4], index: 2, kind: input, shape index: {}]
  %s3 = inlined_call_operand.vmem [shape: f32[1,4], index: 3, kind: input, shape index: {}]
  %s4 = inlined_call_operand.vmem [shape: f32[1,4], index: 4, kind: input, shape index: {}]
  %s5 = inlined_call_operand.vmem [shape: bf16[2,16,16,4], index: 5, kind: output, shape index: {0}]
  %s6 = inlined_call_operand.vmem [shape: f32[2,1,2,4], index: 6, kind: output, shape index: {1}]
  %7 = xla_tuple %s5, %s6
  %s8 = sld [smem:[#allocation0]]
  $region61: #{residual_block_pallas.4} parent=0
    _
  %s10 = ssub.s32 1, %s8
  %s11 = scalar_select 0, %s10, %s8
  loop: start=0, step=1, limit=4
  $region2: #{residual_block_pallas.4} parent=0 // loop_pre_header
    _
  $region3: #{residual_block_pallas.4} parent=0 // loop_header
    %s13 = sphi 0, %s17
    %p14 = scmp.ge.s32.totalorder %s13, 4
    %s20 = sphi 0, %s32
    %s21 = sphi 0, %s28
    %s22 = sphi 0, %s20
    %s23 = sphi 0, %s21
    %s24 = sphi 0, %s22
    %s25 = sphi 0, %s23
    %s37 = sphi 0, %s39
    %s40 = sphi 0, %s37
    %s41 = sphi 0, %s40
    %s57 = sphi 0, %s41
    %s65 = sphi 0, %s67
    %s68 = sphi 0, %s65
    %s69 = sphi 0, %s68
    %s85 = sphi 0, %s69
    %s89 = sphi 0, %s89
    %s91 = sphi 0, %s89
    %s92 = sphi 0, %s91
    %s106 = sphi 0, %s92
    %s110 = sphi 0, %s110
    %s112 = sphi 0, %s110
    %s113 = sphi 0, %s112
    %s127 = sphi 0, %s113
    %s131 = sphi 0, %s131
    %s133 = sphi 0, %s131
    %s134 = sphi 0, %s133
    %s148 = sphi 0, %s134
    %s156 = sphi 0, %s158
    %s159 = sphi 0, %s156
    %s160 = sphi 0, %s159
    %s176 = sphi 0, %s160
    %s184 = sphi 0, %s186
    %s187 = sphi 0, %s184
    %s188 = sphi 0, %s187
    %s204 = sphi 0, %s188
  $region4: #{residual_block_pallas.4} parent=0 // loop_header_branch
    %16 = sbr.rel (%p14) target = $region8
  $region5: #{residual_block_pallas.4} parent=0 // loop_body
    %s18 = ssub.s32 %s13, 1
    %s19 = ssub.s32 %s13, 2
    %s26 = sadd.s32 1, %s21
    %p27 = scmp.ge.s32.totalorder %s26, 1
    %s28 = scalar_select %p27, 0, %s26
    %s29 = sadd.s32 1, %s20
    %s30 = scalar_select %p27, %s29, %s20
    %p31 = scmp.ge.s32.totalorder %s30, 2
    %s32 = scalar_select %p31, 0, %s30
    %s33 = ssub.s32 %s20, %s32
    %s34 = ssub.s32 %s21, %s28
    %s35 = sor.u32 %s33, %s34
    %p36 = scmp.eq.s32.totalorder %s35, 0
    %s38 = sadd.s32 %s37, 1
    %s39 = scalar_select %p36, %s37, %s38
    %p42 = pneg %p36
    %p43 = scmp.eq.s32.totalorder %s13, 1
    %p44 = por %p42, %p43
    %p45 = scmp.ne.s32.totalorder %s37, %s40
    %p46 = scmp.eq.s32.totalorder %s13, 0
    %p47 = por %p45, %p46
    %p48 = scmp.ne.s32.totalorder %s37, %s40
    %p49 = scmp.eq.s32.totalorder %s18, 1
    %p50 = por %p48, %p49
    %p51 = scmp.ne.s32.totalorder %s40, %s41
    %p52 = scmp.eq.s32.totalorder %s18, 0
    %p53 = por %p51, %p52
    %p54 = scmp.ne.s32.totalorder %s40, %s41
    %p55 = scmp.eq.s32.totalorder %s19, 1
    %p56 = por %p54, %p55
    %p58 = scmp.ne.s32.totalorder %s41, %s57
    %p59 = scmp.eq.s32.totalorder %s19, 0
    %p60 = por %p58, %p59
    %s61 = ssub.s32 %s20, %s32
    %s62 = ssub.s32 %s21, %s28
    %s63 = sor.u32 %s61, %s62
    %p64 = scmp.eq.s32.totalorder %s63, 0
    %s66 = sadd.s32 %s65, 1
    %s67 = scalar_select %p64, %s65, %s66
    %p70 = pneg %p64
    %p71 = scmp.eq.s32.totalorder %s13, 1
    %p72 = por %p70, %p71
    %p73 = scmp.ne.s32.totalorder %s65, %s68
    %p74 = scmp.eq.s32.totalorder %s13, 0
    %p75 = por %p73, %p74
    %p76 = scmp.ne.s32.totalorder %s65, %s68
    %p77 = scmp.eq.s32.totalorder %s18, 1
    %p78 = por %p76, %p77
    %p79 = scmp.ne.s32.totalorder %s68, %s69
    %p80 = scmp.eq.s32.totalorder %s18, 0
    %p81 = por %p79, %p80
    %p82 = scmp.ne.s32.totalorder %s68, %s69
    %p83 = scmp.eq.s32.totalorder %s19, 1
    %p84 = por %p82, %p83
    %p86 = scmp.ne.s32.totalorder %s69, %s85
    %p87 = scmp.eq.s32.totalorder %s19, 0
    %p88 = por %p86, %p87
    %s90 = sadd.s32 %s89, 1
    %p93 = scmp.eq.s32.totalorder %s13, 1
    %p94 = scmp.ne.s32.totalorder %s89, %s91
    %p95 = scmp.eq.s32.totalorder %s13, 0
    %p96 = por %p94, %p95
    %p97 = scmp.ne.s32.totalorder %s89, %s91
    %p98 = scmp.eq.s32.totalorder %s18, 1
    %p99 = por %p97, %p98
    %p100 = scmp.ne.s32.totalorder %s91, %s92
    %p101 = scmp.eq.s32.totalorder %s18, 0
    %p102 = por %p100, %p101
    %p103 = scmp.ne.s32.totalorder %s91, %s92
    %p104 = scmp.eq.s32.totalorder %s19, 1
    %p105 = por %p103, %p104
    %p107 = scmp.ne.s32.totalorder %s92, %s106
    %p108 = scmp.eq.s32.totalorder %s19, 0
    %p109 = por %p107, %p108
    %s111 = sadd.s32 %s110, 1
    %p114 = scmp.eq.s32.totalorder %s13, 1
    %p115 = scmp.ne.s32.totalorder %s110, %s112
    %p116 = scmp.eq.s32.totalorder %s13, 0
    %p117 = por %p115, %p116
    %p118 = scmp.ne.s32.totalorder %s110, %s112
    %p119 = scmp.eq.s32.totalorder %s18, 1
    %p120 = por %p118, %p119
    %p121 = scmp.ne.s32.totalorder %s112, %s113
    %p122 = scmp.eq.s32.totalorder %s18, 0
    %p123 = por %p121, %p122
    %p124 = scmp.ne.s32.totalorder %s112, %s113
    %p125 = scmp.eq.s32.totalorder %s19, 1
    %p126 = por %p124, %p125
    %p128 = scmp.ne.s32.totalorder %s113, %s127
    %p129 = scmp.eq.s32.totalorder %s19, 0
    %p130 = por %p128, %p129
    %s132 = sadd.s32 %s131, 1
    %p135 = scmp.eq.s32.totalorder %s13, 1
    %p136 = scmp.ne.s32.totalorder %s131, %s133
    %p137 = scmp.eq.s32.totalorder %s13, 0
    %p138 = por %p136, %p137
    %p139 = scmp.ne.s32.totalorder %s131, %s133
    %p140 = scmp.eq.s32.totalorder %s18, 1
    %p141 = por %p139, %p140
    %p142 = scmp.ne.s32.totalorder %s133, %s134
    %p143 = scmp.eq.s32.totalorder %s18, 0
    %p144 = por %p142, %p143
    %p145 = scmp.ne.s32.totalorder %s133, %s134
    %p146 = scmp.eq.s32.totalorder %s19, 1
    %p147 = por %p145, %p146
    %p149 = scmp.ne.s32.totalorder %s134, %s148
    %p150 = scmp.eq.s32.totalorder %s19, 0
    %p151 = por %p149, %p150
    %s152 = ssub.s32 %s20, %s32
    %s153 = ssub.s32 %s21, %s28
    %s154 = sor.u32 %s152, %s153
    %p155 = scmp.eq.s32.totalorder %s154, 0
    %s157 = sadd.s32 %s156, 1
    %s158 = scalar_select %p155, %s156, %s157
    %p161 = pneg %p155
    %p162 = scmp.eq.s32.totalorder %s13, 1
    %p163 = por %p161, %p162
    %p164 = scmp.ne.s32.totalorder %s156, %s159
    %p165 = scmp.eq.s32.totalorder %s13, 0
    %p166 = por %p164, %p165
    %p167 = scmp.ne.s32.totalorder %s156, %s159
    %p168 = scmp.eq.s32.totalorder %s18, 1
    %p169 = por %p167, %p168
    %p170 = scmp.ne.s32.totalorder %s159, %s160
    %p171 = scmp.eq.s32.totalorder %s18, 0
    %p172 = por %p170, %p171
    %p173 = scmp.ne.s32.totalorder %s159, %s160
    %p174 = scmp.eq.s32.totalorder %s19, 1
    %p175 = por %p173, %p174
    %p177 = scmp.ne.s32.totalorder %s160, %s176
    %p178 = scmp.eq.s32.totalorder %s19, 0
    %p179 = por %p177, %p178
    %s180 = ssub.s32 %s20, %s32
    %s181 = ssub.s32 %s21, %s28
    %s182 = sor.u32 %s180, %s181
    %p183 = scmp.eq.s32.totalorder %s182, 0
    %s185 = sadd.s32 %s184, 1
    %s186 = scalar_select %p183, %s184, %s185
    %p189 = pneg %p183
    %p190 = scmp.eq.s32.totalorder %s13, 1
    %p191 = por %p189, %p190
    %p192 = scmp.ne.s32.totalorder %s184, %s187
    %p193 = scmp.eq.s32.totalorder %s13, 0
    %p194 = por %p192, %p193
    %p195 = scmp.ne.s32.totalorder %s184, %s187
    %p196 = scmp.eq.s32.totalorder %s18, 1
    %p197 = por %p195, %p196
    %p198 = scmp.ne.s32.totalorder %s187, %s188
    %p199 = scmp.eq.s32.totalorder %s18, 0
    %p200 = por %p198, %p199
    %p201 = scmp.ne.s32.totalorder %s187, %s188
    %p202 = scmp.eq.s32.totalorder %s19, 1
    %p203 = por %p201, %p202
    %p205 = scmp.ne.s32.totalorder %s188, %s204
    %p206 = scmp.eq.s32.totalorder %s19, 0
    %p207 = por %p205, %p206
    %p208 = scmp.le.s32.totalorder 1, %s13
    %p209 = scmp.lt.s32.totalorder %s13, 3
    %p210 = pnand %p208, %p209
    %p211 = pneg %p210
    // Predicated region
    $region9: #{residual_block_pallas.4} parent=5 // pred_check
      _
    $region10: #{residual_block_pallas.4} parent=5 // pred_check_branch
      %213 = sbr.rel (%p210) target = $region12
    $region11: #{residual_block_pallas.4} parent=5 // pred_region
      %s214 = ssub.s32 %s13, 1
      // Predicated region
      $region13: #{residual_block_pallas.4} parent=11 // pred_check
        %p215 = pneg %p102
      $region14: #{residual_block_pallas.4} parent=11 // pred_check_branch
        %217 = sbr.rel (%p215) target = $region16
      $region15: #{residual_block_pallas.4} parent=11 // pred_region
        _
      $region16: #{residual_block_pallas.4} parent=11 // pred_fallthru
        _
      // Predicated region
      $region17: #{residual_block_pallas.4} parent=11 // pred_check
        %p218 = pneg %p123
      $region18: #{residual_block_pallas.4} parent=11 // pred_check_branch
        %220 = sbr.rel (%p218) target = $region20
      $region19: #{residual_block_pallas.4} parent=11 // pred_region
        _
      $region20: #{residual_block_pallas.4} parent=11 // pred_fallthru
        _
      // Predicated region
      $region21: #{residual_block_pallas.4} parent=11 // pred_check
        %p221 = pneg %p144
      $region22: #{residual_block_pallas.4} parent=11 // pred_check_branch
        %223 = sbr.rel (%p221) target = $region24
      $region23: #{residual_block_pallas.4} parent=11 // pred_region
        _
      $region24: #{residual_block_pallas.4} parent=11 // pred_fallthru
        _
    $region12: #{residual_block_pallas.4} parent=5 // pred_fallthru
      _
    %p224 = scmp.lt.s32.totalorder %s13, 2
    // Predicated region
    $region25: #{residual_block_pallas.4} parent=5 // pred_check
      %p225 = pneg %p224
    $region26: #{residual_block_pallas.4} parent=5 // pred_check_branch
      %227 = sbr.rel (%p225) target = $region28
    $region27: #{residual_block_pallas.4} parent=5 // pred_region
      // Predicated region
      $region29: #{residual_block_pallas.4} parent=27 // pred_check
        %p228 = pneg %p47
      $region30: #{residual_block_pallas.4} parent=27 // pred_check_branch
        %230 = sbr.rel (%p228) target = $region32
      $region31: #{residual_block_pallas.4} parent=27 // pred_region
        %s231 = smul.u32 16, %s21
        %p232 = scmp.lt.s32.totalorder %s20, 1
        %s233 = scalar_select %p232, %s20, 1
        %p234 = scmp.lt.s32.totalorder %s231, 15
        %s235 = scalar_select %p234, %s231, 15
        %s236 = smul.addr %s235, 2
        %s237 = smul.addr %s233, 32
        %s238 = sadd.s32 %s236, %s237
        %s239 = smul.addr %s238, 4
        %s240 = scalar_lea.vmem %s0, %s239
        %s241 = smul.u32 16, %s21
      $region32: #{residual_block_pallas.4} parent=27 // pred_fallthru
        _
      // Predicated region
      $region33: #{residual_block_pallas.4} parent=27 // pred_check
        %p242 = pneg %p75
      $region34: #{residual_block_pallas.4} parent=27 // pred_check_branch
        %244 = sbr.rel (%p242) target = $region36
      $region35: #{residual_block_pallas.4} parent=27 // pred_region
        %p245 = scmp.lt.s32.totalorder %s20, 1
        %s246 = scalar_select %p245, %s20, 1
        %p247 = scmp.lt.s32.totalorder %s21, 0
        %s248 = scalar_select %p247, %s21, 0
        %s249 = smul.addr %s248, 4
        %s250 = smul.addr %s246, 4
        %s251 = sadd.s32 %s249, %s250
        %s252 = smul.addr %s251, 4
        %s253 = scalar_lea.vmem %s1, %s252
      $region36: #{residual_block_pallas.4} parent=27 // pred_fallthru
        _
    $region28: #{residual_block_pallas.4} parent=5 // pred_fallthru
      _
    %p254 = scmp.le.s32.totalorder 1, %s13
    %p255 = scmp.lt.s32.totalorder %s13, 3
    %p256 = pnand %p254, %p255
    %p257 = pneg %p256
    // Predicated region
    $region37: #{residual_block_pallas.4} parent=5 // pred_check
      _
    $region38: #{residual_block_pallas.4} parent=5 // pred_check_branch
      %259 = sbr.rel (%p256) target = $region40
    $region39: #{residual_block_pallas.4} parent=5 // pred_region
      %s260 = ssub.s32 %s13, 1
      %s261 = smul.u32 16, %s23
      %p262 = scmp.lt.s32.totalorder %s22, 1
      %s263 = scalar_select %p262, %s22, 1
      %p264 = scmp.lt.s32.totalorder %s261, 15
      %s265 = scalar_select %p264, %s261, 15
      %s266 = smul.addr %s265, 2
      %s267 = smul.addr %s263, 32
      %s268 = sadd.s32 %s266, %s267
      %s269 = smul.addr %s268, 4
      %s270 = scalar_lea.vmem %s0, %s269
      %p271 = pneg %p53
      %p272 = pneg %p50
      %p273 = scmp.lt.s32.totalorder %s22, 1
      %s274 = scalar_select %p273, %s22, 1
      %p275 = scmp.lt.s32.totalorder %s23, 0
      %s276 = scalar_select %p275, %s23, 0
      %s277 = smul.addr %s276, 4
      %s278 = smul.addr %s274, 4
      %s279 = sadd.s32 %s277, %s278
      %s280 = smul.addr %s279, 4
      %s281 = scalar_lea.vmem %s1, %s280
      %p282 = pneg %p81
      %p283 = pneg %p78
      %p284 = pneg %p102
      %p285 = pneg %p99
      %p286 = pneg %p123
      %p287 = pneg %p120
      %p288 = pneg %p144
      %p289 = pneg %p141
      %p290 = pneg %p172
      %p291 = pneg %p169
      %s292 = smul.u32 16, %s23
      %p293 = scmp.lt.s32.totalorder %s22, 1
      %s294 = scalar_select %p293, %s22, 1
      %p295 = scmp.lt.s32.totalorder %s292, 15
      %s296 = scalar_select %p295, %s292, 15
      %s297 = smul.addr %s296, 2
      %s298 = smul.addr %s294, 32
      %s299 = sadd.s32 %s297, %s298
      %s300 = smul.addr %s299, 4
      %s301 = scalar_lea.vmem %s5, %s300
      %p302 = pneg %p200
      %p303 = pneg %p197
      %p304 = scmp.lt.s32.totalorder %s22, 1
      %s305 = scalar_select %p304, %s22, 1
      %p306 = scmp.lt.s32.totalorder %s23, 0
      %s307 = scalar_select %p306, %s23, 0
      %s308 = sadd.s32 %s307, %s305
      %s309 = smul.addr %s308, 2
      %s310 = scalar_lea.vmem %s6, %s309
      %s311 = smul.u32 16, %s23
      %p312 = scmp.lt.s32.totalorder %s22, 1
      %s313 = scalar_select %p312, %s22, 1
      %p314 = scmp.lt.s32.totalorder %s311, 15
      %s315 = scalar_select %p314, %s311, 15
      %s316 = smul.addr %s315, 2
      %s317 = smul.addr %s313, 32
      %s318 = sadd.s32 %s316, %s317
      %s319 = smul.addr %s318, 4
      %s320 = scalar_lea.vmem %s0, %s319
      %s321 = smul.u32 16, %s23
      %p322 = scmp.lt.s32.totalorder %s22, 1
      %s323 = scalar_select %p322, %s22, 1
      %p324 = scmp.lt.s32.totalorder %s23, 0
      %s325 = scalar_select %p324, %s23, 0
      %s326 = smul.addr %s325, 4
      %s327 = smul.addr %s323, 4
      %s328 = sadd.s32 %s326, %s327
      %s329 = smul.addr %s328, 4
      %s330 = scalar_lea.vmem %s1, %s329
      %s331 = smul.u32 16, %s23
      %p332 = scmp.lt.s32.totalorder %s22, 1
      %s333 = scalar_select %p332, %s22, 1
      %p334 = scmp.lt.s32.totalorder %s331, 15
      %s335 = scalar_select %p334, %s331, 15
      %s336 = smul.addr %s335, 2
      %s337 = smul.addr %s333, 32
      %s338 = sadd.s32 %s336, %s337
      %s339 = smul.addr %s338, 4
      %s340 = scalar_lea.vmem %s5, %s339
      %s341 = smul.u32 16, %s23
      %p342 = scmp.lt.s32.totalorder %s22, 1
      %s343 = scalar_select %p342, %s22, 1
      %p344 = scmp.lt.s32.totalorder %s23, 0
      %s345 = scalar_select %p344, %s23, 0
      %s346 = sadd.s32 %s345, %s343
      %s347 = smul.addr %s346, 2
      %s348 = scalar_lea.vmem %s6, %s347
      %v350 = vld [vmem:[%s3] sm:$0x1]
      %v351 = vld [vmem:[%s4] sm:$0x1]
      %v352 = vld [vmem:[%s320] sm:$0xf]
      %v353 = vld [vmem:[%s320 + $0x4] sm:$0xf]
      %v354 = vld [vmem:[%s320 + $0x8] sm:$0xf]
      %v355 = vld [vmem:[%s320 + $0xc] sm:$0xf]
      %v356 = vld [vmem:[%s320 + $0x10] sm:$0xf]
      %v357 = vld [vmem:[%s320 + $0x14] sm:$0xf]
      %v358 = vld [vmem:[%s320 + $0x18] sm:$0xf]
      %v359 = vld [vmem:[%s320 + $0x1c] sm:$0xf]
      %v360 = vld [vmem:[%s320 + $0x20] sm:$0xf]
      %v361 = vld [vmem:[%s320 + $0x24] sm:$0xf]
      %v362 = vld [vmem:[%s320 + $0x28] sm:$0xf]
      %v363 = vld [vmem:[%s320 + $0x2c] sm:$0xf]
      %v364 = vld [vmem:[%s320 + $0x30] sm:$0xf]
      %v365 = vld [vmem:[%s320 + $0x34] sm:$0xf]
      %v366 = vld [vmem:[%s320 + $0x38] sm:$0xf]
      %v367 = vld [vmem:[%s320 + $0x3c] sm:$0xf]
      %v368 = vld [vmem:[%s320 + $0x40] sm:$0xf]
      %v369 = vld [vmem:[%s320 + $0x44] sm:$0xf]
      %v370 = vld [vmem:[%s320 + $0x48] sm:$0xf]
      %v371 = vld [vmem:[%s320 + $0x4c] sm:$0xf]
      %v372 = vld [vmem:[%s320 + $0x50] sm:$0xf]
      %v373 = vld [vmem:[%s320 + $0x54] sm:$0xf]
      %v374 = vld [vmem:[%s320 + $0x58] sm:$0xf]
      %v375 = vld [vmem:[%s320 + $0x5c] sm:$0xf]
      %v376 = vld [vmem:[%s320 + $0x60] sm:$0xf]
      %v377 = vld [vmem:[%s320 + $0x64] sm:$0xf]
      %v378 = vld [vmem:[%s320 + $0x68] sm:$0xf]
      %v379 = vld [vmem:[%s320 + $0x6c] sm:$0xf]
      %v380 = vld [vmem:[%s320 + $0x70] sm:$0xf]
      %v381 = vld [vmem:[%s320 + $0x74] sm:$0xf]
      %v382 = vld [vmem:[%s320 + $0x78] sm:$0xf]
      %v383 = vld [vmem:[%s320 + $0x7c] sm:$0xf]
      %v384 = vunpack.c.l.bf16 %v352
      %v385 = vunpack.c.l.bf16 %v353
      %v386 = vunpack.c.l.bf16 %v354
      %v387 = vunpack.c.l.bf16 %v355
      %v388 = vunpack.c.l.bf16 %v356
      %v389 = vunpack.c.l.bf16 %v357
      %v390 = vunpack.c.l.bf16 %v358
      %v391 = vunpack.c.l.bf16 %v359
      %v392 = vunpack.c.l.bf16 %v360
      %v393 = vunpack.c.l.bf16 %v361
      %v394 = vunpack.c.l.bf16 %v362
      %v395 = vunpack.c.l.bf16 %v363
      %v396 = vunpack.c.l.bf16 %v364
      %v397 = vunpack.c.l.bf16 %v365
      %v398 = vunpack.c.l.bf16 %v366
      %v399 = vunpack.c.l.bf16 %v367
      %v400 = vunpack.c.l.bf16 %v368
      %v401 = vunpack.c.l.bf16 %v369
      %v402 = vunpack.c.l.bf16 %v370
      %v403 = vunpack.c.l.bf16 %v371
      %v404 = vunpack.c.l.bf16 %v372
      %v405 = vunpack.c.l.bf16 %v373
      %v406 = vunpack.c.l.bf16 %v374
      %v407 = vunpack.c.l.bf16 %v375
      %v408 = vunpack.c.l.bf16 %v376
      %v409 = vunpack.c.l.bf16 %v377
      %v410 = vunpack.c.l.bf16 %v378
      %v411 = vunpack.c.l.bf16 %v379
      %v412 = vunpack.c.l.bf16 %v380
      %v413 = vunpack.c.l.bf16 %v381
      %v414 = vunpack.c.l.bf16 %v382
      %v415 = vunpack.c.l.bf16 %v383
      %v417 = vperm.slane %v350, 0
      %v419 = vmul.f32 %v384, %v417
      %v420 = vmul.f32 %v385, %v417
      %v421 = vmul.f32 %v386, %v417
      %v422 = vmul.f32 %v387, %v417
      %v423 = vmul.f32 %v388, %v417
      %v424 = vmul.f32 %v389, %v417
      %v425 = vmul.f32 %v390, %v417
      %v426 = vmul.f32 %v391, %v417
      %v427 = vmul.f32 %v392, %v417
      %v428 = vmul.f32 %v393, %v417
      %v429 = vmul.f32 %v394, %v417
      %v430 = vmul.f32 %v395, %v417
      %v431 = vmul.f32 %v396, %v417
      %v432 = vmul.f32 %v397, %v417
      %v433 = vmul.f32 %v398, %v417
      %v434 = vmul.f32 %v399, %v417
      %v435 = vmul.f32 %v400, %v417
      %v436 = vmul.f32 %v401, %v417
      %v437 = vmul.f32 %v402, %v417
      %v438 = vmul.f32 %v403, %v417
      %v439 = vmul.f32 %v404, %v417
      %v440 = vmul.f32 %v405, %v417
      %v441 = vmul.f32 %v406, %v417
      %v442 = vmul.f32 %v407, %v417
      %v443 = vmul.f32 %v408, %v417
      %v444 = vmul.f32 %v409, %v417
      %v445 = vmul.f32 %v410, %v417
      %v446 = vmul.f32 %v411, %v417
      %v447 = vmul.f32 %v412, %v417
      %v448 = vmul.f32 %v413, %v417
      %v449 = vmul.f32 %v414, %v417
      %v450 = vmul.f32 %v415, %v417
      %v452 = vperm.slane %v351, 0
      %v454 = vadd.f32 %v419, %v452
      %v455 = vadd.f32 %v420, %v452
      %v456 = vadd.f32 %v421, %v452
      %v457 = vadd.f32 %v422, %v452
      %v458 = vadd.f32 %v423, %v452
      %v459 = vadd.f32 %v424, %v452
      %v460 = vadd.f32 %v425, %v452
      %v461 = vadd.f32 %v426, %v452
      %v462 = vadd.f32 %v427, %v452
      %v463 = vadd.f32 %v428, %v452
      %v464 = vadd.f32 %v429, %v452
      %v465 = vadd.f32 %v430, %v452
      %v466 = vadd.f32 %v431, %v452
      %v467 = vadd.f32 %v432, %v452
      %v468 = vadd.f32 %v433, %v452
      %v469 = vadd.f32 %v434, %v452
      %v470 = vadd.f32 %v435, %v452
      %v471 = vadd.f32 %v436, %v452
      %v472 = vadd.f32 %v437, %v452
      %v473 = vadd.f32 %v438, %v452
      %v474 = vadd.f32 %v439, %v452
      %v475 = vadd.f32 %v440, %v452
      %v476 = vadd.f32 %v441, %v452
      %v477 = vadd.f32 %v442, %v452
      %v478 = vadd.f32 %v443, %v452
      %v479 = vadd.f32 %v444, %v452
      %v480 = vadd.f32 %v445, %v452
      %v481 = vadd.f32 %v446, %v452
      %v482 = vadd.f32 %v447, %v452
      %v483 = vadd.f32 %v448, %v452
      %v484 = vadd.f32 %v449, %v452
      %v485 = vadd.f32 %v450, %v452
      %v486 = vmax.f32 %v454, 0.0
      %v487 = vmax.f32 %v455, 0.0
      %v488 = vmax.f32 %v456, 0.0
      %v489 = vmax.f32 %v457, 0.0
      %v490 = vmax.f32 %v458, 0.0
      %v491 = vmax.f32 %v459, 0.0
      %v492 = vmax.f32 %v460, 0.0
      %v493 = vmax.f32 %v461, 0.0
      %v494 = vmax.f32 %v462, 0.0
      %v495 = vmax.f32 %v463, 0.0
      %v496 = vmax.f32 %v464, 0.0
      %v497 = vmax.f32 %v465, 0.0
      %v498 = vmax.f32 %v466, 0.0
      %v499 = vmax.f32 %v467, 0.0
      %v500 = vmax.f32 %v468, 0.0
      %v501 = vmax.f32 %v469, 0.0
      %v502 = vmax.f32 %v470, 0.0
      %v503 = vmax.f32 %v471, 0.0
      %v504 = vmax.f32 %v472, 0.0
      %v505 = vmax.f32 %v473, 0.0
      %v506 = vmax.f32 %v474, 0.0
      %v507 = vmax.f32 %v475, 0.0
      %v508 = vmax.f32 %v476, 0.0
      %v509 = vmax.f32 %v477, 0.0
      %v510 = vmax.f32 %v478, 0.0
      %v511 = vmax.f32 %v479, 0.0
      %v512 = vmax.f32 %v480, 0.0
      %v513 = vmax.f32 %v481, 0.0
      %v514 = vmax.f32 %v482, 0.0
      %v515 = vmax.f32 %v483, 0.0
      %v516 = vmax.f32 %v484, 0.0
      %v517 = vmax.f32 %v485, 0.0
      %v518 = vld [vmem:[%s330] sm:$0xf]
      %v519 = vld [vmem:[%s330 + $0x4] sm:$0xf]
      %v520 = vld [vmem:[%s330 + $0x8] sm:$0xf]
      %v521 = vld [vmem:[%s330 + $0xc] sm:$0xf]
      %v522 = vunpack.c.l.bf16 %v518
      %v523 = vunpack.c.l.bf16 %v519
      %v524 = vunpack.c.l.bf16 %v520
      %v525 = vunpack.c.l.bf16 %v521
      %v526 = vmul.f32 %v522, %v417
      %v527 = vmul.f32 %v523, %v417
      %v528 = vmul.f32 %v524, %v417
      %v529 = vmul.f32 %v525, %v417
      %v530 = vadd.f32 %v526, %v452
      %v531 = vadd.f32 %v527, %v452
      %v532 = vadd.f32 %v528, %v452
      %v533 = vadd.f32 %v529, %v452
      %v534 = vmax.f32 %v530, 0.0
      %v535 = vmax.f32 %v531, 0.0
      %v536 = vmax.f32 %v532, 0.0
      %v537 = vmax.f32 %v533, 0.0
      %s538 = scalar_lea.vmem [#allocation2], 24
      %vm539 = vcmask 31744
      %540 = vst.msk [vmem:[%s538 + $0x1] sm:$0xff] %vm539, %v486
      %541 = vst.msk [vmem:[%s538 + $0x9] sm:$0xff] %vm539, %v487
      %542 = vst.msk [vmem:[%s538 + $0x19] sm:$0xff] %vm539, %v488
      %543 = vst.msk [vmem:[%s538 + $0x21] sm:$0xff] %vm539, %v489
      %544 = vst.msk [vmem:[%s538 + $0x31] sm:$0xff] %vm539, %v490
      %545 = vst.msk [vmem:[%s538 + $0x39] sm:$0xff] %vm539, %v491
      %546 = vst.msk [vmem:[%s538 + $0x49] sm:$0xff] %vm539, %v492
      %547 = vst.msk [vmem:[%s538 + $0x51] sm:$0xff] %vm539, %v493
      %548 = vst.msk [vmem:[%s538 + $0x61] sm:$0xff] %vm539, %v494
      %549 = vst.msk [vmem:[%s538 + $0x69] sm:$0xff] %vm539, %v495
      %550 = vst.msk [vmem:[%s538 + $0x79] sm:$0xff] %vm539, %v496
      %551 = vst.msk [vmem:[%s538 + $0x81] sm:$0xff] %vm539, %v497
      %552 = vst.msk [vmem:[%s538 + $0x91] sm:$0xff] %vm539, %v498
      %553 = vst.msk [vmem:[%s538 + $0x99] sm:$0xff] %vm539, %v499
      %554 = vst.msk [vmem:[%s538 + $0xa9] sm:$0xff] %vm539, %v500
      %555 = vst.msk [vmem:[%s538 + $0xb1] sm:$0xff] %vm539, %v501
      %556 = vst.msk [vmem:[%s538 + $0xc1] sm:$0xff] %vm539, %v502
      %557 = vst.msk [vmem:[%s538 + $0xc9] sm:$0xff] %vm539, %v503
      %558 = vst.msk [vmem:[%s538 + $0xd9] sm:$0xff] %vm539, %v504
      %559 = vst.msk [vmem:[%s538 + $0xe1] sm:$0xff] %vm539, %v505
      %560 = vst.msk [vmem:[%s538 + $0xf1] sm:$0xff] %vm539, %v506
      %561 = vst.msk [vmem:[%s538 + $0xf9] sm:$0xff] %vm539, %v507
      %562 = vst.msk [vmem:[%s538 + $0x109] sm:$0xff] %vm539, %v508
      %563 = vst.msk [vmem:[%s538 + $0x111] sm:$0xff] %vm539, %v509
      %564 = vst.msk [vmem:[%s538 + $0x121] sm:$0xff] %vm539, %v510
      %565 = vst.msk [vmem:[%s538 + $0x129] sm:$0xff] %vm539, %v511
      %566 = vst.msk [vmem:[%s538 + $0x139] sm:$0xff] %vm539, %v512
      %567 = vst.msk [vmem:[%s538 + $0x141] sm:$0xff] %vm539, %v513
      %568 = vst.msk [vmem:[%s538 + $0x151] sm:$0xff] %vm539, %v514
      %569 = vst.msk [vmem:[%s538 + $0x159] sm:$0xff] %vm539, %v515
      %570 = vst.msk [vmem:[%s538 + $0x169] sm:$0xff] %vm539, %v516
      %571 = vst.msk [vmem:[%s538 + $0x171] sm:$0xff] %vm539, %v517
      %572 = vst.msk [vmem:[#allocation2 + $0x1] sm:$0xff] %vm539, %v534
      %573 = vst.msk [vmem:[#allocation2 + $0x9] sm:$0xff] %vm539, %v535
      %s574 = scalar_lea.vmem [#allocation2], 408
      %575 = vst.msk [vmem:[%s574 + $0x1] sm:$0xff] %vm539, %v536
      %576 = vst.msk [vmem:[%s574 + $0x9] sm:$0xff] %vm539, %v537
      %v577 = vld [vmem:[#allocation2 + $0x2] sm:$0x1]
      %v578 = vld [vmem:[#allocation2 + $0x1a] sm:$0x1]
      %v579 = vld [vmem:[#allocation2 + $0x32] sm:$0x1]
      %v580 = vld [vmem:[#allocation2 + $0x4a] sm:$0x1]
      %v581 = vld [vmem:[#allocation2 + $0x62] sm:$0x1]
      %v582 = vld [vmem:[#allocation2 + $0x7a] sm:$0x1]
      %v583 = vld [vmem:[#allocation2 + $0x92] sm:$0x1]
      %v584 = vld [vmem:[#allocation2 + $0xaa] sm:$0x1]
      %v585 = vld [vmem:[#allocation2 + $0xc2] sm:$0x1]
      %v586 = vld [vmem:[#allocation2 + $0xda] sm:$0x1]
      %v587 = vld [vmem:[#allocation2 + $0xf2] sm:$0x1]
      %v588 = vld [vmem:[#allocation2 + $0x10a] sm:$0x1]
      %v589 = vld [vmem:[#allocation2 + $0x122] sm:$0x1]
      %v590 = vld [vmem:[#allocation2 + $0x13a] sm:$0x1]
      %v591 = vld [vmem:[#allocation2 + $0x152] sm:$0x1]
      %v592 = vld [vmem:[#allocation2 + $0x16a] sm:$0x1]
      %v593 = vld [vmem:[#allocation2 + $0x182] sm:$0x1]
      %v594 = vld [vmem:[#allocation2 + $0x19a] sm:$0x1]
      %vm595 = vcmask 24576
      %596 = vst.msk [vmem:[#allocation2] sm:$0x1] %vm595, %v577
      %597 = vst.msk [vmem:[#allocation2 + $0x18] sm:$0x1] %vm595, %v578
      %598 = vst.msk [vmem:[#allocation2 + $0x30] sm:$0x1] %vm595, %v579
      %599 = vst.msk [vmem:[#allocation2 + $0x48] sm:$0x1] %vm595, %v580
      %600 = vst.msk [vmem:[#allocation2 + $0x60] sm:$0x1] %vm595, %v581
      %601 = vst.msk [vmem:[#allocation2 + $0x78] sm:$0x1] %vm595, %v582
      %602 = vst.msk [vmem:[#allocation2 + $0x90] sm:$0x1] %vm595, %v583
      %603 = vst.msk [vmem:[#allocation2 + $0xa8] sm:$0x1] %vm595, %v584
      %604 = vst.msk [vmem:[#allocation2 + $0xc0] sm:$0x1] %vm595, %v585
      %605 = vst.msk [vmem:[#allocation2 + $0xd8] sm:$0x1] %vm595, %v586
      %606 = vst.msk [vmem:[#allocation2 + $0xf0] sm:$0x1] %vm595, %v587
      %607 = vst.msk [vmem:[#allocation2 + $0x108] sm:$0x1] %vm595, %v588
      %608 = vst.msk [vmem:[#allocation2 + $0x120] sm:$0x1] %vm595, %v589
      %609 = vst.msk [vmem:[#allocation2 + $0x138] sm:$0x1] %vm595, %v590
      %610 = vst.msk [vmem:[#allocation2 + $0x150] sm:$0x1] %vm595, %v591
      %611 = vst.msk [vmem:[#allocation2 + $0x168] sm:$0x1] %vm595, %v592
      %612 = vst.msk [vmem:[#allocation2 + $0x180] sm:$0x1] %vm595, %v593
      %613 = vst.msk [vmem:[#allocation2 + $0x198] sm:$0x1] %vm595, %v594
      %v614 = vld [vmem:[#allocation2 + $0xf] sm:$0x1]
      %v615 = vld [vmem:[#allocation2 + $0x27] sm:$0x1]
      %v616 = vld [vmem:[#allocation2 + $0x3f] sm:$0x1]
      %v617 = vld [vmem:[#allocation2 + $0x57] sm:$0x1]
      %v618 = vld [vmem:[#allocation2 + $0x6f] sm:$0x1]
      %v619 = vld [vmem:[#allocation2 + $0x87] sm:$0x1]
      %v620 = vld [vmem:[#allocation2 + $0x9f] sm:$0x1]
      %v621 = vld [vmem:[#allocation2 + $0xb7] sm:$0x1]
      %v622 = vld [vmem:[#allocation2 + $0xcf] sm:$0x1]
      %v623 = vld [vmem:[#allocation2 + $0xe7] sm:$0x1]
      %v624 = vld [vmem:[#allocation2 + $0xff] sm:$0x1]
      %v625 = vld [vmem:[#allocation2 + $0x117] sm:$0x1]
      %v626 = vld [vmem:[#allocation2 + $0x12f] sm:$0x1]
      %v627 = vld [vmem:[#allocation2 + $0x147] sm:$0x1]
      %v628 = vld [vmem:[#allocation2 + $0x15f] sm:$0x1]
      %v629 = vld [vmem:[#allocation2 + $0x177] sm:$0x1]
      %v630 = vld [vmem:[#allocation2 + $0x18f] sm:$0x1]
      %v631 = vld [vmem:[#allocation2 + $0x1a7] sm:$0x1]
      %632 = vst.msk [vmem:[#allocation2 + $0x11] sm:$0x1] %vm595, %v614
      %633 = vst.msk [vmem:[#allocation2 + $0x29] sm:$0x1] %vm595, %v615
      %634 = vst.msk [vmem:[#allocation2 + $0x41] sm:$0x1] %vm595, %v616
      %635 = vst.msk [vmem:[#allocation2 + $0x59] sm:$0x1] %vm595, %v617
      %636 = vst.msk [vmem:[#allocation2 + $0x71] sm:$0x1] %vm595, %v618
      %637 = vst.msk [vmem:[#allocation2 + $0x89] sm:$0x1] %vm595, %v619
      %638 = vst.msk [vmem:[#allocation2 + $0xa1] sm:$0x1] %vm595, %v620
      %639 = vst.msk [vmem:[#allocation2 + $0xb9] sm:$0x1] %vm595, %v621
      %640 = vst.msk [vmem:[#allocation2 + $0xd1] sm:$0x1] %vm595, %v622
      %641 = vst.msk [vmem:[#allocation2 + $0xe9] sm:$0x1] %vm595, %v623
      %642 = vst.msk [vmem:[#allocation2 + $0x101] sm:$0x1] %vm595, %v624
      %643 = vst.msk [vmem:[#allocation2 + $0x119] sm:$0x1] %vm595, %v625
      %644 = vst.msk [vmem:[#allocation2 + $0x131] sm:$0x1] %vm595, %v626
      %645 = vst.msk [vmem:[#allocation2 + $0x149] sm:$0x1] %vm595, %v627
      %646 = vst.msk [vmem:[#allocation2 + $0x161] sm:$0x1] %vm595, %v628
      %647 = vst.msk [vmem:[#allocation2 + $0x179] sm:$0x1] %vm595, %v629
      %648 = vst.msk [vmem:[#allocation2 + $0x191] sm:$0x1] %vm595, %v630
      %649 = vst.msk [vmem:[#allocation2 + $0x1a9] sm:$0x1] %vm595, %v631
      %v650 = vld [vmem:[#allocation2] sm:$0xff]
      %v651 = vld [vmem:[#allocation2 + $0x8] sm:$0xff]
      %v652 = vld [vmem:[#allocation2 + $0x18] sm:$0xff]
      %v653 = vld [vmem:[#allocation2 + $0x20] sm:$0xff]
      %v654 = vld [vmem:[#allocation2 + $0x30] sm:$0xff]
      %v655 = vld [vmem:[#allocation2 + $0x38] sm:$0xff]
      %v656 = vld [vmem:[#allocation2 + $0x48] sm:$0xff]
      %v657 = vld [vmem:[#allocation2 + $0x50] sm:$0xff]
      %v658 = vld [vmem:[#allocation2 + $0x60] sm:$0xff]
      %v659 = vld [vmem:[#allocation2 + $0x68] sm:$0xff]
      %v660 = vld [vmem:[#allocation2 + $0x78] sm:$0xff]
      %v661 = vld [vmem:[#allocation2 + $0x80] sm:$0xff]
      %v662 = vld [vmem:[#allocation2 + $0x90] sm:$0xff]
      %v663 = vld [vmem:[#allocation2 + $0x98] sm:$0xff]
      %v664 = vld [vmem:[#allocation2 + $0xa8] sm:$0xff]
      %v665 = vld [vmem:[#allocation2 + $0xb0] sm:$0xff]
      %v666 = vld [vmem:[#allocation2 + $0xc0] sm:$0xff]
      %v667 = vld [vmem:[#allocation2 + $0xc8] sm:$0xff]
      %v668 = vld [vmem:[#allocation2 + $0xd8] sm:$0xff]
      %v669 = vld [vmem:[#allocation2 + $0xe0] sm:$0xff]
      %v670 = vld [vmem:[#allocation2 + $0xf0] sm:$0xff]
      %v671 = vld [vmem:[#allocation2 + $0xf8] sm:$0xff]
      %v672 = vld [vmem:[#allocation2 + $0x108] sm:$0xff]
      %v673 = vld [vmem:[#allocation2 + $0x110] sm:$0xff]
      %v674 = vld [vmem:[#allocation2 + $0x120] sm:$0xff]
      %v675 = vld [vmem:[#allocation2 + $0x128] sm:$0xff]
      %v676 = vld [vmem:[#allocation2 + $0x138] sm:$0xff]
      %v677 = vld [vmem:[#allocation2 + $0x140] sm:$0xff]
      %v678 = vld [vmem:[#allocation2 + $0x150] sm:$0xff]
      %v679 = vld [vmem:[#allocation2 + $0x158] sm:$0xff]
      %v680 = vld [vmem:[#allocation2 + $0x168] sm:$0xff]
      %v681 = vld [vmem:[#allocation2 + $0x170] sm:$0xff]
      %v682 = vpack.c.bf16 %v650, %v650
      %v683 = vpack.c.bf16 %v651, %v651
      %v684 = vpack.c.bf16 %v652, %v652
      %v685 = vpack.c.bf16 %v653, %v653
      %v686 = vpack.c.bf16 %v654, %v654
      %v687 = vpack.c.bf16 %v655, %v655
      %v688 = vpack.c.bf16 %v656, %v656
      %v689 = vpack.c.bf16 %v657, %v657
      %v690 = vpack.c.bf16 %v658, %v658
      %v691 = vpack.c.bf16 %v659, %v659
      %v692 = vpack.c.bf16 %v660, %v660
      %v693 = vpack.c.bf16 %v661, %v661
      %v694 = vpack.c.bf16 %v662, %v662
      %v695 = vpack.c.bf16 %v663, %v663
      %v696 = vpack.c.bf16 %v664, %v664
      %v697 = vpack.c.bf16 %v665, %v665
      %v698 = vpack.c.bf16 %v666, %v666
      %v699 = vpack.c.bf16 %v667, %v667
      %v700 = vpack.c.bf16 %v668, %v668
      %v701 = vpack.c.bf16 %v669, %v669
      %v702 = vpack.c.bf16 %v670, %v670
      %v703 = vpack.c.bf16 %v671, %v671
      %v704 = vpack.c.bf16 %v672, %v672
      %v705 = vpack.c.bf16 %v673, %v673
      %v706 = vpack.c.bf16 %v674, %v674
      %v707 = vpack.c.bf16 %v675, %v675
      %v708 = vpack.c.bf16 %v676, %v676
      %v709 = vpack.c.bf16 %v677, %v677
      %v710 = vpack.c.bf16 %v678, %v678
      %v711 = vpack.c.bf16 %v679, %v679
      %v712 = vpack.c.bf16 %v680, %v680
      %v713 = vpack.c.bf16 %v681, %v681
      %v714 = vld [vmem:[%s2] sm:$0x3]
      %v715 = vld [vmem:[#allocation2 + $0x1] sm:$0xff]
      %v716 = vld [vmem:[#allocation2 + $0x9] sm:$0xff]
      %v717 = vld [vmem:[#allocation2 + $0x19] sm:$0xff]
      %v718 = vld [vmem:[#allocation2 + $0x21] sm:$0xff]
      %v719 = vld [vmem:[#allocation2 + $0x31] sm:$0xff]
      %v720 = vld [vmem:[#allocation2 + $0x39] sm:$0xff]
      %v721 = vld [vmem:[#allocation2 + $0x49] sm:$0xff]
      %v722 = vld [vmem:[#allocation2 + $0x51] sm:$0xff]
      %v723 = vld [vmem:[#allocation2 + $0x61] sm:$0xff]
      %v724 = vld [vmem:[#allocation2 + $0x69] sm:$0xff]
      %v725 = vld [vmem:[#allocation2 + $0x79] sm:$0xff]
      %v726 = vld [vmem:[#allocation2 + $0x81] sm:$0xff]
      %v727 = vld [vmem:[#allocation2 + $0x91] sm:$0xff]
      %v728 = vld [vmem:[#allocation2 + $0x99] sm:$0xff]
      %v729 = vld [vmem:[#allocation2 + $0xa9] sm:$0xff]
      %v730 = vld [vmem:[#allocation2 + $0xb1] sm:$0xff]
      %v731 = vld [vmem:[#allocation2 + $0xc1] sm:$0xff]
      %v732 = vld [vmem:[#allocation2 + $0xc9] sm:$0xff]
      %v733 = vld [vmem:[#allocation2 + $0xd9] sm:$0xff]
      %v734 = vld [vmem:[#allocation2 + $0xe1] sm:$0xff]
      %v735 = vld [vmem:[#allocation2 + $0xf1] sm:$0xff]
      %v736 = vld [vmem:[#allocation2 + $0xf9] sm:$0xff]
      %v737 = vld [vmem:[#allocation2 + $0x109] sm:$0xff]
      %v738 = vld [vmem:[#allocation2 + $0x111] sm:$0xff]
      %v739 = vld [vmem:[#allocation2 + $0x121] sm:$0xff]
      %v740 = vld [vmem:[#allocation2 + $0x129] sm:$0xff]
      %v741 = vld [vmem:[#allocation2 + $0x139] sm:$0xff]
      %v742 = vld [vmem:[#allocation2 + $0x141] sm:$0xff]
      %v743 = vld [vmem:[#allocation2 + $0x151] sm:$0xff]
      %v744 = vld [vmem:[#allocation2 + $0x159] sm:$0xff]
      %v745 = vld [vmem:[#allocation2 + $0x169] sm:$0xff]
      %v746 = vld [vmem:[#allocation2 + $0x171] sm:$0xff]
      %v747 = vpack.c.bf16 %v715, %v715
      %v748 = vpack.c.bf16 %v716, %v716
      %v749 = vpack.c.bf16 %v717, %v717
      %v750 = vpack.c.bf16 %v718, %v718
      %v751 = vpack.c.bf16 %v719, %v719
      %v752 = vpack.c.bf16 %v720, %v720
      %v753 = vpack.c.bf16 %v721, %v721
      %v754 = vpack.c.bf16 %v722, %v722
      %v755 = vpack.c.bf16 %v723, %v723
      %v756 = vpack.c.bf16 %v724, %v724
      %v757 = vpack.c.bf16 %v725, %v725
      %v758 = vpack.c.bf16 %v726, %v726
      %v759 = vpack.c.bf16 %v727, %v727
      %v760 = vpack.c.bf16 %v728, %v728
      %v761 = vpack.c.bf16 %v729, %v729
      %v762 = vpack.c.bf16 %v730, %v730
      %v763 = vpack.c.bf16 %v731, %v731
      %v764 = vpack.c.bf16 %v732, %v732
      %v765 = vpack.c.bf16 %v733, %v733
      %v766 = vpack.c.bf16 %v734, %v734
      %v767 = vpack.c.bf16 %v735, %v735
      %v768 = vpack.c.bf16 %v736, %v736
      %v769 = vpack.c.bf16 %v737, %v737
      %v770 = vpack.c.bf16 %v738, %v738
      %v771 = vpack.c.bf16 %v739, %v739
      %v772 = vpack.c.bf16 %v740, %v740
      %v773 = vpack.c.bf16 %v741, %v741
      %v774 = vpack.c.bf16 %v742, %v742
      %v775 = vpack.c.bf16 %v743, %v743
      %v776 = vpack.c.bf16 %v744, %v744
      %v777 = vpack.c.bf16 %v745, %v745
      %v778 = vpack.c.bf16 %v746, %v746
      %s779 = scalar_lea.vmem %s2, 2
      %v780 = vld [vmem:[%s779] sm:$0x3]
      %v813 = vunpack.c.l.b16 %v747
      %v814 = vunpack.c.l.b16 %v748
      %v815 = vunpack.c.l.b16 %v749
      %v816 = vunpack.c.l.b16 %v750
      %v817 = vunpack.c.l.b16 %v751
      %v818 = vunpack.c.l.b16 %v752
      %v819 = vunpack.c.l.b16 %v753
      %v820 = vunpack.c.l.b16 %v754
      %v821 = vunpack.c.l.b16 %v755
      %v822 = vunpack.c.l.b16 %v756
      %v823 = vunpack.c.l.b16 %v757
      %v824 = vunpack.c.l.b16 %v758
      %v825 = vunpack.c.l.b16 %v759
      %v826 = vunpack.c.l.b16 %v760
      %v827 = vunpack.c.l.b16 %v761
      %v828 = vunpack.c.l.b16 %v762
      %v829 = vunpack.c.l.b16 %v763
      %v830 = vunpack.c.l.b16 %v764
      %v831 = vunpack.c.l.b16 %v765
      %v832 = vunpack.c.l.b16 %v766
      %v833 = vunpack.c.l.b16 %v767
      %v834 = vunpack.c.l.b16 %v768
      %v835 = vunpack.c.l.b16 %v769
      %v836 = vunpack.c.l.b16 %v770
      %v837 = vunpack.c.l.b16 %v771
      %v838 = vunpack.c.l.b16 %v772
      %v839 = vunpack.c.l.b16 %v773
      %v840 = vunpack.c.l.b16 %v774
      %v841 = vunpack.c.l.b16 %v775
      %v842 = vunpack.c.l.b16 %v776
      %v843 = vunpack.c.l.b16 %v777
      %v844 = vunpack.c.l.b16 %v778
      %v845 = vpack.c.b16 %v814, %v813
      %v846 = vpack.c.b16 %v816, %v815
      %v847 = vpack.c.b16 %v818, %v817
      %v848 = vpack.c.b16 %v820, %v819
      %v849 = vpack.c.b16 %v822, %v821
      %v850 = vpack.c.b16 %v824, %v823
      %v851 = vpack.c.b16 %v826, %v825
      %v852 = vpack.c.b16 %v828, %v827
      %v853 = vpack.c.b16 %v830, %v829
      %v854 = vpack.c.b16 %v832, %v831
      %v855 = vpack.c.b16 %v834, %v833
      %v856 = vpack.c.b16 %v836, %v835
      %v857 = vpack.c.b16 %v838, %v837
      %v858 = vpack.c.b16 %v840, %v839
      %v859 = vpack.c.b16 %v842, %v841
      %v860 = vpack.c.b16 %v844, %v843
      %v862 = vsel %vm539, %v845, 0
      %v865 = vsel %vm539, %v846, 0
      %v868 = vsel %vm539, %v847, 0
      %v871 = vsel %vm539, %v848, 0
      %v874 = vsel %vm539, %v849, 0
      %v877 = vsel %vm539, %v850, 0
      %v880 = vsel %vm539, %v851, 0
      %v883 = vsel %vm539, %v852, 0
      %v886 = vsel %vm539, %v853, 0
      %v889 = vsel %vm539, %v854, 0
      %v892 = vsel %vm539, %v855, 0
      %v895 = vsel %vm539, %v856, 0
      %v898 = vsel %vm539, %v857, 0
      %v901 = vsel %vm539, %v858, 0
      %v904 = vsel %vm539, %v859, 0
      %v907 = vsel %vm539, %v860, 0
      %vm909 = vcmask 1041408
      %v911 = vsel %vm909, %v780, 0
      %913 = vmatpush.bf16.msra.mxu0 0
      %914 = vmatpush.bf16.msra.mxu0 0
      %915 = vmatpush.bf16.msra.mxu0 0
      %916 = vmatpush.bf16.msra.mxu0 0
      %917 = vmatpush.bf16.msra.mxu0 0
      %918 = vmatpush.bf16.msra.mxu0 0
      %919 = vmatpush.bf16.msra.mxu0 0
      %920 = vmatpush.bf16.msra.mxu0 %v911
      %921 = vmatmul.bf16.gmra.mxu0 %v862
      %v922 = vpop.f32.mrf.mxu0
      %v923 = vadd.f32 0.0, %v922
      %v924 = vpop.f32.mrf.mxu0
      %v925 = vadd.f32 0.0, %v924
      %926 = vmatmul.bf16.gmra.mxu0 %v865
      %v927 = vpop.f32.mrf.mxu0
      %v928 = vadd.f32 0.0, %v927
      %v929 = vpop.f32.mrf.mxu0
      %v930 = vadd.f32 0.0, %v929
      %931 = vmatmul.bf16.gmra.mxu0 %v868
      %v932 = vpop.f32.mrf.mxu0
      %v933 = vadd.f32 0.0, %v932
      %v934 = vpop.f32.mrf.mxu0
      %v935 = vadd.f32 0.0, %v934
      %936 = vmatmul.bf16.gmra.mxu0 %v871
      %v937 = vpop.f32.mrf.mxu0
      %v938 = vadd.f32 0.0, %v937
      %v939 = vpop.f32.mrf.mxu0
      %v940 = vadd.f32 0.0, %v939
      %941 = vmatmul.bf16.gmra.mxu0 %v874
      %v942 = vpop.f32.mrf.mxu0
      %v943 = vadd.f32 0.0, %v942
      %v944 = vpop.f32.mrf.mxu0
      %v945 = vadd.f32 0.0, %v944
      %946 = vmatmul.bf16.gmra.mxu0 %v877
      %v947 = vpop.f32.mrf.mxu0
      %v948 = vadd.f32 0.0, %v947
      %v949 = vpop.f32.mrf.mxu0
      %v950 = vadd.f32 0.0, %v949
      %951 = vmatmul.bf16.gmra.mxu0 %v880
      %v952 = vpop.f32.mrf.mxu0
      %v953 = vadd.f32 0.0, %v952
      %v954 = vpop.f32.mrf.mxu0
      %v955 = vadd.f32 0.0, %v954
      %956 = vmatmul.bf16.gmra.mxu0 %v883
      %v957 = vpop.f32.mrf.mxu0
      %v958 = vadd.f32 0.0, %v957
      %v959 = vpop.f32.mrf.mxu0
      %v960 = vadd.f32 0.0, %v959
      %961 = vmatmul.bf16.gmra.mxu0 %v886
      %v962 = vpop.f32.mrf.mxu0
      %v963 = vadd.f32 0.0, %v962
      %v964 = vpop.f32.mrf.mxu0
      %v965 = vadd.f32 0.0, %v964
      %966 = vmatmul.bf16.gmra.mxu0 %v889
      %v967 = vpop.f32.mrf.mxu0
      %v968 = vadd.f32 0.0, %v967
      %v969 = vpop.f32.mrf.mxu0
      %v970 = vadd.f32 0.0, %v969
      %971 = vmatmul.bf16.gmra.mxu0 %v892
      %v972 = vpop.f32.mrf.mxu0
      %v973 = vadd.f32 0.0, %v972
      %v974 = vpop.f32.mrf.mxu0
      %v975 = vadd.f32 0.0, %v974
      %976 = vmatmul.bf16.gmra.mxu0 %v895
      %v977 = vpop.f32.mrf.mxu0
      %v978 = vadd.f32 0.0, %v977
      %v979 = vpop.f32.mrf.mxu0
      %v980 = vadd.f32 0.0, %v979
      %981 = vmatmul.bf16.gmra.mxu0 %v898
      %v982 = vpop.f32.mrf.mxu0
      %v983 = vadd.f32 0.0, %v982
      %v984 = vpop.f32.mrf.mxu0
      %v985 = vadd.f32 0.0, %v984
      %986 = vmatmul.bf16.gmra.mxu0 %v901
      %v987 = vpop.f32.mrf.mxu0
      %v988 = vadd.f32 0.0, %v987
      %v989 = vpop.f32.mrf.mxu0
      %v990 = vadd.f32 0.0, %v989
      %991 = vmatmul.bf16.gmra.mxu0 %v904
      %v992 = vpop.f32.mrf.mxu0
      %v993 = vadd.f32 0.0, %v992
      %v994 = vpop.f32.mrf.mxu0
      %v995 = vadd.f32 0.0, %v994
      %996 = vmatmul.bf16.gmra.mxu0 %v907
      %v997 = vpop.f32.mrf.mxu0
      %v998 = vadd.f32 0.0, %v997
      %v999 = vpop.f32.mrf.mxu0
      %v1000 = vadd.f32 0.0, %v999
      %1001 = vdwg.mxu0
      %v1034 = vunpack.c.l.b16 %v682
      %v1035 = vunpack.c.l.b16 %v683
      %v1036 = vunpack.c.l.b16 %v684
      %v1037 = vunpack.c.l.b16 %v685
      %v1038 = vunpack.c.l.b16 %v686
      %v1039 = vunpack.c.l.b16 %v687
      %v1040 = vunpack.c.l.b16 %v688
      %v1041 = vunpack.c.l.b16 %v689
      %v1042 = vunpack.c.l.b16 %v690
      %v1043 = vunpack.c.l.b16 %v691
      %v1044 = vunpack.c.l.b16 %v692
      %v1045 = vunpack.c.l.b16 %v693
      %v1046 = vunpack.c.l.b16 %v694
      %v1047 = vunpack.c.l.b16 %v695
      %v1048 = vunpack.c.l.b16 %v696
      %v1049 = vunpack.c.l.b16 %v697
      %v1050 = vunpack.c.l.b16 %v698
      %v1051 = vunpack.c.l.b16 %v699
      %v1052 = vunpack.c.l.b16 %v700
      %v1053 = vunpack.c.l.b16 %v701
      %v1054 = vunpack.c.l.b16 %v702
      %v1055 = vunpack.c.l.b16 %v703
      %v1056 = vunpack.c.l.b16 %v704
      %v1057 = vunpack.c.l.b16 %v705
      %v1058 = vunpack.c.l.b16 %v706
      %v1059 = vunpack.c.l.b16 %v707
      %v1060 = vunpack.c.l.b16 %v708
      %v1061 = vunpack.c.l.b16 %v709
      %v1062 = vunpack.c.l.b16 %v710
      %v1063 = vunpack.c.l.b16 %v711
      %v1064 = vunpack.c.l.b16 %v712
      %v1065 = vunpack.c.l.b16 %v713
      %v1066 = vpack.c.b16 %v1035, %v1034
      %v1067 = vpack.c.b16 %v1037, %v1036
      %v1068 = vpack.c.b16 %v1039, %v1038
      %v1069 = vpack.c.b16 %v1041, %v1040
      %v1070 = vpack.c.b16 %v1043, %v1042
      %v1071 = vpack.c.b16 %v1045, %v1044
      %v1072 = vpack.c.b16 %v1047, %v1046
      %v1073 = vpack.c.b16 %v1049, %v1048
      %v1074 = vpack.c.b16 %v1051, %v1050
      %v1075 = vpack.c.b16 %v1053, %v1052
      %v1076 = vpack.c.b16 %v1055, %v1054
      %v1077 = vpack.c.b16 %v1057, %v1056
      %v1078 = vpack.c.b16 %v1059, %v1058
      %v1079 = vpack.c.b16 %v1061, %v1060
      %v1080 = vpack.c.b16 %v1063, %v1062
      %v1081 = vpack.c.b16 %v1065, %v1064
      %v1083 = vsel %vm539, %v1066, 0
      %v1086 = vsel %vm539, %v1067, 0
      %v1089 = vsel %vm539, %v1068, 0
      %v1092 = vsel %vm539, %v1069, 0
      %v1095 = vsel %vm539, %v1070, 0
      %v1098 = vsel %vm539, %v1071, 0
      %v1101 = vsel %vm539, %v1072, 0
      %v1104 = vsel %vm539, %v1073, 0
      %v1107 = vsel %vm539, %v1074, 0
      %v1110 = vsel %vm539, %v1075, 0
      %v1113 = vsel %vm539, %v1076, 0
      %v1116 = vsel %vm539, %v1077, 0
      %v1119 = vsel %vm539, %v1078, 0
      %v1122 = vsel %vm539, %v1079, 0
      %v1125 = vsel %vm539, %v1080, 0
      %v1128 = vsel %vm539, %v1081, 0
      %v1131 = vsel %vm909, %v714, 0
      %1133 = vmatpush.bf16.msra.mxu0 0
      %1134 = vmatpush.bf16.msra.mxu0 0
      %1135 = vmatpush.bf16.msra.mxu0 0
      %1136 = vmatpush.bf16.msra.mxu0 0
      %1137 = vmatpush.bf16.msra.mxu0 0
      %1138 = vmatpush.bf16.msra.mxu0 0
      %1139 = vmatpush.bf16.msra.mxu0 0
      %1140 = vmatpush.bf16.msra.mxu0 %v1131
      %1141 = vmatmul.bf16.gmra.mxu0 %v1083
      %v1142 = vpop.f32.mrf.mxu0
      %v1143 = vadd.f32 %v923, %v1142
      %v1144 = vpop.f32.mrf.mxu0
      %v1145 = vadd.f32 %v925, %v1144
      %1146 = vmatmul.bf16.gmra.mxu0 %v1086
      %v1147 = vpop.f32.mrf.mxu0
      %v1148 = vadd.f32 %v928, %v1147
      %v1149 = vpop.f32.mrf.mxu0
      %v1150 = vadd.f32 %v930, %v1149
      %1151 = vmatmul.bf16.gmra.mxu0 %v1089
      %v1152 = vpop.f32.mrf.mxu0
      %v1153 = vadd.f32 %v933, %v1152
      %v1154 = vpop.f32.mrf.mxu0
      %v1155 = vadd.f32 %v935, %v1154
      %1156 = vmatmul.bf16.gmra.mxu0 %v1092
      %v1157 = vpop.f32.mrf.mxu0
      %v1158 = vadd.f32 %v938, %v1157
      %v1159 = vpop.f32.mrf.mxu0
      %v1160 = vadd.f32 %v940, %v1159
      %1161 = vmatmul.bf16.gmra.mxu0 %v1095
      %v1162 = vpop.f32.mrf.mxu0
      %v1163 = vadd.f32 %v943, %v1162
      %v1164 = vpop.f32.mrf.mxu0
      %v1165 = vadd.f32 %v945, %v1164
      %1166 = vmatmul.bf16.gmra.mxu0 %v1098
      %v1167 = vpop.f32.mrf.mxu0
      %v1168 = vadd.f32 %v948, %v1167
      %v1169 = vpop.f32.mrf.mxu0
      %v1170 = vadd.f32 %v950, %v1169
      %1171 = vmatmul.bf16.gmra.mxu0 %v1101
      %v1172 = vpop.f32.mrf.mxu0
      %v1173 = vadd.f32 %v953, %v1172
      %v1174 = vpop.f32.mrf.mxu0
      %v1175 = vadd.f32 %v955, %v1174
      %1176 = vmatmul.bf16.gmra.mxu0 %v1104
      %v1177 = vpop.f32.mrf.mxu0
      %v1178 = vadd.f32 %v958, %v1177
      %v1179 = vpop.f32.mrf.mxu0
      %v1180 = vadd.f32 %v960, %v1179
      %1181 = vmatmul.bf16.gmra.mxu0 %v1107
      %v1182 = vpop.f32.mrf.mxu0
      %v1183 = vadd.f32 %v963, %v1182
      %v1184 = vpop.f32.mrf.mxu0
      %v1185 = vadd.f32 %v965, %v1184
      %1186 = vmatmul.bf16.gmra.mxu0 %v1110
      %v1187 = vpop.f32.mrf.mxu0
      %v1188 = vadd.f32 %v968, %v1187
      %v1189 = vpop.f32.mrf.mxu0
      %v1190 = vadd.f32 %v970, %v1189
      %1191 = vmatmul.bf16.gmra.mxu0 %v1113
      %v1192 = vpop.f32.mrf.mxu0
      %v1193 = vadd.f32 %v973, %v1192
      %v1194 = vpop.f32.mrf.mxu0
      %v1195 = vadd.f32 %v975, %v1194
      %1196 = vmatmul.bf16.gmra.mxu0 %v1116
      %v1197 = vpop.f32.mrf.mxu0
      %v1198 = vadd.f32 %v978, %v1197
      %v1199 = vpop.f32.mrf.mxu0
      %v1200 = vadd.f32 %v980, %v1199
      %1201 = vmatmul.bf16.gmra.mxu0 %v1119
      %v1202 = vpop.f32.mrf.mxu0
      %v1203 = vadd.f32 %v983, %v1202
      %v1204 = vpop.f32.mrf.mxu0
      %v1205 = vadd.f32 %v985, %v1204
      %1206 = vmatmul.bf16.gmra.mxu0 %v1122
      %v1207 = vpop.f32.mrf.mxu0
      %v1208 = vadd.f32 %v988, %v1207
      %v1209 = vpop.f32.mrf.mxu0
      %v1210 = vadd.f32 %v990, %v1209
      %1211 = vmatmul.bf16.gmra.mxu0 %v1125
      %v1212 = vpop.f32.mrf.mxu0
      %v1213 = vadd.f32 %v993, %v1212
      %v1214 = vpop.f32.mrf.mxu0
      %v1215 = vadd.f32 %v995, %v1214
      %1216 = vmatmul.bf16.gmra.mxu0 %v1128
      %v1217 = vpop.f32.mrf.mxu0
      %v1218 = vadd.f32 %v998, %v1217
      %v1219 = vpop.f32.mrf.mxu0
      %v1220 = vadd.f32 %v1000, %v1219
      %1221 = vdwg.mxu0
      %v1222 = vld [vmem:[#allocation2 + $0x2] sm:$0xff]
      %v1223 = vld [vmem:[#allocation2 + $0xa] sm:$0xff]
      %v1224 = vld [vmem:[#allocation2 + $0x1a] sm:$0xff]
      %v1225 = vld [vmem:[#allocation2 + $0x22] sm:$0xff]
      %v1226 = vld [vmem:[#allocation2 + $0x32] sm:$0xff]
      %v1227 = vld [vmem:[#allocation2 + $0x3a] sm:$0xff]
      %v1228 = vld [vmem:[#allocation2 + $0x4a] sm:$0xff]
      %v1229 = vld [vmem:[#allocation2 + $0x52] sm:$0xff]
      %v1230 = vld [vmem:[#allocation2 + $0x62] sm:$0xff]
      %v1231 = vld [vmem:[#allocation2 + $0x6a] sm:$0xff]
      %v1232 = vld [vmem:[#allocation2 + $0x7a] sm:$0xff]
      %v1233 = vld [vmem:[#allocation2 + $0x82] sm:$0xff]
      %v1234 = vld [vmem:[#allocation2 + $0x92] sm:$0xff]
      %v1235 = vld [vmem:[#allocation2 + $0x9a] sm:$0xff]
      %v1236 = vld [vmem:[#allocation2 + $0xaa] sm:$0xff]
      %v1237 = vld [vmem:[#allocation2 + $0xb2] sm:$0xff]
      %v1238 = vld [vmem:[#allocation2 + $0xc2] sm:$0xff]
      %v1239 = vld [vmem:[#allocation2 + $0xca] sm:$0xff]
      %v1240 = vld [vmem:[#allocation2 + $0xda] sm:$0xff]
      %v1241 = vld [vmem:[#allocation2 + $0xe2] sm:$0xff]
      %v1242 = vld [vmem:[#allocation2 + $0xf2] sm:$0xff]
      %v1243 = vld [vmem:[#allocation2 + $0xfa] sm:$0xff]
      %v1244 = vld [vmem:[#allocation2 + $0x10a] sm:$0xff]
      %v1245 = vld [vmem:[#allocation2 + $0x112] sm:$0xff]
      %v1246 = vld [vmem:[#allocation2 + $0x122] sm:$0xff]
      %v1247 = vld [vmem:[#allocation2 + $0x12a] sm:$0xff]
      %v1248 = vld [vmem:[#allocation2 + $0x13a] sm:$0xff]
      %v1249 = vld [vmem:[#allocation2 + $0x142] sm:$0xff]
      %v1250 = vld [vmem:[#allocation2 + $0x152] sm:$0xff]
      %v1251 = vld [vmem:[#allocation2 + $0x15a] sm:$0xff]
      %v1252 = vld [vmem:[#allocation2 + $0x16a] sm:$0xff]
      %v1253 = vld [vmem:[#allocation2 + $0x172] sm:$0xff]
      %v1254 = vpack.c.bf16 %v1222, %v1222
      %v1255 = vpack.c.bf16 %v1223, %v1223
      %v1256 = vpack.c.bf16 %v1224, %v1224
      %v1257 = vpack.c.bf16 %v1225, %v1225
      %v1258 = vpack.c.bf16 %v1226, %v1226
      %v1259 = vpack.c.bf16 %v1227, %v1227
      %v1260 = vpack.c.bf16 %v1228, %v1228
      %v1261 = vpack.c.bf16 %v1229, %v1229
      %v1262 = vpack.c.bf16 %v1230, %v1230
      %v1263 = vpack.c.bf16 %v1231, %v1231
      %v1264 = vpack.c.bf16 %v1232, %v1232
      %v1265 = vpack.c.bf16 %v1233, %v1233
      %v1266 = vpack.c.bf16 %v1234, %v1234
      %v1267 = vpack.c.bf16 %v1235, %v1235
      %v1268 = vpack.c.bf16 %v1236, %v1236
      %v1269 = vpack.c.bf16 %v1237, %v1237
      %v1270 = vpack.c.bf16 %v1238, %v1238
      %v1271 = vpack.c.bf16 %v1239, %v1239
      %v1272 = vpack.c.bf16 %v1240, %v1240
      %v1273 = vpack.c.bf16 %v1241, %v1241
      %v1274 = vpack.c.bf16 %v1242, %v1242
      %v1275 = vpack.c.bf16 %v1243, %v1243
      %v1276 = vpack.c.bf16 %v1244, %v1244
      %v1277 = vpack.c.bf16 %v1245, %v1245
      %v1278 = vpack.c.bf16 %v1246, %v1246
      %v1279 = vpack.c.bf16 %v1247, %v1247
      %v1280 = vpack.c.bf16 %v1248, %v1248
      %v1281 = vpack.c.bf16 %v1249, %v1249
      %v1282 = vpack.c.bf16 %v1250, %v1250
      %v1283 = vpack.c.bf16 %v1251, %v1251
      %v1284 = vpack.c.bf16 %v1252, %v1252
      %v1285 = vpack.c.bf16 %v1253, %v1253
      %s1286 = scalar_lea.vmem %s2, 4
      %v1287 = vld [vmem:[%s1286] sm:$0x3]
      %v1320 = vunpack.c.l.b16 %v1254
      %v1321 = vunpack.c.l.b16 %v1255
      %v1322 = vunpack.c.l.b16 %v1256
      %v1323 = vunpack.c.l.b16 %v1257
      %v1324 = vunpack.c.l.b16 %v1258
      %v1325 = vunpack.c.l.b16 %v1259
      %v1326 = vunpack.c.l.b16 %v1260
      %v1327 = vunpack.c.l.b16 %v1261
      %v1328 = vunpack.c.l.b16 %v1262
      %v1329 = vunpack.c.l.b16 %v1263
      %v1330 = vunpack.c.l.b16 %v1264
      %v1331 = vunpack.c.l.b16 %v1265
      %v1332 = vunpack.c.l.b16 %v1266
      %v1333 = vunpack.c.l.b16 %v1267
      %v1334 = vunpack.c.l.b16 %v1268
      %v1335 = vunpack.c.l.b16 %v1269
      %v1336 = vunpack.c.l.b16 %v1270
      %v1337 = vunpack.c.l.b16 %v1271
      %v1338 = vunpack.c.l.b16 %v1272
      %v1339 = vunpack.c.l.b16 %v1273
      %v1340 = vunpack.c.l.b16 %v1274
      %v1341 = vunpack.c.l.b16 %v1275
      %v1342 = vunpack.c.l.b16 %v1276
      %v1343 = vunpack.c.l.b16 %v1277
      %v1344 = vunpack.c.l.b16 %v1278
      %v1345 = vunpack.c.l.b16 %v1279
      %v1346 = vunpack.c.l.b16 %v1280
      %v1347 = vunpack.c.l.b16 %v1281
      %v1348 = vunpack.c.l.b16 %v1282
      %v1349 = vunpack.c.l.b16 %v1283
      %v1350 = vunpack.c.l.b16 %v1284
      %v1351 = vunpack.c.l.b16 %v1285
      %v1352 = vpack.c.b16 %v1321, %v1320
      %v1353 = vpack.c.b16 %v1323, %v1322
      %v1354 = vpack.c.b16 %v1325, %v1324
      %v1355 = vpack.c.b16 %v1327, %v1326
      %v1356 = vpack.c.b16 %v1329, %v1328
      %v1357 = vpack.c.b16 %v1331, %v1330
      %v1358 = vpack.c.b16 %v1333, %v1332
      %v1359 = vpack.c.b16 %v1335, %v1334
      %v1360 = vpack.c.b16 %v1337, %v1336
      %v1361 = vpack.c.b16 %v1339, %v1338
      %v1362 = vpack.c.b16 %v1341, %v1340
      %v1363 = vpack.c.b16 %v1343, %v1342
      %v1364 = vpack.c.b16 %v1345, %v1344
      %v1365 = vpack.c.b16 %v1347, %v1346
      %v1366 = vpack.c.b16 %v1349, %v1348
      %v1367 = vpack.c.b16 %v1351, %v1350
      %v1369 = vsel %vm539, %v1352, 0
      %v1372 = vsel %vm539, %v1353, 0
      %v1375 = vsel %vm539, %v1354, 0
      %v1378 = vsel %vm539, %v1355, 0
      %v1381 = vsel %vm539, %v1356, 0
      %v1384 = vsel %vm539, %v1357, 0
      %v1387 = vsel %vm539, %v1358, 0
      %v1390 = vsel %vm539, %v1359, 0
      %v1393 = vsel %vm539, %v1360, 0
      %v1396 = vsel %vm539, %v1361, 0
      %v1399 = vsel %vm539, %v1362, 0
      %v1402 = vsel %vm539, %v1363, 0
      %v1405 = vsel %vm539, %v1364, 0
      %v1408 = vsel %vm539, %v1365, 0
      %v1411 = vsel %vm539, %v1366, 0
      %v1414 = vsel %vm539, %v1367, 0
      %v1417 = vsel %vm909, %v1287, 0
      %1419 = vmatpush.bf16.msra.mxu0 0
      %1420 = vmatpush.bf16.msra.mxu0 0
      %1421 = vmatpush.bf16.msra.mxu0 0
      %1422 = vmatpush.bf16.msra.mxu0 0
      %1423 = vmatpush.bf16.msra.mxu0 0
      %1424 = vmatpush.bf16.msra.mxu0 0
      %1425 = vmatpush.bf16.msra.mxu0 0
      %1426 = vmatpush.bf16.msra.mxu0 %v1417
      %1427 = vmatmul.bf16.gmra.mxu0 %v1369
      %v1428 = vpop.f32.mrf.mxu0
      %v1429 = vadd.f32 0.0, %v1428
      %v1430 = vpop.f32.mrf.mxu0
      %v1431 = vadd.f32 0.0, %v1430
      %1432 = vmatmul.bf16.gmra.mxu0 %v1372
      %v1433 = vpop.f32.mrf.mxu0
      %v1434 = vadd.f32 0.0, %v1433
      %v1435 = vpop.f32.mrf.mxu0
      %v1436 = vadd.f32 0.0, %v1435
      %1437 = vmatmul.bf16.gmra.mxu0 %v1375
      %v1438 = vpop.f32.mrf.mxu0
      %v1439 = vadd.f32 0.0, %v1438
      %v1440 = vpop.f32.mrf.mxu0
      %v1441 = vadd.f32 0.0, %v1440
      %1442 = vmatmul.bf16.gmra.mxu0 %v1378
      %v1443 = vpop.f32.mrf.mxu0
      %v1444 = vadd.f32 0.0, %v1443
      %v1445 = vpop.f32.mrf.mxu0
      %v1446 = vadd.f32 0.0, %v1445
      %1447 = vmatmul.bf16.gmra.mxu0 %v1381
      %v1448 = vpop.f32.mrf.mxu0
      %v1449 = vadd.f32 0.0, %v1448
      %v1450 = vpop.f32.mrf.mxu0
      %v1451 = vadd.f32 0.0, %v1450
      %1452 = vmatmul.bf16.gmra.mxu0 %v1384
      %v1453 = vpop.f32.mrf.mxu0
      %v1454 = vadd.f32 0.0, %v1453
      %v1455 = vpop.f32.mrf.mxu0
      %v1456 = vadd.f32 0.0, %v1455
      %1457 = vmatmul.bf16.gmra.mxu0 %v1387
      %v1458 = vpop.f32.mrf.mxu0
      %v1459 = vadd.f32 0.0, %v1458
      %v1460 = vpop.f32.mrf.mxu0
      %v1461 = vadd.f32 0.0, %v1460
      %1462 = vmatmul.bf16.gmra.mxu0 %v1390
      %v1463 = vpop.f32.mrf.mxu0
      %v1464 = vadd.f32 0.0, %v1463
      %v1465 = vpop.f32.mrf.mxu0
      %v1466 = vadd.f32 0.0, %v1465
      %1467 = vmatmul.bf16.gmra.mxu0 %v1393
      %v1468 = vpop.f32.mrf.mxu0
      %v1469 = vadd.f32 0.0, %v1468
      %v1470 = vpop.f32.mrf.mxu0
      %v1471 = vadd.f32 0.0, %v1470
      %1472 = vmatmul.bf16.gmra.mxu0 %v1396
      %v1473 = vpop.f32.mrf.mxu0
      %v1474 = vadd.f32 0.0, %v1473
      %v1475 = vpop.f32.mrf.mxu0
      %v1476 = vadd.f32 0.0, %v1475
      %1477 = vmatmul.bf16.gmra.mxu0 %v1399
      %v1478 = vpop.f32.mrf.mxu0
      %v1479 = vadd.f32 0.0, %v1478
      %v1480 = vpop.f32.mrf.mxu0
      %v1481 = vadd.f32 0.0, %v1480
      %1482 = vmatmul.bf16.gmra.mxu0 %v1402
      %v1483 = vpop.f32.mrf.mxu0
      %v1484 = vadd.f32 0.0, %v1483
      %v1485 = vpop.f32.mrf.mxu0
      %v1486 = vadd.f32 0.0, %v1485
      %1487 = vmatmul.bf16.gmra.mxu0 %v1405
      %v1488 = vpop.f32.mrf.mxu0
      %v1489 = vadd.f32 0.0, %v1488
      %v1490 = vpop.f32.mrf.mxu0
      %v1491 = vadd.f32 0.0, %v1490
      %1492 = vmatmul.bf16.gmra.mxu0 %v1408
      %v1493 = vpop.f32.mrf.mxu0
      %v1494 = vadd.f32 0.0, %v1493
      %v1495 = vpop.f32.mrf.mxu0
      %v1496 = vadd.f32 0.0, %v1495
      %1497 = vmatmul.bf16.gmra.mxu0 %v1411
      %v1498 = vpop.f32.mrf.mxu0
      %v1499 = vadd.f32 0.0, %v1498
      %v1500 = vpop.f32.mrf.mxu0
      %v1501 = vadd.f32 0.0, %v1500
      %1502 = vmatmul.bf16.gmra.mxu0 %v1414
      %v1503 = vpop.f32.mrf.mxu0
      %v1504 = vadd.f32 0.0, %v1503
      %v1505 = vpop.f32.mrf.mxu0
      %v1506 = vadd.f32 0.0, %v1505
      %1507 = vdwg.mxu0
      %v1508 = vadd.f32 %v1143, %v1429
      %v1509 = vadd.f32 %v1145, %v1431
      %v1510 = vadd.f32 %v1148, %v1434
      %v1511 = vadd.f32 %v1150, %v1436
      %v1512 = vadd.f32 %v1153, %v1439
      %v1513 = vadd.f32 %v1155, %v1441
      %v1514 = vadd.f32 %v1158, %v1444
      %v1515 = vadd.f32 %v1160, %v1446
      %v1516 = vadd.f32 %v1163, %v1449
      %v1517 = vadd.f32 %v1165, %v1451
      %v1518 = vadd.f32 %v1168, %v1454
      %v1519 = vadd.f32 %v1170, %v1456
      %v1520 = vadd.f32 %v1173, %v1459
      %v1521 = vadd.f32 %v1175, %v1461
      %v1522 = vadd.f32 %v1178, %v1464
      %v1523 = vadd.f32 %v1180, %v1466
      %v1524 = vadd.f32 %v1183, %v1469
      %v1525 = vadd.f32 %v1185, %v1471
      %v1526 = vadd.f32 %v1188, %v1474
      %v1527 = vadd.f32 %v1190, %v1476
      %v1528 = vadd.f32 %v1193, %v1479
      %v1529 = vadd.f32 %v1195, %v1481
      %v1530 = vadd.f32 %v1198, %v1484
      %v1531 = vadd.f32 %v1200, %v1486
      %v1532 = vadd.f32 %v1203, %v1489
      %v1533 = vadd.f32 %v1205, %v1491
      %v1534 = vadd.f32 %v1208, %v1494
      %v1535 = vadd.f32 %v1210, %v1496
      %v1536 = vadd.f32 %v1213, %v1499
      %v1537 = vadd.f32 %v1215, %v1501
      %v1538 = vadd.f32 %v1218, %v1504
      %v1539 = vadd.f32 %v1220, %v1506
      %v1540 = vld [vmem:[%s538] sm:$0xff]
      %v1541 = vld [vmem:[%s538 + $0x8] sm:$0xff]
      %v1542 = vld [vmem:[%s538 + $0x18] sm:$0xff]
      %v1543 = vld [vmem:[%s538 + $0x20] sm:$0xff]
      %v1544 = vld [vmem:[%s538 + $0x30] sm:$0xff]
      %v1545 = vld [vmem:[%s538 + $0x38] sm:$0xff]
      %v1546 = vld [vmem:[%s538 + $0x48] sm:$0xff]
      %v1547 = vld [vmem:[%s538 + $0x50] sm:$0xff]
      %v1548 = vld [vmem:[%s538 + $0x60] sm:$0xff]
      %v1549 = vld [vmem:[%s538 + $0x68] sm:$0xff]
      %v1550 = vld [vmem:[%s538 + $0x78] sm:$0xff]
      %v1551 = vld [vmem:[%s538 + $0x80] sm:$0xff]
      %v1552 = vld [vmem:[%s538 + $0x90] sm:$0xff]
      %v1553 = vld [vmem:[%s538 + $0x98] sm:$0xff]
      %v1554 = vld [vmem:[%s538 + $0xa8] sm:$0xff]
      %v1555 = vld [vmem:[%s538 + $0xb0] sm:$0xff]
      %v1556 = vld [vmem:[%s538 + $0xc0] sm:$0xff]
      %v1557 = vld [vmem:[%s538 + $0xc8] sm:$0xff]
      %v1558 = vld [vmem:[%s538 + $0xd8] sm:$0xff]
      %v1559 = vld [vmem:[%s538 + $0xe0] sm:$0xff]
      %v1560 = vld [vmem:[%s538 + $0xf0] sm:$0xff]
      %v1561 = vld [vmem:[%s538 + $0xf8] sm:$0xff]
      %v1562 = vld [vmem:[%s538 + $0x108] sm:$0xff]
      %v1563 = vld [vmem:[%s538 + $0x110] sm:$0xff]
      %v1564 = vld [vmem:[%s538 + $0x120] sm:$0xff]
      %v1565 = vld [vmem:[%s538 + $0x128] sm:$0xff]
      %v1566 = vld [vmem:[%s538 + $0x138] sm:$0xff]
      %v1567 = vld [vmem:[%s538 + $0x140] sm:$0xff]
      %v1568 = vld [vmem:[%s538 + $0x150] sm:$0xff]
      %v1569 = vld [vmem:[%s538 + $0x158] sm:$0xff]
      %v1570 = vld [vmem:[%s538 + $0x168] sm:$0xff]
      %v1571 = vld [vmem:[%s538 + $0x170] sm:$0xff]
      %v1572 = vpack.c.bf16 %v1540, %v1540
      %v1573 = vpack.c.bf16 %v1541, %v1541
      %v1574 = vpack.c.bf16 %v1542, %v1542
      %v1575 = vpack.c.bf16 %v1543, %v1543
      %v1576 = vpack.c.bf16 %v1544, %v1544
      %v1577 = vpack.c.bf16 %v1545, %v1545
      %v1578 = vpack.c.bf16 %v1546, %v1546
      %v1579 = vpack.c.bf16 %v1547, %v1547
      %v1580 = vpack.c.bf16 %v1548, %v1548
      %v1581 = vpack.c.bf16 %v1549, %v1549
      %v1582 = vpack.c.bf16 %v1550, %v1550
      %v1583 = vpack.c.bf16 %v1551, %v1551
      %v1584 = vpack.c.bf16 %v1552, %v1552
      %v1585 = vpack.c.bf16 %v1553, %v1553
      %v1586 = vpack.c.bf16 %v1554, %v1554
      %v1587 = vpack.c.bf16 %v1555, %v1555
      %v1588 = vpack.c.bf16 %v1556, %v1556
      %v1589 = vpack.c.bf16 %v1557, %v1557
      %v1590 = vpack.c.bf16 %v1558, %v1558
      %v1591 = vpack.c.bf16 %v1559, %v1559
      %v1592 = vpack.c.bf16 %v1560, %v1560
      %v1593 = vpack.c.bf16 %v1561, %v1561
      %v1594 = vpack.c.bf16 %v1562, %v1562
      %v1595 = vpack.c.bf16 %v1563, %v1563
      %v1596 = vpack.c.bf16 %v1564, %v1564
      %v1597 = vpack.c.bf16 %v1565, %v1565
      %v1598 = vpack.c.bf16 %v1566, %v1566
      %v1599 = vpack.c.bf16 %v1567, %v1567
      %v1600 = vpack.c.bf16 %v1568, %v1568
      %v1601 = vpack.c.bf16 %v1569, %v1569
      %v1602 = vpack.c.bf16 %v1570, %v1570
      %v1603 = vpack.c.bf16 %v1571, %v1571
      %s1604 = scalar_lea.vmem %s2, 6
      %v1605 = vld [vmem:[%s1604] sm:$0x3]
      %v1638 = vunpack.c.l.b16 %v1572
      %v1639 = vunpack.c.l.b16 %v1573
      %v1640 = vunpack.c.l.b16 %v1574
      %v1641 = vunpack.c.l.b16 %v1575
      %v1642 = vunpack.c.l.b16 %v1576
      %v1643 = vunpack.c.l.b16 %v1577
      %v1644 = vunpack.c.l.b16 %v1578
      %v1645 = vunpack.c.l.b16 %v1579
      %v1646 = vunpack.c.l.b16 %v1580
      %v1647 = vunpack.c.l.b16 %v1581
      %v1648 = vunpack.c.l.b16 %v1582
      %v1649 = vunpack.c.l.b16 %v1583
      %v1650 = vunpack.c.l.b16 %v1584
      %v1651 = vunpack.c.l.b16 %v1585
      %v1652 = vunpack.c.l.b16 %v1586
      %v1653 = vunpack.c.l.b16 %v1587
      %v1654 = vunpack.c.l.b16 %v1588
      %v1655 = vunpack.c.l.b16 %v1589
      %v1656 = vunpack.c.l.b16 %v1590
      %v1657 = vunpack.c.l.b16 %v1591
      %v1658 = vunpack.c.l.b16 %v1592
      %v1659 = vunpack.c.l.b16 %v1593
      %v1660 = vunpack.c.l.b16 %v1594
      %v1661 = vunpack.c.l.b16 %v1595
      %v1662 = vunpack.c.l.b16 %v1596
      %v1663 = vunpack.c.l.b16 %v1597
      %v1664 = vunpack.c.l.b16 %v1598
      %v1665 = vunpack.c.l.b16 %v1599
      %v1666 = vunpack.c.l.b16 %v1600
      %v1667 = vunpack.c.l.b16 %v1601
      %v1668 = vunpack.c.l.b16 %v1602
      %v1669 = vunpack.c.l.b16 %v1603
      %v1670 = vpack.c.b16 %v1639, %v1638
      %v1671 = vpack.c.b16 %v1641, %v1640
      %v1672 = vpack.c.b16 %v1643, %v1642
      %v1673 = vpack.c.b16 %v1645, %v1644
      %v1674 = vpack.c.b16 %v1647, %v1646
      %v1675 = vpack.c.b16 %v1649, %v1648
      %v1676 = vpack.c.b16 %v1651, %v1650
      %v1677 = vpack.c.b16 %v1653, %v1652
      %v1678 = vpack.c.b16 %v1655, %v1654
      %v1679 = vpack.c.b16 %v1657, %v1656
      %v1680 = vpack.c.b16 %v1659, %v1658
      %v1681 = vpack.c.b16 %v1661, %v1660
      %v1682 = vpack.c.b16 %v1663, %v1662
      %v1683 = vpack.c.b16 %v1665, %v1664
      %v1684 = vpack.c.b16 %v1667, %v1666
      %v1685 = vpack.c.b16 %v1669, %v1668
      %v1687 = vsel %vm539, %v1670, 0
      %v1690 = vsel %vm539, %v1671, 0
      %v1693 = vsel %vm539, %v1672, 0
      %v1696 = vsel %vm539, %v1673, 0
      %v1699 = vsel %vm539, %v1674, 0
      %v1702 = vsel %vm539, %v1675, 0
      %v1705 = vsel %vm539, %v1676, 0
      %v1708 = vsel %vm539, %v1677, 0
      %v1711 = vsel %vm539, %v1678, 0
      %v1714 = vsel %vm539, %v1679, 0
      %v1717 = vsel %vm539, %v1680, 0
      %v1720 = vsel %vm539, %v1681, 0
      %v1723 = vsel %vm539, %v1682, 0
      %v1726 = vsel %vm539, %v1683, 0
      %v1729 = vsel %vm539, %v1684, 0
      %v1732 = vsel %vm539, %v1685, 0
      %v1735 = vsel %vm909, %v1605, 0
      %1737 = vmatpush.bf16.msra.mxu0 0
      %1738 = vmatpush.bf16.msra.mxu0 0
      %1739 = vmatpush.bf16.msra.mxu0 0
      %1740 = vmatpush.bf16.msra.mxu0 0
      %1741 = vmatpush.bf16.msra.mxu0 0
      %1742 = vmatpush.bf16.msra.mxu0 0
      %1743 = vmatpush.bf16.msra.mxu0 0
      %1744 = vmatpush.bf16.msra.mxu0 %v1735
      %1745 = vmatmul.bf16.gmra.mxu0 %v1687
      %v1746 = vpop.f32.mrf.mxu0
      %v1747 = vadd.f32 0.0, %v1746
      %v1748 = vpop.f32.mrf.mxu0
      %v1749 = vadd.f32 0.0, %v1748
      %1750 = vmatmul.bf16.gmra.mxu0 %v1690
      %v1751 = vpop.f32.mrf.mxu0
      %v1752 = vadd.f32 0.0, %v1751
      %v1753 = vpop.f32.mrf.mxu0
      %v1754 = vadd.f32 0.0, %v1753
      %1755 = vmatmul.bf16.gmra.mxu0 %v1693
      %v1756 = vpop.f32.mrf.mxu0
      %v1757 = vadd.f32 0.0, %v1756
      %v1758 = vpop.f32.mrf.mxu0
      %v1759 = vadd.f32 0.0, %v1758
      %1760 = vmatmul.bf16.gmra.mxu0 %v1696
      %v1761 = vpop.f32.mrf.mxu0
      %v1762 = vadd.f32 0.0, %v1761
      %v1763 = vpop.f32.mrf.mxu0
      %v1764 = vadd.f32 0.0, %v1763
      %1765 = vmatmul.bf16.gmra.mxu0 %v1699
      %v1766 = vpop.f32.mrf.mxu0
      %v1767 = vadd.f32 0.0, %v1766
      %v1768 = vpop.f32.mrf.mxu0
      %v1769 = vadd.f32 0.0, %v1768
      %1770 = vmatmul.bf16.gmra.mxu0 %v1702
      %v1771 = vpop.f32.mrf.mxu0
      %v1772 = vadd.f32 0.0, %v1771
      %v1773 = vpop.f32.mrf.mxu0
      %v1774 = vadd.f32 0.0, %v1773
      %1775 = vmatmul.bf16.gmra.mxu0 %v1705
      %v1776 = vpop.f32.mrf.mxu0
      %v1777 = vadd.f32 0.0, %v1776
      %v1778 = vpop.f32.mrf.mxu0
      %v1779 = vadd.f32 0.0, %v1778
      %1780 = vmatmul.bf16.gmra.mxu0 %v1708
      %v1781 = vpop.f32.mrf.mxu0
      %v1782 = vadd.f32 0.0, %v1781
      %v1783 = vpop.f32.mrf.mxu0
      %v1784 = vadd.f32 0.0, %v1783
      %1785 = vmatmul.bf16.gmra.mxu0 %v1711
      %v1786 = vpop.f32.mrf.mxu0
      %v1787 = vadd.f32 0.0, %v1786
      %v1788 = vpop.f32.mrf.mxu0
      %v1789 = vadd.f32 0.0, %v1788
      %1790 = vmatmul.bf16.gmra.mxu0 %v1714
      %v1791 = vpop.f32.mrf.mxu0
      %v1792 = vadd.f32 0.0, %v1791
      %v1793 = vpop.f32.mrf.mxu0
      %v1794 = vadd.f32 0.0, %v1793
      %1795 = vmatmul.bf16.gmra.mxu0 %v1717
      %v1796 = vpop.f32.mrf.mxu0
      %v1797 = vadd.f32 0.0, %v1796
      %v1798 = vpop.f32.mrf.mxu0
      %v1799 = vadd.f32 0.0, %v1798
      %1800 = vmatmul.bf16.gmra.mxu0 %v1720
      %v1801 = vpop.f32.mrf.mxu0
      %v1802 = vadd.f32 0.0, %v1801
      %v1803 = vpop.f32.mrf.mxu0
      %v1804 = vadd.f32 0.0, %v1803
      %1805 = vmatmul.bf16.gmra.mxu0 %v1723
      %v1806 = vpop.f32.mrf.mxu0
      %v1807 = vadd.f32 0.0, %v1806
      %v1808 = vpop.f32.mrf.mxu0
      %v1809 = vadd.f32 0.0, %v1808
      %1810 = vmatmul.bf16.gmra.mxu0 %v1726
      %v1811 = vpop.f32.mrf.mxu0
      %v1812 = vadd.f32 0.0, %v1811
      %v1813 = vpop.f32.mrf.mxu0
      %v1814 = vadd.f32 0.0, %v1813
      %1815 = vmatmul.bf16.gmra.mxu0 %v1729
      %v1816 = vpop.f32.mrf.mxu0
      %v1817 = vadd.f32 0.0, %v1816
      %v1818 = vpop.f32.mrf.mxu0
      %v1819 = vadd.f32 0.0, %v1818
      %1820 = vmatmul.bf16.gmra.mxu0 %v1732
      %v1821 = vpop.f32.mrf.mxu0
      %v1822 = vadd.f32 0.0, %v1821
      %v1823 = vpop.f32.mrf.mxu0
      %v1824 = vadd.f32 0.0, %v1823
      %1825 = vdwg.mxu0
      %v1826 = vadd.f32 %v1508, %v1747
      %v1827 = vadd.f32 %v1509, %v1749
      %v1828 = vadd.f32 %v1510, %v1752
      %v1829 = vadd.f32 %v1511, %v1754
      %v1830 = vadd.f32 %v1512, %v1757
      %v1831 = vadd.f32 %v1513, %v1759
      %v1832 = vadd.f32 %v1514, %v1762
      %v1833 = vadd.f32 %v1515, %v1764
      %v1834 = vadd.f32 %v1516, %v1767
      %v1835 = vadd.f32 %v1517, %v1769
      %v1836 = vadd.f32 %v1518, %v1772
      %v1837 = vadd.f32 %v1519, %v1774
      %v1838 = vadd.f32 %v1520, %v1777
      %v1839 = vadd.f32 %v1521, %v1779
      %v1840 = vadd.f32 %v1522, %v1782
      %v1841 = vadd.f32 %v1523, %v1784
      %v1842 = vadd.f32 %v1524, %v1787
      %v1843 = vadd.f32 %v1525, %v1789
      %v1844 = vadd.f32 %v1526, %v1792
      %v1845 = vadd.f32 %v1527, %v1794
      %v1846 = vadd.f32 %v1528, %v1797
      %v1847 = vadd.f32 %v1529, %v1799
      %v1848 = vadd.f32 %v1530, %v1802
      %v1849 = vadd.f32 %v1531, %v1804
      %v1850 = vadd.f32 %v1532, %v1807
      %v1851 = vadd.f32 %v1533, %v1809
      %v1852 = vadd.f32 %v1534, %v1812
      %v1853 = vadd.f32 %v1535, %v1814
      %v1854 = vadd.f32 %v1536, %v1817
      %v1855 = vadd.f32 %v1537, %v1819
      %v1856 = vadd.f32 %v1538, %v1822
      %v1857 = vadd.f32 %v1539, %v1824
      %v1858 = vld [vmem:[%s538 + $0x1] sm:$0xff]
      %v1859 = vld [vmem:[%s538 + $0x9] sm:$0xff]
      %v1860 = vld [vmem:[%s538 + $0x19] sm:$0xff]
      %v1861 = vld [vmem:[%s538 + $0x21] sm:$0xff]
      %v1862 = vld [vmem:[%s538 + $0x31] sm:$0xff]
      %v1863 = vld [vmem:[%s538 + $0x39] sm:$0xff]
      %v1864 = vld [vmem:[%s538 + $0x49] sm:$0xff]
      %v1865 = vld [vmem:[%s538 + $0x51] sm:$0xff]
      %v1866 = vld [vmem:[%s538 + $0x61] sm:$0xff]
      %v1867 = vld [vmem:[%s538 + $0x69] sm:$0xff]
      %v1868 = vld [vmem:[%s538 + $0x79] sm:$0xff]
      %v1869 = vld [vmem:[%s538 + $0x81] sm:$0xff]
      %v1870 = vld [vmem:[%s538 + $0x91] sm:$0xff]
      %v1871 = vld [vmem:[%s538 + $0x99] sm:$0xff]
      %v1872 = vld [vmem:[%s538 + $0xa9] sm:$0xff]
      %v1873 = vld [vmem:[%s538 + $0xb1] sm:$0xff]
      %v1874 = vld [vmem:[%s538 + $0xc1] sm:$0xff]
      %v1875 = vld [vmem:[%s538 + $0xc9] sm:$0xff]
      %v1876 = vld [vmem:[%s538 + $0xd9] sm:$0xff]
      %v1877 = vld [vmem:[%s538 + $0xe1] sm:$0xff]
      %v1878 = vld [vmem:[%s538 + $0xf1] sm:$0xff]
      %v1879 = vld [vmem:[%s538 + $0xf9] sm:$0xff]
      %v1880 = vld [vmem:[%s538 + $0x109] sm:$0xff]
      %v1881 = vld [vmem:[%s538 + $0x111] sm:$0xff]
      %v1882 = vld [vmem:[%s538 + $0x121] sm:$0xff]
      %v1883 = vld [vmem:[%s538 + $0x129] sm:$0xff]
      %v1884 = vld [vmem:[%s538 + $0x139] sm:$0xff]
      %v1885 = vld [vmem:[%s538 + $0x141] sm:$0xff]
      %v1886 = vld [vmem:[%s538 + $0x151] sm:$0xff]
      %v1887 = vld [vmem:[%s538 + $0x159] sm:$0xff]
      %v1888 = vld [vmem:[%s538 + $0x169] sm:$0xff]
      %v1889 = vld [vmem:[%s538 + $0x171] sm:$0xff]
      %v1890 = vpack.c.bf16 %v1858, %v1858
      %v1891 = vpack.c.bf16 %v1859, %v1859
      %v1892 = vpack.c.bf16 %v1860, %v1860
      %v1893 = vpack.c.bf16 %v1861, %v1861
      %v1894 = vpack.c.bf16 %v1862, %v1862
      %v1895 = vpack.c.bf16 %v1863, %v1863
      %v1896 = vpack.c.bf16 %v1864, %v1864
      %v1897 = vpack.c.bf16 %v1865, %v1865
      %v1898 = vpack.c.bf16 %v1866, %v1866
      %v1899 = vpack.c.bf16 %v1867, %v1867
      %v1900 = vpack.c.bf16 %v1868, %v1868
      %v1901 = vpack.c.bf16 %v1869, %v1869
      %v1902 = vpack.c.bf16 %v1870, %v1870
      %v1903 = vpack.c.bf16 %v1871, %v1871
      %v1904 = vpack.c.bf16 %v1872, %v1872
      %v1905 = vpack.c.bf16 %v1873, %v1873
      %v1906 = vpack.c.bf16 %v1874, %v1874
      %v1907 = vpack.c.bf16 %v1875, %v1875
      %v1908 = vpack.c.bf16 %v1876, %v1876
      %v1909 = vpack.c.bf16 %v1877, %v1877
      %v1910 = vpack.c.bf16 %v1878, %v1878
      %v1911 = vpack.c.bf16 %v1879, %v1879
      %v1912 = vpack.c.bf16 %v1880, %v1880
      %v1913 = vpack.c.bf16 %v1881, %v1881
      %v1914 = vpack.c.bf16 %v1882, %v1882
      %v1915 = vpack.c.bf16 %v1883, %v1883
      %v1916 = vpack.c.bf16 %v1884, %v1884
      %v1917 = vpack.c.bf16 %v1885, %v1885
      %v1918 = vpack.c.bf16 %v1886, %v1886
      %v1919 = vpack.c.bf16 %v1887, %v1887
      %v1920 = vpack.c.bf16 %v1888, %v1888
      %v1921 = vpack.c.bf16 %v1889, %v1889
      %s1922 = scalar_lea.vmem %s2, 8
      %v1923 = vld [vmem:[%s1922] sm:$0x3]
      %v1956 = vunpack.c.l.b16 %v1890
      %v1957 = vunpack.c.l.b16 %v1891
      %v1958 = vunpack.c.l.b16 %v1892
      %v1959 = vunpack.c.l.b16 %v1893
      %v1960 = vunpack.c.l.b16 %v1894
      %v1961 = vunpack.c.l.b16 %v1895
      %v1962 = vunpack.c.l.b16 %v1896
      %v1963 = vunpack.c.l.b16 %v1897
      %v1964 = vunpack.c.l.b16 %v1898
      %v1965 = vunpack.c.l.b16 %v1899
      %v1966 = vunpack.c.l.b16 %v1900
      %v1967 = vunpack.c.l.b16 %v1901
      %v1968 = vunpack.c.l.b16 %v1902
      %v1969 = vunpack.c.l.b16 %v1903
      %v1970 = vunpack.c.l.b16 %v1904
      %v1971 = vunpack.c.l.b16 %v1905
      %v1972 = vunpack.c.l.b16 %v1906
      %v1973 = vunpack.c.l.b16 %v1907
      %v1974 = vunpack.c.l.b16 %v1908
      %v1975 = vunpack.c.l.b16 %v1909
      %v1976 = vunpack.c.l.b16 %v1910
      %v1977 = vunpack.c.l.b16 %v1911
      %v1978 = vunpack.c.l.b16 %v1912
      %v1979 = vunpack.c.l.b16 %v1913
      %v1980 = vunpack.c.l.b16 %v1914
      %v1981 = vunpack.c.l.b16 %v1915
      %v1982 = vunpack.c.l.b16 %v1916
      %v1983 = vunpack.c.l.b16 %v1917
      %v1984 = vunpack.c.l.b16 %v1918
      %v1985 = vunpack.c.l.b16 %v1919
      %v1986 = vunpack.c.l.b16 %v1920
      %v1987 = vunpack.c.l.b16 %v1921
      %v1988 = vpack.c.b16 %v1957, %v1956
      %v1989 = vpack.c.b16 %v1959, %v1958
      %v1990 = vpack.c.b16 %v1961, %v1960
      %v1991 = vpack.c.b16 %v1963, %v1962
      %v1992 = vpack.c.b16 %v1965, %v1964
      %v1993 = vpack.c.b16 %v1967, %v1966
      %v1994 = vpack.c.b16 %v1969, %v1968
      %v1995 = vpack.c.b16 %v1971, %v1970
      %v1996 = vpack.c.b16 %v1973, %v1972
      %v1997 = vpack.c.b16 %v1975, %v1974
      %v1998 = vpack.c.b16 %v1977, %v1976
      %v1999 = vpack.c.b16 %v1979, %v1978
      %v2000 = vpack.c.b16 %v1981, %v1980
      %v2001 = vpack.c.b16 %v1983, %v1982
      %v2002 = vpack.c.b16 %v1985, %v1984
      %v2003 = vpack.c.b16 %v1987, %v1986
      %v2005 = vsel %vm539, %v1988, 0
      %v2008 = vsel %vm539, %v1989, 0
      %v2011 = vsel %vm539, %v1990, 0
      %v2014 = vsel %vm539, %v1991, 0
      %v2017 = vsel %vm539, %v1992, 0
      %v2020 = vsel %vm539, %v1993, 0
      %v2023 = vsel %vm539, %v1994, 0
      %v2026 = vsel %vm539, %v1995, 0
      %v2029 = vsel %vm539, %v1996, 0
      %v2032 = vsel %vm539, %v1997, 0
      %v2035 = vsel %vm539, %v1998, 0
      %v2038 = vsel %vm539, %v1999, 0
      %v2041 = vsel %vm539, %v2000, 0
      %v2044 = vsel %vm539, %v2001, 0
      %v2047 = vsel %vm539, %v2002, 0
      %v2050 = vsel %vm539, %v2003, 0
      %v2053 = vsel %vm909, %v1923, 0
      %2055 = vmatpush.bf16.msra.mxu0 0
      %2056 = vmatpush.bf16.msra.mxu0 0
      %2057 = vmatpush.bf16.msra.mxu0 0
      %2058 = vmatpush.bf16.msra.mxu0 0
      %2059 = vmatpush.bf16.msra.mxu0 0
      %2060 = vmatpush.bf16.msra.mxu0 0
      %2061 = vmatpush.bf16.msra.mxu0 0
      %2062 = vmatpush.bf16.msra.mxu0 %v2053
      %2063 = vmatmul.bf16.gmra.mxu0 %v2005
      %v2064 = vpop.f32.mrf.mxu0
      %v2065 = vadd.f32 0.0, %v2064
      %v2066 = vpop.f32.mrf.mxu0
      %v2067 = vadd.f32 0.0, %v2066
      %2068 = vmatmul.bf16.gmra.mxu0 %v2008
      %v2069 = vpop.f32.mrf.mxu0
      %v2070 = vadd.f32 0.0, %v2069
      %v2071 = vpop.f32.mrf.mxu0
      %v2072 = vadd.f32 0.0, %v2071
      %2073 = vmatmul.bf16.gmra.mxu0 %v2011
      %v2074 = vpop.f32.mrf.mxu0
      %v2075 = vadd.f32 0.0, %v2074
      %v2076 = vpop.f32.mrf.mxu0
      %v2077 = vadd.f32 0.0, %v2076
      %2078 = vmatmul.bf16.gmra.mxu0 %v2014
      %v2079 = vpop.f32.mrf.mxu0
      %v2080 = vadd.f32 0.0, %v2079
      %v2081 = vpop.f32.mrf.mxu0
      %v2082 = vadd.f32 0.0, %v2081
      %2083 = vmatmul.bf16.gmra.mxu0 %v2017
      %v2084 = vpop.f32.mrf.mxu0
      %v2085 = vadd.f32 0.0, %v2084
      %v2086 = vpop.f32.mrf.mxu0
      %v2087 = vadd.f32 0.0, %v2086
      %2088 = vmatmul.bf16.gmra.mxu0 %v2020
      %v2089 = vpop.f32.mrf.mxu0
      %v2090 = vadd.f32 0.0, %v2089
      %v2091 = vpop.f32.mrf.mxu0
      %v2092 = vadd.f32 0.0, %v2091
      %2093 = vmatmul.bf16.gmra.mxu0 %v2023
      %v2094 = vpop.f32.mrf.mxu0
      %v2095 = vadd.f32 0.0, %v2094
      %v2096 = vpop.f32.mrf.mxu0
      %v2097 = vadd.f32 0.0, %v2096
      %2098 = vmatmul.bf16.gmra.mxu0 %v2026
      %v2099 = vpop.f32.mrf.mxu0
      %v2100 = vadd.f32 0.0, %v2099
      %v2101 = vpop.f32.mrf.mxu0
      %v2102 = vadd.f32 0.0, %v2101
      %2103 = vmatmul.bf16.gmra.mxu0 %v2029
      %v2104 = vpop.f32.mrf.mxu0
      %v2105 = vadd.f32 0.0, %v2104
      %v2106 = vpop.f32.mrf.mxu0
      %v2107 = vadd.f32 0.0, %v2106
      %2108 = vmatmul.bf16.gmra.mxu0 %v2032
      %v2109 = vpop.f32.mrf.mxu0
      %v2110 = vadd.f32 0.0, %v2109
      %v2111 = vpop.f32.mrf.mxu0
      %v2112 = vadd.f32 0.0, %v2111
      %2113 = vmatmul.bf16.gmra.mxu0 %v2035
      %v2114 = vpop.f32.mrf.mxu0
      %v2115 = vadd.f32 0.0, %v2114
      %v2116 = vpop.f32.mrf.mxu0
      %v2117 = vadd.f32 0.0, %v2116
      %2118 = vmatmul.bf16.gmra.mxu0 %v2038
      %v2119 = vpop.f32.mrf.mxu0
      %v2120 = vadd.f32 0.0, %v2119
      %v2121 = vpop.f32.mrf.mxu0
      %v2122 = vadd.f32 0.0, %v2121
      %2123 = vmatmul.bf16.gmra.mxu0 %v2041
      %v2124 = vpop.f32.mrf.mxu0
      %v2125 = vadd.f32 0.0, %v2124
      %v2126 = vpop.f32.mrf.mxu0
      %v2127 = vadd.f32 0.0, %v2126
      %2128 = vmatmul.bf16.gmra.mxu0 %v2044
      %v2129 = vpop.f32.mrf.mxu0
      %v2130 = vadd.f32 0.0, %v2129
      %v2131 = vpop.f32.mrf.mxu0
      %v2132 = vadd.f32 0.0, %v2131
      %2133 = vmatmul.bf16.gmra.mxu0 %v2047
      %v2134 = vpop.f32.mrf.mxu0
      %v2135 = vadd.f32 0.0, %v2134
      %v2136 = vpop.f32.mrf.mxu0
      %v2137 = vadd.f32 0.0, %v2136
      %2138 = vmatmul.bf16.gmra.mxu0 %v2050
      %v2139 = vpop.f32.mrf.mxu0
      %v2140 = vadd.f32 0.0, %v2139
      %v2141 = vpop.f32.mrf.mxu0
      %v2142 = vadd.f32 0.0, %v2141
      %2143 = vdwg.mxu0
      %v2144 = vadd.f32 %v1826, %v2065
      %v2145 = vadd.f32 %v1827, %v2067
      %v2146 = vadd.f32 %v1828, %v2070
      %v2147 = vadd.f32 %v1829, %v2072
      %v2148 = vadd.f32 %v1830, %v2075
      %v2149 = vadd.f32 %v1831, %v2077
      %v2150 = vadd.f32 %v1832, %v2080
      %v2151 = vadd.f32 %v1833, %v2082
      %v2152 = vadd.f32 %v1834, %v2085
      %v2153 = vadd.f32 %v1835, %v2087
      %v2154 = vadd.f32 %v1836, %v2090
      %v2155 = vadd.f32 %v1837, %v2092
      %v2156 = vadd.f32 %v1838, %v2095
      %v2157 = vadd.f32 %v1839, %v2097
      %v2158 = vadd.f32 %v1840, %v2100
      %v2159 = vadd.f32 %v1841, %v2102
      %v2160 = vadd.f32 %v1842, %v2105
      %v2161 = vadd.f32 %v1843, %v2107
      %v2162 = vadd.f32 %v1844, %v2110
      %v2163 = vadd.f32 %v1845, %v2112
      %v2164 = vadd.f32 %v1846, %v2115
      %v2165 = vadd.f32 %v1847, %v2117
      %v2166 = vadd.f32 %v1848, %v2120
      %v2167 = vadd.f32 %v1849, %v2122
      %v2168 = vadd.f32 %v1850, %v2125
      %v2169 = vadd.f32 %v1851, %v2127
      %v2170 = vadd.f32 %v1852, %v2130
      %v2171 = vadd.f32 %v1853, %v2132
      %v2172 = vadd.f32 %v1854, %v2135
      %v2173 = vadd.f32 %v1855, %v2137
      %v2174 = vadd.f32 %v1856, %v2140
      %v2175 = vadd.f32 %v1857, %v2142
      %v2176 = vld [vmem:[%s538 + $0x2] sm:$0xff]
      %v2177 = vld [vmem:[%s538 + $0xa] sm:$0xff]
      %v2178 = vld [vmem:[%s538 + $0x1a] sm:$0xff]
      %v2179 = vld [vmem:[%s538 + $0x22] sm:$0xff]
      %v2180 = vld [vmem:[%s538 + $0x32] sm:$0xff]
      %v2181 = vld [vmem:[%s538 + $0x3a] sm:$0xff]
      %v2182 = vld [vmem:[%s538 + $0x4a] sm:$0xff]
      %v2183 = vld [vmem:[%s538 + $0x52] sm:$0xff]
      %v2184 = vld [vmem:[%s538 + $0x62] sm:$0xff]
      %v2185 = vld [vmem:[%s538 + $0x6a] sm:$0xff]
      %v2186 = vld [vmem:[%s538 + $0x7a] sm:$0xff]
      %v2187 = vld [vmem:[%s538 + $0x82] sm:$0xff]
      %v2188 = vld [vmem:[%s538 + $0x92] sm:$0xff]
      %v2189 = vld [vmem:[%s538 + $0x9a] sm:$0xff]
      %v2190 = vld [vmem:[%s538 + $0xaa] sm:$0xff]
      %v2191 = vld [vmem:[%s538 + $0xb2] sm:$0xff]
      %v2192 = vld [vmem:[%s538 + $0xc2] sm:$0xff]
      %v2193 = vld [vmem:[%s538 + $0xca] sm:$0xff]
      %v2194 = vld [vmem:[%s538 + $0xda] sm:$0xff]
      %v2195 = vld [vmem:[%s538 + $0xe2] sm:$0xff]
      %v2196 = vld [vmem:[%s538 + $0xf2] sm:$0xff]
      %v2197 = vld [vmem:[%s538 + $0xfa] sm:$0xff]
      %v2198 = vld [vmem:[%s538 + $0x10a] sm:$0xff]
      %v2199 = vld [vmem:[%s538 + $0x112] sm:$0xff]
      %v2200 = vld [vmem:[%s538 + $0x122] sm:$0xff]
      %v2201 = vld [vmem:[%s538 + $0x12a] sm:$0xff]
      %v2202 = vld [vmem:[%s538 + $0x13a] sm:$0xff]
      %v2203 = vld [vmem:[%s538 + $0x142] sm:$0xff]
      %v2204 = vld [vmem:[%s538 + $0x152] sm:$0xff]
      %v2205 = vld [vmem:[%s538 + $0x15a] sm:$0xff]
      %v2206 = vld [vmem:[%s538 + $0x16a] sm:$0xff]
      %v2207 = vld [vmem:[%s538 + $0x172] sm:$0xff]
      %v2208 = vpack.c.bf16 %v2176, %v2176
      %v2209 = vpack.c.bf16 %v2177, %v2177
      %v2210 = vpack.c.bf16 %v2178, %v2178
      %v2211 = vpack.c.bf16 %v2179, %v2179
      %v2212 = vpack.c.bf16 %v2180, %v2180
      %v2213 = vpack.c.bf16 %v2181, %v2181
      %v2214 = vpack.c.bf16 %v2182, %v2182
      %v2215 = vpack.c.bf16 %v2183, %v2183
      %v2216 = vpack.c.bf16 %v2184, %v2184
      %v2217 = vpack.c.bf16 %v2185, %v2185
      %v2218 = vpack.c.bf16 %v2186, %v2186
      %v2219 = vpack.c.bf16 %v2187, %v2187
      %v2220 = vpack.c.bf16 %v2188, %v2188
      %v2221 = vpack.c.bf16 %v2189, %v2189
      %v2222 = vpack.c.bf16 %v2190, %v2190
      %v2223 = vpack.c.bf16 %v2191, %v2191
      %v2224 = vpack.c.bf16 %v2192, %v2192
      %v2225 = vpack.c.bf16 %v2193, %v2193
      %v2226 = vpack.c.bf16 %v2194, %v2194
      %v2227 = vpack.c.bf16 %v2195, %v2195
      %v2228 = vpack.c.bf16 %v2196, %v2196
      %v2229 = vpack.c.bf16 %v2197, %v2197
      %v2230 = vpack.c.bf16 %v2198, %v2198
      %v2231 = vpack.c.bf16 %v2199, %v2199
      %v2232 = vpack.c.bf16 %v2200, %v2200
      %v2233 = vpack.c.bf16 %v2201, %v2201
      %v2234 = vpack.c.bf16 %v2202, %v2202
      %v2235 = vpack.c.bf16 %v2203, %v2203
      %v2236 = vpack.c.bf16 %v2204, %v2204
      %v2237 = vpack.c.bf16 %v2205, %v2205
      %v2238 = vpack.c.bf16 %v2206, %v2206
      %v2239 = vpack.c.bf16 %v2207, %v2207
      %s2240 = scalar_lea.vmem %s2, 10
      %v2241 = vld [vmem:[%s2240] sm:$0x3]
      %v2274 = vunpack.c.l.b16 %v2208
      %v2275 = vunpack.c.l.b16 %v2209
      %v2276 = vunpack.c.l.b16 %v2210
      %v2277 = vunpack.c.l.b16 %v2211
      %v2278 = vunpack.c.l.b16 %v2212
      %v2279 = vunpack.c.l.b16 %v2213
      %v2280 = vunpack.c.l.b16 %v2214
      %v2281 = vunpack.c.l.b16 %v2215
      %v2282 = vunpack.c.l.b16 %v2216
      %v2283 = vunpack.c.l.b16 %v2217
      %v2284 = vunpack.c.l.b16 %v2218
      %v2285 = vunpack.c.l.b16 %v2219
      %v2286 = vunpack.c.l.b16 %v2220
      %v2287 = vunpack.c.l.b16 %v2221
      %v2288 = vunpack.c.l.b16 %v2222
      %v2289 = vunpack.c.l.b16 %v2223
      %v2290 = vunpack.c.l.b16 %v2224
      %v2291 = vunpack.c.l.b16 %v2225
      %v2292 = vunpack.c.l.b16 %v2226
      %v2293 = vunpack.c.l.b16 %v2227
      %v2294 = vunpack.c.l.b16 %v2228
      %v2295 = vunpack.c.l.b16 %v2229
      %v2296 = vunpack.c.l.b16 %v2230
      %v2297 = vunpack.c.l.b16 %v2231
      %v2298 = vunpack.c.l.b16 %v2232
      %v2299 = vunpack.c.l.b16 %v2233
      %v2300 = vunpack.c.l.b16 %v2234
      %v2301 = vunpack.c.l.b16 %v2235
      %v2302 = vunpack.c.l.b16 %v2236
      %v2303 = vunpack.c.l.b16 %v2237
      %v2304 = vunpack.c.l.b16 %v2238
      %v2305 = vunpack.c.l.b16 %v2239
      %v2306 = vpack.c.b16 %v2275, %v2274
      %v2307 = vpack.c.b16 %v2277, %v2276
      %v2308 = vpack.c.b16 %v2279, %v2278
      %v2309 = vpack.c.b16 %v2281, %v2280
      %v2310 = vpack.c.b16 %v2283, %v2282
      %v2311 = vpack.c.b16 %v2285, %v2284
      %v2312 = vpack.c.b16 %v2287, %v2286
      %v2313 = vpack.c.b16 %v2289, %v2288
      %v2314 = vpack.c.b16 %v2291, %v2290
      %v2315 = vpack.c.b16 %v2293, %v2292
      %v2316 = vpack.c.b16 %v2295, %v2294
      %v2317 = vpack.c.b16 %v2297, %v2296
      %v2318 = vpack.c.b16 %v2299, %v2298
      %v2319 = vpack.c.b16 %v2301, %v2300
      %v2320 = vpack.c.b16 %v2303, %v2302
      %v2321 = vpack.c.b16 %v2305, %v2304
      %v2323 = vsel %vm539, %v2306, 0
      %v2326 = vsel %vm539, %v2307, 0
      %v2329 = vsel %vm539, %v2308, 0
      %v2332 = vsel %vm539, %v2309, 0
      %v2335 = vsel %vm539, %v2310, 0
      %v2338 = vsel %vm539, %v2311, 0
      %v2341 = vsel %vm539, %v2312, 0
      %v2344 = vsel %vm539, %v2313, 0
      %v2347 = vsel %vm539, %v2314, 0
      %v2350 = vsel %vm539, %v2315, 0
      %v2353 = vsel %vm539, %v2316, 0
      %v2356 = vsel %vm539, %v2317, 0
      %v2359 = vsel %vm539, %v2318, 0
      %v2362 = vsel %vm539, %v2319, 0
      %v2365 = vsel %vm539, %v2320, 0
      %v2368 = vsel %vm539, %v2321, 0
      %v2371 = vsel %vm909, %v2241, 0
      %2373 = vmatpush.bf16.msra.mxu0 0
      %2374 = vmatpush.bf16.msra.mxu0 0
      %2375 = vmatpush.bf16.msra.mxu0 0
      %2376 = vmatpush.bf16.msra.mxu0 0
      %2377 = vmatpush.bf16.msra.mxu0 0
      %2378 = vmatpush.bf16.msra.mxu0 0
      %2379 = vmatpush.bf16.msra.mxu0 0
      %2380 = vmatpush.bf16.msra.mxu0 %v2371
      %2381 = vmatmul.bf16.gmra.mxu0 %v2323
      %v2382 = vpop.f32.mrf.mxu0
      %v2383 = vadd.f32 0.0, %v2382
      %v2384 = vpop.f32.mrf.mxu0
      %v2385 = vadd.f32 0.0, %v2384
      %2386 = vmatmul.bf16.gmra.mxu0 %v2326
      %v2387 = vpop.f32.mrf.mxu0
      %v2388 = vadd.f32 0.0, %v2387
      %v2389 = vpop.f32.mrf.mxu0
      %v2390 = vadd.f32 0.0, %v2389
      %2391 = vmatmul.bf16.gmra.mxu0 %v2329
      %v2392 = vpop.f32.mrf.mxu0
      %v2393 = vadd.f32 0.0, %v2392
      %v2394 = vpop.f32.mrf.mxu0
      %v2395 = vadd.f32 0.0, %v2394
      %2396 = vmatmul.bf16.gmra.mxu0 %v2332
      %v2397 = vpop.f32.mrf.mxu0
      %v2398 = vadd.f32 0.0, %v2397
      %v2399 = vpop.f32.mrf.mxu0
      %v2400 = vadd.f32 0.0, %v2399
      %2401 = vmatmul.bf16.gmra.mxu0 %v2335
      %v2402 = vpop.f32.mrf.mxu0
      %v2403 = vadd.f32 0.0, %v2402
      %v2404 = vpop.f32.mrf.mxu0
      %v2405 = vadd.f32 0.0, %v2404
      %2406 = vmatmul.bf16.gmra.mxu0 %v2338
      %v2407 = vpop.f32.mrf.mxu0
      %v2408 = vadd.f32 0.0, %v2407
      %v2409 = vpop.f32.mrf.mxu0
      %v2410 = vadd.f32 0.0, %v2409
      %2411 = vmatmul.bf16.gmra.mxu0 %v2341
      %v2412 = vpop.f32.mrf.mxu0
      %v2413 = vadd.f32 0.0, %v2412
      %v2414 = vpop.f32.mrf.mxu0
      %v2415 = vadd.f32 0.0, %v2414
      %2416 = vmatmul.bf16.gmra.mxu0 %v2344
      %v2417 = vpop.f32.mrf.mxu0
      %v2418 = vadd.f32 0.0, %v2417
      %v2419 = vpop.f32.mrf.mxu0
      %v2420 = vadd.f32 0.0, %v2419
      %2421 = vmatmul.bf16.gmra.mxu0 %v2347
      %v2422 = vpop.f32.mrf.mxu0
      %v2423 = vadd.f32 0.0, %v2422
      %v2424 = vpop.f32.mrf.mxu0
      %v2425 = vadd.f32 0.0, %v2424
      %2426 = vmatmul.bf16.gmra.mxu0 %v2350
      %v2427 = vpop.f32.mrf.mxu0
      %v2428 = vadd.f32 0.0, %v2427
      %v2429 = vpop.f32.mrf.mxu0
      %v2430 = vadd.f32 0.0, %v2429
      %2431 = vmatmul.bf16.gmra.mxu0 %v2353
      %v2432 = vpop.f32.mrf.mxu0
      %v2433 = vadd.f32 0.0, %v2432
      %v2434 = vpop.f32.mrf.mxu0
      %v2435 = vadd.f32 0.0, %v2434
      %2436 = vmatmul.bf16.gmra.mxu0 %v2356
      %v2437 = vpop.f32.mrf.mxu0
      %v2438 = vadd.f32 0.0, %v2437
      %v2439 = vpop.f32.mrf.mxu0
      %v2440 = vadd.f32 0.0, %v2439
      %2441 = vmatmul.bf16.gmra.mxu0 %v2359
      %v2442 = vpop.f32.mrf.mxu0
      %v2443 = vadd.f32 0.0, %v2442
      %v2444 = vpop.f32.mrf.mxu0
      %v2445 = vadd.f32 0.0, %v2444
      %2446 = vmatmul.bf16.gmra.mxu0 %v2362
      %v2447 = vpop.f32.mrf.mxu0
      %v2448 = vadd.f32 0.0, %v2447
      %v2449 = vpop.f32.mrf.mxu0
      %v2450 = vadd.f32 0.0, %v2449
      %2451 = vmatmul.bf16.gmra.mxu0 %v2365
      %v2452 = vpop.f32.mrf.mxu0
      %v2453 = vadd.f32 0.0, %v2452
      %v2454 = vpop.f32.mrf.mxu0
      %v2455 = vadd.f32 0.0, %v2454
      %2456 = vmatmul.bf16.gmra.mxu0 %v2368
      %v2457 = vpop.f32.mrf.mxu0
      %v2458 = vadd.f32 0.0, %v2457
      %v2459 = vpop.f32.mrf.mxu0
      %v2460 = vadd.f32 0.0, %v2459
      %2461 = vdwg.mxu0
      %v2462 = vadd.f32 %v2144, %v2383
      %v2463 = vadd.f32 %v2145, %v2385
      %v2464 = vadd.f32 %v2146, %v2388
      %v2465 = vadd.f32 %v2147, %v2390
      %v2466 = vadd.f32 %v2148, %v2393
      %v2467 = vadd.f32 %v2149, %v2395
      %v2468 = vadd.f32 %v2150, %v2398
      %v2469 = vadd.f32 %v2151, %v2400
      %v2470 = vadd.f32 %v2152, %v2403
      %v2471 = vadd.f32 %v2153, %v2405
      %v2472 = vadd.f32 %v2154, %v2408
      %v2473 = vadd.f32 %v2155, %v2410
      %v2474 = vadd.f32 %v2156, %v2413
      %v2475 = vadd.f32 %v2157, %v2415
      %v2476 = vadd.f32 %v2158, %v2418
      %v2477 = vadd.f32 %v2159, %v2420
      %v2478 = vadd.f32 %v2160, %v2423
      %v2479 = vadd.f32 %v2161, %v2425
      %v2480 = vadd.f32 %v2162, %v2428
      %v2481 = vadd.f32 %v2163, %v2430
      %v2482 = vadd.f32 %v2164, %v2433
      %v2483 = vadd.f32 %v2165, %v2435
      %v2484 = vadd.f32 %v2166, %v2438
      %v2485 = vadd.f32 %v2167, %v2440
      %v2486 = vadd.f32 %v2168, %v2443
      %v2487 = vadd.f32 %v2169, %v2445
      %v2488 = vadd.f32 %v2170, %v2448
      %v2489 = vadd.f32 %v2171, %v2450
      %v2490 = vadd.f32 %v2172, %v2453
      %v2491 = vadd.f32 %v2173, %v2455
      %v2492 = vadd.f32 %v2174, %v2458
      %v2493 = vadd.f32 %v2175, %v2460
      %s2494 = scalar_lea.vmem [#allocation2], 48
      %v2495 = vld [vmem:[%s2494] sm:$0xff]
      %v2496 = vld [vmem:[%s2494 + $0x8] sm:$0xff]
      %v2497 = vld [vmem:[%s2494 + $0x18] sm:$0xff]
      %v2498 = vld [vmem:[%s2494 + $0x20] sm:$0xff]
      %v2499 = vld [vmem:[%s2494 + $0x30] sm:$0xff]
      %v2500 = vld [vmem:[%s2494 + $0x38] sm:$0xff]
      %v2501 = vld [vmem:[%s2494 + $0x48] sm:$0xff]
      %v2502 = vld [vmem:[%s2494 + $0x50] sm:$0xff]
      %v2503 = vld [vmem:[%s2494 + $0x60] sm:$0xff]
      %v2504 = vld [vmem:[%s2494 + $0x68] sm:$0xff]
      %v2505 = vld [vmem:[%s2494 + $0x78] sm:$0xff]
      %v2506 = vld [vmem:[%s2494 + $0x80] sm:$0xff]
      %v2507 = vld [vmem:[%s2494 + $0x90] sm:$0xff]
      %v2508 = vld [vmem:[%s2494 + $0x98] sm:$0xff]
      %v2509 = vld [vmem:[%s2494 + $0xa8] sm:$0xff]
      %v2510 = vld [vmem:[%s2494 + $0xb0] sm:$0xff]
      %v2511 = vld [vmem:[%s2494 + $0xc0] sm:$0xff]
      %v2512 = vld [vmem:[%s2494 + $0xc8] sm:$0xff]
      %v2513 = vld [vmem:[%s2494 + $0xd8] sm:$0xff]
      %v2514 = vld [vmem:[%s2494 + $0xe0] sm:$0xff]
      %v2515 = vld [vmem:[%s2494 + $0xf0] sm:$0xff]
      %v2516 = vld [vmem:[%s2494 + $0xf8] sm:$0xff]
      %v2517 = vld [vmem:[%s2494 + $0x108] sm:$0xff]
      %v2518 = vld [vmem:[%s2494 + $0x110] sm:$0xff]
      %v2519 = vld [vmem:[%s2494 + $0x120] sm:$0xff]
      %v2520 = vld [vmem:[%s2494 + $0x128] sm:$0xff]
      %v2521 = vld [vmem:[%s2494 + $0x138] sm:$0xff]
      %v2522 = vld [vmem:[%s2494 + $0x140] sm:$0xff]
      %v2523 = vld [vmem:[%s2494 + $0x150] sm:$0xff]
      %v2524 = vld [vmem:[%s2494 + $0x158] sm:$0xff]
      %v2525 = vld [vmem:[%s2494 + $0x168] sm:$0xff]
      %v2526 = vld [vmem:[%s2494 + $0x170] sm:$0xff]
      %v2527 = vpack.c.bf16 %v2495, %v2495
      %v2528 = vpack.c.bf16 %v2496, %v2496
      %v2529 = vpack.c.bf16 %v2497, %v2497
      %v2530 = vpack.c.bf16 %v2498, %v2498
      %v2531 = vpack.c.bf16 %v2499, %v2499
      %v2532 = vpack.c.bf16 %v2500, %v2500
      %v2533 = vpack.c.bf16 %v2501, %v2501
      %v2534 = vpack.c.bf16 %v2502, %v2502
      %v2535 = vpack.c.bf16 %v2503, %v2503
      %v2536 = vpack.c.bf16 %v2504, %v2504
      %v2537 = vpack.c.bf16 %v2505, %v2505
      %v2538 = vpack.c.bf16 %v2506, %v2506
      %v2539 = vpack.c.bf16 %v2507, %v2507
      %v2540 = vpack.c.bf16 %v2508, %v2508
      %v2541 = vpack.c.bf16 %v2509, %v2509
      %v2542 = vpack.c.bf16 %v2510, %v2510
      %v2543 = vpack.c.bf16 %v2511, %v2511
      %v2544 = vpack.c.bf16 %v2512, %v2512
      %v2545 = vpack.c.bf16 %v2513, %v2513
      %v2546 = vpack.c.bf16 %v2514, %v2514
      %v2547 = vpack.c.bf16 %v2515, %v2515
      %v2548 = vpack.c.bf16 %v2516, %v2516
      %v2549 = vpack.c.bf16 %v2517, %v2517
      %v2550 = vpack.c.bf16 %v2518, %v2518
      %v2551 = vpack.c.bf16 %v2519, %v2519
      %v2552 = vpack.c.bf16 %v2520, %v2520
      %v2553 = vpack.c.bf16 %v2521, %v2521
      %v2554 = vpack.c.bf16 %v2522, %v2522
      %v2555 = vpack.c.bf16 %v2523, %v2523
      %v2556 = vpack.c.bf16 %v2524, %v2524
      %v2557 = vpack.c.bf16 %v2525, %v2525
      %v2558 = vpack.c.bf16 %v2526, %v2526
      %s2559 = scalar_lea.vmem %s2, 12
      %v2560 = vld [vmem:[%s2559] sm:$0x3]
      %v2593 = vunpack.c.l.b16 %v2527
      %v2594 = vunpack.c.l.b16 %v2528
      %v2595 = vunpack.c.l.b16 %v2529
      %v2596 = vunpack.c.l.b16 %v2530
      %v2597 = vunpack.c.l.b16 %v2531
      %v2598 = vunpack.c.l.b16 %v2532
      %v2599 = vunpack.c.l.b16 %v2533
      %v2600 = vunpack.c.l.b16 %v2534
      %v2601 = vunpack.c.l.b16 %v2535
      %v2602 = vunpack.c.l.b16 %v2536
      %v2603 = vunpack.c.l.b16 %v2537
      %v2604 = vunpack.c.l.b16 %v2538
      %v2605 = vunpack.c.l.b16 %v2539
      %v2606 = vunpack.c.l.b16 %v2540
      %v2607 = vunpack.c.l.b16 %v2541
      %v2608 = vunpack.c.l.b16 %v2542
      %v2609 = vunpack.c.l.b16 %v2543
      %v2610 = vunpack.c.l.b16 %v2544
      %v2611 = vunpack.c.l.b16 %v2545
      %v2612 = vunpack.c.l.b16 %v2546
      %v2613 = vunpack.c.l.b16 %v2547
      %v2614 = vunpack.c.l.b16 %v2548
      %v2615 = vunpack.c.l.b16 %v2549
      %v2616 = vunpack.c.l.b16 %v2550
      %v2617 = vunpack.c.l.b16 %v2551
      %v2618 = vunpack.c.l.b16 %v2552
      %v2619 = vunpack.c.l.b16 %v2553
      %v2620 = vunpack.c.l.b16 %v2554
      %v2621 = vunpack.c.l.b16 %v2555
      %v2622 = vunpack.c.l.b16 %v2556
      %v2623 = vunpack.c.l.b16 %v2557
      %v2624 = vunpack.c.l.b16 %v2558
      %v2625 = vpack.c.b16 %v2594, %v2593
      %v2626 = vpack.c.b16 %v2596, %v2595
      %v2627 = vpack.c.b16 %v2598, %v2597
      %v2628 = vpack.c.b16 %v2600, %v2599
      %v2629 = vpack.c.b16 %v2602, %v2601
      %v2630 = vpack.c.b16 %v2604, %v2603
      %v2631 = vpack.c.b16 %v2606, %v2605
      %v2632 = vpack.c.b16 %v2608, %v2607
      %v2633 = vpack.c.b16 %v2610, %v2609
      %v2634 = vpack.c.b16 %v2612, %v2611
      %v2635 = vpack.c.b16 %v2614, %v2613
      %v2636 = vpack.c.b16 %v2616, %v2615
      %v2637 = vpack.c.b16 %v2618, %v2617
      %v2638 = vpack.c.b16 %v2620, %v2619
      %v2639 = vpack.c.b16 %v2622, %v2621
      %v2640 = vpack.c.b16 %v2624, %v2623
      %v2642 = vsel %vm539, %v2625, 0
      %v2645 = vsel %vm539, %v2626, 0
      %v2648 = vsel %vm539, %v2627, 0
      %v2651 = vsel %vm539, %v2628, 0
      %v2654 = vsel %vm539, %v2629, 0
      %v2657 = vsel %vm539, %v2630, 0
      %v2660 = vsel %vm539, %v2631, 0
      %v2663 = vsel %vm539, %v2632, 0
      %v2666 = vsel %vm539, %v2633, 0
      %v2669 = vsel %vm539, %v2634, 0
      %v2672 = vsel %vm539, %v2635, 0
      %v2675 = vsel %vm539, %v2636, 0
      %v2678 = vsel %vm539, %v2637, 0
      %v2681 = vsel %vm539, %v2638, 0
      %v2684 = vsel %vm539, %v2639, 0
      %v2687 = vsel %vm539, %v2640, 0
      %v2690 = vsel %vm909, %v2560, 0
      %2692 = vmatpush.bf16.msra.mxu0 0
      %2693 = vmatpush.bf16.msra.mxu0 0
      %2694 = vmatpush.bf16.msra.mxu0 0
      %2695 = vmatpush.bf16.msra.mxu0 0
      %2696 = vmatpush.bf16.msra.mxu0 0
      %2697 = vmatpush.bf16.msra.mxu0 0
      %2698 = vmatpush.bf16.msra.mxu0 0
      %2699 = vmatpush.bf16.msra.mxu0 %v2690
      %2700 = vmatmul.bf16.gmra.mxu0 %v2642
      %v2701 = vpop.f32.mrf.mxu0
      %v2702 = vadd.f32 0.0, %v2701
      %v2703 = vpop.f32.mrf.mxu0
      %v2704 = vadd.f32 0.0, %v2703
      %2705 = vmatmul.bf16.gmra.mxu0 %v2645
      %v2706 = vpop.f32.mrf.mxu0
      %v2707 = vadd.f32 0.0, %v2706
      %v2708 = vpop.f32.mrf.mxu0
      %v2709 = vadd.f32 0.0, %v2708
      %2710 = vmatmul.bf16.gmra.mxu0 %v2648
      %v2711 = vpop.f32.mrf.mxu0
      %v2712 = vadd.f32 0.0, %v2711
      %v2713 = vpop.f32.mrf.mxu0
      %v2714 = vadd.f32 0.0, %v2713
      %2715 = vmatmul.bf16.gmra.mxu0 %v2651
      %v2716 = vpop.f32.mrf.mxu0
      %v2717 = vadd.f32 0.0, %v2716
      %v2718 = vpop.f32.mrf.mxu0
      %v2719 = vadd.f32 0.0, %v2718
      %2720 = vmatmul.bf16.gmra.mxu0 %v2654
      %v2721 = vpop.f32.mrf.mxu0
      %v2722 = vadd.f32 0.0, %v2721
      %v2723 = vpop.f32.mrf.mxu0
      %v2724 = vadd.f32 0.0, %v2723
      %2725 = vmatmul.bf16.gmra.mxu0 %v2657
      %v2726 = vpop.f32.mrf.mxu0
      %v2727 = vadd.f32 0.0, %v2726
      %v2728 = vpop.f32.mrf.mxu0
      %v2729 = vadd.f32 0.0, %v2728
      %2730 = vmatmul.bf16.gmra.mxu0 %v2660
      %v2731 = vpop.f32.mrf.mxu0
      %v2732 = vadd.f32 0.0, %v2731
      %v2733 = vpop.f32.mrf.mxu0
      %v2734 = vadd.f32 0.0, %v2733
      %2735 = vmatmul.bf16.gmra.mxu0 %v2663
      %v2736 = vpop.f32.mrf.mxu0
      %v2737 = vadd.f32 0.0, %v2736
      %v2738 = vpop.f32.mrf.mxu0
      %v2739 = vadd.f32 0.0, %v2738
      %2740 = vmatmul.bf16.gmra.mxu0 %v2666
      %v2741 = vpop.f32.mrf.mxu0
      %v2742 = vadd.f32 0.0, %v2741
      %v2743 = vpop.f32.mrf.mxu0
      %v2744 = vadd.f32 0.0, %v2743
      %2745 = vmatmul.bf16.gmra.mxu0 %v2669
      %v2746 = vpop.f32.mrf.mxu0
      %v2747 = vadd.f32 0.0, %v2746
      %v2748 = vpop.f32.mrf.mxu0
      %v2749 = vadd.f32 0.0, %v2748
      %2750 = vmatmul.bf16.gmra.mxu0 %v2672
      %v2751 = vpop.f32.mrf.mxu0
      %v2752 = vadd.f32 0.0, %v2751
      %v2753 = vpop.f32.mrf.mxu0
      %v2754 = vadd.f32 0.0, %v2753
      %2755 = vmatmul.bf16.gmra.mxu0 %v2675
      %v2756 = vpop.f32.mrf.mxu0
      %v2757 = vadd.f32 0.0, %v2756
      %v2758 = vpop.f32.mrf.mxu0
      %v2759 = vadd.f32 0.0, %v2758
      %2760 = vmatmul.bf16.gmra.mxu0 %v2678
      %v2761 = vpop.f32.mrf.mxu0
      %v2762 = vadd.f32 0.0, %v2761
      %v2763 = vpop.f32.mrf.mxu0
      %v2764 = vadd.f32 0.0, %v2763
      %2765 = vmatmul.bf16.gmra.mxu0 %v2681
      %v2766 = vpop.f32.mrf.mxu0
      %v2767 = vadd.f32 0.0, %v2766
      %v2768 = vpop.f32.mrf.mxu0
      %v2769 = vadd.f32 0.0, %v2768
      %2770 = vmatmul.bf16.gmra.mxu0 %v2684
      %v2771 = vpop.f32.mrf.mxu0
      %v2772 = vadd.f32 0.0, %v2771
      %v2773 = vpop.f32.mrf.mxu0
      %v2774 = vadd.f32 0.0, %v2773
      %2775 = vmatmul.bf16.gmra.mxu0 %v2687
      %v2776 = vpop.f32.mrf.mxu0
      %v2777 = vadd.f32 0.0, %v2776
      %v2778 = vpop.f32.mrf.mxu0
      %v2779 = vadd.f32 0.0, %v2778
      %2780 = vdwg.mxu0
      %v2781 = vadd.f32 %v2462, %v2702
      %v2782 = vadd.f32 %v2463, %v2704
      %v2783 = vadd.f32 %v2464, %v2707
      %v2784 = vadd.f32 %v2465, %v2709
      %v2785 = vadd.f32 %v2466, %v2712
      %v2786 = vadd.f32 %v2467, %v2714
      %v2787 = vadd.f32 %v2468, %v2717
      %v2788 = vadd.f32 %v2469, %v2719
      %v2789 = vadd.f32 %v2470, %v2722
      %v2790 = vadd.f32 %v2471, %v2724
      %v2791 = vadd.f32 %v2472, %v2727
      %v2792 = vadd.f32 %v2473, %v2729
      %v2793 = vadd.f32 %v2474, %v2732
      %v2794 = vadd.f32 %v2475, %v2734
      %v2795 = vadd.f32 %v2476, %v2737
      %v2796 = vadd.f32 %v2477, %v2739
      %v2797 = vadd.f32 %v2478, %v2742
      %v2798 = vadd.f32 %v2479, %v2744
      %v2799 = vadd.f32 %v2480, %v2747
      %v2800 = vadd.f32 %v2481, %v2749
      %v2801 = vadd.f32 %v2482, %v2752
      %v2802 = vadd.f32 %v2483, %v2754
      %v2803 = vadd.f32 %v2484, %v2757
      %v2804 = vadd.f32 %v2485, %v2759
      %v2805 = vadd.f32 %v2486, %v2762
      %v2806 = vadd.f32 %v2487, %v2764
      %v2807 = vadd.f32 %v2488, %v2767
      %v2808 = vadd.f32 %v2489, %v2769
      %v2809 = vadd.f32 %v2490, %v2772
      %v2810 = vadd.f32 %v2491, %v2774
      %v2811 = vadd.f32 %v2492, %v2777
      %v2812 = vadd.f32 %v2493, %v2779
      %v2813 = vld [vmem:[%s2494 + $0x1] sm:$0xff]
      %v2814 = vld [vmem:[%s2494 + $0x9] sm:$0xff]
      %v2815 = vld [vmem:[%s2494 + $0x19] sm:$0xff]
      %v2816 = vld [vmem:[%s2494 + $0x21] sm:$0xff]
      %v2817 = vld [vmem:[%s2494 + $0x31] sm:$0xff]
      %v2818 = vld [vmem:[%s2494 + $0x39] sm:$0xff]
      %v2819 = vld [vmem:[%s2494 + $0x49] sm:$0xff]
      %v2820 = vld [vmem:[%s2494 + $0x51] sm:$0xff]
      %v2821 = vld [vmem:[%s2494 + $0x61] sm:$0xff]
      %v2822 = vld [vmem:[%s2494 + $0x69] sm:$0xff]
      %v2823 = vld [vmem:[%s2494 + $0x79] sm:$0xff]
      %v2824 = vld [vmem:[%s2494 + $0x81] sm:$0xff]
      %v2825 = vld [vmem:[%s2494 + $0x91] sm:$0xff]
      %v2826 = vld [vmem:[%s2494 + $0x99] sm:$0xff]
      %v2827 = vld [vmem:[%s2494 + $0xa9] sm:$0xff]
      %v2828 = vld [vmem:[%s2494 + $0xb1] sm:$0xff]
      %v2829 = vld [vmem:[%s2494 + $0xc1] sm:$0xff]
      %v2830 = vld [vmem:[%s2494 + $0xc9] sm:$0xff]
      %v2831 = vld [vmem:[%s2494 + $0xd9] sm:$0xff]
      %v2832 = vld [vmem:[%s2494 + $0xe1] sm:$0xff]
      %v2833 = vld [vmem:[%s2494 + $0xf1] sm:$0xff]
      %v2834 = vld [vmem:[%s2494 + $0xf9] sm:$0xff]
      %v2835 = vld [vmem:[%s2494 + $0x109] sm:$0xff]
      %v2836 = vld [vmem:[%s2494 + $0x111] sm:$0xff]
      %v2837 = vld [vmem:[%s2494 + $0x121] sm:$0xff]
      %v2838 = vld [vmem:[%s2494 + $0x129] sm:$0xff]
      %v2839 = vld [vmem:[%s2494 + $0x139] sm:$0xff]
      %v2840 = vld [vmem:[%s2494 + $0x141] sm:$0xff]
      %v2841 = vld [vmem:[%s2494 + $0x151] sm:$0xff]
      %v2842 = vld [vmem:[%s2494 + $0x159] sm:$0xff]
      %v2843 = vld [vmem:[%s2494 + $0x169] sm:$0xff]
      %v2844 = vld [vmem:[%s2494 + $0x171] sm:$0xff]
      %v2845 = vpack.c.bf16 %v2813, %v2813
      %v2846 = vpack.c.bf16 %v2814, %v2814
      %v2847 = vpack.c.bf16 %v2815, %v2815
      %v2848 = vpack.c.bf16 %v2816, %v2816
      %v2849 = vpack.c.bf16 %v2817, %v2817
      %v2850 = vpack.c.bf16 %v2818, %v2818
      %v2851 = vpack.c.bf16 %v2819, %v2819
      %v2852 = vpack.c.bf16 %v2820, %v2820
      %v2853 = vpack.c.bf16 %v2821, %v2821
      %v2854 = vpack.c.bf16 %v2822, %v2822
      %v2855 = vpack.c.bf16 %v2823, %v2823
      %v2856 = vpack.c.bf16 %v2824, %v2824
      %v2857 = vpack.c.bf16 %v2825, %v2825
      %v2858 = vpack.c.bf16 %v2826, %v2826
      %v2859 = vpack.c.bf16 %v2827, %v2827
      %v2860 = vpack.c.bf16 %v2828, %v2828
      %v2861 = vpack.c.bf16 %v2829, %v2829
      %v2862 = vpack.c.bf16 %v2830, %v2830
      %v2863 = vpack.c.bf16 %v2831, %v2831
      %v2864 = vpack.c.bf16 %v2832, %v2832
      %v2865 = vpack.c.bf16 %v2833, %v2833
      %v2866 = vpack.c.bf16 %v2834, %v2834
      %v2867 = vpack.c.bf16 %v2835, %v2835
      %v2868 = vpack.c.bf16 %v2836, %v2836
      %v2869 = vpack.c.bf16 %v2837, %v2837
      %v2870 = vpack.c.bf16 %v2838, %v2838
      %v2871 = vpack.c.bf16 %v2839, %v2839
      %v2872 = vpack.c.bf16 %v2840, %v2840
      %v2873 = vpack.c.bf16 %v2841, %v2841
      %v2874 = vpack.c.bf16 %v2842, %v2842
      %v2875 = vpack.c.bf16 %v2843, %v2843
      %v2876 = vpack.c.bf16 %v2844, %v2844
      %s2877 = scalar_lea.vmem %s2, 14
      %v2878 = vld [vmem:[%s2877] sm:$0x3]
      %v2911 = vunpack.c.l.b16 %v2845
      %v2912 = vunpack.c.l.b16 %v2846
      %v2913 = vunpack.c.l.b16 %v2847
      %v2914 = vunpack.c.l.b16 %v2848
      %v2915 = vunpack.c.l.b16 %v2849
      %v2916 = vunpack.c.l.b16 %v2850
      %v2917 = vunpack.c.l.b16 %v2851
      %v2918 = vunpack.c.l.b16 %v2852
      %v2919 = vunpack.c.l.b16 %v2853
      %v2920 = vunpack.c.l.b16 %v2854
      %v2921 = vunpack.c.l.b16 %v2855
      %v2922 = vunpack.c.l.b16 %v2856
      %v2923 = vunpack.c.l.b16 %v2857
      %v2924 = vunpack.c.l.b16 %v2858
      %v2925 = vunpack.c.l.b16 %v2859
      %v2926 = vunpack.c.l.b16 %v2860
      %v2927 = vunpack.c.l.b16 %v2861
      %v2928 = vunpack.c.l.b16 %v2862
      %v2929 = vunpack.c.l.b16 %v2863
      %v2930 = vunpack.c.l.b16 %v2864
      %v2931 = vunpack.c.l.b16 %v2865
      %v2932 = vunpack.c.l.b16 %v2866
      %v2933 = vunpack.c.l.b16 %v2867
      %v2934 = vunpack.c.l.b16 %v2868
      %v2935 = vunpack.c.l.b16 %v2869
      %v2936 = vunpack.c.l.b16 %v2870
      %v2937 = vunpack.c.l.b16 %v2871
      %v2938 = vunpack.c.l.b16 %v2872
      %v2939 = vunpack.c.l.b16 %v2873
      %v2940 = vunpack.c.l.b16 %v2874
      %v2941 = vunpack.c.l.b16 %v2875
      %v2942 = vunpack.c.l.b16 %v2876
      %v2943 = vpack.c.b16 %v2912, %v2911
      %v2944 = vpack.c.b16 %v2914, %v2913
      %v2945 = vpack.c.b16 %v2916, %v2915
      %v2946 = vpack.c.b16 %v2918, %v2917
      %v2947 = vpack.c.b16 %v2920, %v2919
      %v2948 = vpack.c.b16 %v2922, %v2921
      %v2949 = vpack.c.b16 %v2924, %v2923
      %v2950 = vpack.c.b16 %v2926, %v2925
      %v2951 = vpack.c.b16 %v2928, %v2927
      %v2952 = vpack.c.b16 %v2930, %v2929
      %v2953 = vpack.c.b16 %v2932, %v2931
      %v2954 = vpack.c.b16 %v2934, %v2933
      %v2955 = vpack.c.b16 %v2936, %v2935
      %v2956 = vpack.c.b16 %v2938, %v2937
      %v2957 = vpack.c.b16 %v2940, %v2939
      %v2958 = vpack.c.b16 %v2942, %v2941
      %v2960 = vsel %vm539, %v2943, 0
      %v2963 = vsel %vm539, %v2944, 0
      %v2966 = vsel %vm539, %v2945, 0
      %v2969 = vsel %vm539, %v2946, 0
      %v2972 = vsel %vm539, %v2947, 0
      %v2975 = vsel %vm539, %v2948, 0
      %v2978 = vsel %vm539, %v2949, 0
      %v2981 = vsel %vm539, %v2950, 0
      %v2984 = vsel %vm539, %v2951, 0
      %v2987 = vsel %vm539, %v2952, 0
      %v2990 = vsel %vm539, %v2953, 0
      %v2993 = vsel %vm539, %v2954, 0
      %v2996 = vsel %vm539, %v2955, 0
      %v2999 = vsel %vm539, %v2956, 0
      %v3002 = vsel %vm539, %v2957, 0
      %v3005 = vsel %vm539, %v2958, 0
      %v3008 = vsel %vm909, %v2878, 0
      %3010 = vmatpush.bf16.msra.mxu0 0
      %3011 = vmatpush.bf16.msra.mxu0 0
      %3012 = vmatpush.bf16.msra.mxu0 0
      %3013 = vmatpush.bf16.msra.mxu0 0
      %3014 = vmatpush.bf16.msra.mxu0 0
      %3015 = vmatpush.bf16.msra.mxu0 0
      %3016 = vmatpush.bf16.msra.mxu0 0
      %3017 = vmatpush.bf16.msra.mxu0 %v3008
      %3018 = vmatmul.bf16.gmra.mxu0 %v2960
      %v3019 = vpop.f32.mrf.mxu0
      %v3020 = vadd.f32 0.0, %v3019
      %v3021 = vpop.f32.mrf.mxu0
      %v3022 = vadd.f32 0.0, %v3021
      %3023 = vmatmul.bf16.gmra.mxu0 %v2963
      %v3024 = vpop.f32.mrf.mxu0
      %v3025 = vadd.f32 0.0, %v3024
      %v3026 = vpop.f32.mrf.mxu0
      %v3027 = vadd.f32 0.0, %v3026
      %3028 = vmatmul.bf16.gmra.mxu0 %v2966
      %v3029 = vpop.f32.mrf.mxu0
      %v3030 = vadd.f32 0.0, %v3029
      %v3031 = vpop.f32.mrf.mxu0
      %v3032 = vadd.f32 0.0, %v3031
      %3033 = vmatmul.bf16.gmra.mxu0 %v2969
      %v3034 = vpop.f32.mrf.mxu0
      %v3035 = vadd.f32 0.0, %v3034
      %v3036 = vpop.f32.mrf.mxu0
      %v3037 = vadd.f32 0.0, %v3036
      %3038 = vmatmul.bf16.gmra.mxu0 %v2972
      %v3039 = vpop.f32.mrf.mxu0
      %v3040 = vadd.f32 0.0, %v3039
      %v3041 = vpop.f32.mrf.mxu0
      %v3042 = vadd.f32 0.0, %v3041
      %3043 = vmatmul.bf16.gmra.mxu0 %v2975
      %v3044 = vpop.f32.mrf.mxu0
      %v3045 = vadd.f32 0.0, %v3044
      %v3046 = vpop.f32.mrf.mxu0
      %v3047 = vadd.f32 0.0, %v3046
      %3048 = vmatmul.bf16.gmra.mxu0 %v2978
      %v3049 = vpop.f32.mrf.mxu0
      %v3050 = vadd.f32 0.0, %v3049
      %v3051 = vpop.f32.mrf.mxu0
      %v3052 = vadd.f32 0.0, %v3051
      %3053 = vmatmul.bf16.gmra.mxu0 %v2981
      %v3054 = vpop.f32.mrf.mxu0
      %v3055 = vadd.f32 0.0, %v3054
      %v3056 = vpop.f32.mrf.mxu0
      %v3057 = vadd.f32 0.0, %v3056
      %3058 = vmatmul.bf16.gmra.mxu0 %v2984
      %v3059 = vpop.f32.mrf.mxu0
      %v3060 = vadd.f32 0.0, %v3059
      %v3061 = vpop.f32.mrf.mxu0
      %v3062 = vadd.f32 0.0, %v3061
      %3063 = vmatmul.bf16.gmra.mxu0 %v2987
      %v3064 = vpop.f32.mrf.mxu0
      %v3065 = vadd.f32 0.0, %v3064
      %v3066 = vpop.f32.mrf.mxu0
      %v3067 = vadd.f32 0.0, %v3066
      %3068 = vmatmul.bf16.gmra.mxu0 %v2990
      %v3069 = vpop.f32.mrf.mxu0
      %v3070 = vadd.f32 0.0, %v3069
      %v3071 = vpop.f32.mrf.mxu0
      %v3072 = vadd.f32 0.0, %v3071
      %3073 = vmatmul.bf16.gmra.mxu0 %v2993
      %v3074 = vpop.f32.mrf.mxu0
      %v3075 = vadd.f32 0.0, %v3074
      %v3076 = vpop.f32.mrf.mxu0
      %v3077 = vadd.f32 0.0, %v3076
      %3078 = vmatmul.bf16.gmra.mxu0 %v2996
      %v3079 = vpop.f32.mrf.mxu0
      %v3080 = vadd.f32 0.0, %v3079
      %v3081 = vpop.f32.mrf.mxu0
      %v3082 = vadd.f32 0.0, %v3081
      %3083 = vmatmul.bf16.gmra.mxu0 %v2999
      %v3084 = vpop.f32.mrf.mxu0
      %v3085 = vadd.f32 0.0, %v3084
      %v3086 = vpop.f32.mrf.mxu0
      %v3087 = vadd.f32 0.0, %v3086
      %3088 = vmatmul.bf16.gmra.mxu0 %v3002
      %v3089 = vpop.f32.mrf.mxu0
      %v3090 = vadd.f32 0.0, %v3089
      %v3091 = vpop.f32.mrf.mxu0
      %v3092 = vadd.f32 0.0, %v3091
      %3093 = vmatmul.bf16.gmra.mxu0 %v3005
      %v3094 = vpop.f32.mrf.mxu0
      %v3095 = vadd.f32 0.0, %v3094
      %v3096 = vpop.f32.mrf.mxu0
      %v3097 = vadd.f32 0.0, %v3096
      %3098 = vdwg.mxu0
      %v3099 = vadd.f32 %v2781, %v3020
      %v3100 = vadd.f32 %v2782, %v3022
      %v3101 = vadd.f32 %v2783, %v3025
      %v3102 = vadd.f32 %v2784, %v3027
      %v3103 = vadd.f32 %v2785, %v3030
      %v3104 = vadd.f32 %v2786, %v3032
      %v3105 = vadd.f32 %v2787, %v3035
      %v3106 = vadd.f32 %v2788, %v3037
      %v3107 = vadd.f32 %v2789, %v3040
      %v3108 = vadd.f32 %v2790, %v3042
      %v3109 = vadd.f32 %v2791, %v3045
      %v3110 = vadd.f32 %v2792, %v3047
      %v3111 = vadd.f32 %v2793, %v3050
      %v3112 = vadd.f32 %v2794, %v3052
      %v3113 = vadd.f32 %v2795, %v3055
      %v3114 = vadd.f32 %v2796, %v3057
      %v3115 = vadd.f32 %v2797, %v3060
      %v3116 = vadd.f32 %v2798, %v3062
      %v3117 = vadd.f32 %v2799, %v3065
      %v3118 = vadd.f32 %v2800, %v3067
      %v3119 = vadd.f32 %v2801, %v3070
      %v3120 = vadd.f32 %v2802, %v3072
      %v3121 = vadd.f32 %v2803, %v3075
      %v3122 = vadd.f32 %v2804, %v3077
      %v3123 = vadd.f32 %v2805, %v3080
      %v3124 = vadd.f32 %v2806, %v3082
      %v3125 = vadd.f32 %v2807, %v3085
      %v3126 = vadd.f32 %v2808, %v3087
      %v3127 = vadd.f32 %v2809, %v3090
      %v3128 = vadd.f32 %v2810, %v3092
      %v3129 = vadd.f32 %v2811, %v3095
      %v3130 = vadd.f32 %v2812, %v3097
      %v3131 = vld [vmem:[%s2494 + $0x2] sm:$0xff]
      %v3132 = vld [vmem:[%s2494 + $0xa] sm:$0xff]
      %v3133 = vld [vmem:[%s2494 + $0x1a] sm:$0xff]
      %v3134 = vld [vmem:[%s2494 + $0x22] sm:$0xff]
      %v3135 = vld [vmem:[%s2494 + $0x32] sm:$0xff]
      %v3136 = vld [vmem:[%s2494 + $0x3a] sm:$0xff]
      %v3137 = vld [vmem:[%s2494 + $0x4a] sm:$0xff]
      %v3138 = vld [vmem:[%s2494 + $0x52] sm:$0xff]
      %v3139 = vld [vmem:[%s2494 + $0x62] sm:$0xff]
      %v3140 = vld [vmem:[%s2494 + $0x6a] sm:$0xff]
      %v3141 = vld [vmem:[%s2494 + $0x7a] sm:$0xff]
      %v3142 = vld [vmem:[%s2494 + $0x82] sm:$0xff]
      %v3143 = vld [vmem:[%s2494 + $0x92] sm:$0xff]
      %v3144 = vld [vmem:[%s2494 + $0x9a] sm:$0xff]
      %v3145 = vld [vmem:[%s2494 + $0xaa] sm:$0xff]
      %v3146 = vld [vmem:[%s2494 + $0xb2] sm:$0xff]
      %v3147 = vld [vmem:[%s2494 + $0xc2] sm:$0xff]
      %v3148 = vld [vmem:[%s2494 + $0xca] sm:$0xff]
      %v3149 = vld [vmem:[%s2494 + $0xda] sm:$0xff]
      %v3150 = vld [vmem:[%s2494 + $0xe2] sm:$0xff]
      %v3151 = vld [vmem:[%s2494 + $0xf2] sm:$0xff]
      %v3152 = vld [vmem:[%s2494 + $0xfa] sm:$0xff]
      %v3153 = vld [vmem:[%s2494 + $0x10a] sm:$0xff]
      %v3154 = vld [vmem:[%s2494 + $0x112] sm:$0xff]
      %v3155 = vld [vmem:[%s2494 + $0x122] sm:$0xff]
      %v3156 = vld [vmem:[%s2494 + $0x12a] sm:$0xff]
      %v3157 = vld [vmem:[%s2494 + $0x13a] sm:$0xff]
      %v3158 = vld [vmem:[%s2494 + $0x142] sm:$0xff]
      %v3159 = vld [vmem:[%s2494 + $0x152] sm:$0xff]
      %v3160 = vld [vmem:[%s2494 + $0x15a] sm:$0xff]
      %v3161 = vld [vmem:[%s2494 + $0x16a] sm:$0xff]
      %v3162 = vld [vmem:[%s2494 + $0x172] sm:$0xff]
      %v3163 = vpack.c.bf16 %v3131, %v3131
      %v3164 = vpack.c.bf16 %v3132, %v3132
      %v3165 = vpack.c.bf16 %v3133, %v3133
      %v3166 = vpack.c.bf16 %v3134, %v3134
      %v3167 = vpack.c.bf16 %v3135, %v3135
      %v3168 = vpack.c.bf16 %v3136, %v3136
      %v3169 = vpack.c.bf16 %v3137, %v3137
      %v3170 = vpack.c.bf16 %v3138, %v3138
      %v3171 = vpack.c.bf16 %v3139, %v3139
      %v3172 = vpack.c.bf16 %v3140, %v3140
      %v3173 = vpack.c.bf16 %v3141, %v3141
      %v3174 = vpack.c.bf16 %v3142, %v3142
      %v3175 = vpack.c.bf16 %v3143, %v3143
      %v3176 = vpack.c.bf16 %v3144, %v3144
      %v3177 = vpack.c.bf16 %v3145, %v3145
      %v3178 = vpack.c.bf16 %v3146, %v3146
      %v3179 = vpack.c.bf16 %v3147, %v3147
      %v3180 = vpack.c.bf16 %v3148, %v3148
      %v3181 = vpack.c.bf16 %v3149, %v3149
      %v3182 = vpack.c.bf16 %v3150, %v3150
      %v3183 = vpack.c.bf16 %v3151, %v3151
      %v3184 = vpack.c.bf16 %v3152, %v3152
      %v3185 = vpack.c.bf16 %v3153, %v3153
      %v3186 = vpack.c.bf16 %v3154, %v3154
      %v3187 = vpack.c.bf16 %v3155, %v3155
      %v3188 = vpack.c.bf16 %v3156, %v3156
      %v3189 = vpack.c.bf16 %v3157, %v3157
      %v3190 = vpack.c.bf16 %v3158, %v3158
      %v3191 = vpack.c.bf16 %v3159, %v3159
      %v3192 = vpack.c.bf16 %v3160, %v3160
      %v3193 = vpack.c.bf16 %v3161, %v3161
      %v3194 = vpack.c.bf16 %v3162, %v3162
      %s3195 = scalar_lea.vmem %s2, 16
      %v3196 = vld [vmem:[%s3195] sm:$0x3]
      %v3229 = vunpack.c.l.b16 %v3163
      %v3230 = vunpack.c.l.b16 %v3164
      %v3231 = vunpack.c.l.b16 %v3165
      %v3232 = vunpack.c.l.b16 %v3166
      %v3233 = vunpack.c.l.b16 %v3167
      %v3234 = vunpack.c.l.b16 %v3168
      %v3235 = vunpack.c.l.b16 %v3169
      %v3236 = vunpack.c.l.b16 %v3170
      %v3237 = vunpack.c.l.b16 %v3171
      %v3238 = vunpack.c.l.b16 %v3172
      %v3239 = vunpack.c.l.b16 %v3173
      %v3240 = vunpack.c.l.b16 %v3174
      %v3241 = vunpack.c.l.b16 %v3175
      %v3242 = vunpack.c.l.b16 %v3176
      %v3243 = vunpack.c.l.b16 %v3177
      %v3244 = vunpack.c.l.b16 %v3178
      %v3245 = vunpack.c.l.b16 %v3179
      %v3246 = vunpack.c.l.b16 %v3180
      %v3247 = vunpack.c.l.b16 %v3181
      %v3248 = vunpack.c.l.b16 %v3182
      %v3249 = vunpack.c.l.b16 %v3183
      %v3250 = vunpack.c.l.b16 %v3184
      %v3251 = vunpack.c.l.b16 %v3185
      %v3252 = vunpack.c.l.b16 %v3186
      %v3253 = vunpack.c.l.b16 %v3187
      %v3254 = vunpack.c.l.b16 %v3188
      %v3255 = vunpack.c.l.b16 %v3189
      %v3256 = vunpack.c.l.b16 %v3190
      %v3257 = vunpack.c.l.b16 %v3191
      %v3258 = vunpack.c.l.b16 %v3192
      %v3259 = vunpack.c.l.b16 %v3193
      %v3260 = vunpack.c.l.b16 %v3194
      %v3261 = vpack.c.b16 %v3230, %v3229
      %v3262 = vpack.c.b16 %v3232, %v3231
      %v3263 = vpack.c.b16 %v3234, %v3233
      %v3264 = vpack.c.b16 %v3236, %v3235
      %v3265 = vpack.c.b16 %v3238, %v3237
      %v3266 = vpack.c.b16 %v3240, %v3239
      %v3267 = vpack.c.b16 %v3242, %v3241
      %v3268 = vpack.c.b16 %v3244, %v3243
      %v3269 = vpack.c.b16 %v3246, %v3245
      %v3270 = vpack.c.b16 %v3248, %v3247
      %v3271 = vpack.c.b16 %v3250, %v3249
      %v3272 = vpack.c.b16 %v3252, %v3251
      %v3273 = vpack.c.b16 %v3254, %v3253
      %v3274 = vpack.c.b16 %v3256, %v3255
      %v3275 = vpack.c.b16 %v3258, %v3257
      %v3276 = vpack.c.b16 %v3260, %v3259
      %v3278 = vsel %vm539, %v3261, 0
      %v3281 = vsel %vm539, %v3262, 0
      %v3284 = vsel %vm539, %v3263, 0
      %v3287 = vsel %vm539, %v3264, 0
      %v3290 = vsel %vm539, %v3265, 0
      %v3293 = vsel %vm539, %v3266, 0
      %v3296 = vsel %vm539, %v3267, 0
      %v3299 = vsel %vm539, %v3268, 0
      %v3302 = vsel %vm539, %v3269, 0
      %v3305 = vsel %vm539, %v3270, 0
      %v3308 = vsel %vm539, %v3271, 0
      %v3311 = vsel %vm539, %v3272, 0
      %v3314 = vsel %vm539, %v3273, 0
      %v3317 = vsel %vm539, %v3274, 0
      %v3320 = vsel %vm539, %v3275, 0
      %v3323 = vsel %vm539, %v3276, 0
      %v3326 = vsel %vm909, %v3196, 0
      %3328 = vmatpush.bf16.msra.mxu0 0
      %3329 = vmatpush.bf16.msra.mxu0 0
      %3330 = vmatpush.bf16.msra.mxu0 0
      %3331 = vmatpush.bf16.msra.mxu0 0
      %3332 = vmatpush.bf16.msra.mxu0 0
      %3333 = vmatpush.bf16.msra.mxu0 0
      %3334 = vmatpush.bf16.msra.mxu0 0
      %3335 = vmatpush.bf16.msra.mxu0 %v3326
      %3336 = vmatmul.bf16.gmra.mxu0 %v3278
      %v3337 = vpop.f32.mrf.mxu0
      %v3338 = vadd.f32 0.0, %v3337
      %v3339 = vpop.f32.mrf.mxu0
      %v3340 = vadd.f32 0.0, %v3339
      %3341 = vmatmul.bf16.gmra.mxu0 %v3281
      %v3342 = vpop.f32.mrf.mxu0
      %v3343 = vadd.f32 0.0, %v3342
      %v3344 = vpop.f32.mrf.mxu0
      %v3345 = vadd.f32 0.0, %v3344
      %3346 = vmatmul.bf16.gmra.mxu0 %v3284
      %v3347 = vpop.f32.mrf.mxu0
      %v3348 = vadd.f32 0.0, %v3347
      %v3349 = vpop.f32.mrf.mxu0
      %v3350 = vadd.f32 0.0, %v3349
      %3351 = vmatmul.bf16.gmra.mxu0 %v3287
      %v3352 = vpop.f32.mrf.mxu0
      %v3353 = vadd.f32 0.0, %v3352
      %v3354 = vpop.f32.mrf.mxu0
      %v3355 = vadd.f32 0.0, %v3354
      %3356 = vmatmul.bf16.gmra.mxu0 %v3290
      %v3357 = vpop.f32.mrf.mxu0
      %v3358 = vadd.f32 0.0, %v3357
      %v3359 = vpop.f32.mrf.mxu0
      %v3360 = vadd.f32 0.0, %v3359
      %3361 = vmatmul.bf16.gmra.mxu0 %v3293
      %v3362 = vpop.f32.mrf.mxu0
      %v3363 = vadd.f32 0.0, %v3362
      %v3364 = vpop.f32.mrf.mxu0
      %v3365 = vadd.f32 0.0, %v3364
      %3366 = vmatmul.bf16.gmra.mxu0 %v3296
      %v3367 = vpop.f32.mrf.mxu0
      %v3368 = vadd.f32 0.0, %v3367
      %v3369 = vpop.f32.mrf.mxu0
      %v3370 = vadd.f32 0.0, %v3369
      %3371 = vmatmul.bf16.gmra.mxu0 %v3299
      %v3372 = vpop.f32.mrf.mxu0
      %v3373 = vadd.f32 0.0, %v3372
      %v3374 = vpop.f32.mrf.mxu0
      %v3375 = vadd.f32 0.0, %v3374
      %3376 = vmatmul.bf16.gmra.mxu0 %v3302
      %v3377 = vpop.f32.mrf.mxu0
      %v3378 = vadd.f32 0.0, %v3377
      %v3379 = vpop.f32.mrf.mxu0
      %v3380 = vadd.f32 0.0, %v3379
      %3381 = vmatmul.bf16.gmra.mxu0 %v3305
      %v3382 = vpop.f32.mrf.mxu0
      %v3383 = vadd.f32 0.0, %v3382
      %v3384 = vpop.f32.mrf.mxu0
      %v3385 = vadd.f32 0.0, %v3384
      %3386 = vmatmul.bf16.gmra.mxu0 %v3308
      %v3387 = vpop.f32.mrf.mxu0
      %v3388 = vadd.f32 0.0, %v3387
      %v3389 = vpop.f32.mrf.mxu0
      %v3390 = vadd.f32 0.0, %v3389
      %3391 = vmatmul.bf16.gmra.mxu0 %v3311
      %v3392 = vpop.f32.mrf.mxu0
      %v3393 = vadd.f32 0.0, %v3392
      %v3394 = vpop.f32.mrf.mxu0
      %v3395 = vadd.f32 0.0, %v3394
      %3396 = vmatmul.bf16.gmra.mxu0 %v3314
      %v3397 = vpop.f32.mrf.mxu0
      %v3398 = vadd.f32 0.0, %v3397
      %v3399 = vpop.f32.mrf.mxu0
      %v3400 = vadd.f32 0.0, %v3399
      %3401 = vmatmul.bf16.gmra.mxu0 %v3317
      %v3402 = vpop.f32.mrf.mxu0
      %v3403 = vadd.f32 0.0, %v3402
      %v3404 = vpop.f32.mrf.mxu0
      %v3405 = vadd.f32 0.0, %v3404
      %3406 = vmatmul.bf16.gmra.mxu0 %v3320
      %v3407 = vpop.f32.mrf.mxu0
      %v3408 = vadd.f32 0.0, %v3407
      %v3409 = vpop.f32.mrf.mxu0
      %v3410 = vadd.f32 0.0, %v3409
      %3411 = vmatmul.bf16.gmra.mxu0 %v3323
      %v3412 = vpop.f32.mrf.mxu0
      %v3413 = vadd.f32 0.0, %v3412
      %v3414 = vpop.f32.mrf.mxu0
      %v3415 = vadd.f32 0.0, %v3414
      %3416 = vdwg.mxu0
      %v3417 = vadd.f32 %v3099, %v3338
      %v3418 = vadd.f32 %v3100, %v3340
      %v3419 = vadd.f32 %v3101, %v3343
      %v3420 = vadd.f32 %v3102, %v3345
      %v3421 = vadd.f32 %v3103, %v3348
      %v3422 = vadd.f32 %v3104, %v3350
      %v3423 = vadd.f32 %v3105, %v3353
      %v3424 = vadd.f32 %v3106, %v3355
      %v3425 = vadd.f32 %v3107, %v3358
      %v3426 = vadd.f32 %v3108, %v3360
      %v3427 = vadd.f32 %v3109, %v3363
      %v3428 = vadd.f32 %v3110, %v3365
      %v3429 = vadd.f32 %v3111, %v3368
      %v3430 = vadd.f32 %v3112, %v3370
      %v3431 = vadd.f32 %v3113, %v3373
      %v3432 = vadd.f32 %v3114, %v3375
      %v3433 = vadd.f32 %v3115, %v3378
      %v3434 = vadd.f32 %v3116, %v3380
      %v3435 = vadd.f32 %v3117, %v3383
      %v3436 = vadd.f32 %v3118, %v3385
      %v3437 = vadd.f32 %v3119, %v3388
      %v3438 = vadd.f32 %v3120, %v3390
      %v3439 = vadd.f32 %v3121, %v3393
      %v3440 = vadd.f32 %v3122, %v3395
      %v3441 = vadd.f32 %v3123, %v3398
      %v3442 = vadd.f32 %v3124, %v3400
      %v3443 = vadd.f32 %v3125, %v3403
      %v3444 = vadd.f32 %v3126, %v3405
      %v3445 = vadd.f32 %v3127, %v3408
      %v3446 = vadd.f32 %v3128, %v3410
      %v3447 = vadd.f32 %v3129, %v3413
      %v3448 = vadd.f32 %v3130, %v3415
      %v3449 = vpack.c.bf16 %v3417, %v3417
      %v3450 = vpack.c.bf16 %v3418, %v3418
      %v3451 = vpack.c.bf16 %v3419, %v3419
      %v3452 = vpack.c.bf16 %v3420, %v3420
      %v3453 = vpack.c.bf16 %v3421, %v3421
      %v3454 = vpack.c.bf16 %v3422, %v3422
      %v3455 = vpack.c.bf16 %v3423, %v3423
      %v3456 = vpack.c.bf16 %v3424, %v3424
      %v3457 = vpack.c.bf16 %v3425, %v3425
      %v3458 = vpack.c.bf16 %v3426, %v3426
      %v3459 = vpack.c.bf16 %v3427, %v3427
      %v3460 = vpack.c.bf16 %v3428, %v3428
      %v3461 = vpack.c.bf16 %v3429, %v3429
      %v3462 = vpack.c.bf16 %v3430, %v3430
      %v3463 = vpack.c.bf16 %v3431, %v3431
      %v3464 = vpack.c.bf16 %v3432, %v3432
      %v3465 = vpack.c.bf16 %v3433, %v3433
      %v3466 = vpack.c.bf16 %v3434, %v3434
      %v3467 = vpack.c.bf16 %v3435, %v3435
      %v3468 = vpack.c.bf16 %v3436, %v3436
      %v3469 = vpack.c.bf16 %v3437, %v3437
      %v3470 = vpack.c.bf16 %v3438, %v3438
      %v3471 = vpack.c.bf16 %v3439, %v3439
      %v3472 = vpack.c.bf16 %v3440, %v3440
      %v3473 = vpack.c.bf16 %v3441, %v3441
      %v3474 = vpack.c.bf16 %v3442, %v3442
      %v3475 = vpack.c.bf16 %v3443, %v3443
      %v3476 = vpack.c.bf16 %v3444, %v3444
      %v3477 = vpack.c.bf16 %v3445, %v3445
      %v3478 = vpack.c.bf16 %v3446, %v3446
      %v3479 = vpack.c.bf16 %v3447, %v3447
      %v3480 = vpack.c.bf16 %v3448, %v3448
      %vm3481 = vcmask 27648
      %3482 = vst.msk [vmem:[%s340] sm:$0xf] %vm3481, %v3449
      %3483 = vst.msk [vmem:[%s340 + $0x4] sm:$0xf] %vm3481, %v3450
      %3484 = vst.msk [vmem:[%s340 + $0x8] sm:$0xf] %vm3481, %v3451
      %3485 = vst.msk [vmem:[%s340 + $0xc] sm:$0xf] %vm3481, %v3452
      %3486 = vst.msk [vmem:[%s340 + $0x10] sm:$0xf] %vm3481, %v3453
      %3487 = vst.msk [vmem:[%s340 + $0x14] sm:$0xf] %vm3481, %v3454
      %3488 = vst.msk [vmem:[%s340 + $0x18] sm:$0xf] %vm3481, %v3455
      %3489 = vst.msk [vmem:[%s340 + $0x1c] sm:$0xf] %vm3481, %v3456
      %3490 = vst.msk [vmem:[%s340 + $0x20] sm:$0xf] %vm3481, %v3457
      %3491 = vst.msk [vmem:[%s340 + $0x24] sm:$0xf] %vm3481, %v3458
      %3492 = vst.msk [vmem:[%s340 + $0x28] sm:$0xf] %vm3481, %v3459
      %3493 = vst.msk [vmem:[%s340 + $0x2c] sm:$0xf] %vm3481, %v3460
      %3494 = vst.msk [vmem:[%s340 + $0x30] sm:$0xf] %vm3481, %v3461
      %3495 = vst.msk [vmem:[%s340 + $0x34] sm:$0xf] %vm3481, %v3462
      %3496 = vst.msk [vmem:[%s340 + $0x38] sm:$0xf] %vm3481, %v3463
      %3497 = vst.msk [vmem:[%s340 + $0x3c] sm:$0xf] %vm3481, %v3464
      %3498 = vst.msk [vmem:[%s340 + $0x40] sm:$0xf] %vm3481, %v3465
      %3499 = vst.msk [vmem:[%s340 + $0x44] sm:$0xf] %vm3481, %v3466
      %3500 = vst.msk [vmem:[%s340 + $0x48] sm:$0xf] %vm3481, %v3467
      %3501 = vst.msk [vmem:[%s340 + $0x4c] sm:$0xf] %vm3481, %v3468
      %3502 = vst.msk [vmem:[%s340 + $0x50] sm:$0xf] %vm3481, %v3469
      %3503 = vst.msk [vmem:[%s340 + $0x54] sm:$0xf] %vm3481, %v3470
      %3504 = vst.msk [vmem:[%s340 + $0x58] sm:$0xf] %vm3481, %v3471
      %3505 = vst.msk [vmem:[%s340 + $0x5c] sm:$0xf] %vm3481, %v3472
      %3506 = vst.msk [vmem:[%s340 + $0x60] sm:$0xf] %vm3481, %v3473
      %3507 = vst.msk [vmem:[%s340 + $0x64] sm:$0xf] %vm3481, %v3474
      %3508 = vst.msk [vmem:[%s340 + $0x68] sm:$0xf] %vm3481, %v3475
      %3509 = vst.msk [vmem:[%s340 + $0x6c] sm:$0xf] %vm3481, %v3476
      %3510 = vst.msk [vmem:[%s340 + $0x70] sm:$0xf] %vm3481, %v3477
      %3511 = vst.msk [vmem:[%s340 + $0x74] sm:$0xf] %vm3481, %v3478
      %3512 = vst.msk [vmem:[%s340 + $0x78] sm:$0xf] %vm3481, %v3479
      %3513 = vst.msk [vmem:[%s340 + $0x7c] sm:$0xf] %vm3481, %v3480
      %v3514 = vsel %vm539, %v3417, 0.0
      %v3515 = vsel %vm539, %v3418, 0.0
      %v3516 = vadd.f32 %v3514, %v3515
      %v3517 = vsel %vm539, %v3419, 0.0
      %v3518 = vadd.f32 %v3516, %v3517
      %v3519 = vsel %vm539, %v3420, 0.0
      %v3520 = vadd.f32 %v3518, %v3519
      %v3521 = vsel %vm539, %v3421, 0.0
      %v3522 = vadd.f32 %v3520, %v3521
      %v3523 = vsel %vm539, %v3422, 0.0
      %v3524 = vadd.f32 %v3522, %v3523
      %v3525 = vsel %vm539, %v3423, 0.0
      %v3526 = vadd.f32 %v3524, %v3525
      %v3527 = vsel %vm539, %v3424, 0.0
      %v3528 = vadd.f32 %v3526, %v3527
      %v3529 = vsel %vm539, %v3425, 0.0
      %v3530 = vadd.f32 %v3528, %v3529
      %v3531 = vsel %vm539, %v3426, 0.0
      %v3532 = vadd.f32 %v3530, %v3531
      %v3533 = vsel %vm539, %v3427, 0.0
      %v3534 = vadd.f32 %v3532, %v3533
      %v3535 = vsel %vm539, %v3428, 0.0
      %v3536 = vadd.f32 %v3534, %v3535
      %v3537 = vsel %vm539, %v3429, 0.0
      %v3538 = vadd.f32 %v3536, %v3537
      %v3539 = vsel %vm539, %v3430, 0.0
      %v3540 = vadd.f32 %v3538, %v3539
      %v3541 = vsel %vm539, %v3431, 0.0
      %v3542 = vadd.f32 %v3540, %v3541
      %v3543 = vsel %vm539, %v3432, 0.0
      %v3544 = vadd.f32 %v3542, %v3543
      %v3545 = vsel %vm539, %v3433, 0.0
      %v3546 = vadd.f32 %v3544, %v3545
      %v3547 = vsel %vm539, %v3434, 0.0
      %v3548 = vadd.f32 %v3546, %v3547
      %v3549 = vsel %vm539, %v3435, 0.0
      %v3550 = vadd.f32 %v3548, %v3549
      %v3551 = vsel %vm539, %v3436, 0.0
      %v3552 = vadd.f32 %v3550, %v3551
      %v3553 = vsel %vm539, %v3437, 0.0
      %v3554 = vadd.f32 %v3552, %v3553
      %v3555 = vsel %vm539, %v3438, 0.0
      %v3556 = vadd.f32 %v3554, %v3555
      %v3557 = vsel %vm539, %v3439, 0.0
      %v3558 = vadd.f32 %v3556, %v3557
      %v3559 = vsel %vm539, %v3440, 0.0
      %v3560 = vadd.f32 %v3558, %v3559
      %v3561 = vsel %vm539, %v3441, 0.0
      %v3562 = vadd.f32 %v3560, %v3561
      %v3563 = vsel %vm539, %v3442, 0.0
      %v3564 = vadd.f32 %v3562, %v3563
      %v3565 = vsel %vm539, %v3443, 0.0
      %v3566 = vadd.f32 %v3564, %v3565
      %v3567 = vsel %vm539, %v3444, 0.0
      %v3568 = vadd.f32 %v3566, %v3567
      %v3569 = vsel %vm539, %v3445, 0.0
      %v3570 = vadd.f32 %v3568, %v3569
      %v3571 = vsel %vm539, %v3446, 0.0
      %v3572 = vadd.f32 %v3570, %v3571
      %v3573 = vsel %vm539, %v3447, 0.0
      %v3574 = vadd.f32 %v3572, %v3573
      %v3575 = vsel %vm539, %v3448, 0.0
      %v3576 = vadd.f32 %v3574, %v3575
      %v3577 = vrot.slane %v3576, 4
      %v3578 = vadd.f32 %v3576, %v3577
      %v3579 = vrot.slane %v3578, 2
      %v3580 = vadd.f32 %v3578, %v3579
      %v3581 = vrot.slane %v3580, 1
      %v3582 = vadd.f32 %v3580, %v3581
      %v3583 = vrcp.pop 256.0
      %v3584 = vmul.f32 256.0, %v3583
      %v3585 = vsub.f32 1.0, %v3584
      %v3586 = vmul.f32 %v3583, %v3585
      %v3587 = vadd.f32 %v3583, %v3586
      %vm3588 = vweird.f32 %v3583
      %v3589 = vsel %vm3588, %v3583, %v3587
      %v3590 = vmul.f32 %v3582, %v3589
      %v3591 = vsub.f32 %v3417, %v3590
      %v3592 = vsub.f32 %v3418, %v3590
      %v3593 = vsub.f32 %v3419, %v3590
      %v3594 = vsub.f32 %v3420, %v3590
      %v3595 = vsub.f32 %v3421, %v3590
      %v3596 = vsub.f32 %v3422, %v3590
      %v3597 = vsub.f32 %v3423, %v3590
      %v3598 = vsub.f32 %v3424, %v3590
      %v3599 = vsub.f32 %v3425, %v3590
      %v3600 = vsub.f32 %v3426, %v3590
      %v3601 = vsub.f32 %v3427, %v3590
      %v3602 = vsub.f32 %v3428, %v3590
      %v3603 = vsub.f32 %v3429, %v3590
      %v3604 = vsub.f32 %v3430, %v3590
      %v3605 = vsub.f32 %v3431, %v3590
      %v3606 = vsub.f32 %v3432, %v3590
      %v3607 = vsub.f32 %v3433, %v3590
      %v3608 = vsub.f32 %v3434, %v3590
      %v3609 = vsub.f32 %v3435, %v3590
      %v3610 = vsub.f32 %v3436, %v3590
      %v3611 = vsub.f32 %v3437, %v3590
      %v3612 = vsub.f32 %v3438, %v3590
      %v3613 = vsub.f32 %v3439, %v3590
      %v3614 = vsub.f32 %v3440, %v3590
      %v3615 = vsub.f32 %v3441, %v3590
      %v3616 = vsub.f32 %v3442, %v3590
      %v3617 = vsub.f32 %v3443, %v3590
      %v3618 = vsub.f32 %v3444, %v3590
      %v3619 = vsub.f32 %v3445, %v3590
      %v3620 = vsub.f32 %v3446, %v3590
      %v3621 = vsub.f32 %v3447, %v3590
      %v3622 = vsub.f32 %v3448, %v3590
      %v3623 = vmul.f32 %v3591, %v3591
      %v3624 = vmul.f32 %v3592, %v3592
      %v3625 = vmul.f32 %v3593, %v3593
      %v3626 = vmul.f32 %v3594, %v3594
      %v3627 = vmul.f32 %v3595, %v3595
      %v3628 = vmul.f32 %v3596, %v3596
      %v3629 = vmul.f32 %v3597, %v3597
      %v3630 = vmul.f32 %v3598, %v3598
      %v3631 = vmul.f32 %v3599, %v3599
      %v3632 = vmul.f32 %v3600, %v3600
      %v3633 = vmul.f32 %v3601, %v3601
      %v3634 = vmul.f32 %v3602, %v3602
      %v3635 = vmul.f32 %v3603, %v3603
      %v3636 = vmul.f32 %v3604, %v3604
      %v3637 = vmul.f32 %v3605, %v3605
      %v3638 = vmul.f32 %v3606, %v3606
      %v3639 = vmul.f32 %v3607, %v3607
      %v3640 = vmul.f32 %v3608, %v3608
      %v3641 = vmul.f32 %v3609, %v3609
      %v3642 = vmul.f32 %v3610, %v3610
      %v3643 = vmul.f32 %v3611, %v3611
      %v3644 = vmul.f32 %v3612, %v3612
      %v3645 = vmul.f32 %v3613, %v3613
      %v3646 = vmul.f32 %v3614, %v3614
      %v3647 = vmul.f32 %v3615, %v3615
      %v3648 = vmul.f32 %v3616, %v3616
      %v3649 = vmul.f32 %v3617, %v3617
      %v3650 = vmul.f32 %v3618, %v3618
      %v3651 = vmul.f32 %v3619, %v3619
      %v3652 = vmul.f32 %v3620, %v3620
      %v3653 = vmul.f32 %v3621, %v3621
      %v3654 = vmul.f32 %v3622, %v3622
      %v3655 = vsel %vm539, %v3623, 0.0
      %v3656 = vsel %vm539, %v3624, 0.0
      %v3657 = vadd.f32 %v3655, %v3656
      %v3658 = vsel %vm539, %v3625, 0.0
      %v3659 = vadd.f32 %v3657, %v3658
      %v3660 = vsel %vm539, %v3626, 0.0
      %v3661 = vadd.f32 %v3659, %v3660
      %v3662 = vsel %vm539, %v3627, 0.0
      %v3663 = vadd.f32 %v3661, %v3662
      %v3664 = vsel %vm539, %v3628, 0.0
      %v3665 = vadd.f32 %v3663, %v3664
      %v3666 = vsel %vm539, %v3629, 0.0
      %v3667 = vadd.f32 %v3665, %v3666
      %v3668 = vsel %vm539, %v3630, 0.0
      %v3669 = vadd.f32 %v3667, %v3668
      %v3670 = vsel %vm539, %v3631, 0.0
      %v3671 = vadd.f32 %v3669, %v3670
      %v3672 = vsel %vm539, %v3632, 0.0
      %v3673 = vadd.f32 %v3671, %v3672
      %v3674 = vsel %vm539, %v3633, 0.0
      %v3675 = vadd.f32 %v3673, %v3674
      %v3676 = vsel %vm539, %v3634, 0.0
      %v3677 = vadd.f32 %v3675, %v3676
      %v3678 = vsel %vm539, %v3635, 0.0
      %v3679 = vadd.f32 %v3677, %v3678
      %v3680 = vsel %vm539, %v3636, 0.0
      %v3681 = vadd.f32 %v3679, %v3680
      %v3682 = vsel %vm539, %v3637, 0.0
      %v3683 = vadd.f32 %v3681, %v3682
      %v3684 = vsel %vm539, %v3638, 0.0
      %v3685 = vadd.f32 %v3683, %v3684
      %v3686 = vsel %vm539, %v3639, 0.0
      %v3687 = vadd.f32 %v3685, %v3686
      %v3688 = vsel %vm539, %v3640, 0.0
      %v3689 = vadd.f32 %v3687, %v3688
      %v3690 = vsel %vm539, %v3641, 0.0
      %v3691 = vadd.f32 %v3689, %v3690
      %v3692 = vsel %vm539, %v3642, 0.0
      %v3693 = vadd.f32 %v3691, %v3692
      %v3694 = vsel %vm539, %v3643, 0.0
      %v3695 = vadd.f32 %v3693, %v3694
      %v3696 = vsel %vm539, %v3644, 0.0
      %v3697 = vadd.f32 %v3695, %v3696
      %v3698 = vsel %vm539, %v3645, 0.0
      %v3699 = vadd.f32 %v3697, %v3698
      %v3700 = vsel %vm539, %v3646, 0.0
      %v3701 = vadd.f32 %v3699, %v3700
      %v3702 = vsel %vm539, %v3647, 0.0
      %v3703 = vadd.f32 %v3701, %v3702
      %v3704 = vsel %vm539, %v3648, 0.0
      %v3705 = vadd.f32 %v3703, %v3704
      %v3706 = vsel %vm539, %v3649, 0.0
      %v3707 = vadd.f32 %v3705, %v3706
      %v3708 = vsel %vm539, %v3650, 0.0
      %v3709 = vadd.f32 %v3707, %v3708
      %v3710 = vsel %vm539, %v3651, 0.0
      %v3711 = vadd.f32 %v3709, %v3710
      %v3712 = vsel %vm539, %v3652, 0.0
      %v3713 = vadd.f32 %v3711, %v3712
      %v3714 = vsel %vm539, %v3653, 0.0
      %v3715 = vadd.f32 %v3713, %v3714
      %v3716 = vsel %vm539, %v3654, 0.0
      %v3717 = vadd.f32 %v3715, %v3716
      %v3718 = vrot.slane %v3717, 4
      %v3719 = vadd.f32 %v3717, %v3718
      %v3720 = vrot.slane %v3719, 2
      %v3721 = vadd.f32 %v3719, %v3720
      %v3722 = vrot.slane %v3721, 1
      %v3723 = vadd.f32 %v3721, %v3722
      %vm3724 = vcmask 1040384
      %v3725 = vsel %vm3724, %v3590, %v3723
      %vm3726 = vcmask 25600
      %3727 = vst.msk [vmem:[%s348] sm:$0x3] %vm3726, %v3725
      %s3728 = smul.u32 16, %s23
      %p3729 = scmp.lt.s32.totalorder %s22, 1
      %s3730 = scalar_select %p3729, %s22, 1
      %p3731 = scmp.lt.s32.totalorder %s3728, 15
      %s3732 = scalar_select %p3731, %s3728, 15
      %s3733 = smul.addr %s3732, 2
      %s3734 = smul.addr %s3730, 32
      %s3735 = sadd.s32 %s3733, %s3734
      %s3736 = smul.addr %s3735, 4
      %s3737 = scalar_lea.vmem %s5, %s3736
      %p3738 = scmp.lt.s32.totalorder %s22, 1
      %s3739 = scalar_select %p3738, %s22, 1
      %p3740 = scmp.lt.s32.totalorder %s23, 0
      %s3741 = scalar_select %p3740, %s23, 0
      %s3742 = sadd.s32 %s3741, %s3739
      %s3743 = smul.addr %s3742, 2
      %s3744 = scalar_lea.vmem %s6, %s3743
      // Predicated region
      $region41: #{residual_block_pallas.4} parent=39 // pred_check
        %p3745 = pneg %p169
      $region42: #{residual_block_pallas.4} parent=39 // pred_check_branch
        %3747 = sbr.rel (%p3745) target = $region44
      $region43: #{residual_block_pallas.4} parent=39 // pred_region
        %s3748 = smul.u32 16, %s23
      $region44: #{residual_block_pallas.4} parent=39 // pred_fallthru
        _
      // Predicated region
      $region45: #{residual_block_pallas.4} parent=39 // pred_check
        %p3749 = pneg %p197
      $region46: #{residual_block_pallas.4} parent=39 // pred_check_branch
        %3751 = sbr.rel (%p3749) target = $region48
      $region47: #{residual_block_pallas.4} parent=39 // pred_region
        _
      $region48: #{residual_block_pallas.4} parent=39 // pred_fallthru
        _
    $region40: #{residual_block_pallas.4} parent=5 // pred_fallthru
      _
    %p3752 = scmp.le.s32.totalorder 2, %s13
    // Predicated region
    $region49: #{residual_block_pallas.4} parent=5 // pred_check
      %p3753 = pneg %p3752
    $region50: #{residual_block_pallas.4} parent=5 // pred_check_branch
      %3755 = sbr.rel (%p3753) target = $region52
    $region51: #{residual_block_pallas.4} parent=5 // pred_region
      %s3756 = ssub.s32 %s13, 2
      // Predicated region
      $region53: #{residual_block_pallas.4} parent=51 // pred_check
        %p3757 = pneg %p175
      $region54: #{residual_block_pallas.4} parent=51 // pred_check_branch
        %3759 = sbr.rel (%p3757) target = $region56
      $region55: #{residual_block_pallas.4} parent=51 // pred_region
        %s3760 = smul.u32 16, %s25
        %p3761 = scmp.lt.s32.totalorder %s24, 1
        %s3762 = scalar_select %p3761, %s24, 1
        %p3763 = scmp.lt.s32.totalorder %s3760, 15
        %s3764 = scalar_select %p3763, %s3760, 15
        %s3765 = smul.addr %s3764, 2
        %s3766 = smul.addr %s3762, 32
        %s3767 = sadd.s32 %s3765, %s3766
        %s3768 = smul.addr %s3767, 4
        %s3769 = scalar_lea.vmem %s5, %s3768
      $region56: #{residual_block_pallas.4} parent=51 // pred_fallthru
        _
      // Predicated region
      $region57: #{residual_block_pallas.4} parent=51 // pred_check
        %p3770 = pneg %p203
      $region58: #{residual_block_pallas.4} parent=51 // pred_check_branch
        %3772 = sbr.rel (%p3770) target = $region60
      $region59: #{residual_block_pallas.4} parent=51 // pred_region
        %p3773 = scmp.lt.s32.totalorder %s24, 1
        %s3774 = scalar_select %p3773, %s24, 1
        %p3775 = scmp.lt.s32.totalorder %s25, 0
        %s3776 = scalar_select %p3775, %s25, 0
        %s3777 = sadd.s32 %s3776, %s3774
        %s3778 = smul.addr %s3777, 2
        %s3779 = scalar_lea.vmem %s6, %s3778
      $region60: #{residual_block_pallas.4} parent=51 // pred_fallthru
        _
    $region52: #{residual_block_pallas.4} parent=5 // pred_fallthru
      _
  $region6: #{residual_block_pallas.4} parent=0 // loop_footer
    %s17 = sadd.s32 1, %s13
  $region7: #{residual_block_pallas.4} parent=0 // loop_footer_branch
    %12 = sbr.rel target = $region3
  $region8: #{residual_block_pallas.4} parent=0 // loop_exit
    _

</llo_original>
